<compile_context>
chip_gen: v5e
topology: v5e:2x2
jax: 0.10.0
libtpu: 0.0.40
codegen_flags: <defaults>
</compile_context>

<pallas_src>
import functools

import jax
import jax.numpy as jnp
import numpy as np
from jax import lax
from jax.experimental import pallas as pl
from jax.experimental.pallas import tpu as pltpu


# ----------------------------------------------------------------------------
# Fused kernel: 5x (3x3 conv + ReLU, dense connections) + 1x1 LFF + residual
# ----------------------------------------------------------------------------
def rdb_fused_kernel(x_ref, mask_ref, wl_ref, bl_ref, wlff_ref, blff_ref,
                     o_ref, stack_ref, out3_ref, *, C, G, L, x_base, Wp,
                     P_out):
    """One batch element per grid step; channels on sublanes, pixels on lanes.

    x_ref    : (1, C, P_out)     zero-padded input image, f32, lane-dense
    mask_ref : (1, P_out)        interior-pixel mask, f32 (host-computed)
    wl_ref   : (L, 9G, C_totp)   3x3 conv weights, tap-collapsed, bf16
    bl_ref   : (L, G, 1)         conv biases, f32
    wlff_ref : (C, C_totp)       1x1 LFF weight, bf16
    blff_ref : (C, 1)            LFF bias, f32
    o_ref    : (1, C, P_out)     output, f32, lane-dense
    stack_ref: (C_totp, P_out)   bf16 dense-feature stack (VMEM scratch)
    out3_ref : (3G, P_out)       f32 per-dy matmul result (VMEM scratch)
    """
    G3 = 3 * G
    maskf = mask_ref[...]                                  # (1, P_out)

    # x channels (+ explicit zero alignment rows up to x_base) into the stack.
    # Everything the layer matmuls read is fully (re)written each grid step,
    # so the scratch never needs a bulk re-zero and is megacore-safe.
    stack_ref[0:C, :] = x_ref[0].astype(jnp.bfloat16)
    if x_base > C:
        stack_ref[C:x_base, :] = jnp.zeros((x_base - C, P_out), jnp.bfloat16)

    def shift_lanes(v, off):
        # s[:, p] = v[:, (p + off) % P_out].  Wrapped lanes only ever land on
        # halo / alignment pixels, which maskf zeroes afterwards.
        if off == 0:
            return v
        k = off % P_out
        return jnp.concatenate([v[:, k:], v[:, :k]], axis=1)

    # Dense 3x3 conv layers.  Taps collapsed into the matmul M dimension:
    # one (3G x K_i) @ (K_i x P_out) matmul per dy row; the conv result is
    # recovered with 9 lane-shifted slab adds.  K_i is the contiguous prefix
    # of valid channels (no zero-padded K columns are multiplied).
    for i in range(L):
        k_i = x_base + i * G
        y = jnp.zeros((G, P_out), jnp.float32)
        for dy in range(3):
            out3_ref[...] = jnp.dot(
                wl_ref[i, dy * G3:(dy + 1) * G3, 0:k_i],
                stack_ref[0:k_i, :],
                preferred_element_type=jnp.float32)        # (3G, P_out) f32
            for dx in range(3):
                off = (dy - 1) * Wp + (dx - 1)
                y = y + shift_lanes(out3_ref[dx * G:(dx + 1) * G, :], off)
        # Bias + ReLU + interior mask (mask doubles as next layer's zero pad).
        y = jnp.maximum(y + bl_ref[i], 0.0) * maskf
        stack_ref[k_i:k_i + G, :] = y.astype(jnp.bfloat16)

    # 1x1 LFF over the full stack, then * 0.2 + residual (f32 epilogue).
    fused = jnp.dot(wlff_ref[...], stack_ref[...],
                    preferred_element_type=jnp.float32) + blff_ref[...]
    o_ref[0] = (fused * 0.2 + x_ref[0]).astype(o_ref.dtype)


# ----------------------------------------------------------------------------
# Parameter packing: [x (padded to x_base) | g0 | g1 | ... ] channel order
# ----------------------------------------------------------------------------
def _pack_params(params, C, G, L, x_base):
    C_totp = x_base + L * G
    wl = np.zeros((L, 9 * G, C_totp), np.float32)
    bl = np.zeros((L, G, 1), np.float32)
    for i, (w, b) in enumerate(params["layers"]):
        w = np.asarray(w)                                  # (3,3, C+i*G, G)
        w9 = np.transpose(w.reshape(9, C + i * G, G), (0, 2, 1))
        w9 = w9.reshape(9 * G, C + i * G)                  # row = t*G + g
        wl[i, :, :C] = w9[:, :C]                           # x channels
        if i > 0:
            wl[i, :, x_base:x_base + i * G] = w9[:, C:]    # g0 .. g_{i-1}
        bl[i, :, 0] = np.asarray(b)
    w_lff, b_lff = params["lff"]
    w_lff = np.asarray(w_lff)                              # (C + L*G, C)
    wlff = np.zeros((C, C_totp), np.float32)
    wlff[:, :C] = w_lff[:C, :].T
    wlff[:, x_base:x_base + L * G] = w_lff[C:, :].T
    blff = np.asarray(b_lff).reshape(C, 1)
    return (jnp.asarray(wl, jnp.bfloat16), jnp.asarray(bl, jnp.float32),
            jnp.asarray(wlff, jnp.bfloat16), jnp.asarray(blff, jnp.float32))


# ----------------------------------------------------------------------------
# Wrapper
# ----------------------------------------------------------------------------
def residual_dense_block(x_nhwc, params):
    """Forward pass of ResidualDenseBlock as a single fused Pallas kernel."""
    N, H, W, C = x_nhwc.shape
    L = len(params["layers"])
    G = params["layers"][0][0].shape[-1]
    x_base = ((C + 15) // 16) * 16              # bf16 sublane-pack aligned
    C_totp = x_base + L * G
    Hp, Wp = H + 2, W + 2
    P = Hp * Wp
    P_out = ((P + 127) // 128) * 128            # lane-dense pixel axis

    wl, bl, wlff, blff = _pack_params(params, C, G, L, x_base)

    # Interior-pixel mask, computed on the host (no in-kernel div/mod).
    m2 = np.zeros((Hp, Wp), np.float32)
    m2[1:H + 1, 1:W + 1] = 1.0
    mask = np.zeros((1, P_out), np.float32)
    mask[0, :P] = m2.reshape(-1)
    mask = jnp.asarray(mask)

    # Input: NHWC -> zero-padded, channels-on-sublanes / pixels-on-lanes.
    x_pad = jnp.pad(x_nhwc, ((0, 0), (1, 1), (1, 1), (0, 0)))
    x_t = jnp.transpose(x_pad, (0, 3, 1, 2)).reshape(N, C, P)
    x_t = jnp.pad(x_t.astype(jnp.float32), ((0, 0), (0, 0), (0, P_out - P)))

    flops = 2 * N * P_out * (sum((x_base + i * G) * 9 * G for i in range(L))
                             + C_totp * C)
    bytes_accessed = (x_t.size * 4 + wl.size * 2 + bl.size * 4
                      + wlff.size * 2 + blff.size * 4 + N * C * P_out * 4)

    kernel = functools.partial(rdb_fused_kernel, C=C, G=G, L=L,
                               x_base=x_base, Wp=Wp, P_out=P_out)
    out_t = pl.pallas_call(
        kernel,
        out_shape=jax.ShapeDtypeStruct((N, C, P_out), x_nhwc.dtype),
        grid=(N,),
        in_specs=[
            pl.BlockSpec((1, C, P_out), lambda n: (n, 0, 0)),
            pl.BlockSpec((1, P_out), lambda n: (0, 0)),
            pl.BlockSpec((L, 9 * G, C_totp), lambda n: (0, 0, 0)),
            pl.BlockSpec((L, G, 1), lambda n: (0, 0, 0)),
            pl.BlockSpec((C, C_totp), lambda n: (0, 0)),
            pl.BlockSpec((C, 1), lambda n: (0, 0)),
        ],
        out_specs=pl.BlockSpec((1, C, P_out), lambda n: (n, 0, 0)),
        scratch_shapes=[
            pltpu.VMEM((C_totp, P_out), jnp.bfloat16),   # dense-feature stack
            pltpu.VMEM((3 * G, P_out), jnp.float32),     # per-dy matmul out
        ],
        compiler_params=pltpu.CompilerParams(
            dimension_semantics=("parallel",)),
        cost_estimate=pl.CostEstimate(flops=int(flops), transcendentals=0,
                                      bytes_accessed=int(bytes_accessed)),
    )(x_t, mask, wl, bl, wlff, blff)

    out = out_t[:, :, :P].reshape(N, C, Hp, Wp)[:, :, 1:H + 1, 1:W + 1]
    return jnp.transpose(out, (0, 2, 3, 1))


# ----------------------------------------------------------------------------
# Deterministic parameter construction (shapes per PyTorch module __init__)
# ----------------------------------------------------------------------------
def init_params(key, in_channels, growth_channels=32, num_layers=5):
    params = {"layers": []}
    for i in range(num_layers):
        cin = in_channels + i * growth_channels
        key, kw, kb = jax.random.split(key, 3)
        fan_in = cin * 3 * 3
        bound = 1.0 / np.sqrt(fan_in)
        w = jax.random.uniform(kw, (3, 3, cin, growth_channels),
                               jnp.float32, -bound, bound)
        b = jax.random.uniform(kb, (growth_channels,), jnp.float32,
                               -bound, bound)
        params["layers"].append((w, b))
    cin = in_channels + num_layers * growth_channels
    key, kw, kb = jax.random.split(key, 3)
    bound = 1.0 / np.sqrt(cin)
    w_lff = jax.random.uniform(kw, (cin, in_channels), jnp.float32,
                               -bound, bound)
    b_lff = jax.random.uniform(kb, (in_channels,), jnp.float32, -bound, bound)
    params["lff"] = (w_lff, b_lff)
    return params


# ----------------------------------------------------------------------------
# Pure-JAX reference (f32) for correctness check
# ----------------------------------------------------------------------------
def reference_forward(x_nhwc, params):
    dn = ("NHWC", "HWIO", "NHWC")
    features = [x_nhwc]
    for (w, b) in params["layers"]:
        concat = jnp.concatenate(features, axis=-1)
        out = lax.conv_general_dilated(concat, w, (1, 1), "SAME",
                                       dimension_numbers=dn) + b
        features.append(jnp.maximum(out, 0.0))
    concat = jnp.concatenate(features, axis=-1)
    w_lff, b_lff = params["lff"]
    fused = lax.conv_general_dilated(
        concat, w_lff.reshape(1, 1, *w_lff.shape), (1, 1), "SAME",
        dimension_numbers=dn) + b_lff
    return fused * 0.2 + x_nhwc


if __name__ == "__main__":
    key = jax.random.PRNGKey(0)
    k_x, k_p = jax.random.split(key)

    N, C, H, W = 2, 4, 16, 16                     # PyTorch-style NCHW shape
    x_nchw = jax.random.normal(k_x, (N, C, H, W), jnp.float32)
    x_nhwc = jnp.transpose(x_nchw, (0, 2, 3, 1))  # kernel layout: NHWC

    params = init_params(k_p, in_channels=C, growth_channels=32, num_layers=5)

    out = jax.block_until_ready(residual_dense_block(x_nhwc, params))
    ref = jax.block_until_ready(reference_forward(x_nhwc, params))

    # bf16 matmul operands (f32 MXU accumulation) vs. an all-f32 reference:
    # use a correspondingly relaxed tolerance.
    np.testing.assert_allclose(np.asarray(out), np.asarray(ref),
                               rtol=2e-2, atol=2e-2)

    print("KERNEL_OK")
</pallas_src>

<mosaic_0001>
module attributes {stable_mosaic.version = 11 : i64} {
  func.func @rdb_fused_kernel(%arg0: i32, %arg1: memref<1x4x384xf32, #tpu.memory_space<vmem>>, %arg2: memref<1x384xf32, #tpu.memory_space<vmem>>, %arg3: memref<5x288x176xbf16, #tpu.memory_space<vmem>>, %arg4: memref<5x32x1xf32, #tpu.memory_space<vmem>>, %arg5: memref<4x176xbf16, #tpu.memory_space<vmem>>, %arg6: memref<4x1xf32, #tpu.memory_space<vmem>>, %arg7: memref<1x4x384xf32, #tpu.memory_space<vmem>>, %arg8: memref<176x384xbf16, #tpu.memory_space<vmem>>, %arg9: memref<96x384xf32, #tpu.memory_space<vmem>>) attributes {dimension_semantics = [#tpu.dimension_semantics<parallel>], iteration_bounds = array<i64: 2>, scalar_prefetch = 0 : i64, scratch_operands = 2 : i64, tpu.core_type = #tpu.core_type<tc>, window_params = [{transform_indices = @transform_0, window_bounds = array<i64: 1, 4, 384>}, {pipeline_mode = #tpu.pipeline_mode<synchronous>, transform_indices = @transform_1, window_bounds = array<i64: 1, 384>}, {pipeline_mode = #tpu.pipeline_mode<synchronous>, transform_indices = @transform_2, window_bounds = array<i64: 5, 288, 176>}, {pipeline_mode = #tpu.pipeline_mode<synchronous>, transform_indices = @transform_3, window_bounds = array<i64: 5, 32, 1>}, {pipeline_mode = #tpu.pipeline_mode<synchronous>, transform_indices = @transform_4, window_bounds = array<i64: 4, 176>}, {pipeline_mode = #tpu.pipeline_mode<synchronous>, transform_indices = @transform_5, window_bounds = array<i64: 4, 1>}, {transform_indices = @transform_6, window_bounds = array<i64: 1, 4, 384>}]} {
    %c0 = arith.constant 0 : index
    %c0_0 = arith.constant 0 : index
    %0 = vector.load %arg2[%c0, %c0_0] : memref<1x384xf32, #tpu.memory_space<vmem>>, vector<1x384xf32>
    %c0_1 = arith.constant 0 : index
    %c0_2 = arith.constant 0 : index
    %c0_3 = arith.constant 0 : index
    %1 = vector.load %arg1[%c0_1, %c0_2, %c0_3] : memref<1x4x384xf32, #tpu.memory_space<vmem>>, vector<1x4x384xf32>
    %2 = vector.shape_cast %1 : vector<1x4x384xf32> to vector<4x384xf32>
    %3 = arith.truncf %2 : vector<4x384xf32> to vector<4x384xbf16>
    %c0_4 = arith.constant 0 : index
    %c0_5 = arith.constant 0 : index
    %4 = vector.load %arg8[%c0_4, %c0_5] : memref<176x384xbf16, #tpu.memory_space<vmem>>, vector<4x384xbf16>
    tpu.vector_store %arg8[%c0_4, %c0_5], %3 {strides = array<i32>} : memref<176x384xbf16, #tpu.memory_space<vmem>>, vector<4x384xbf16>,
    %cst = arith.constant 0.000000e+00 : bf16
    %5 = vector.broadcast %cst : bf16 to vector<12x384xbf16>
    %c4 = arith.constant 4 : index
    %c0_6 = arith.constant 0 : index
    %6 = vector.load %arg8[%c4, %c0_6] : memref<176x384xbf16, #tpu.memory_space<vmem>>, vector<12x384xbf16>
    tpu.vector_store %arg8[%c4, %c0_6], %5 {strides = array<i32>} : memref<176x384xbf16, #tpu.memory_space<vmem>>, vector<12x384xbf16>,
    %cst_7 = arith.constant 0.000000e+00 : f32
    %7 = vector.broadcast %cst_7 : f32 to vector<32x384xf32>
    %c0_8 = arith.constant 0 : index
    %c0_9 = arith.constant 0 : index
    %c0_10 = arith.constant 0 : index
    %8 = vector.load %arg3[%c0_8, %c0_9, %c0_10] : memref<5x288x176xbf16, #tpu.memory_space<vmem>>, vector<1x96x16xbf16>
    %9 = vector.shape_cast %8 : vector<1x96x16xbf16> to vector<96x16xbf16>
    %c0_11 = arith.constant 0 : index
    %c0_12 = arith.constant 0 : index
    %10 = vector.load %arg8[%c0_11, %c0_12] : memref<176x384xbf16, #tpu.memory_space<vmem>>, vector<16x384xbf16>
    %cst_13 = arith.constant dense<0.000000e+00> : vector<96x384xf32>
    %11 = tpu.matmul %9, %10, %cst_13 {dimension_numbers = #tpu.dot_dimension_numbers<[1], [0], [0], [1], [0, 0, 1, 1], [], []>} : vector<96x16xbf16>, vector<16x384xbf16>, vector<96x384xf32> -> vector<96x384xf32>
    %c0_14 = arith.constant 0 : index
    %c0_15 = arith.constant 0 : index
    %12 = vector.load %arg9[%c0_14, %c0_15] : memref<96x384xf32, #tpu.memory_space<vmem>>, vector<96x384xf32>
    tpu.vector_store %arg9[%c0_14, %c0_15], %11 {strides = array<i32>} : memref<96x384xf32, #tpu.memory_space<vmem>>, vector<96x384xf32>,
    %c0_16 = arith.constant 0 : index
    %c0_17 = arith.constant 0 : index
    %13 = vector.load %arg9[%c0_16, %c0_17] : memref<96x384xf32, #tpu.memory_space<vmem>>, vector<32x384xf32>
    %14 = vector.extract_strided_slice %13 {offsets = [0, 365], sizes = [32, 19], strides = [1, 1]} : vector<32x384xf32> to vector<32x19xf32>
    %15 = vector.extract_strided_slice %13 {offsets = [0, 0], sizes = [32, 365], strides = [1, 1]} : vector<32x384xf32> to vector<32x365xf32>
    %16 = tpu.concatenate %14, %15 in 1 : vector<32x19xf32>, vector<32x365xf32> -> vector<32x384xf32>
    %17 = arith.addf %7, %16 : vector<32x384xf32>
    %c32 = arith.constant 32 : index
    %c0_18 = arith.constant 0 : index
    %18 = vector.load %arg9[%c32, %c0_18] : memref<96x384xf32, #tpu.memory_space<vmem>>, vector<32x384xf32>
    %19 = vector.extract_strided_slice %18 {offsets = [0, 366], sizes = [32, 18], strides = [1, 1]} : vector<32x384xf32> to vector<32x18xf32>
    %20 = vector.extract_strided_slice %18 {offsets = [0, 0], sizes = [32, 366], strides = [1, 1]} : vector<32x384xf32> to vector<32x366xf32>
    %21 = tpu.concatenate %19, %20 in 1 : vector<32x18xf32>, vector<32x366xf32> -> vector<32x384xf32>
    %22 = arith.addf %17, %21 : vector<32x384xf32>
    %c64 = arith.constant 64 : index
    %c0_19 = arith.constant 0 : index
    %23 = vector.load %arg9[%c64, %c0_19] : memref<96x384xf32, #tpu.memory_space<vmem>>, vector<32x384xf32>
    %24 = vector.extract_strided_slice %23 {offsets = [0, 367], sizes = [32, 17], strides = [1, 1]} : vector<32x384xf32> to vector<32x17xf32>
    %25 = vector.extract_strided_slice %23 {offsets = [0, 0], sizes = [32, 367], strides = [1, 1]} : vector<32x384xf32> to vector<32x367xf32>
    %26 = tpu.concatenate %24, %25 in 1 : vector<32x17xf32>, vector<32x367xf32> -> vector<32x384xf32>
    %27 = arith.addf %22, %26 : vector<32x384xf32>
    %c0_20 = arith.constant 0 : index
    %c96 = arith.constant 96 : index
    %c0_21 = arith.constant 0 : index
    %28 = vector.load %arg3[%c0_20, %c96, %c0_21] : memref<5x288x176xbf16, #tpu.memory_space<vmem>>, vector<1x96x16xbf16>
    %29 = vector.shape_cast %28 : vector<1x96x16xbf16> to vector<96x16xbf16>
    %c0_22 = arith.constant 0 : index
    %c0_23 = arith.constant 0 : index
    %30 = vector.load %arg8[%c0_22, %c0_23] : memref<176x384xbf16, #tpu.memory_space<vmem>>, vector<16x384xbf16>
    %cst_24 = arith.constant dense<0.000000e+00> : vector<96x384xf32>
    %31 = tpu.matmul %29, %30, %cst_24 {dimension_numbers = #tpu.dot_dimension_numbers<[1], [0], [0], [1], [0, 0, 1, 1], [], []>} : vector<96x16xbf16>, vector<16x384xbf16>, vector<96x384xf32> -> vector<96x384xf32>
    %c0_25 = arith.constant 0 : index
    %c0_26 = arith.constant 0 : index
    %32 = vector.load %arg9[%c0_25, %c0_26] : memref<96x384xf32, #tpu.memory_space<vmem>>, vector<96x384xf32>
    tpu.vector_store %arg9[%c0_25, %c0_26], %31 {strides = array<i32>} : memref<96x384xf32, #tpu.memory_space<vmem>>, vector<96x384xf32>,
    %c0_27 = arith.constant 0 : index
    %c0_28 = arith.constant 0 : index
    %33 = vector.load %arg9[%c0_27, %c0_28] : memref<96x384xf32, #tpu.memory_space<vmem>>, vector<32x384xf32>
    %34 = vector.extract_strided_slice %33 {offsets = [0, 383], sizes = [32, 1], strides = [1, 1]} : vector<32x384xf32> to vector<32x1xf32>
    %35 = vector.extract_strided_slice %33 {offsets = [0, 0], sizes = [32, 383], strides = [1, 1]} : vector<32x384xf32> to vector<32x383xf32>
    %36 = tpu.concatenate %34, %35 in 1 : vector<32x1xf32>, vector<32x383xf32> -> vector<32x384xf32>
    %37 = arith.addf %27, %36 : vector<32x384xf32>
    %c32_29 = arith.constant 32 : index
    %c0_30 = arith.constant 0 : index
    %38 = vector.load %arg9[%c32_29, %c0_30] : memref<96x384xf32, #tpu.memory_space<vmem>>, vector<32x384xf32>
    %39 = arith.addf %37, %38 : vector<32x384xf32>
    %c64_31 = arith.constant 64 : index
    %c0_32 = arith.constant 0 : index
    %40 = vector.load %arg9[%c64_31, %c0_32] : memref<96x384xf32, #tpu.memory_space<vmem>>, vector<32x384xf32>
    %41 = vector.extract_strided_slice %40 {offsets = [0, 1], sizes = [32, 383], strides = [1, 1]} : vector<32x384xf32> to vector<32x383xf32>
    %42 = vector.extract_strided_slice %40 {offsets = [0, 0], sizes = [32, 1], strides = [1, 1]} : vector<32x384xf32> to vector<32x1xf32>
    %43 = tpu.concatenate %41, %42 in 1 : vector<32x383xf32>, vector<32x1xf32> -> vector<32x384xf32>
    %44 = arith.addf %39, %43 : vector<32x384xf32>
    %c0_33 = arith.constant 0 : index
    %c192 = arith.constant 192 : index
    %c0_34 = arith.constant 0 : index
    %45 = vector.load %arg3[%c0_33, %c192, %c0_34] : memref<5x288x176xbf16, #tpu.memory_space<vmem>>, vector<1x96x16xbf16>
    %46 = vector.shape_cast %45 : vector<1x96x16xbf16> to vector<96x16xbf16>
    %c0_35 = arith.constant 0 : index
    %c0_36 = arith.constant 0 : index
    %47 = vector.load %arg8[%c0_35, %c0_36] : memref<176x384xbf16, #tpu.memory_space<vmem>>, vector<16x384xbf16>
    %cst_37 = arith.constant dense<0.000000e+00> : vector<96x384xf32>
    %48 = tpu.matmul %46, %47, %cst_37 {dimension_numbers = #tpu.dot_dimension_numbers<[1], [0], [0], [1], [0, 0, 1, 1], [], []>} : vector<96x16xbf16>, vector<16x384xbf16>, vector<96x384xf32> -> vector<96x384xf32>
    %c0_38 = arith.constant 0 : index
    %c0_39 = arith.constant 0 : index
    %49 = vector.load %arg9[%c0_38, %c0_39] : memref<96x384xf32, #tpu.memory_space<vmem>>, vector<96x384xf32>
    tpu.vector_store %arg9[%c0_38, %c0_39], %48 {strides = array<i32>} : memref<96x384xf32, #tpu.memory_space<vmem>>, vector<96x384xf32>,
    %c0_40 = arith.constant 0 : index
    %c0_41 = arith.constant 0 : index
    %50 = vector.load %arg9[%c0_40, %c0_41] : memref<96x384xf32, #tpu.memory_space<vmem>>, vector<32x384xf32>
    %51 = vector.extract_strided_slice %50 {offsets = [0, 17], sizes = [32, 367], strides = [1, 1]} : vector<32x384xf32> to vector<32x367xf32>
    %52 = vector.extract_strided_slice %50 {offsets = [0, 0], sizes = [32, 17], strides = [1, 1]} : vector<32x384xf32> to vector<32x17xf32>
    %53 = tpu.concatenate %51, %52 in 1 : vector<32x367xf32>, vector<32x17xf32> -> vector<32x384xf32>
    %54 = arith.addf %44, %53 : vector<32x384xf32>
    %c32_42 = arith.constant 32 : index
    %c0_43 = arith.constant 0 : index
    %55 = vector.load %arg9[%c32_42, %c0_43] : memref<96x384xf32, #tpu.memory_space<vmem>>, vector<32x384xf32>
    %56 = vector.extract_strided_slice %55 {offsets = [0, 18], sizes = [32, 366], strides = [1, 1]} : vector<32x384xf32> to vector<32x366xf32>
    %57 = vector.extract_strided_slice %55 {offsets = [0, 0], sizes = [32, 18], strides = [1, 1]} : vector<32x384xf32> to vector<32x18xf32>
    %58 = tpu.concatenate %56, %57 in 1 : vector<32x366xf32>, vector<32x18xf32> -> vector<32x384xf32>
    %59 = arith.addf %54, %58 : vector<32x384xf32>
    %c64_44 = arith.constant 64 : index
    %c0_45 = arith.constant 0 : index
    %60 = vector.load %arg9[%c64_44, %c0_45] : memref<96x384xf32, #tpu.memory_space<vmem>>, vector<32x384xf32>
    %61 = vector.extract_strided_slice %60 {offsets = [0, 19], sizes = [32, 365], strides = [1, 1]} : vector<32x384xf32> to vector<32x365xf32>
    %62 = vector.extract_strided_slice %60 {offsets = [0, 0], sizes = [32, 19], strides = [1, 1]} : vector<32x384xf32> to vector<32x19xf32>
    %63 = tpu.concatenate %61, %62 in 1 : vector<32x365xf32>, vector<32x19xf32> -> vector<32x384xf32>
    %64 = arith.addf %59, %63 : vector<32x384xf32>
    %c0_46 = arith.constant 0 : index
    %c0_47 = arith.constant 0 : index
    %c0_48 = arith.constant 0 : index
    %65 = vector.load %arg4[%c0_46, %c0_47, %c0_48] : memref<5x32x1xf32, #tpu.memory_space<vmem>>, vector<1x32x1xf32>
    %66 = vector.shape_cast %65 : vector<1x32x1xf32> to vector<32x1xf32>
    %67 = vector.broadcast %66 : vector<32x1xf32> to vector<32x384xf32>
    %68 = arith.addf %64, %67 : vector<32x384xf32>
    %cst_49 = arith.constant 0.000000e+00 : f32
    %69 = vector.broadcast %cst_49 : f32 to vector<32x384xf32>
    %70 = arith.maximumf %68, %69 : vector<32x384xf32>
    %71 = vector.broadcast %0 : vector<1x384xf32> to vector<32x384xf32>
    %72 = arith.mulf %70, %71 : vector<32x384xf32>
    %73 = arith.truncf %72 : vector<32x384xf32> to vector<32x384xbf16>
    %c16 = arith.constant 16 : index
    %c0_50 = arith.constant 0 : index
    %74 = vector.load %arg8[%c16, %c0_50] : memref<176x384xbf16, #tpu.memory_space<vmem>>, vector<32x384xbf16>
    tpu.vector_store %arg8[%c16, %c0_50], %73 {strides = array<i32>} : memref<176x384xbf16, #tpu.memory_space<vmem>>, vector<32x384xbf16>,
    %cst_51 = arith.constant 0.000000e+00 : f32
    %75 = vector.broadcast %cst_51 : f32 to vector<32x384xf32>
    %c1 = arith.constant 1 : index
    %c0_52 = arith.constant 0 : index
    %c0_53 = arith.constant 0 : index
    %76 = vector.load %arg3[%c1, %c0_52, %c0_53] : memref<5x288x176xbf16, #tpu.memory_space<vmem>>, vector<1x96x48xbf16>
    %77 = vector.shape_cast %76 : vector<1x96x48xbf16> to vector<96x48xbf16>
    %c0_54 = arith.constant 0 : index
    %c0_55 = arith.constant 0 : index
    %78 = vector.load %arg8[%c0_54, %c0_55] : memref<176x384xbf16, #tpu.memory_space<vmem>>, vector<48x384xbf16>
    %cst_56 = arith.constant dense<0.000000e+00> : vector<96x384xf32>
    %79 = tpu.matmul %77, %78, %cst_56 {dimension_numbers = #tpu.dot_dimension_numbers<[1], [0], [0], [1], [0, 0, 1, 1], [], []>} : vector<96x48xbf16>, vector<48x384xbf16>, vector<96x384xf32> -> vector<96x384xf32>
    %c0_57 = arith.constant 0 : index
    %c0_58 = arith.constant 0 : index
    %80 = vector.load %arg9[%c0_57, %c0_58] : memref<96x384xf32, #tpu.memory_space<vmem>>, vector<96x384xf32>
    tpu.vector_store %arg9[%c0_57, %c0_58], %79 {strides = array<i32>} : memref<96x384xf32, #tpu.memory_space<vmem>>, vector<96x384xf32>,
    %c0_59 = arith.constant 0 : index
    %c0_60 = arith.constant 0 : index
    %81 = vector.load %arg9[%c0_59, %c0_60] : memref<96x384xf32, #tpu.memory_space<vmem>>, vector<32x384xf32>
    %82 = vector.extract_strided_slice %81 {offsets = [0, 365], sizes = [32, 19], strides = [1, 1]} : vector<32x384xf32> to vector<32x19xf32>
    %83 = vector.extract_strided_slice %81 {offsets = [0, 0], sizes = [32, 365], strides = [1, 1]} : vector<32x384xf32> to vector<32x365xf32>
    %84 = tpu.concatenate %82, %83 in 1 : vector<32x19xf32>, vector<32x365xf32> -> vector<32x384xf32>
    %85 = arith.addf %75, %84 : vector<32x384xf32>
    %c32_61 = arith.constant 32 : index
    %c0_62 = arith.constant 0 : index
    %86 = vector.load %arg9[%c32_61, %c0_62] : memref<96x384xf32, #tpu.memory_space<vmem>>, vector<32x384xf32>
    %87 = vector.extract_strided_slice %86 {offsets = [0, 366], sizes = [32, 18], strides = [1, 1]} : vector<32x384xf32> to vector<32x18xf32>
    %88 = vector.extract_strided_slice %86 {offsets = [0, 0], sizes = [32, 366], strides = [1, 1]} : vector<32x384xf32> to vector<32x366xf32>
    %89 = tpu.concatenate %87, %88 in 1 : vector<32x18xf32>, vector<32x366xf32> -> vector<32x384xf32>
    %90 = arith.addf %85, %89 : vector<32x384xf32>
    %c64_63 = arith.constant 64 : index
    %c0_64 = arith.constant 0 : index
    %91 = vector.load %arg9[%c64_63, %c0_64] : memref<96x384xf32, #tpu.memory_space<vmem>>, vector<32x384xf32>
    %92 = vector.extract_strided_slice %91 {offsets = [0, 367], sizes = [32, 17], strides = [1, 1]} : vector<32x384xf32> to vector<32x17xf32>
    %93 = vector.extract_strided_slice %91 {offsets = [0, 0], sizes = [32, 367], strides = [1, 1]} : vector<32x384xf32> to vector<32x367xf32>
    %94 = tpu.concatenate %92, %93 in 1 : vector<32x17xf32>, vector<32x367xf32> -> vector<32x384xf32>
    %95 = arith.addf %90, %94 : vector<32x384xf32>
    %c1_65 = arith.constant 1 : index
    %c96_66 = arith.constant 96 : index
    %c0_67 = arith.constant 0 : index
    %96 = vector.load %arg3[%c1_65, %c96_66, %c0_67] : memref<5x288x176xbf16, #tpu.memory_space<vmem>>, vector<1x96x48xbf16>
    %97 = vector.shape_cast %96 : vector<1x96x48xbf16> to vector<96x48xbf16>
    %c0_68 = arith.constant 0 : index
    %c0_69 = arith.constant 0 : index
    %98 = vector.load %arg8[%c0_68, %c0_69] : memref<176x384xbf16, #tpu.memory_space<vmem>>, vector<48x384xbf16>
    %cst_70 = arith.constant dense<0.000000e+00> : vector<96x384xf32>
    %99 = tpu.matmul %97, %98, %cst_70 {dimension_numbers = #tpu.dot_dimension_numbers<[1], [0], [0], [1], [0, 0, 1, 1], [], []>} : vector<96x48xbf16>, vector<48x384xbf16>, vector<96x384xf32> -> vector<96x384xf32>
    %c0_71 = arith.constant 0 : index
    %c0_72 = arith.constant 0 : index
    %100 = vector.load %arg9[%c0_71, %c0_72] : memref<96x384xf32, #tpu.memory_space<vmem>>, vector<96x384xf32>
    tpu.vector_store %arg9[%c0_71, %c0_72], %99 {strides = array<i32>} : memref<96x384xf32, #tpu.memory_space<vmem>>, vector<96x384xf32>,
    %c0_73 = arith.constant 0 : index
    %c0_74 = arith.constant 0 : index
    %101 = vector.load %arg9[%c0_73, %c0_74] : memref<96x384xf32, #tpu.memory_space<vmem>>, vector<32x384xf32>
    %102 = vector.extract_strided_slice %101 {offsets = [0, 383], sizes = [32, 1], strides = [1, 1]} : vector<32x384xf32> to vector<32x1xf32>
    %103 = vector.extract_strided_slice %101 {offsets = [0, 0], sizes = [32, 383], strides = [1, 1]} : vector<32x384xf32> to vector<32x383xf32>
    %104 = tpu.concatenate %102, %103 in 1 : vector<32x1xf32>, vector<32x383xf32> -> vector<32x384xf32>
    %105 = arith.addf %95, %104 : vector<32x384xf32>
    %c32_75 = arith.constant 32 : index
    %c0_76 = arith.constant 0 : index
    %106 = vector.load %arg9[%c32_75, %c0_76] : memref<96x384xf32, #tpu.memory_space<vmem>>, vector<32x384xf32>
    %107 = arith.addf %105, %106 : vector<32x384xf32>
    %c64_77 = arith.constant 64 : index
    %c0_78 = arith.constant 0 : index
    %108 = vector.load %arg9[%c64_77, %c0_78] : memref<96x384xf32, #tpu.memory_space<vmem>>, vector<32x384xf32>
    %109 = vector.extract_strided_slice %108 {offsets = [0, 1], sizes = [32, 383], strides = [1, 1]} : vector<32x384xf32> to vector<32x383xf32>
    %110 = vector.extract_strided_slice %108 {offsets = [0, 0], sizes = [32, 1], strides = [1, 1]} : vector<32x384xf32> to vector<32x1xf32>
    %111 = tpu.concatenate %109, %110 in 1 : vector<32x383xf32>, vector<32x1xf32> -> vector<32x384xf32>
    %112 = arith.addf %107, %111 : vector<32x384xf32>
    %c1_79 = arith.constant 1 : index
    %c192_80 = arith.constant 192 : index
    %c0_81 = arith.constant 0 : index
    %113 = vector.load %arg3[%c1_79, %c192_80, %c0_81] : memref<5x288x176xbf16, #tpu.memory_space<vmem>>, vector<1x96x48xbf16>
    %114 = vector.shape_cast %113 : vector<1x96x48xbf16> to vector<96x48xbf16>
    %c0_82 = arith.constant 0 : index
    %c0_83 = arith.constant 0 : index
    %115 = vector.load %arg8[%c0_82, %c0_83] : memref<176x384xbf16, #tpu.memory_space<vmem>>, vector<48x384xbf16>
    %cst_84 = arith.constant dense<0.000000e+00> : vector<96x384xf32>
    %116 = tpu.matmul %114, %115, %cst_84 {dimension_numbers = #tpu.dot_dimension_numbers<[1], [0], [0], [1], [0, 0, 1, 1], [], []>} : vector<96x48xbf16>, vector<48x384xbf16>, vector<96x384xf32> -> vector<96x384xf32>
    %c0_85 = arith.constant 0 : index
    %c0_86 = arith.constant 0 : index
    %117 = vector.load %arg9[%c0_85, %c0_86] : memref<96x384xf32, #tpu.memory_space<vmem>>, vector<96x384xf32>
    tpu.vector_store %arg9[%c0_85, %c0_86], %116 {strides = array<i32>} : memref<96x384xf32, #tpu.memory_space<vmem>>, vector<96x384xf32>,
    %c0_87 = arith.constant 0 : index
    %c0_88 = arith.constant 0 : index
    %118 = vector.load %arg9[%c0_87, %c0_88] : memref<96x384xf32, #tpu.memory_space<vmem>>, vector<32x384xf32>
    %119 = vector.extract_strided_slice %118 {offsets = [0, 17], sizes = [32, 367], strides = [1, 1]} : vector<32x384xf32> to vector<32x367xf32>
    %120 = vector.extract_strided_slice %118 {offsets = [0, 0], sizes = [32, 17], strides = [1, 1]} : vector<32x384xf32> to vector<32x17xf32>
    %121 = tpu.concatenate %119, %120 in 1 : vector<32x367xf32>, vector<32x17xf32> -> vector<32x384xf32>
    %122 = arith.addf %112, %121 : vector<32x384xf32>
    %c32_89 = arith.constant 32 : index
    %c0_90 = arith.constant 0 : index
    %123 = vector.load %arg9[%c32_89, %c0_90] : memref<96x384xf32, #tpu.memory_space<vmem>>, vector<32x384xf32>
    %124 = vector.extract_strided_slice %123 {offsets = [0, 18], sizes = [32, 366], strides = [1, 1]} : vector<32x384xf32> to vector<32x366xf32>
    %125 = vector.extract_strided_slice %123 {offsets = [0, 0], sizes = [32, 18], strides = [1, 1]} : vector<32x384xf32> to vector<32x18xf32>
    %126 = tpu.concatenate %124, %125 in 1 : vector<32x366xf32>, vector<32x18xf32> -> vector<32x384xf32>
    %127 = arith.addf %122, %126 : vector<32x384xf32>
    %c64_91 = arith.constant 64 : index
    %c0_92 = arith.constant 0 : index
    %128 = vector.load %arg9[%c64_91, %c0_92] : memref<96x384xf32, #tpu.memory_space<vmem>>, vector<32x384xf32>
    %129 = vector.extract_strided_slice %128 {offsets = [0, 19], sizes = [32, 365], strides = [1, 1]} : vector<32x384xf32> to vector<32x365xf32>
    %130 = vector.extract_strided_slice %128 {offsets = [0, 0], sizes = [32, 19], strides = [1, 1]} : vector<32x384xf32> to vector<32x19xf32>
    %131 = tpu.concatenate %129, %130 in 1 : vector<32x365xf32>, vector<32x19xf32> -> vector<32x384xf32>
    %132 = arith.addf %127, %131 : vector<32x384xf32>
    %c1_93 = arith.constant 1 : index
    %c0_94 = arith.constant 0 : index
    %c0_95 = arith.constant 0 : index
    %133 = vector.load %arg4[%c1_93, %c0_94, %c0_95] : memref<5x32x1xf32, #tpu.memory_space<vmem>>, vector<1x32x1xf32>
    %134 = vector.shape_cast %133 : vector<1x32x1xf32> to vector<32x1xf32>
    %135 = vector.broadcast %134 : vector<32x1xf32> to vector<32x384xf32>
    %136 = arith.addf %132, %135 : vector<32x384xf32>
    %cst_96 = arith.constant 0.000000e+00 : f32
    %137 = vector.broadcast %cst_96 : f32 to vector<32x384xf32>
    %138 = arith.maximumf %136, %137 : vector<32x384xf32>
    %139 = vector.broadcast %0 : vector<1x384xf32> to vector<32x384xf32>
    %140 = arith.mulf %138, %139 : vector<32x384xf32>
    %141 = arith.truncf %140 : vector<32x384xf32> to vector<32x384xbf16>
    %c48 = arith.constant 48 : index
    %c0_97 = arith.constant 0 : index
    %142 = vector.load %arg8[%c48, %c0_97] : memref<176x384xbf16, #tpu.memory_space<vmem>>, vector<32x384xbf16>
    tpu.vector_store %arg8[%c48, %c0_97], %141 {strides = array<i32>} : memref<176x384xbf16, #tpu.memory_space<vmem>>, vector<32x384xbf16>,
    %cst_98 = arith.constant 0.000000e+00 : f32
    %143 = vector.broadcast %cst_98 : f32 to vector<32x384xf32>
    %c2 = arith.constant 2 : index
    %c0_99 = arith.constant 0 : index
    %c0_100 = arith.constant 0 : index
    %144 = vector.load %arg3[%c2, %c0_99, %c0_100] : memref<5x288x176xbf16, #tpu.memory_space<vmem>>, vector<1x96x80xbf16>
    %145 = vector.shape_cast %144 : vector<1x96x80xbf16> to vector<96x80xbf16>
    %c0_101 = arith.constant 0 : index
    %c0_102 = arith.constant 0 : index
    %146 = vector.load %arg8[%c0_101, %c0_102] : memref<176x384xbf16, #tpu.memory_space<vmem>>, vector<80x384xbf16>
    %cst_103 = arith.constant dense<0.000000e+00> : vector<96x384xf32>
    %147 = tpu.matmul %145, %146, %cst_103 {dimension_numbers = #tpu.dot_dimension_numbers<[1], [0], [0], [1], [0, 0, 1, 1], [], []>} : vector<96x80xbf16>, vector<80x384xbf16>, vector<96x384xf32> -> vector<96x384xf32>
    %c0_104 = arith.constant 0 : index
    %c0_105 = arith.constant 0 : index
    %148 = vector.load %arg9[%c0_104, %c0_105] : memref<96x384xf32, #tpu.memory_space<vmem>>, vector<96x384xf32>
    tpu.vector_store %arg9[%c0_104, %c0_105], %147 {strides = array<i32>} : memref<96x384xf32, #tpu.memory_space<vmem>>, vector<96x384xf32>,
    %c0_106 = arith.constant 0 : index
    %c0_107 = arith.constant 0 : index
    %149 = vector.load %arg9[%c0_106, %c0_107] : memref<96x384xf32, #tpu.memory_space<vmem>>, vector<32x384xf32>
    %150 = vector.extract_strided_slice %149 {offsets = [0, 365], sizes = [32, 19], strides = [1, 1]} : vector<32x384xf32> to vector<32x19xf32>
    %151 = vector.extract_strided_slice %149 {offsets = [0, 0], sizes = [32, 365], strides = [1, 1]} : vector<32x384xf32> to vector<32x365xf32>
    %152 = tpu.concatenate %150, %151 in 1 : vector<32x19xf32>, vector<32x365xf32> -> vector<32x384xf32>
    %153 = arith.addf %143, %152 : vector<32x384xf32>
    %c32_108 = arith.constant 32 : index
    %c0_109 = arith.constant 0 : index
    %154 = vector.load %arg9[%c32_108, %c0_109] : memref<96x384xf32, #tpu.memory_space<vmem>>, vector<32x384xf32>
    %155 = vector.extract_strided_slice %154 {offsets = [0, 366], sizes = [32, 18], strides = [1, 1]} : vector<32x384xf32> to vector<32x18xf32>
    %156 = vector.extract_strided_slice %154 {offsets = [0, 0], sizes = [32, 366], strides = [1, 1]} : vector<32x384xf32> to vector<32x366xf32>
    %157 = tpu.concatenate %155, %156 in 1 : vector<32x18xf32>, vector<32x366xf32> -> vector<32x384xf32>
    %158 = arith.addf %153, %157 : vector<32x384xf32>
    %c64_110 = arith.constant 64 : index
    %c0_111 = arith.constant 0 : index
    %159 = vector.load %arg9[%c64_110, %c0_111] : memref<96x384xf32, #tpu.memory_space<vmem>>, vector<32x384xf32>
    %160 = vector.extract_strided_slice %159 {offsets = [0, 367], sizes = [32, 17], strides = [1, 1]} : vector<32x384xf32> to vector<32x17xf32>
    %161 = vector.extract_strided_slice %159 {offsets = [0, 0], sizes = [32, 367], strides = [1, 1]} : vector<32x384xf32> to vector<32x367xf32>
    %162 = tpu.concatenate %160, %161 in 1 : vector<32x17xf32>, vector<32x367xf32> -> vector<32x384xf32>
    %163 = arith.addf %158, %162 : vector<32x384xf32>
    %c2_112 = arith.constant 2 : index
    %c96_113 = arith.constant 96 : index
    %c0_114 = arith.constant 0 : index
    %164 = vector.load %arg3[%c2_112, %c96_113, %c0_114] : memref<5x288x176xbf16, #tpu.memory_space<vmem>>, vector<1x96x80xbf16>
    %165 = vector.shape_cast %164 : vector<1x96x80xbf16> to vector<96x80xbf16>
    %c0_115 = arith.constant 0 : index
    %c0_116 = arith.constant 0 : index
    %166 = vector.load %arg8[%c0_115, %c0_116] : memref<176x384xbf16, #tpu.memory_space<vmem>>, vector<80x384xbf16>
    %cst_117 = arith.constant dense<0.000000e+00> : vector<96x384xf32>
    %167 = tpu.matmul %165, %166, %cst_117 {dimension_numbers = #tpu.dot_dimension_numbers<[1], [0], [0], [1], [0, 0, 1, 1], [], []>} : vector<96x80xbf16>, vector<80x384xbf16>, vector<96x384xf32> -> vector<96x384xf32>
    %c0_118 = arith.constant 0 : index
    %c0_119 = arith.constant 0 : index
    %168 = vector.load %arg9[%c0_118, %c0_119] : memref<96x384xf32, #tpu.memory_space<vmem>>, vector<96x384xf32>
    tpu.vector_store %arg9[%c0_118, %c0_119], %167 {strides = array<i32>} : memref<96x384xf32, #tpu.memory_space<vmem>>, vector<96x384xf32>,
    %c0_120 = arith.constant 0 : index
    %c0_121 = arith.constant 0 : index
    %169 = vector.load %arg9[%c0_120, %c0_121] : memref<96x384xf32, #tpu.memory_space<vmem>>, vector<32x384xf32>
    %170 = vector.extract_strided_slice %169 {offsets = [0, 383], sizes = [32, 1], strides = [1, 1]} : vector<32x384xf32> to vector<32x1xf32>
    %171 = vector.extract_strided_slice %169 {offsets = [0, 0], sizes = [32, 383], strides = [1, 1]} : vector<32x384xf32> to vector<32x383xf32>
    %172 = tpu.concatenate %170, %171 in 1 : vector<32x1xf32>, vector<32x383xf32> -> vector<32x384xf32>
    %173 = arith.addf %163, %172 : vector<32x384xf32>
    %c32_122 = arith.constant 32 : index
    %c0_123 = arith.constant 0 : index
    %174 = vector.load %arg9[%c32_122, %c0_123] : memref<96x384xf32, #tpu.memory_space<vmem>>, vector<32x384xf32>
    %175 = arith.addf %173, %174 : vector<32x384xf32>
    %c64_124 = arith.constant 64 : index
    %c0_125 = arith.constant 0 : index
    %176 = vector.load %arg9[%c64_124, %c0_125] : memref<96x384xf32, #tpu.memory_space<vmem>>, vector<32x384xf32>
    %177 = vector.extract_strided_slice %176 {offsets = [0, 1], sizes = [32, 383], strides = [1, 1]} : vector<32x384xf32> to vector<32x383xf32>
    %178 = vector.extract_strided_slice %176 {offsets = [0, 0], sizes = [32, 1], strides = [1, 1]} : vector<32x384xf32> to vector<32x1xf32>
    %179 = tpu.concatenate %177, %178 in 1 : vector<32x383xf32>, vector<32x1xf32> -> vector<32x384xf32>
    %180 = arith.addf %175, %179 : vector<32x384xf32>
    %c2_126 = arith.constant 2 : index
    %c192_127 = arith.constant 192 : index
    %c0_128 = arith.constant 0 : index
    %181 = vector.load %arg3[%c2_126, %c192_127, %c0_128] : memref<5x288x176xbf16, #tpu.memory_space<vmem>>, vector<1x96x80xbf16>
    %182 = vector.shape_cast %181 : vector<1x96x80xbf16> to vector<96x80xbf16>
    %c0_129 = arith.constant 0 : index
    %c0_130 = arith.constant 0 : index
    %183 = vector.load %arg8[%c0_129, %c0_130] : memref<176x384xbf16, #tpu.memory_space<vmem>>, vector<80x384xbf16>
    %cst_131 = arith.constant dense<0.000000e+00> : vector<96x384xf32>
    %184 = tpu.matmul %182, %183, %cst_131 {dimension_numbers = #tpu.dot_dimension_numbers<[1], [0], [0], [1], [0, 0, 1, 1], [], []>} : vector<96x80xbf16>, vector<80x384xbf16>, vector<96x384xf32> -> vector<96x384xf32>
    %c0_132 = arith.constant 0 : index
    %c0_133 = arith.constant 0 : index
    %185 = vector.load %arg9[%c0_132, %c0_133] : memref<96x384xf32, #tpu.memory_space<vmem>>, vector<96x384xf32>
    tpu.vector_store %arg9[%c0_132, %c0_133], %184 {strides = array<i32>} : memref<96x384xf32, #tpu.memory_space<vmem>>, vector<96x384xf32>,
    %c0_134 = arith.constant 0 : index
    %c0_135 = arith.constant 0 : index
    %186 = vector.load %arg9[%c0_134, %c0_135] : memref<96x384xf32, #tpu.memory_space<vmem>>, vector<32x384xf32>
    %187 = vector.extract_strided_slice %186 {offsets = [0, 17], sizes = [32, 367], strides = [1, 1]} : vector<32x384xf32> to vector<32x367xf32>
    %188 = vector.extract_strided_slice %186 {offsets = [0, 0], sizes = [32, 17], strides = [1, 1]} : vector<32x384xf32> to vector<32x17xf32>
    %189 = tpu.concatenate %187, %188 in 1 : vector<32x367xf32>, vector<32x17xf32> -> vector<32x384xf32>
    %190 = arith.addf %180, %189 : vector<32x384xf32>
    %c32_136 = arith.constant 32 : index
    %c0_137 = arith.constant 0 : index
    %191 = vector.load %arg9[%c32_136, %c0_137] : memref<96x384xf32, #tpu.memory_space<vmem>>, vector<32x384xf32>
    %192 = vector.extract_strided_slice %191 {offsets = [0, 18], sizes = [32, 366], strides = [1, 1]} : vector<32x384xf32> to vector<32x366xf32>
    %193 = vector.extract_strided_slice %191 {offsets = [0, 0], sizes = [32, 18], strides = [1, 1]} : vector<32x384xf32> to vector<32x18xf32>
    %194 = tpu.concatenate %192, %193 in 1 : vector<32x366xf32>, vector<32x18xf32> -> vector<32x384xf32>
    %195 = arith.addf %190, %194 : vector<32x384xf32>
    %c64_138 = arith.constant 64 : index
    %c0_139 = arith.constant 0 : index
    %196 = vector.load %arg9[%c64_138, %c0_139] : memref<96x384xf32, #tpu.memory_space<vmem>>, vector<32x384xf32>
    %197 = vector.extract_strided_slice %196 {offsets = [0, 19], sizes = [32, 365], strides = [1, 1]} : vector<32x384xf32> to vector<32x365xf32>
    %198 = vector.extract_strided_slice %196 {offsets = [0, 0], sizes = [32, 19], strides = [1, 1]} : vector<32x384xf32> to vector<32x19xf32>
    %199 = tpu.concatenate %197, %198 in 1 : vector<32x365xf32>, vector<32x19xf32> -> vector<32x384xf32>
    %200 = arith.addf %195, %199 : vector<32x384xf32>
    %c2_140 = arith.constant 2 : index
    %c0_141 = arith.constant 0 : index
    %c0_142 = arith.constant 0 : index
    %201 = vector.load %arg4[%c2_140, %c0_141, %c0_142] : memref<5x32x1xf32, #tpu.memory_space<vmem>>, vector<1x32x1xf32>
    %202 = vector.shape_cast %201 : vector<1x32x1xf32> to vector<32x1xf32>
    %203 = vector.broadcast %202 : vector<32x1xf32> to vector<32x384xf32>
    %204 = arith.addf %200, %203 : vector<32x384xf32>
    %cst_143 = arith.constant 0.000000e+00 : f32
    %205 = vector.broadcast %cst_143 : f32 to vector<32x384xf32>
    %206 = arith.maximumf %204, %205 : vector<32x384xf32>
    %207 = vector.broadcast %0 : vector<1x384xf32> to vector<32x384xf32>
    %208 = arith.mulf %206, %207 : vector<32x384xf32>
    %209 = arith.truncf %208 : vector<32x384xf32> to vector<32x384xbf16>
    %c80 = arith.constant 80 : index
    %c0_144 = arith.constant 0 : index
    %210 = vector.load %arg8[%c80, %c0_144] : memref<176x384xbf16, #tpu.memory_space<vmem>>, vector<32x384xbf16>
    tpu.vector_store %arg8[%c80, %c0_144], %209 {strides = array<i32>} : memref<176x384xbf16, #tpu.memory_space<vmem>>, vector<32x384xbf16>,
    %cst_145 = arith.constant 0.000000e+00 : f32
    %211 = vector.broadcast %cst_145 : f32 to vector<32x384xf32>
    %c3 = arith.constant 3 : index
    %c0_146 = arith.constant 0 : index
    %c0_147 = arith.constant 0 : index
    %212 = vector.load %arg3[%c3, %c0_146, %c0_147] : memref<5x288x176xbf16, #tpu.memory_space<vmem>>, vector<1x96x112xbf16>
    %213 = vector.shape_cast %212 : vector<1x96x112xbf16> to vector<96x112xbf16>
    %c0_148 = arith.constant 0 : index
    %c0_149 = arith.constant 0 : index
    %214 = vector.load %arg8[%c0_148, %c0_149] : memref<176x384xbf16, #tpu.memory_space<vmem>>, vector<112x384xbf16>
    %cst_150 = arith.constant dense<0.000000e+00> : vector<96x384xf32>
    %215 = tpu.matmul %213, %214, %cst_150 {dimension_numbers = #tpu.dot_dimension_numbers<[1], [0], [0], [1], [0, 0, 1, 1], [], []>} : vector<96x112xbf16>, vector<112x384xbf16>, vector<96x384xf32> -> vector<96x384xf32>
    %c0_151 = arith.constant 0 : index
    %c0_152 = arith.constant 0 : index
    %216 = vector.load %arg9[%c0_151, %c0_152] : memref<96x384xf32, #tpu.memory_space<vmem>>, vector<96x384xf32>
    tpu.vector_store %arg9[%c0_151, %c0_152], %215 {strides = array<i32>} : memref<96x384xf32, #tpu.memory_space<vmem>>, vector<96x384xf32>,
    %c0_153 = arith.constant 0 : index
    %c0_154 = arith.constant 0 : index
    %217 = vector.load %arg9[%c0_153, %c0_154] : memref<96x384xf32, #tpu.memory_space<vmem>>, vector<32x384xf32>
    %218 = vector.extract_strided_slice %217 {offsets = [0, 365], sizes = [32, 19], strides = [1, 1]} : vector<32x384xf32> to vector<32x19xf32>
    %219 = vector.extract_strided_slice %217 {offsets = [0, 0], sizes = [32, 365], strides = [1, 1]} : vector<32x384xf32> to vector<32x365xf32>
    %220 = tpu.concatenate %218, %219 in 1 : vector<32x19xf32>, vector<32x365xf32> -> vector<32x384xf32>
    %221 = arith.addf %211, %220 : vector<32x384xf32>
    %c32_155 = arith.constant 32 : index
    %c0_156 = arith.constant 0 : index
    %222 = vector.load %arg9[%c32_155, %c0_156] : memref<96x384xf32, #tpu.memory_space<vmem>>, vector<32x384xf32>
    %223 = vector.extract_strided_slice %222 {offsets = [0, 366], sizes = [32, 18], strides = [1, 1]} : vector<32x384xf32> to vector<32x18xf32>
    %224 = vector.extract_strided_slice %222 {offsets = [0, 0], sizes = [32, 366], strides = [1, 1]} : vector<32x384xf32> to vector<32x366xf32>
    %225 = tpu.concatenate %223, %224 in 1 : vector<32x18xf32>, vector<32x366xf32> -> vector<32x384xf32>
    %226 = arith.addf %221, %225 : vector<32x384xf32>
    %c64_157 = arith.constant 64 : index
    %c0_158 = arith.constant 0 : index
    %227 = vector.load %arg9[%c64_157, %c0_158] : memref<96x384xf32, #tpu.memory_space<vmem>>, vector<32x384xf32>
    %228 = vector.extract_strided_slice %227 {offsets = [0, 367], sizes = [32, 17], strides = [1, 1]} : vector<32x384xf32> to vector<32x17xf32>
    %229 = vector.extract_strided_slice %227 {offsets = [0, 0], sizes = [32, 367], strides = [1, 1]} : vector<32x384xf32> to vector<32x367xf32>
    %230 = tpu.concatenate %228, %229 in 1 : vector<32x17xf32>, vector<32x367xf32> -> vector<32x384xf32>
    %231 = arith.addf %226, %230 : vector<32x384xf32>
    %c3_159 = arith.constant 3 : index
    %c96_160 = arith.constant 96 : index
    %c0_161 = arith.constant 0 : index
    %232 = vector.load %arg3[%c3_159, %c96_160, %c0_161] : memref<5x288x176xbf16, #tpu.memory_space<vmem>>, vector<1x96x112xbf16>
    %233 = vector.shape_cast %232 : vector<1x96x112xbf16> to vector<96x112xbf16>
    %c0_162 = arith.constant 0 : index
    %c0_163 = arith.constant 0 : index
    %234 = vector.load %arg8[%c0_162, %c0_163] : memref<176x384xbf16, #tpu.memory_space<vmem>>, vector<112x384xbf16>
    %cst_164 = arith.constant dense<0.000000e+00> : vector<96x384xf32>
    %235 = tpu.matmul %233, %234, %cst_164 {dimension_numbers = #tpu.dot_dimension_numbers<[1], [0], [0], [1], [0, 0, 1, 1], [], []>} : vector<96x112xbf16>, vector<112x384xbf16>, vector<96x384xf32> -> vector<96x384xf32>
    %c0_165 = arith.constant 0 : index
    %c0_166 = arith.constant 0 : index
    %236 = vector.load %arg9[%c0_165, %c0_166] : memref<96x384xf32, #tpu.memory_space<vmem>>, vector<96x384xf32>
    tpu.vector_store %arg9[%c0_165, %c0_166], %235 {strides = array<i32>} : memref<96x384xf32, #tpu.memory_space<vmem>>, vector<96x384xf32>,
    %c0_167 = arith.constant 0 : index
    %c0_168 = arith.constant 0 : index
    %237 = vector.load %arg9[%c0_167, %c0_168] : memref<96x384xf32, #tpu.memory_space<vmem>>, vector<32x384xf32>
    %238 = vector.extract_strided_slice %237 {offsets = [0, 383], sizes = [32, 1], strides = [1, 1]} : vector<32x384xf32> to vector<32x1xf32>
    %239 = vector.extract_strided_slice %237 {offsets = [0, 0], sizes = [32, 383], strides = [1, 1]} : vector<32x384xf32> to vector<32x383xf32>
    %240 = tpu.concatenate %238, %239 in 1 : vector<32x1xf32>, vector<32x383xf32> -> vector<32x384xf32>
    %241 = arith.addf %231, %240 : vector<32x384xf32>
    %c32_169 = arith.constant 32 : index
    %c0_170 = arith.constant 0 : index
    %242 = vector.load %arg9[%c32_169, %c0_170] : memref<96x384xf32, #tpu.memory_space<vmem>>, vector<32x384xf32>
    %243 = arith.addf %241, %242 : vector<32x384xf32>
    %c64_171 = arith.constant 64 : index
    %c0_172 = arith.constant 0 : index
    %244 = vector.load %arg9[%c64_171, %c0_172] : memref<96x384xf32, #tpu.memory_space<vmem>>, vector<32x384xf32>
    %245 = vector.extract_strided_slice %244 {offsets = [0, 1], sizes = [32, 383], strides = [1, 1]} : vector<32x384xf32> to vector<32x383xf32>
    %246 = vector.extract_strided_slice %244 {offsets = [0, 0], sizes = [32, 1], strides = [1, 1]} : vector<32x384xf32> to vector<32x1xf32>
    %247 = tpu.concatenate %245, %246 in 1 : vector<32x383xf32>, vector<32x1xf32> -> vector<32x384xf32>
    %248 = arith.addf %243, %247 : vector<32x384xf32>
    %c3_173 = arith.constant 3 : index
    %c192_174 = arith.constant 192 : index
    %c0_175 = arith.constant 0 : index
    %249 = vector.load %arg3[%c3_173, %c192_174, %c0_175] : memref<5x288x176xbf16, #tpu.memory_space<vmem>>, vector<1x96x112xbf16>
    %250 = vector.shape_cast %249 : vector<1x96x112xbf16> to vector<96x112xbf16>
    %c0_176 = arith.constant 0 : index
    %c0_177 = arith.constant 0 : index
    %251 = vector.load %arg8[%c0_176, %c0_177] : memref<176x384xbf16, #tpu.memory_space<vmem>>, vector<112x384xbf16>
    %cst_178 = arith.constant dense<0.000000e+00> : vector<96x384xf32>
    %252 = tpu.matmul %250, %251, %cst_178 {dimension_numbers = #tpu.dot_dimension_numbers<[1], [0], [0], [1], [0, 0, 1, 1], [], []>} : vector<96x112xbf16>, vector<112x384xbf16>, vector<96x384xf32> -> vector<96x384xf32>
    %c0_179 = arith.constant 0 : index
    %c0_180 = arith.constant 0 : index
    %253 = vector.load %arg9[%c0_179, %c0_180] : memref<96x384xf32, #tpu.memory_space<vmem>>, vector<96x384xf32>
    tpu.vector_store %arg9[%c0_179, %c0_180], %252 {strides = array<i32>} : memref<96x384xf32, #tpu.memory_space<vmem>>, vector<96x384xf32>,
    %c0_181 = arith.constant 0 : index
    %c0_182 = arith.constant 0 : index
    %254 = vector.load %arg9[%c0_181, %c0_182] : memref<96x384xf32, #tpu.memory_space<vmem>>, vector<32x384xf32>
    %255 = vector.extract_strided_slice %254 {offsets = [0, 17], sizes = [32, 367], strides = [1, 1]} : vector<32x384xf32> to vector<32x367xf32>
    %256 = vector.extract_strided_slice %254 {offsets = [0, 0], sizes = [32, 17], strides = [1, 1]} : vector<32x384xf32> to vector<32x17xf32>
    %257 = tpu.concatenate %255, %256 in 1 : vector<32x367xf32>, vector<32x17xf32> -> vector<32x384xf32>
    %258 = arith.addf %248, %257 : vector<32x384xf32>
    %c32_183 = arith.constant 32 : index
    %c0_184 = arith.constant 0 : index
    %259 = vector.load %arg9[%c32_183, %c0_184] : memref<96x384xf32, #tpu.memory_space<vmem>>, vector<32x384xf32>
    %260 = vector.extract_strided_slice %259 {offsets = [0, 18], sizes = [32, 366], strides = [1, 1]} : vector<32x384xf32> to vector<32x366xf32>
    %261 = vector.extract_strided_slice %259 {offsets = [0, 0], sizes = [32, 18], strides = [1, 1]} : vector<32x384xf32> to vector<32x18xf32>
    %262 = tpu.concatenate %260, %261 in 1 : vector<32x366xf32>, vector<32x18xf32> -> vector<32x384xf32>
    %263 = arith.addf %258, %262 : vector<32x384xf32>
    %c64_185 = arith.constant 64 : index
    %c0_186 = arith.constant 0 : index
    %264 = vector.load %arg9[%c64_185, %c0_186] : memref<96x384xf32, #tpu.memory_space<vmem>>, vector<32x384xf32>
    %265 = vector.extract_strided_slice %264 {offsets = [0, 19], sizes = [32, 365], strides = [1, 1]} : vector<32x384xf32> to vector<32x365xf32>
    %266 = vector.extract_strided_slice %264 {offsets = [0, 0], sizes = [32, 19], strides = [1, 1]} : vector<32x384xf32> to vector<32x19xf32>
    %267 = tpu.concatenate %265, %266 in 1 : vector<32x365xf32>, vector<32x19xf32> -> vector<32x384xf32>
    %268 = arith.addf %263, %267 : vector<32x384xf32>
    %c3_187 = arith.constant 3 : index
    %c0_188 = arith.constant 0 : index
    %c0_189 = arith.constant 0 : index
    %269 = vector.load %arg4[%c3_187, %c0_188, %c0_189] : memref<5x32x1xf32, #tpu.memory_space<vmem>>, vector<1x32x1xf32>
    %270 = vector.shape_cast %269 : vector<1x32x1xf32> to vector<32x1xf32>
    %271 = vector.broadcast %270 : vector<32x1xf32> to vector<32x384xf32>
    %272 = arith.addf %268, %271 : vector<32x384xf32>
    %cst_190 = arith.constant 0.000000e+00 : f32
    %273 = vector.broadcast %cst_190 : f32 to vector<32x384xf32>
    %274 = arith.maximumf %272, %273 : vector<32x384xf32>
    %275 = vector.broadcast %0 : vector<1x384xf32> to vector<32x384xf32>
    %276 = arith.mulf %274, %275 : vector<32x384xf32>
    %277 = arith.truncf %276 : vector<32x384xf32> to vector<32x384xbf16>
    %c112 = arith.constant 112 : index
    %c0_191 = arith.constant 0 : index
    %278 = vector.load %arg8[%c112, %c0_191] : memref<176x384xbf16, #tpu.memory_space<vmem>>, vector<32x384xbf16>
    tpu.vector_store %arg8[%c112, %c0_191], %277 {strides = array<i32>} : memref<176x384xbf16, #tpu.memory_space<vmem>>, vector<32x384xbf16>,
    %cst_192 = arith.constant 0.000000e+00 : f32
    %279 = vector.broadcast %cst_192 : f32 to vector<32x384xf32>
    %c4_193 = arith.constant 4 : index
    %c0_194 = arith.constant 0 : index
    %c0_195 = arith.constant 0 : index
    %280 = vector.load %arg3[%c4_193, %c0_194, %c0_195] : memref<5x288x176xbf16, #tpu.memory_space<vmem>>, vector<1x96x144xbf16>
    %281 = vector.shape_cast %280 : vector<1x96x144xbf16> to vector<96x144xbf16>
    %c0_196 = arith.constant 0 : index
    %c0_197 = arith.constant 0 : index
    %282 = vector.load %arg8[%c0_196, %c0_197] : memref<176x384xbf16, #tpu.memory_space<vmem>>, vector<144x384xbf16>
    %cst_198 = arith.constant dense<0.000000e+00> : vector<96x384xf32>
    %283 = tpu.matmul %281, %282, %cst_198 {dimension_numbers = #tpu.dot_dimension_numbers<[1], [0], [0], [1], [0, 0, 1, 1], [], []>} : vector<96x144xbf16>, vector<144x384xbf16>, vector<96x384xf32> -> vector<96x384xf32>
    %c0_199 = arith.constant 0 : index
    %c0_200 = arith.constant 0 : index
    %284 = vector.load %arg9[%c0_199, %c0_200] : memref<96x384xf32, #tpu.memory_space<vmem>>, vector<96x384xf32>
    tpu.vector_store %arg9[%c0_199, %c0_200], %283 {strides = array<i32>} : memref<96x384xf32, #tpu.memory_space<vmem>>, vector<96x384xf32>,
    %c0_201 = arith.constant 0 : index
    %c0_202 = arith.constant 0 : index
    %285 = vector.load %arg9[%c0_201, %c0_202] : memref<96x384xf32, #tpu.memory_space<vmem>>, vector<32x384xf32>
    %286 = vector.extract_strided_slice %285 {offsets = [0, 365], sizes = [32, 19], strides = [1, 1]} : vector<32x384xf32> to vector<32x19xf32>
    %287 = vector.extract_strided_slice %285 {offsets = [0, 0], sizes = [32, 365], strides = [1, 1]} : vector<32x384xf32> to vector<32x365xf32>
    %288 = tpu.concatenate %286, %287 in 1 : vector<32x19xf32>, vector<32x365xf32> -> vector<32x384xf32>
    %289 = arith.addf %279, %288 : vector<32x384xf32>
    %c32_203 = arith.constant 32 : index
    %c0_204 = arith.constant 0 : index
    %290 = vector.load %arg9[%c32_203, %c0_204] : memref<96x384xf32, #tpu.memory_space<vmem>>, vector<32x384xf32>
    %291 = vector.extract_strided_slice %290 {offsets = [0, 366], sizes = [32, 18], strides = [1, 1]} : vector<32x384xf32> to vector<32x18xf32>
    %292 = vector.extract_strided_slice %290 {offsets = [0, 0], sizes = [32, 366], strides = [1, 1]} : vector<32x384xf32> to vector<32x366xf32>
    %293 = tpu.concatenate %291, %292 in 1 : vector<32x18xf32>, vector<32x366xf32> -> vector<32x384xf32>
    %294 = arith.addf %289, %293 : vector<32x384xf32>
    %c64_205 = arith.constant 64 : index
    %c0_206 = arith.constant 0 : index
    %295 = vector.load %arg9[%c64_205, %c0_206] : memref<96x384xf32, #tpu.memory_space<vmem>>, vector<32x384xf32>
    %296 = vector.extract_strided_slice %295 {offsets = [0, 367], sizes = [32, 17], strides = [1, 1]} : vector<32x384xf32> to vector<32x17xf32>
    %297 = vector.extract_strided_slice %295 {offsets = [0, 0], sizes = [32, 367], strides = [1, 1]} : vector<32x384xf32> to vector<32x367xf32>
    %298 = tpu.concatenate %296, %297 in 1 : vector<32x17xf32>, vector<32x367xf32> -> vector<32x384xf32>
    %299 = arith.addf %294, %298 : vector<32x384xf32>
    %c4_207 = arith.constant 4 : index
    %c96_208 = arith.constant 96 : index
    %c0_209 = arith.constant 0 : index
    %300 = vector.load %arg3[%c4_207, %c96_208, %c0_209] : memref<5x288x176xbf16, #tpu.memory_space<vmem>>, vector<1x96x144xbf16>
    %301 = vector.shape_cast %300 : vector<1x96x144xbf16> to vector<96x144xbf16>
    %c0_210 = arith.constant 0 : index
    %c0_211 = arith.constant 0 : index
    %302 = vector.load %arg8[%c0_210, %c0_211] : memref<176x384xbf16, #tpu.memory_space<vmem>>, vector<144x384xbf16>
    %cst_212 = arith.constant dense<0.000000e+00> : vector<96x384xf32>
    %303 = tpu.matmul %301, %302, %cst_212 {dimension_numbers = #tpu.dot_dimension_numbers<[1], [0], [0], [1], [0, 0, 1, 1], [], []>} : vector<96x144xbf16>, vector<144x384xbf16>, vector<96x384xf32> -> vector<96x384xf32>
    %c0_213 = arith.constant 0 : index
    %c0_214 = arith.constant 0 : index
    %304 = vector.load %arg9[%c0_213, %c0_214] : memref<96x384xf32, #tpu.memory_space<vmem>>, vector<96x384xf32>
    tpu.vector_store %arg9[%c0_213, %c0_214], %303 {strides = array<i32>} : memref<96x384xf32, #tpu.memory_space<vmem>>, vector<96x384xf32>,
    %c0_215 = arith.constant 0 : index
    %c0_216 = arith.constant 0 : index
    %305 = vector.load %arg9[%c0_215, %c0_216] : memref<96x384xf32, #tpu.memory_space<vmem>>, vector<32x384xf32>
    %306 = vector.extract_strided_slice %305 {offsets = [0, 383], sizes = [32, 1], strides = [1, 1]} : vector<32x384xf32> to vector<32x1xf32>
    %307 = vector.extract_strided_slice %305 {offsets = [0, 0], sizes = [32, 383], strides = [1, 1]} : vector<32x384xf32> to vector<32x383xf32>
    %308 = tpu.concatenate %306, %307 in 1 : vector<32x1xf32>, vector<32x383xf32> -> vector<32x384xf32>
    %309 = arith.addf %299, %308 : vector<32x384xf32>
    %c32_217 = arith.constant 32 : index
    %c0_218 = arith.constant 0 : index
    %310 = vector.load %arg9[%c32_217, %c0_218] : memref<96x384xf32, #tpu.memory_space<vmem>>, vector<32x384xf32>
    %311 = arith.addf %309, %310 : vector<32x384xf32>
    %c64_219 = arith.constant 64 : index
    %c0_220 = arith.constant 0 : index
    %312 = vector.load %arg9[%c64_219, %c0_220] : memref<96x384xf32, #tpu.memory_space<vmem>>, vector<32x384xf32>
    %313 = vector.extract_strided_slice %312 {offsets = [0, 1], sizes = [32, 383], strides = [1, 1]} : vector<32x384xf32> to vector<32x383xf32>
    %314 = vector.extract_strided_slice %312 {offsets = [0, 0], sizes = [32, 1], strides = [1, 1]} : vector<32x384xf32> to vector<32x1xf32>
    %315 = tpu.concatenate %313, %314 in 1 : vector<32x383xf32>, vector<32x1xf32> -> vector<32x384xf32>
    %316 = arith.addf %311, %315 : vector<32x384xf32>
    %c4_221 = arith.constant 4 : index
    %c192_222 = arith.constant 192 : index
    %c0_223 = arith.constant 0 : index
    %317 = vector.load %arg3[%c4_221, %c192_222, %c0_223] : memref<5x288x176xbf16, #tpu.memory_space<vmem>>, vector<1x96x144xbf16>
    %318 = vector.shape_cast %317 : vector<1x96x144xbf16> to vector<96x144xbf16>
    %c0_224 = arith.constant 0 : index
    %c0_225 = arith.constant 0 : index
    %319 = vector.load %arg8[%c0_224, %c0_225] : memref<176x384xbf16, #tpu.memory_space<vmem>>, vector<144x384xbf16>
    %cst_226 = arith.constant dense<0.000000e+00> : vector<96x384xf32>
    %320 = tpu.matmul %318, %319, %cst_226 {dimension_numbers = #tpu.dot_dimension_numbers<[1], [0], [0], [1], [0, 0, 1, 1], [], []>} : vector<96x144xbf16>, vector<144x384xbf16>, vector<96x384xf32> -> vector<96x384xf32>
    %c0_227 = arith.constant 0 : index
    %c0_228 = arith.constant 0 : index
    %321 = vector.load %arg9[%c0_227, %c0_228] : memref<96x384xf32, #tpu.memory_space<vmem>>, vector<96x384xf32>
    tpu.vector_store %arg9[%c0_227, %c0_228], %320 {strides = array<i32>} : memref<96x384xf32, #tpu.memory_space<vmem>>, vector<96x384xf32>,
    %c0_229 = arith.constant 0 : index
    %c0_230 = arith.constant 0 : index
    %322 = vector.load %arg9[%c0_229, %c0_230] : memref<96x384xf32, #tpu.memory_space<vmem>>, vector<32x384xf32>
    %323 = vector.extract_strided_slice %322 {offsets = [0, 17], sizes = [32, 367], strides = [1, 1]} : vector<32x384xf32> to vector<32x367xf32>
    %324 = vector.extract_strided_slice %322 {offsets = [0, 0], sizes = [32, 17], strides = [1, 1]} : vector<32x384xf32> to vector<32x17xf32>
    %325 = tpu.concatenate %323, %324 in 1 : vector<32x367xf32>, vector<32x17xf32> -> vector<32x384xf32>
    %326 = arith.addf %316, %325 : vector<32x384xf32>
    %c32_231 = arith.constant 32 : index
    %c0_232 = arith.constant 0 : index
    %327 = vector.load %arg9[%c32_231, %c0_232] : memref<96x384xf32, #tpu.memory_space<vmem>>, vector<32x384xf32>
    %328 = vector.extract_strided_slice %327 {offsets = [0, 18], sizes = [32, 366], strides = [1, 1]} : vector<32x384xf32> to vector<32x366xf32>
    %329 = vector.extract_strided_slice %327 {offsets = [0, 0], sizes = [32, 18], strides = [1, 1]} : vector<32x384xf32> to vector<32x18xf32>
    %330 = tpu.concatenate %328, %329 in 1 : vector<32x366xf32>, vector<32x18xf32> -> vector<32x384xf32>
    %331 = arith.addf %326, %330 : vector<32x384xf32>
    %c64_233 = arith.constant 64 : index
    %c0_234 = arith.constant 0 : index
    %332 = vector.load %arg9[%c64_233, %c0_234] : memref<96x384xf32, #tpu.memory_space<vmem>>, vector<32x384xf32>
    %333 = vector.extract_strided_slice %332 {offsets = [0, 19], sizes = [32, 365], strides = [1, 1]} : vector<32x384xf32> to vector<32x365xf32>
    %334 = vector.extract_strided_slice %332 {offsets = [0, 0], sizes = [32, 19], strides = [1, 1]} : vector<32x384xf32> to vector<32x19xf32>
    %335 = tpu.concatenate %333, %334 in 1 : vector<32x365xf32>, vector<32x19xf32> -> vector<32x384xf32>
    %336 = arith.addf %331, %335 : vector<32x384xf32>
    %c4_235 = arith.constant 4 : index
    %c0_236 = arith.constant 0 : index
    %c0_237 = arith.constant 0 : index
    %337 = vector.load %arg4[%c4_235, %c0_236, %c0_237] : memref<5x32x1xf32, #tpu.memory_space<vmem>>, vector<1x32x1xf32>
    %338 = vector.shape_cast %337 : vector<1x32x1xf32> to vector<32x1xf32>
    %339 = vector.broadcast %338 : vector<32x1xf32> to vector<32x384xf32>
    %340 = arith.addf %336, %339 : vector<32x384xf32>
    %cst_238 = arith.constant 0.000000e+00 : f32
    %341 = vector.broadcast %cst_238 : f32 to vector<32x384xf32>
    %342 = arith.maximumf %340, %341 : vector<32x384xf32>
    %343 = vector.broadcast %0 : vector<1x384xf32> to vector<32x384xf32>
    %344 = arith.mulf %342, %343 : vector<32x384xf32>
    %345 = arith.truncf %344 : vector<32x384xf32> to vector<32x384xbf16>
    %c144 = arith.constant 144 : index
    %c0_239 = arith.constant 0 : index
    %346 = vector.load %arg8[%c144, %c0_239] : memref<176x384xbf16, #tpu.memory_space<vmem>>, vector<32x384xbf16>
    tpu.vector_store %arg8[%c144, %c0_239], %345 {strides = array<i32>} : memref<176x384xbf16, #tpu.memory_space<vmem>>, vector<32x384xbf16>,
    %c0_240 = arith.constant 0 : index
    %c0_241 = arith.constant 0 : index
    %347 = vector.load %arg5[%c0_240, %c0_241] : memref<4x176xbf16, #tpu.memory_space<vmem>>, vector<4x176xbf16>
    %c0_242 = arith.constant 0 : index
    %c0_243 = arith.constant 0 : index
    %348 = vector.load %arg8[%c0_242, %c0_243] : memref<176x384xbf16, #tpu.memory_space<vmem>>, vector<176x384xbf16>
    %cst_244 = arith.constant dense<0.000000e+00> : vector<4x384xf32>
    %349 = tpu.matmul %347, %348, %cst_244 {dimension_numbers = #tpu.dot_dimension_numbers<[1], [0], [0], [1], [0, 0, 1, 1], [], []>} : vector<4x176xbf16>, vector<176x384xbf16>, vector<4x384xf32> -> vector<4x384xf32>
    %c0_245 = arith.constant 0 : index
    %c0_246 = arith.constant 0 : index
    %350 = vector.load %arg6[%c0_245, %c0_246] : memref<4x1xf32, #tpu.memory_space<vmem>>, vector<4x1xf32>
    %351 = vector.broadcast %350 : vector<4x1xf32> to vector<4x384xf32>
    %352 = arith.addf %349, %351 : vector<4x384xf32>
    %cst_247 = arith.constant 2.000000e-01 : f32
    %353 = vector.broadcast %cst_247 : f32 to vector<4x384xf32>
    %354 = arith.mulf %352, %353 : vector<4x384xf32>
    %c0_248 = arith.constant 0 : index
    %c0_249 = arith.constant 0 : index
    %c0_250 = arith.constant 0 : index
    %355 = vector.load %arg1[%c0_248, %c0_249, %c0_250] : memref<1x4x384xf32, #tpu.memory_space<vmem>>, vector<1x4x384xf32>
    %356 = vector.shape_cast %355 : vector<1x4x384xf32> to vector<4x384xf32>
    %357 = arith.addf %354, %356 : vector<4x384xf32>
    %c0_251 = arith.constant 0 : index
    %c0_252 = arith.constant 0 : index
    %c0_253 = arith.constant 0 : index
    %358 = vector.load %arg7[%c0_251, %c0_252, %c0_253] : memref<1x4x384xf32, #tpu.memory_space<vmem>>, vector<1x4x384xf32>
    %359 = vector.shape_cast %358 : vector<1x4x384xf32> to vector<4x384xf32>
    %360 = vector.shape_cast %357 : vector<4x384xf32> to vector<1x4x384xf32>
    tpu.vector_store %arg7[%c0_251, %c0_252, %c0_253], %360 {strides = array<i32>} : memref<1x4x384xf32, #tpu.memory_space<vmem>>, vector<1x4x384xf32>,
    return
  }
  func.func @transform_0(%arg0: i32) -> (i32, i32, i32) {
    %c0_i32 = arith.constant 0 : i32
    %c0_i32_0 = arith.constant 0 : i32
    %c0_i32_1 = arith.constant 0 : i32
    return %arg0, %c0_i32, %c0_i32_0 : i32, i32, i32
  }
  func.func @transform_1(%arg0: i32) -> (i32, i32) {
    %c0_i32 = arith.constant 0 : i32
    %c0_i32_0 = arith.constant 0 : i32
    %c0_i32_1 = arith.constant 0 : i32
    return %c0_i32, %c0_i32_0 : i32, i32
  }
  func.func @transform_2(%arg0: i32) -> (i32, i32, i32) {
    %c0_i32 = arith.constant 0 : i32
    %c0_i32_0 = arith.constant 0 : i32
    %c0_i32_1 = arith.constant 0 : i32
    %c0_i32_2 = arith.constant 0 : i32
    return %c0_i32, %c0_i32_0, %c0_i32_1 : i32, i32, i32
  }
  func.func @transform_3(%arg0: i32) -> (i32, i32, i32) {
    %c0_i32 = arith.constant 0 : i32
    %c0_i32_0 = arith.constant 0 : i32
    %c0_i32_1 = arith.constant 0 : i32
    %c0_i32_2 = arith.constant 0 : i32
    return %c0_i32, %c0_i32_0, %c0_i32_1 : i32, i32, i32
  }
  func.func @transform_4(%arg0: i32) -> (i32, i32) {
    %c0_i32 = arith.constant 0 : i32
    %c0_i32_0 = arith.constant 0 : i32
    %c0_i32_1 = arith.constant 0 : i32
    return %c0_i32, %c0_i32_0 : i32, i32
  }
  func.func @transform_5(%arg0: i32) -> (i32, i32) {
    %c0_i32 = arith.constant 0 : i32
    %c0_i32_0 = arith.constant 0 : i32
    %c0_i32_1 = arith.constant 0 : i32
    return %c0_i32, %c0_i32_0 : i32, i32
  }
  func.func @transform_6(%arg0: i32) -> (i32, i32, i32) {
    %c0_i32 = arith.constant 0 : i32
    %c0_i32_0 = arith.constant 0 : i32
    %c0_i32_1 = arith.constant 0 : i32
    return %arg0, %c0_i32, %c0_i32_0 : i32, i32, i32
  }
}

</mosaic_0001>

<llo_original>
// kernel: tpu_custom_call.1
$region0: #{tpu_custom_call.1}
  #allocation0 [shape = 'u32[]', space=smem, size = 0x4, offset = 0x4, fixed_abs, tag = 'smem constant byte address 0x4 - core index']
  #allocation1 [shape = 'u32[72,128]{1,0:T(1,128)}', space=vmem, size = 0x9000, scoped, tag = 'internal scratch']
  #allocation2 [shape = 'bf16[176,384]{1,0:T(8,128)(2,1)}', space=vmem, size = 0x21000, scoped, tag = 'scratch operand']
  #allocation3 [shape = 'f32[96,384]{1,0:T(8,128)}', space=vmem, size = 0x24000, scoped, tag = 'scratch operand']
  %s0 = inlined_call_operand.vmem [shape: f32[2,4,384], index: 0, kind: input, shape index: {}]
  %s1 = inlined_call_operand.vmem [shape: f32[1,384], index: 1, kind: input, shape index: {}]
  %s2 = inlined_call_operand.vmem [shape: bf16[5,288,176], index: 2, kind: input, shape index: {}]
  %s3 = inlined_call_operand.vmem [shape: f32[5,32,1], index: 3, kind: input, shape index: {}]
  %s4 = inlined_call_operand.vmem [shape: bf16[4,176], index: 4, kind: input, shape index: {}]
  %s5 = inlined_call_operand.vmem [shape: f32[4,1], index: 5, kind: input, shape index: {}]
  %s6 = inlined_call_operand.hbm [shape: f32[2,4,384], index: 6, kind: output, shape index: {}]
  %s7 = sld [smem:[#allocation0]]
  $region57: #{tpu_custom_call.1} parent=0
    _
  %s9 = ssub.s32 1, %s7
  %s10 = scalar_select 0, %s9, %s7
  $region1: #{tpu_custom_call.1} parent=0
    #allocation4 [shape = 'u8[12288]{0}', space=vmem, size = 0x3000, scoped, tag = 'output window, operand 0']
    #allocation5 [shape = 's32[2]{0}', space=sflag, size = 0x8, scoped, tag = 'scoped memory for tpu_custom_call.1']
    %11 = vsyncpa [#allocation5], 0
    %s12 = scalar_lea.sflag [#allocation5], 1
    %13 = vsyncpa %s12, 0
    loop: start=0, step=1, limit=4
    $region2: #{tpu_custom_call.1} parent=1 // loop_pre_header
      _
    $region3: #{tpu_custom_call.1} parent=1 // loop_header
      %s15 = sphi 0, %s19
      %p16 = scmp.ge.s32.totalorder %s15, 4
      %s25 = sphi 0, %s27
      %s28 = sphi 0, %s25
      %s29 = sphi 0, %s28
      %s45 = sphi 0, %s29
      %s49 = sphi 0, %s49
      %s51 = sphi 0, %s49
      %s52 = sphi 0, %s51
      %s66 = sphi 0, %s52
      %s70 = sphi 0, %s70
      %s72 = sphi 0, %s70
      %s73 = sphi 0, %s72
      %s87 = sphi 0, %s73
      %s91 = sphi 0, %s91
      %s93 = sphi 0, %s91
      %s94 = sphi 0, %s93
      %s108 = sphi 0, %s94
      %s112 = sphi 0, %s112
      %s114 = sphi 0, %s112
      %s115 = sphi 0, %s114
      %s129 = sphi 0, %s115
      %s133 = sphi 0, %s133
      %s135 = sphi 0, %s133
      %s136 = sphi 0, %s135
      %s150 = sphi 0, %s136
      %s156 = sphi 0, %s158
      %s159 = sphi 0, %s156
      %s160 = sphi 0, %s159
      %s176 = sphi 0, %s160
    $region4: #{tpu_custom_call.1} parent=1 // loop_header_branch
      %18 = sbr.rel (%p16) target = $region8
    $region5: #{tpu_custom_call.1} parent=1 // loop_body
      %s20 = ssub.s32 %s15, 1
      %s21 = ssub.s32 %s15, 2
      %s22 = sadd.s32 %s15, 1
      %s23 = ssub.s32 %s15, %s22
      %p24 = scmp.eq.s32.totalorder %s23, 0
      %s26 = sadd.s32 %s25, 1
      %s27 = scalar_select %p24, %s25, %s26
      %p30 = pneg %p24
      %p31 = scmp.eq.s32.totalorder %s15, 1
      %p32 = por %p30, %p31
      %p33 = scmp.ne.s32.totalorder %s25, %s28
      %p34 = scmp.eq.s32.totalorder %s15, 0
      %p35 = por %p33, %p34
      %p36 = scmp.ne.s32.totalorder %s25, %s28
      %p37 = scmp.eq.s32.totalorder %s20, 1
      %p38 = por %p36, %p37
      %p39 = scmp.ne.s32.totalorder %s28, %s29
      %p40 = scmp.eq.s32.totalorder %s20, 0
      %p41 = por %p39, %p40
      %p42 = scmp.ne.s32.totalorder %s28, %s29
      %p43 = scmp.eq.s32.totalorder %s21, 1
      %p44 = por %p42, %p43
      %p46 = scmp.ne.s32.totalorder %s29, %s45
      %p47 = scmp.eq.s32.totalorder %s21, 0
      %p48 = por %p46, %p47
      %s50 = sadd.s32 %s49, 1
      %p53 = scmp.eq.s32.totalorder %s15, 1
      %p54 = scmp.ne.s32.totalorder %s49, %s51
      %p55 = scmp.eq.s32.totalorder %s15, 0
      %p56 = por %p54, %p55
      %p57 = scmp.ne.s32.totalorder %s49, %s51
      %p58 = scmp.eq.s32.totalorder %s20, 1
      %p59 = por %p57, %p58
      %p60 = scmp.ne.s32.totalorder %s51, %s52
      %p61 = scmp.eq.s32.totalorder %s20, 0
      %p62 = por %p60, %p61
      %p63 = scmp.ne.s32.totalorder %s51, %s52
      %p64 = scmp.eq.s32.totalorder %s21, 1
      %p65 = por %p63, %p64
      %p67 = scmp.ne.s32.totalorder %s52, %s66
      %p68 = scmp.eq.s32.totalorder %s21, 0
      %p69 = por %p67, %p68
      %s71 = sadd.s32 %s70, 1
      %p74 = scmp.eq.s32.totalorder %s15, 1
      %p75 = scmp.ne.s32.totalorder %s70, %s72
      %p76 = scmp.eq.s32.totalorder %s15, 0
      %p77 = por %p75, %p76
      %p78 = scmp.ne.s32.totalorder %s70, %s72
      %p79 = scmp.eq.s32.totalorder %s20, 1
      %p80 = por %p78, %p79
      %p81 = scmp.ne.s32.totalorder %s72, %s73
      %p82 = scmp.eq.s32.totalorder %s20, 0
      %p83 = por %p81, %p82
      %p84 = scmp.ne.s32.totalorder %s72, %s73
      %p85 = scmp.eq.s32.totalorder %s21, 1
      %p86 = por %p84, %p85
      %p88 = scmp.ne.s32.totalorder %s73, %s87
      %p89 = scmp.eq.s32.totalorder %s21, 0
      %p90 = por %p88, %p89
      %s92 = sadd.s32 %s91, 1
      %p95 = scmp.eq.s32.totalorder %s15, 1
      %p96 = scmp.ne.s32.totalorder %s91, %s93
      %p97 = scmp.eq.s32.totalorder %s15, 0
      %p98 = por %p96, %p97
      %p99 = scmp.ne.s32.totalorder %s91, %s93
      %p100 = scmp.eq.s32.totalorder %s20, 1
      %p101 = por %p99, %p100
      %p102 = scmp.ne.s32.totalorder %s93, %s94
      %p103 = scmp.eq.s32.totalorder %s20, 0
      %p104 = por %p102, %p103
      %p105 = scmp.ne.s32.totalorder %s93, %s94
      %p106 = scmp.eq.s32.totalorder %s21, 1
      %p107 = por %p105, %p106
      %p109 = scmp.ne.s32.totalorder %s94, %s108
      %p110 = scmp.eq.s32.totalorder %s21, 0
      %p111 = por %p109, %p110
      %s113 = sadd.s32 %s112, 1
      %p116 = scmp.eq.s32.totalorder %s15, 1
      %p117 = scmp.ne.s32.totalorder %s112, %s114
      %p118 = scmp.eq.s32.totalorder %s15, 0
      %p119 = por %p117, %p118
      %p120 = scmp.ne.s32.totalorder %s112, %s114
      %p121 = scmp.eq.s32.totalorder %s20, 1
      %p122 = por %p120, %p121
      %p123 = scmp.ne.s32.totalorder %s114, %s115
      %p124 = scmp.eq.s32.totalorder %s20, 0
      %p125 = por %p123, %p124
      %p126 = scmp.ne.s32.totalorder %s114, %s115
      %p127 = scmp.eq.s32.totalorder %s21, 1
      %p128 = por %p126, %p127
      %p130 = scmp.ne.s32.totalorder %s115, %s129
      %p131 = scmp.eq.s32.totalorder %s21, 0
      %p132 = por %p130, %p131
      %s134 = sadd.s32 %s133, 1
      %p137 = scmp.eq.s32.totalorder %s15, 1
      %p138 = scmp.ne.s32.totalorder %s133, %s135
      %p139 = scmp.eq.s32.totalorder %s15, 0
      %p140 = por %p138, %p139
      %p141 = scmp.ne.s32.totalorder %s133, %s135
      %p142 = scmp.eq.s32.totalorder %s20, 1
      %p143 = por %p141, %p142
      %p144 = scmp.ne.s32.totalorder %s135, %s136
      %p145 = scmp.eq.s32.totalorder %s20, 0
      %p146 = por %p144, %p145
      %p147 = scmp.ne.s32.totalorder %s135, %s136
      %p148 = scmp.eq.s32.totalorder %s21, 1
      %p149 = por %p147, %p148
      %p151 = scmp.ne.s32.totalorder %s136, %s150
      %p152 = scmp.eq.s32.totalorder %s21, 0
      %p153 = por %p151, %p152
      %s154 = ssub.s32 %s15, %s22
      %p155 = scmp.eq.s32.totalorder %s154, 0
      %s157 = sadd.s32 %s156, 1
      %s158 = scalar_select %p155, %s156, %s157
      %p161 = pneg %p155
      %p162 = scmp.eq.s32.totalorder %s15, 1
      %p163 = por %p161, %p162
      %p164 = scmp.ne.s32.totalorder %s156, %s159
      %p165 = scmp.eq.s32.totalorder %s15, 0
      %p166 = por %p164, %p165
      %p167 = scmp.ne.s32.totalorder %s156, %s159
      %p168 = scmp.eq.s32.totalorder %s20, 1
      %p169 = por %p167, %p168
      %p170 = scmp.ne.s32.totalorder %s159, %s160
      %p171 = scmp.eq.s32.totalorder %s20, 0
      %p172 = por %p170, %p171
      %p173 = scmp.ne.s32.totalorder %s159, %s160
      %p174 = scmp.eq.s32.totalorder %s21, 1
      %p175 = por %p173, %p174
      %p177 = scmp.ne.s32.totalorder %s160, %s176
      %p178 = scmp.eq.s32.totalorder %s21, 0
      %p179 = por %p177, %p178
      %p180 = scmp.le.s32.totalorder 1, %s15
      %p181 = scmp.lt.s32.totalorder %s15, 3
      %p182 = pnand %p180, %p181
      %p183 = pneg %p182
      // Predicated region
      $region9: #{tpu_custom_call.1} parent=5 // pred_check
        _
      $region10: #{tpu_custom_call.1} parent=5 // pred_check_branch
        %185 = sbr.rel (%p182) target = $region12
      $region11: #{tpu_custom_call.1} parent=5 // pred_region
        %s186 = ssub.s32 %s15, 1
        // Predicated region
        $region13: #{tpu_custom_call.1} parent=11 // pred_check
          %p187 = pneg %p62
        $region14: #{tpu_custom_call.1} parent=11 // pred_check_branch
          %189 = sbr.rel (%p187) target = $region16
        $region15: #{tpu_custom_call.1} parent=11 // pred_region
          _
        $region16: #{tpu_custom_call.1} parent=11 // pred_fallthru
          _
        // Predicated region
        $region17: #{tpu_custom_call.1} parent=11 // pred_check
          %p190 = pneg %p83
        $region18: #{tpu_custom_call.1} parent=11 // pred_check_branch
          %192 = sbr.rel (%p190) target = $region20
        $region19: #{tpu_custom_call.1} parent=11 // pred_region
          _
        $region20: #{tpu_custom_call.1} parent=11 // pred_fallthru
          _
        // Predicated region
        $region21: #{tpu_custom_call.1} parent=11 // pred_check
          %p193 = pneg %p104
        $region22: #{tpu_custom_call.1} parent=11 // pred_check_branch
          %195 = sbr.rel (%p193) target = $region24
        $region23: #{tpu_custom_call.1} parent=11 // pred_region
          _
        $region24: #{tpu_custom_call.1} parent=11 // pred_fallthru
          _
        // Predicated region
        $region25: #{tpu_custom_call.1} parent=11 // pred_check
          %p196 = pneg %p125
        $region26: #{tpu_custom_call.1} parent=11 // pred_check_branch
          %198 = sbr.rel (%p196) target = $region28
        $region27: #{tpu_custom_call.1} parent=11 // pred_region
          _
        $region28: #{tpu_custom_call.1} parent=11 // pred_fallthru
          _
        // Predicated region
        $region29: #{tpu_custom_call.1} parent=11 // pred_check
          %p199 = pneg %p146
        $region30: #{tpu_custom_call.1} parent=11 // pred_check_branch
          %201 = sbr.rel (%p199) target = $region32
        $region31: #{tpu_custom_call.1} parent=11 // pred_region
          _
        $region32: #{tpu_custom_call.1} parent=11 // pred_fallthru
          _
      $region12: #{tpu_custom_call.1} parent=5 // pred_fallthru
        _
      %p202 = scmp.lt.s32.totalorder %s15, 2
      // Predicated region
      $region33: #{tpu_custom_call.1} parent=5 // pred_check
        %p203 = pneg %p202
      $region34: #{tpu_custom_call.1} parent=5 // pred_check_branch
        %205 = sbr.rel (%p203) target = $region36
      $region35: #{tpu_custom_call.1} parent=5 // pred_region
        // Predicated region
        $region37: #{tpu_custom_call.1} parent=35 // pred_check
          %p206 = pneg %p35
        $region38: #{tpu_custom_call.1} parent=35 // pred_check_branch
          %208 = sbr.rel (%p206) target = $region40
        $region39: #{tpu_custom_call.1} parent=35 // pred_region
          %p209 = scmp.lt.s32.totalorder %s15, 1
          %s210 = scalar_select %p209, %s15, 1
          %s211 = smul.addr %s210, 3
          %s212 = smul.addr %s211, 4
          %s213 = scalar_lea.vmem %s0, %s212
        $region40: #{tpu_custom_call.1} parent=35 // pred_fallthru
          _
      $region36: #{tpu_custom_call.1} parent=5 // pred_fallthru
        _
      %p214 = scmp.le.s32.totalorder 1, %s15
      %p215 = scmp.lt.s32.totalorder %s15, 3
      %p216 = pnand %p214, %p215
      %p217 = pneg %p216
      // Predicated region
      $region41: #{tpu_custom_call.1} parent=5 // pred_check
        _
      $region42: #{tpu_custom_call.1} parent=5 // pred_check_branch
        %219 = sbr.rel (%p216) target = $region44
      $region43: #{tpu_custom_call.1} parent=5 // pred_region
        %s220 = ssub.s32 %s15, 1
        %p221 = scmp.lt.s32.totalorder %s20, 1
        %s222 = scalar_select %p221, %s20, 1
        %s223 = smul.addr %s222, 3
        %s224 = smul.addr %s223, 4
        %s225 = scalar_lea.vmem %s0, %s224
        %p226 = pneg %p41
        %p227 = pneg %p38
        %p228 = pneg %p62
        %p229 = pneg %p59
        %p230 = pneg %p83
        %p231 = pneg %p80
        %p232 = pneg %p104
        %p233 = pneg %p101
        %p234 = pneg %p125
        %p235 = pneg %p122
        %p236 = pneg %p146
        %p237 = pneg %p143
        %p238 = pneg %p172
        %p239 = pneg %p169
        %s240 = sand.u32 %s159, 1
        %s241 = scalar_lea.sflag [#allocation5], %s240
        %s242 = sand.u32 %s159, 1
        %s243 = smul.addr %s242, 12
        %s244 = scalar_lea.vmem [#allocation4], %s243
        %p245 = scmp.lt.s32.totalorder %s20, 1
        %s246 = scalar_select %p245, %s20, 1
        %s247 = smul.addr %s246, 3
        %s248 = smul.addr %s247, 4
        %s249 = scalar_lea.vmem %s0, %s248
        %v251 = vld [vmem:[%s1] sm:$0x7]
        %v252 = vld [vmem:[%s249] sm:$0xff]
        %v253 = vld [vmem:[%s249 + $0x8] sm:$0xf]
        %256 = vst [vmem:[#allocation1] ss:$2 sm:$0xff] %v252
        %s257 = scalar_lea.vmem [#allocation1], 16
        %258 = vst [vmem:[%s257] ss:$2 sm:$0xff] %v253
        %v259 = vld.sshfl [vmem:[#allocation1] sm:$0xff pattern:$0x75316420]
        %v260 = vld.sshfl [vmem:[#allocation1 + $0x8] sm:$0xff pattern:$0x75316420]
        %v261 = vld.sshfl [vmem:[#allocation1 + $0x10] sm:$0xff pattern:$0x75316420]
        %v265 = vpack.c.bf16 %v260, %v259
        %v266 = vpack.c.bf16 %v261, %v261
        %267 = vst [vmem:[#allocation2] sm:$0x33] %v265
        %268 = vst [vmem:[#allocation2 + $0x8] sm:$0x3] %v266
        %269 = vst [vmem:[#allocation2] sm:$0xcc] 0
        %270 = vst [vmem:[#allocation2 + $0x8] sm:$0xc] 0
        %271 = vst [vmem:[#allocation2 + $0xc] sm:$0xff] 0
        %272 = vst [vmem:[#allocation2 + $0x14] sm:$0xf] 0
        %v273 = vld [vmem:[%s2] sm:$0xf]
        %v274 = vld [vmem:[%s2 + $0x8] sm:$0xf]
        %v275 = vld [vmem:[%s2 + $0x10] sm:$0xf]
        %v276 = vld [vmem:[%s2 + $0x18] sm:$0xf]
        %v277 = vld [vmem:[%s2 + $0x20] sm:$0xf]
        %v278 = vld [vmem:[%s2 + $0x28] sm:$0xf]
        %v279 = vld [vmem:[%s2 + $0x30] sm:$0xf]
        %v280 = vld [vmem:[%s2 + $0x38] sm:$0xf]
        %v281 = vld [vmem:[%s2 + $0x40] sm:$0xf]
        %v282 = vld [vmem:[%s2 + $0x48] sm:$0xf]
        %v283 = vld [vmem:[%s2 + $0x50] sm:$0xf]
        %v284 = vld [vmem:[%s2 + $0x58] sm:$0xf]
        %v285 = vld [vmem:[#allocation2] sm:$0xff]
        %v286 = vld [vmem:[#allocation2 + $0x8] sm:$0xf]
        %v287 = vld [vmem:[#allocation2 + $0xc] sm:$0xff]
        %v288 = vld [vmem:[#allocation2 + $0x14] sm:$0xf]
        %v301 = vunpack.c.l.b16 %v273
        %v302 = vunpack.c.l.b16 %v274
        %v303 = vunpack.c.l.b16 %v275
        %v304 = vunpack.c.l.b16 %v276
        %v305 = vunpack.c.l.b16 %v277
        %v306 = vunpack.c.l.b16 %v278
        %v307 = vunpack.c.l.b16 %v279
        %v308 = vunpack.c.l.b16 %v280
        %v309 = vunpack.c.l.b16 %v281
        %v310 = vunpack.c.l.b16 %v282
        %v311 = vunpack.c.l.b16 %v283
        %v312 = vunpack.c.l.b16 %v284
        %v313 = vpack.c.b16 %v302, %v301
        %v314 = vpack.c.b16 %v304, %v303
        %v315 = vpack.c.b16 %v306, %v305
        %v316 = vpack.c.b16 %v308, %v307
        %v317 = vpack.c.b16 %v310, %v309
        %v318 = vpack.c.b16 %v312, %v311
        %v323 = vunpack.c.l.b16 %v285
        %v324 = vunpack.c.h.b16 %v285
        %v325 = vunpack.c.l.b16 %v286
        %v326 = vunpack.c.l.b16 %v287
        %v327 = vunpack.c.h.b16 %v287
        %v328 = vunpack.c.l.b16 %v288
        %v329 = vpack.c.b16 %v326, %v323
        %v330 = vpack.c.b16 %v327, %v324
        %v331 = vpack.c.b16 %v328, %v325
        %vm335 = vcmask 130048
        %v337 = vsel %vm335, %v313, 0
        %v340 = vsel %vm335, %v314, 0
        %v343 = vsel %vm335, %v315, 0
        %v346 = vsel %vm335, %v316, 0
        %v349 = vsel %vm335, %v317, 0
        %v352 = vsel %vm335, %v318, 0
        %354 = vmatpush.bf16.msra.mxu0 0
        %355 = vmatpush.bf16.msra.mxu0 0
        %356 = vmatpush.bf16.msra.mxu0 0
        %357 = vmatpush.bf16.msra.mxu0 0
        %358 = vmatpush.bf16.msra.mxu0 0
        %359 = vmatpush.bf16.msra.mxu0 0
        %360 = vmatpush.bf16.msra.mxu0 0
        %361 = vmatpush.bf16.msra.mxu0 %v329
        %362 = vmatmul.bf16.gmra.mxu0 %v337
        %v363 = vpop.f32.mrf.mxu0
        %v364 = vadd.f32 0.0, %v363
        %v365 = vpop.f32.mrf.mxu0
        %v366 = vadd.f32 0.0, %v365
        %367 = vmatmul.bf16.gmra.mxu0 %v340
        %v368 = vpop.f32.mrf.mxu0
        %v369 = vadd.f32 0.0, %v368
        %v370 = vpop.f32.mrf.mxu0
        %v371 = vadd.f32 0.0, %v370
        %372 = vmatmul.bf16.gmra.mxu0 %v343
        %v373 = vpop.f32.mrf.mxu0
        %v374 = vadd.f32 0.0, %v373
        %v375 = vpop.f32.mrf.mxu0
        %v376 = vadd.f32 0.0, %v375
        %377 = vmatmul.bf16.gmra.mxu0 %v346
        %v378 = vpop.f32.mrf.mxu0
        %v379 = vadd.f32 0.0, %v378
        %v380 = vpop.f32.mrf.mxu0
        %v381 = vadd.f32 0.0, %v380
        %382 = vmatmul.bf16.gmra.mxu0 %v349
        %v383 = vpop.f32.mrf.mxu0
        %v384 = vadd.f32 0.0, %v383
        %v385 = vpop.f32.mrf.mxu0
        %v386 = vadd.f32 0.0, %v385
        %387 = vmatmul.bf16.gmra.mxu0 %v352
        %v388 = vpop.f32.mrf.mxu0
        %v389 = vadd.f32 0.0, %v388
        %v390 = vpop.f32.mrf.mxu0
        %v391 = vadd.f32 0.0, %v390
        %392 = vdwg.mxu0
        %393 = vmatpush.bf16.msra.mxu0 0
        %394 = vmatpush.bf16.msra.mxu0 0
        %395 = vmatpush.bf16.msra.mxu0 0
        %396 = vmatpush.bf16.msra.mxu0 0
        %397 = vmatpush.bf16.msra.mxu0 0
        %398 = vmatpush.bf16.msra.mxu0 0
        %399 = vmatpush.bf16.msra.mxu0 0
        %400 = vmatpush.bf16.msra.mxu0 %v330
        %401 = vmatmul.bf16.gmra.mxu0 %v337
        %v402 = vpop.f32.mrf.mxu0
        %v403 = vadd.f32 0.0, %v402
        %v404 = vpop.f32.mrf.mxu0
        %v405 = vadd.f32 0.0, %v404
        %406 = vmatmul.bf16.gmra.mxu0 %v340
        %v407 = vpop.f32.mrf.mxu0
        %v408 = vadd.f32 0.0, %v407
        %v409 = vpop.f32.mrf.mxu0
        %v410 = vadd.f32 0.0, %v409
        %411 = vmatmul.bf16.gmra.mxu0 %v343
        %v412 = vpop.f32.mrf.mxu0
        %v413 = vadd.f32 0.0, %v412
        %v414 = vpop.f32.mrf.mxu0
        %v415 = vadd.f32 0.0, %v414
        %416 = vmatmul.bf16.gmra.mxu0 %v346
        %v417 = vpop.f32.mrf.mxu0
        %v418 = vadd.f32 0.0, %v417
        %v419 = vpop.f32.mrf.mxu0
        %v420 = vadd.f32 0.0, %v419
        %421 = vmatmul.bf16.gmra.mxu0 %v349
        %v422 = vpop.f32.mrf.mxu0
        %v423 = vadd.f32 0.0, %v422
        %v424 = vpop.f32.mrf.mxu0
        %v425 = vadd.f32 0.0, %v424
        %426 = vmatmul.bf16.gmra.mxu0 %v352
        %v427 = vpop.f32.mrf.mxu0
        %v428 = vadd.f32 0.0, %v427
        %v429 = vpop.f32.mrf.mxu0
        %v430 = vadd.f32 0.0, %v429
        %431 = vdwg.mxu0
        %432 = vmatpush.bf16.msra.mxu0 0
        %433 = vmatpush.bf16.msra.mxu0 0
        %434 = vmatpush.bf16.msra.mxu0 0
        %435 = vmatpush.bf16.msra.mxu0 0
        %436 = vmatpush.bf16.msra.mxu0 0
        %437 = vmatpush.bf16.msra.mxu0 0
        %438 = vmatpush.bf16.msra.mxu0 0
        %439 = vmatpush.bf16.msra.mxu0 %v331
        %440 = vmatmul.bf16.gmra.mxu0 %v337
        %v441 = vpop.f32.mrf.mxu0
        %v442 = vadd.f32 0.0, %v441
        %v443 = vpop.f32.mrf.mxu0
        %v444 = vadd.f32 0.0, %v443
        %445 = vmatmul.bf16.gmra.mxu0 %v340
        %v446 = vpop.f32.mrf.mxu0
        %v447 = vadd.f32 0.0, %v446
        %v448 = vpop.f32.mrf.mxu0
        %v449 = vadd.f32 0.0, %v448
        %450 = vmatmul.bf16.gmra.mxu0 %v343
        %v451 = vpop.f32.mrf.mxu0
        %v452 = vadd.f32 0.0, %v451
        %v453 = vpop.f32.mrf.mxu0
        %v454 = vadd.f32 0.0, %v453
        %455 = vmatmul.bf16.gmra.mxu0 %v346
        %v456 = vpop.f32.mrf.mxu0
        %v457 = vadd.f32 0.0, %v456
        %v458 = vpop.f32.mrf.mxu0
        %v459 = vadd.f32 0.0, %v458
        %460 = vmatmul.bf16.gmra.mxu0 %v349
        %v461 = vpop.f32.mrf.mxu0
        %v462 = vadd.f32 0.0, %v461
        %v463 = vpop.f32.mrf.mxu0
        %v464 = vadd.f32 0.0, %v463
        %465 = vmatmul.bf16.gmra.mxu0 %v352
        %v466 = vpop.f32.mrf.mxu0
        %v467 = vadd.f32 0.0, %v466
        %v468 = vpop.f32.mrf.mxu0
        %v469 = vadd.f32 0.0, %v468
        %470 = vdwg.mxu0
        %471 = vst [vmem:[#allocation3] sm:$0xff] %v364
        %472 = vst [vmem:[#allocation3 + $0x8] sm:$0xff] %v403
        %473 = vst [vmem:[#allocation3 + $0x10] sm:$0xff] %v442
        %474 = vst [vmem:[#allocation3 + $0x18] sm:$0xff] %v366
        %475 = vst [vmem:[#allocation3 + $0x20] sm:$0xff] %v405
        %476 = vst [vmem:[#allocation3 + $0x28] sm:$0xff] %v444
        %477 = vst [vmem:[#allocation3 + $0x30] sm:$0xff] %v369
        %478 = vst [vmem:[#allocation3 + $0x38] sm:$0xff] %v408
        %479 = vst [vmem:[#allocation3 + $0x40] sm:$0xff] %v447
        %480 = vst [vmem:[#allocation3 + $0x48] sm:$0xff] %v371
        %481 = vst [vmem:[#allocation3 + $0x50] sm:$0xff] %v410
        %482 = vst [vmem:[#allocation3 + $0x58] sm:$0xff] %v449
        %483 = vst [vmem:[#allocation3 + $0x60] sm:$0xff] %v374
        %484 = vst [vmem:[#allocation3 + $0x68] sm:$0xff] %v413
        %485 = vst [vmem:[#allocation3 + $0x70] sm:$0xff] %v452
        %486 = vst [vmem:[#allocation3 + $0x78] sm:$0xff] %v376
        %487 = vst [vmem:[#allocation3 + $0x80] sm:$0xff] %v415
        %488 = vst [vmem:[#allocation3 + $0x88] sm:$0xff] %v454
        %489 = vst [vmem:[#allocation3 + $0x90] sm:$0xff] %v379
        %490 = vst [vmem:[#allocation3 + $0x98] sm:$0xff] %v418
        %491 = vst [vmem:[#allocation3 + $0xa0] sm:$0xff] %v457
        %492 = vst [vmem:[#allocation3 + $0xa8] sm:$0xff] %v381
        %493 = vst [vmem:[#allocation3 + $0xb0] sm:$0xff] %v420
        %494 = vst [vmem:[#allocation3 + $0xb8] sm:$0xff] %v459
        %495 = vst [vmem:[#allocation3 + $0xc0] sm:$0xff] %v384
        %496 = vst [vmem:[#allocation3 + $0xc8] sm:$0xff] %v423
        %497 = vst [vmem:[#allocation3 + $0xd0] sm:$0xff] %v462
        %498 = vst [vmem:[#allocation3 + $0xd8] sm:$0xff] %v386
        %499 = vst [vmem:[#allocation3 + $0xe0] sm:$0xff] %v425
        %500 = vst [vmem:[#allocation3 + $0xe8] sm:$0xff] %v464
        %501 = vst [vmem:[#allocation3 + $0xf0] sm:$0xff] %v389
        %502 = vst [vmem:[#allocation3 + $0xf8] sm:$0xff] %v428
        %503 = vst [vmem:[#allocation3 + $0x100] sm:$0xff] %v467
        %504 = vst [vmem:[#allocation3 + $0x108] sm:$0xff] %v391
        %505 = vst [vmem:[#allocation3 + $0x110] sm:$0xff] %v430
        %506 = vst [vmem:[#allocation3 + $0x118] sm:$0xff] %v469
        %v507 = vld [vmem:[#allocation3] sm:$0xff]
        %v508 = vld [vmem:[#allocation3 + $0x8] sm:$0xff]
        %v509 = vld [vmem:[#allocation3 + $0x10] sm:$0xff]
        %v510 = vld [vmem:[#allocation3 + $0x18] sm:$0xff]
        %v511 = vld [vmem:[#allocation3 + $0x20] sm:$0xff]
        %v512 = vld [vmem:[#allocation3 + $0x28] sm:$0xff]
        %v513 = vld [vmem:[#allocation3 + $0x30] sm:$0xff]
        %v514 = vld [vmem:[#allocation3 + $0x38] sm:$0xff]
        %v515 = vld [vmem:[#allocation3 + $0x40] sm:$0xff]
        %v516 = vld [vmem:[#allocation3 + $0x48] sm:$0xff]
        %v517 = vld [vmem:[#allocation3 + $0x50] sm:$0xff]
        %v518 = vld [vmem:[#allocation3 + $0x58] sm:$0xff]
        %523 = vrot.lane.b32.xlu0 %v509, 19
        %v524 = vpop.permute.xlu0 %523
        %525 = vrot.lane.b32.xlu0 %v512, 19
        %v526 = vpop.permute.xlu0 %525
        %527 = vrot.lane.b32.xlu0 %v515, 19
        %v528 = vpop.permute.xlu0 %527
        %529 = vrot.lane.b32.xlu0 %v518, 19
        %v530 = vpop.permute.xlu0 %529
        %543 = vrot.lane.b32.xlu0 %v507, 19
        %v544 = vpop.permute.xlu0 %543
        %545 = vrot.lane.b32.xlu0 %v508, 19
        %v546 = vpop.permute.xlu0 %545
        %547 = vrot.lane.b32.xlu0 %v510, 19
        %v548 = vpop.permute.xlu0 %547
        %549 = vrot.lane.b32.xlu0 %v511, 19
        %v550 = vpop.permute.xlu0 %549
        %551 = vrot.lane.b32.xlu0 %v513, 19
        %v552 = vpop.permute.xlu0 %551
        %553 = vrot.lane.b32.xlu0 %v514, 19
        %v554 = vpop.permute.xlu0 %553
        %555 = vrot.lane.b32.xlu0 %v516, 19
        %v556 = vpop.permute.xlu0 %555
        %557 = vrot.lane.b32.xlu0 %v517, 19
        %v558 = vpop.permute.xlu0 %557
        %vm559 = vcmask 154624
        %v560 = vsel %vm559, %v544, %v546
        %v561 = vsel %vm559, %v546, %v524
        %v562 = vsel %vm559, %v548, %v550
        %v563 = vsel %vm559, %v550, %v526
        %v564 = vsel %vm559, %v552, %v554
        %v565 = vsel %vm559, %v554, %v528
        %v566 = vsel %vm559, %v556, %v558
        %v567 = vsel %vm559, %v558, %v530
        %v580 = vsel %vm559, %v524, %v544
        %v581 = vsel %vm559, %v526, %v548
        %v582 = vsel %vm559, %v528, %v552
        %v583 = vsel %vm559, %v530, %v556
        %v584 = vadd.f32 %v580, 0.0
        %v585 = vadd.f32 %v560, 0.0
        %v586 = vadd.f32 %v561, 0.0
        %v587 = vadd.f32 %v581, 0.0
        %v588 = vadd.f32 %v562, 0.0
        %v589 = vadd.f32 %v563, 0.0
        %v590 = vadd.f32 %v582, 0.0
        %v591 = vadd.f32 %v564, 0.0
        %v592 = vadd.f32 %v565, 0.0
        %v593 = vadd.f32 %v583, 0.0
        %v594 = vadd.f32 %v566, 0.0
        %v595 = vadd.f32 %v567, 0.0
        %v596 = vld [vmem:[#allocation3 + $0x60] sm:$0xff]
        %v597 = vld [vmem:[#allocation3 + $0x68] sm:$0xff]
        %v598 = vld [vmem:[#allocation3 + $0x70] sm:$0xff]
        %v599 = vld [vmem:[#allocation3 + $0x78] sm:$0xff]
        %v600 = vld [vmem:[#allocation3 + $0x80] sm:$0xff]
        %v601 = vld [vmem:[#allocation3 + $0x88] sm:$0xff]
        %v602 = vld [vmem:[#allocation3 + $0x90] sm:$0xff]
        %v603 = vld [vmem:[#allocation3 + $0x98] sm:$0xff]
        %v604 = vld [vmem:[#allocation3 + $0xa0] sm:$0xff]
        %v605 = vld [vmem:[#allocation3 + $0xa8] sm:$0xff]
        %v606 = vld [vmem:[#allocation3 + $0xb0] sm:$0xff]
        %v607 = vld [vmem:[#allocation3 + $0xb8] sm:$0xff]
        %612 = vrot.lane.b32.xlu0 %v598, 18
        %v613 = vpop.permute.xlu0 %612
        %614 = vrot.lane.b32.xlu0 %v601, 18
        %v615 = vpop.permute.xlu0 %614
        %616 = vrot.lane.b32.xlu0 %v604, 18
        %v617 = vpop.permute.xlu0 %616
        %618 = vrot.lane.b32.xlu0 %v607, 18
        %v619 = vpop.permute.xlu0 %618
        %632 = vrot.lane.b32.xlu0 %v596, 18
        %v633 = vpop.permute.xlu0 %632
        %634 = vrot.lane.b32.xlu0 %v597, 18
        %v635 = vpop.permute.xlu0 %634
        %636 = vrot.lane.b32.xlu0 %v599, 18
        %v637 = vpop.permute.xlu0 %636
        %638 = vrot.lane.b32.xlu0 %v600, 18
        %v639 = vpop.permute.xlu0 %638
        %640 = vrot.lane.b32.xlu0 %v602, 18
        %v641 = vpop.permute.xlu0 %640
        %642 = vrot.lane.b32.xlu0 %v603, 18
        %v643 = vpop.permute.xlu0 %642
        %644 = vrot.lane.b32.xlu0 %v605, 18
        %v645 = vpop.permute.xlu0 %644
        %646 = vrot.lane.b32.xlu0 %v606, 18
        %v647 = vpop.permute.xlu0 %646
        %vm648 = vcmask 146432
        %v649 = vsel %vm648, %v633, %v635
        %v650 = vsel %vm648, %v635, %v613
        %v651 = vsel %vm648, %v637, %v639
        %v652 = vsel %vm648, %v639, %v615
        %v653 = vsel %vm648, %v641, %v643
        %v654 = vsel %vm648, %v643, %v617
        %v655 = vsel %vm648, %v645, %v647
        %v656 = vsel %vm648, %v647, %v619
        %v669 = vsel %vm648, %v613, %v633
        %v670 = vsel %vm648, %v615, %v637
        %v671 = vsel %vm648, %v617, %v641
        %v672 = vsel %vm648, %v619, %v645
        %v673 = vadd.f32 %v584, %v669
        %v674 = vadd.f32 %v585, %v649
        %v675 = vadd.f32 %v586, %v650
        %v676 = vadd.f32 %v587, %v670
        %v677 = vadd.f32 %v588, %v651
        %v678 = vadd.f32 %v589, %v652
        %v679 = vadd.f32 %v590, %v671
        %v680 = vadd.f32 %v591, %v653
        %v681 = vadd.f32 %v592, %v654
        %v682 = vadd.f32 %v593, %v672
        %v683 = vadd.f32 %v594, %v655
        %v684 = vadd.f32 %v595, %v656
        %v685 = vld [vmem:[#allocation3 + $0xc0] sm:$0xff]
        %v686 = vld [vmem:[#allocation3 + $0xc8] sm:$0xff]
        %v687 = vld [vmem:[#allocation3 + $0xd0] sm:$0xff]
        %v688 = vld [vmem:[#allocation3 + $0xd8] sm:$0xff]
        %v689 = vld [vmem:[#allocation3 + $0xe0] sm:$0xff]
        %v690 = vld [vmem:[#allocation3 + $0xe8] sm:$0xff]
        %v691 = vld [vmem:[#allocation3 + $0xf0] sm:$0xff]
        %v692 = vld [vmem:[#allocation3 + $0xf8] sm:$0xff]
        %v693 = vld [vmem:[#allocation3 + $0x100] sm:$0xff]
        %v694 = vld [vmem:[#allocation3 + $0x108] sm:$0xff]
        %v695 = vld [vmem:[#allocation3 + $0x110] sm:$0xff]
        %v696 = vld [vmem:[#allocation3 + $0x118] sm:$0xff]
        %701 = vrot.lane.b32.xlu0 %v687, 17
        %v702 = vpop.permute.xlu0 %701
        %703 = vrot.lane.b32.xlu0 %v690, 17
        %v704 = vpop.permute.xlu0 %703
        %705 = vrot.lane.b32.xlu0 %v693, 17
        %v706 = vpop.permute.xlu0 %705
        %707 = vrot.lane.b32.xlu0 %v696, 17
        %v708 = vpop.permute.xlu0 %707
        %721 = vrot.lane.b32.xlu0 %v685, 17
        %v722 = vpop.permute.xlu0 %721
        %723 = vrot.lane.b32.xlu0 %v686, 17
        %v724 = vpop.permute.xlu0 %723
        %725 = vrot.lane.b32.xlu0 %v688, 17
        %v726 = vpop.permute.xlu0 %725
        %727 = vrot.lane.b32.xlu0 %v689, 17
        %v728 = vpop.permute.xlu0 %727
        %729 = vrot.lane.b32.xlu0 %v691, 17
        %v730 = vpop.permute.xlu0 %729
        %731 = vrot.lane.b32.xlu0 %v692, 17
        %v732 = vpop.permute.xlu0 %731
        %733 = vrot.lane.b32.xlu0 %v694, 17
        %v734 = vpop.permute.xlu0 %733
        %735 = vrot.lane.b32.xlu0 %v695, 17
        %v736 = vpop.permute.xlu0 %735
        %vm737 = vcmask 138240
        %v738 = vsel %vm737, %v722, %v724
        %v739 = vsel %vm737, %v724, %v702
        %v740 = vsel %vm737, %v726, %v728
        %v741 = vsel %vm737, %v728, %v704
        %v742 = vsel %vm737, %v730, %v732
        %v743 = vsel %vm737, %v732, %v706
        %v744 = vsel %vm737, %v734, %v736
        %v745 = vsel %vm737, %v736, %v708
        %v758 = vsel %vm737, %v702, %v722
        %v759 = vsel %vm737, %v704, %v726
        %v760 = vsel %vm737, %v706, %v730
        %v761 = vsel %vm737, %v708, %v734
        %v762 = vadd.f32 %v673, %v758
        %v763 = vadd.f32 %v674, %v738
        %v764 = vadd.f32 %v675, %v739
        %v765 = vadd.f32 %v676, %v759
        %v766 = vadd.f32 %v677, %v740
        %v767 = vadd.f32 %v678, %v741
        %v768 = vadd.f32 %v679, %v760
        %v769 = vadd.f32 %v680, %v742
        %v770 = vadd.f32 %v681, %v743
        %v771 = vadd.f32 %v682, %v761
        %v772 = vadd.f32 %v683, %v744
        %v773 = vadd.f32 %v684, %v745
        %v774 = vld [vmem:[%s2 + $0x60] sm:$0xf]
        %v775 = vld [vmem:[%s2 + $0x68] sm:$0xf]
        %v776 = vld [vmem:[%s2 + $0x70] sm:$0xf]
        %v777 = vld [vmem:[%s2 + $0x78] sm:$0xf]
        %v778 = vld [vmem:[%s2 + $0x80] sm:$0xf]
        %v779 = vld [vmem:[%s2 + $0x88] sm:$0xf]
        %v780 = vld [vmem:[%s2 + $0x90] sm:$0xf]
        %v781 = vld [vmem:[%s2 + $0x98] sm:$0xf]
        %v782 = vld [vmem:[%s2 + $0xa0] sm:$0xf]
        %v783 = vld [vmem:[%s2 + $0xa8] sm:$0xf]
        %v784 = vld [vmem:[%s2 + $0xb0] sm:$0xf]
        %v785 = vld [vmem:[%s2 + $0xb8] sm:$0xf]
        %v786 = vld [vmem:[#allocation2] sm:$0xff]
        %v787 = vld [vmem:[#allocation2 + $0x8] sm:$0xf]
        %v788 = vld [vmem:[#allocation2 + $0xc] sm:$0xff]
        %v789 = vld [vmem:[#allocation2 + $0x14] sm:$0xf]
        %v802 = vunpack.c.l.b16 %v774
        %v803 = vunpack.c.l.b16 %v775
        %v804 = vunpack.c.l.b16 %v776
        %v805 = vunpack.c.l.b16 %v777
        %v806 = vunpack.c.l.b16 %v778
        %v807 = vunpack.c.l.b16 %v779
        %v808 = vunpack.c.l.b16 %v780
        %v809 = vunpack.c.l.b16 %v781
        %v810 = vunpack.c.l.b16 %v782
        %v811 = vunpack.c.l.b16 %v783
        %v812 = vunpack.c.l.b16 %v784
        %v813 = vunpack.c.l.b16 %v785
        %v814 = vpack.c.b16 %v803, %v802
        %v815 = vpack.c.b16 %v805, %v804
        %v816 = vpack.c.b16 %v807, %v806
        %v817 = vpack.c.b16 %v809, %v808
        %v818 = vpack.c.b16 %v811, %v810
        %v819 = vpack.c.b16 %v813, %v812
        %v824 = vunpack.c.l.b16 %v786
        %v825 = vunpack.c.h.b16 %v786
        %v826 = vunpack.c.l.b16 %v787
        %v827 = vunpack.c.l.b16 %v788
        %v828 = vunpack.c.h.b16 %v788
        %v829 = vunpack.c.l.b16 %v789
        %v830 = vpack.c.b16 %v827, %v824
        %v831 = vpack.c.b16 %v828, %v825
        %v832 = vpack.c.b16 %v829, %v826
        %v837 = vsel %vm335, %v814, 0
        %v840 = vsel %vm335, %v815, 0
        %v843 = vsel %vm335, %v816, 0
        %v846 = vsel %vm335, %v817, 0
        %v849 = vsel %vm335, %v818, 0
        %v852 = vsel %vm335, %v819, 0
        %854 = vmatpush.bf16.msra.mxu0 0
        %855 = vmatpush.bf16.msra.mxu0 0
        %856 = vmatpush.bf16.msra.mxu0 0
        %857 = vmatpush.bf16.msra.mxu0 0
        %858 = vmatpush.bf16.msra.mxu0 0
        %859 = vmatpush.bf16.msra.mxu0 0
        %860 = vmatpush.bf16.msra.mxu0 0
        %861 = vmatpush.bf16.msra.mxu0 %v830
        %862 = vmatmul.bf16.gmra.mxu0 %v837
        %v863 = vpop.f32.mrf.mxu0
        %v864 = vadd.f32 0.0, %v863
        %v865 = vpop.f32.mrf.mxu0
        %v866 = vadd.f32 0.0, %v865
        %867 = vmatmul.bf16.gmra.mxu0 %v840
        %v868 = vpop.f32.mrf.mxu0
        %v869 = vadd.f32 0.0, %v868
        %v870 = vpop.f32.mrf.mxu0
        %v871 = vadd.f32 0.0, %v870
        %872 = vmatmul.bf16.gmra.mxu0 %v843
        %v873 = vpop.f32.mrf.mxu0
        %v874 = vadd.f32 0.0, %v873
        %v875 = vpop.f32.mrf.mxu0
        %v876 = vadd.f32 0.0, %v875
        %877 = vmatmul.bf16.gmra.mxu0 %v846
        %v878 = vpop.f32.mrf.mxu0
        %v879 = vadd.f32 0.0, %v878
        %v880 = vpop.f32.mrf.mxu0
        %v881 = vadd.f32 0.0, %v880
        %882 = vmatmul.bf16.gmra.mxu0 %v849
        %v883 = vpop.f32.mrf.mxu0
        %v884 = vadd.f32 0.0, %v883
        %v885 = vpop.f32.mrf.mxu0
        %v886 = vadd.f32 0.0, %v885
        %887 = vmatmul.bf16.gmra.mxu0 %v852
        %v888 = vpop.f32.mrf.mxu0
        %v889 = vadd.f32 0.0, %v888
        %v890 = vpop.f32.mrf.mxu0
        %v891 = vadd.f32 0.0, %v890
        %892 = vdwg.mxu0
        %893 = vmatpush.bf16.msra.mxu0 0
        %894 = vmatpush.bf16.msra.mxu0 0
        %895 = vmatpush.bf16.msra.mxu0 0
        %896 = vmatpush.bf16.msra.mxu0 0
        %897 = vmatpush.bf16.msra.mxu0 0
        %898 = vmatpush.bf16.msra.mxu0 0
        %899 = vmatpush.bf16.msra.mxu0 0
        %900 = vmatpush.bf16.msra.mxu0 %v831
        %901 = vmatmul.bf16.gmra.mxu0 %v837
        %v902 = vpop.f32.mrf.mxu0
        %v903 = vadd.f32 0.0, %v902
        %v904 = vpop.f32.mrf.mxu0
        %v905 = vadd.f32 0.0, %v904
        %906 = vmatmul.bf16.gmra.mxu0 %v840
        %v907 = vpop.f32.mrf.mxu0
        %v908 = vadd.f32 0.0, %v907
        %v909 = vpop.f32.mrf.mxu0
        %v910 = vadd.f32 0.0, %v909
        %911 = vmatmul.bf16.gmra.mxu0 %v843
        %v912 = vpop.f32.mrf.mxu0
        %v913 = vadd.f32 0.0, %v912
        %v914 = vpop.f32.mrf.mxu0
        %v915 = vadd.f32 0.0, %v914
        %916 = vmatmul.bf16.gmra.mxu0 %v846
        %v917 = vpop.f32.mrf.mxu0
        %v918 = vadd.f32 0.0, %v917
        %v919 = vpop.f32.mrf.mxu0
        %v920 = vadd.f32 0.0, %v919
        %921 = vmatmul.bf16.gmra.mxu0 %v849
        %v922 = vpop.f32.mrf.mxu0
        %v923 = vadd.f32 0.0, %v922
        %v924 = vpop.f32.mrf.mxu0
        %v925 = vadd.f32 0.0, %v924
        %926 = vmatmul.bf16.gmra.mxu0 %v852
        %v927 = vpop.f32.mrf.mxu0
        %v928 = vadd.f32 0.0, %v927
        %v929 = vpop.f32.mrf.mxu0
        %v930 = vadd.f32 0.0, %v929
        %931 = vdwg.mxu0
        %932 = vmatpush.bf16.msra.mxu0 0
        %933 = vmatpush.bf16.msra.mxu0 0
        %934 = vmatpush.bf16.msra.mxu0 0
        %935 = vmatpush.bf16.msra.mxu0 0
        %936 = vmatpush.bf16.msra.mxu0 0
        %937 = vmatpush.bf16.msra.mxu0 0
        %938 = vmatpush.bf16.msra.mxu0 0
        %939 = vmatpush.bf16.msra.mxu0 %v832
        %940 = vmatmul.bf16.gmra.mxu0 %v837
        %v941 = vpop.f32.mrf.mxu0
        %v942 = vadd.f32 0.0, %v941
        %v943 = vpop.f32.mrf.mxu0
        %v944 = vadd.f32 0.0, %v943
        %945 = vmatmul.bf16.gmra.mxu0 %v840
        %v946 = vpop.f32.mrf.mxu0
        %v947 = vadd.f32 0.0, %v946
        %v948 = vpop.f32.mrf.mxu0
        %v949 = vadd.f32 0.0, %v948
        %950 = vmatmul.bf16.gmra.mxu0 %v843
        %v951 = vpop.f32.mrf.mxu0
        %v952 = vadd.f32 0.0, %v951
        %v953 = vpop.f32.mrf.mxu0
        %v954 = vadd.f32 0.0, %v953
        %955 = vmatmul.bf16.gmra.mxu0 %v846
        %v956 = vpop.f32.mrf.mxu0
        %v957 = vadd.f32 0.0, %v956
        %v958 = vpop.f32.mrf.mxu0
        %v959 = vadd.f32 0.0, %v958
        %960 = vmatmul.bf16.gmra.mxu0 %v849
        %v961 = vpop.f32.mrf.mxu0
        %v962 = vadd.f32 0.0, %v961
        %v963 = vpop.f32.mrf.mxu0
        %v964 = vadd.f32 0.0, %v963
        %965 = vmatmul.bf16.gmra.mxu0 %v852
        %v966 = vpop.f32.mrf.mxu0
        %v967 = vadd.f32 0.0, %v966
        %v968 = vpop.f32.mrf.mxu0
        %v969 = vadd.f32 0.0, %v968
        %970 = vdwg.mxu0
        %971 = vst [vmem:[#allocation3] sm:$0xff] %v864
        %972 = vst [vmem:[#allocation3 + $0x8] sm:$0xff] %v903
        %973 = vst [vmem:[#allocation3 + $0x10] sm:$0xff] %v942
        %974 = vst [vmem:[#allocation3 + $0x18] sm:$0xff] %v866
        %975 = vst [vmem:[#allocation3 + $0x20] sm:$0xff] %v905
        %976 = vst [vmem:[#allocation3 + $0x28] sm:$0xff] %v944
        %977 = vst [vmem:[#allocation3 + $0x30] sm:$0xff] %v869
        %978 = vst [vmem:[#allocation3 + $0x38] sm:$0xff] %v908
        %979 = vst [vmem:[#allocation3 + $0x40] sm:$0xff] %v947
        %980 = vst [vmem:[#allocation3 + $0x48] sm:$0xff] %v871
        %981 = vst [vmem:[#allocation3 + $0x50] sm:$0xff] %v910
        %982 = vst [vmem:[#allocation3 + $0x58] sm:$0xff] %v949
        %983 = vst [vmem:[#allocation3 + $0x60] sm:$0xff] %v874
        %984 = vst [vmem:[#allocation3 + $0x68] sm:$0xff] %v913
        %985 = vst [vmem:[#allocation3 + $0x70] sm:$0xff] %v952
        %986 = vst [vmem:[#allocation3 + $0x78] sm:$0xff] %v876
        %987 = vst [vmem:[#allocation3 + $0x80] sm:$0xff] %v915
        %988 = vst [vmem:[#allocation3 + $0x88] sm:$0xff] %v954
        %989 = vst [vmem:[#allocation3 + $0x90] sm:$0xff] %v879
        %990 = vst [vmem:[#allocation3 + $0x98] sm:$0xff] %v918
        %991 = vst [vmem:[#allocation3 + $0xa0] sm:$0xff] %v957
        %992 = vst [vmem:[#allocation3 + $0xa8] sm:$0xff] %v881
        %993 = vst [vmem:[#allocation3 + $0xb0] sm:$0xff] %v920
        %994 = vst [vmem:[#allocation3 + $0xb8] sm:$0xff] %v959
        %995 = vst [vmem:[#allocation3 + $0xc0] sm:$0xff] %v884
        %996 = vst [vmem:[#allocation3 + $0xc8] sm:$0xff] %v923
        %997 = vst [vmem:[#allocation3 + $0xd0] sm:$0xff] %v962
        %998 = vst [vmem:[#allocation3 + $0xd8] sm:$0xff] %v886
        %999 = vst [vmem:[#allocation3 + $0xe0] sm:$0xff] %v925
        %1000 = vst [vmem:[#allocation3 + $0xe8] sm:$0xff] %v964
        %1001 = vst [vmem:[#allocation3 + $0xf0] sm:$0xff] %v889
        %1002 = vst [vmem:[#allocation3 + $0xf8] sm:$0xff] %v928
        %1003 = vst [vmem:[#allocation3 + $0x100] sm:$0xff] %v967
        %1004 = vst [vmem:[#allocation3 + $0x108] sm:$0xff] %v891
        %1005 = vst [vmem:[#allocation3 + $0x110] sm:$0xff] %v930
        %1006 = vst [vmem:[#allocation3 + $0x118] sm:$0xff] %v969
        %v1007 = vld [vmem:[#allocation3] sm:$0xff]
        %v1008 = vld [vmem:[#allocation3 + $0x8] sm:$0xff]
        %v1009 = vld [vmem:[#allocation3 + $0x10] sm:$0xff]
        %v1010 = vld [vmem:[#allocation3 + $0x18] sm:$0xff]
        %v1011 = vld [vmem:[#allocation3 + $0x20] sm:$0xff]
        %v1012 = vld [vmem:[#allocation3 + $0x28] sm:$0xff]
        %v1013 = vld [vmem:[#allocation3 + $0x30] sm:$0xff]
        %v1014 = vld [vmem:[#allocation3 + $0x38] sm:$0xff]
        %v1015 = vld [vmem:[#allocation3 + $0x40] sm:$0xff]
        %v1016 = vld [vmem:[#allocation3 + $0x48] sm:$0xff]
        %v1017 = vld [vmem:[#allocation3 + $0x50] sm:$0xff]
        %v1018 = vld [vmem:[#allocation3 + $0x58] sm:$0xff]
        %1023 = vrot.lane.b32.xlu0 %v1009, 1
        %v1024 = vpop.permute.xlu0 %1023
        %1025 = vrot.lane.b32.xlu0 %v1012, 1
        %v1026 = vpop.permute.xlu0 %1025
        %1027 = vrot.lane.b32.xlu0 %v1015, 1
        %v1028 = vpop.permute.xlu0 %1027
        %1029 = vrot.lane.b32.xlu0 %v1018, 1
        %v1030 = vpop.permute.xlu0 %1029
        %1043 = vrot.lane.b32.xlu0 %v1007, 1
        %v1044 = vpop.permute.xlu0 %1043
        %1045 = vrot.lane.b32.xlu0 %v1008, 1
        %v1046 = vpop.permute.xlu0 %1045
        %1047 = vrot.lane.b32.xlu0 %v1010, 1
        %v1048 = vpop.permute.xlu0 %1047
        %1049 = vrot.lane.b32.xlu0 %v1011, 1
        %v1050 = vpop.permute.xlu0 %1049
        %1051 = vrot.lane.b32.xlu0 %v1013, 1
        %v1052 = vpop.permute.xlu0 %1051
        %1053 = vrot.lane.b32.xlu0 %v1014, 1
        %v1054 = vpop.permute.xlu0 %1053
        %1055 = vrot.lane.b32.xlu0 %v1016, 1
        %v1056 = vpop.permute.xlu0 %1055
        %1057 = vrot.lane.b32.xlu0 %v1017, 1
        %v1058 = vpop.permute.xlu0 %1057
        %vm1059 = vcmask 7168
        %v1060 = vsel %vm1059, %v1044, %v1046
        %v1061 = vsel %vm1059, %v1046, %v1024
        %v1062 = vsel %vm1059, %v1048, %v1050
        %v1063 = vsel %vm1059, %v1050, %v1026
        %v1064 = vsel %vm1059, %v1052, %v1054
        %v1065 = vsel %vm1059, %v1054, %v1028
        %v1066 = vsel %vm1059, %v1056, %v1058
        %v1067 = vsel %vm1059, %v1058, %v1030
        %v1080 = vsel %vm1059, %v1024, %v1044
        %v1081 = vsel %vm1059, %v1026, %v1048
        %v1082 = vsel %vm1059, %v1028, %v1052
        %v1083 = vsel %vm1059, %v1030, %v1056
        %v1084 = vadd.f32 %v762, %v1080
        %v1085 = vadd.f32 %v763, %v1060
        %v1086 = vadd.f32 %v764, %v1061
        %v1087 = vadd.f32 %v765, %v1081
        %v1088 = vadd.f32 %v766, %v1062
        %v1089 = vadd.f32 %v767, %v1063
        %v1090 = vadd.f32 %v768, %v1082
        %v1091 = vadd.f32 %v769, %v1064
        %v1092 = vadd.f32 %v770, %v1065
        %v1093 = vadd.f32 %v771, %v1083
        %v1094 = vadd.f32 %v772, %v1066
        %v1095 = vadd.f32 %v773, %v1067
        %v1096 = vld [vmem:[#allocation3 + $0x60] sm:$0xff]
        %v1097 = vld [vmem:[#allocation3 + $0x68] sm:$0xff]
        %v1098 = vld [vmem:[#allocation3 + $0x70] sm:$0xff]
        %v1099 = vld [vmem:[#allocation3 + $0x78] sm:$0xff]
        %v1100 = vld [vmem:[#allocation3 + $0x80] sm:$0xff]
        %v1101 = vld [vmem:[#allocation3 + $0x88] sm:$0xff]
        %v1102 = vld [vmem:[#allocation3 + $0x90] sm:$0xff]
        %v1103 = vld [vmem:[#allocation3 + $0x98] sm:$0xff]
        %v1104 = vld [vmem:[#allocation3 + $0xa0] sm:$0xff]
        %v1105 = vld [vmem:[#allocation3 + $0xa8] sm:$0xff]
        %v1106 = vld [vmem:[#allocation3 + $0xb0] sm:$0xff]
        %v1107 = vld [vmem:[#allocation3 + $0xb8] sm:$0xff]
        %v1108 = vadd.f32 %v1084, %v1096
        %v1109 = vadd.f32 %v1085, %v1097
        %v1110 = vadd.f32 %v1086, %v1098
        %v1111 = vadd.f32 %v1087, %v1099
        %v1112 = vadd.f32 %v1088, %v1100
        %v1113 = vadd.f32 %v1089, %v1101
        %v1114 = vadd.f32 %v1090, %v1102
        %v1115 = vadd.f32 %v1091, %v1103
        %v1116 = vadd.f32 %v1092, %v1104
        %v1117 = vadd.f32 %v1093, %v1105
        %v1118 = vadd.f32 %v1094, %v1106
        %v1119 = vadd.f32 %v1095, %v1107
        %v1120 = vld [vmem:[#allocation3 + $0xc0] sm:$0xff]
        %v1121 = vld [vmem:[#allocation3 + $0xc8] sm:$0xff]
        %v1122 = vld [vmem:[#allocation3 + $0xd0] sm:$0xff]
        %v1123 = vld [vmem:[#allocation3 + $0xd8] sm:$0xff]
        %v1124 = vld [vmem:[#allocation3 + $0xe0] sm:$0xff]
        %v1125 = vld [vmem:[#allocation3 + $0xe8] sm:$0xff]
        %v1126 = vld [vmem:[#allocation3 + $0xf0] sm:$0xff]
        %v1127 = vld [vmem:[#allocation3 + $0xf8] sm:$0xff]
        %v1128 = vld [vmem:[#allocation3 + $0x100] sm:$0xff]
        %v1129 = vld [vmem:[#allocation3 + $0x108] sm:$0xff]
        %v1130 = vld [vmem:[#allocation3 + $0x110] sm:$0xff]
        %v1131 = vld [vmem:[#allocation3 + $0x118] sm:$0xff]
        %1144 = vrot.lane.b32.xlu0 %v1120, 127
        %v1145 = vpop.permute.xlu0 %1144
        %1146 = vrot.lane.b32.xlu0 %v1121, 127
        %v1147 = vpop.permute.xlu0 %1146
        %1148 = vrot.lane.b32.xlu0 %v1122, 127
        %v1149 = vpop.permute.xlu0 %1148
        %1150 = vrot.lane.b32.xlu0 %v1123, 127
        %v1151 = vpop.permute.xlu0 %1150
        %1152 = vrot.lane.b32.xlu0 %v1124, 127
        %v1153 = vpop.permute.xlu0 %1152
        %1154 = vrot.lane.b32.xlu0 %v1125, 127
        %v1155 = vpop.permute.xlu0 %1154
        %1156 = vrot.lane.b32.xlu0 %v1126, 127
        %v1157 = vpop.permute.xlu0 %1156
        %1158 = vrot.lane.b32.xlu0 %v1127, 127
        %v1159 = vpop.permute.xlu0 %1158
        %1160 = vrot.lane.b32.xlu0 %v1128, 127
        %v1161 = vpop.permute.xlu0 %1160
        %1162 = vrot.lane.b32.xlu0 %v1129, 127
        %v1163 = vpop.permute.xlu0 %1162
        %1164 = vrot.lane.b32.xlu0 %v1130, 127
        %v1165 = vpop.permute.xlu0 %1164
        %1166 = vrot.lane.b32.xlu0 %v1131, 127
        %v1167 = vpop.permute.xlu0 %1166
        %vm1168 = vcmask 1039360
        %v1169 = vsel %vm1168, %v1145, %v1147
        %v1170 = vsel %vm1168, %v1147, %v1149
        %v1171 = vsel %vm1168, %v1151, %v1153
        %v1172 = vsel %vm1168, %v1153, %v1155
        %v1173 = vsel %vm1168, %v1157, %v1159
        %v1174 = vsel %vm1168, %v1159, %v1161
        %v1175 = vsel %vm1168, %v1163, %v1165
        %v1176 = vsel %vm1168, %v1165, %v1167
        %v1193 = vsel %vm1168, %v1149, %v1145
        %v1194 = vsel %vm1168, %v1155, %v1151
        %v1195 = vsel %vm1168, %v1161, %v1157
        %v1196 = vsel %vm1168, %v1167, %v1163
        %v1197 = vadd.f32 %v1108, %v1169
        %v1198 = vadd.f32 %v1109, %v1170
        %v1199 = vadd.f32 %v1110, %v1193
        %v1200 = vadd.f32 %v1111, %v1171
        %v1201 = vadd.f32 %v1112, %v1172
        %v1202 = vadd.f32 %v1113, %v1194
        %v1203 = vadd.f32 %v1114, %v1173
        %v1204 = vadd.f32 %v1115, %v1174
        %v1205 = vadd.f32 %v1116, %v1195
        %v1206 = vadd.f32 %v1117, %v1175
        %v1207 = vadd.f32 %v1118, %v1176
        %v1208 = vadd.f32 %v1119, %v1196
        %v1209 = vld [vmem:[%s2 + $0xc0] sm:$0xf]
        %v1210 = vld [vmem:[%s2 + $0xc8] sm:$0xf]
        %v1211 = vld [vmem:[%s2 + $0xd0] sm:$0xf]
        %v1212 = vld [vmem:[%s2 + $0xd8] sm:$0xf]
        %v1213 = vld [vmem:[%s2 + $0xe0] sm:$0xf]
        %v1214 = vld [vmem:[%s2 + $0xe8] sm:$0xf]
        %v1215 = vld [vmem:[%s2 + $0xf0] sm:$0xf]
        %v1216 = vld [vmem:[%s2 + $0xf8] sm:$0xf]
        %v1217 = vld [vmem:[%s2 + $0x100] sm:$0xf]
        %v1218 = vld [vmem:[%s2 + $0x108] sm:$0xf]
        %v1219 = vld [vmem:[%s2 + $0x110] sm:$0xf]
        %v1220 = vld [vmem:[%s2 + $0x118] sm:$0xf]
        %v1221 = vld [vmem:[#allocation2] sm:$0xff]
        %v1222 = vld [vmem:[#allocation2 + $0x8] sm:$0xf]
        %v1223 = vld [vmem:[#allocation2 + $0xc] sm:$0xff]
        %v1224 = vld [vmem:[#allocation2 + $0x14] sm:$0xf]
        %v1237 = vunpack.c.l.b16 %v1209
        %v1238 = vunpack.c.l.b16 %v1210
        %v1239 = vunpack.c.l.b16 %v1211
        %v1240 = vunpack.c.l.b16 %v1212
        %v1241 = vunpack.c.l.b16 %v1213
        %v1242 = vunpack.c.l.b16 %v1214
        %v1243 = vunpack.c.l.b16 %v1215
        %v1244 = vunpack.c.l.b16 %v1216
        %v1245 = vunpack.c.l.b16 %v1217
        %v1246 = vunpack.c.l.b16 %v1218
        %v1247 = vunpack.c.l.b16 %v1219
        %v1248 = vunpack.c.l.b16 %v1220
        %v1249 = vpack.c.b16 %v1238, %v1237
        %v1250 = vpack.c.b16 %v1240, %v1239
        %v1251 = vpack.c.b16 %v1242, %v1241
        %v1252 = vpack.c.b16 %v1244, %v1243
        %v1253 = vpack.c.b16 %v1246, %v1245
        %v1254 = vpack.c.b16 %v1248, %v1247
        %v1259 = vunpack.c.l.b16 %v1221
        %v1260 = vunpack.c.h.b16 %v1221
        %v1261 = vunpack.c.l.b16 %v1222
        %v1262 = vunpack.c.l.b16 %v1223
        %v1263 = vunpack.c.h.b16 %v1223
        %v1264 = vunpack.c.l.b16 %v1224
        %v1265 = vpack.c.b16 %v1262, %v1259
        %v1266 = vpack.c.b16 %v1263, %v1260
        %v1267 = vpack.c.b16 %v1264, %v1261
        %v1272 = vsel %vm335, %v1249, 0
        %v1275 = vsel %vm335, %v1250, 0
        %v1278 = vsel %vm335, %v1251, 0
        %v1281 = vsel %vm335, %v1252, 0
        %v1284 = vsel %vm335, %v1253, 0
        %v1287 = vsel %vm335, %v1254, 0
        %1289 = vmatpush.bf16.msra.mxu0 0
        %1290 = vmatpush.bf16.msra.mxu0 0
        %1291 = vmatpush.bf16.msra.mxu0 0
        %1292 = vmatpush.bf16.msra.mxu0 0
        %1293 = vmatpush.bf16.msra.mxu0 0
        %1294 = vmatpush.bf16.msra.mxu0 0
        %1295 = vmatpush.bf16.msra.mxu0 0
        %1296 = vmatpush.bf16.msra.mxu0 %v1265
        %1297 = vmatmul.bf16.gmra.mxu0 %v1272
        %v1298 = vpop.f32.mrf.mxu0
        %v1299 = vadd.f32 0.0, %v1298
        %v1300 = vpop.f32.mrf.mxu0
        %v1301 = vadd.f32 0.0, %v1300
        %1302 = vmatmul.bf16.gmra.mxu0 %v1275
        %v1303 = vpop.f32.mrf.mxu0
        %v1304 = vadd.f32 0.0, %v1303
        %v1305 = vpop.f32.mrf.mxu0
        %v1306 = vadd.f32 0.0, %v1305
        %1307 = vmatmul.bf16.gmra.mxu0 %v1278
        %v1308 = vpop.f32.mrf.mxu0
        %v1309 = vadd.f32 0.0, %v1308
        %v1310 = vpop.f32.mrf.mxu0
        %v1311 = vadd.f32 0.0, %v1310
        %1312 = vmatmul.bf16.gmra.mxu0 %v1281
        %v1313 = vpop.f32.mrf.mxu0
        %v1314 = vadd.f32 0.0, %v1313
        %v1315 = vpop.f32.mrf.mxu0
        %v1316 = vadd.f32 0.0, %v1315
        %1317 = vmatmul.bf16.gmra.mxu0 %v1284
        %v1318 = vpop.f32.mrf.mxu0
        %v1319 = vadd.f32 0.0, %v1318
        %v1320 = vpop.f32.mrf.mxu0
        %v1321 = vadd.f32 0.0, %v1320
        %1322 = vmatmul.bf16.gmra.mxu0 %v1287
        %v1323 = vpop.f32.mrf.mxu0
        %v1324 = vadd.f32 0.0, %v1323
        %v1325 = vpop.f32.mrf.mxu0
        %v1326 = vadd.f32 0.0, %v1325
        %1327 = vdwg.mxu0
        %1328 = vmatpush.bf16.msra.mxu0 0
        %1329 = vmatpush.bf16.msra.mxu0 0
        %1330 = vmatpush.bf16.msra.mxu0 0
        %1331 = vmatpush.bf16.msra.mxu0 0
        %1332 = vmatpush.bf16.msra.mxu0 0
        %1333 = vmatpush.bf16.msra.mxu0 0
        %1334 = vmatpush.bf16.msra.mxu0 0
        %1335 = vmatpush.bf16.msra.mxu0 %v1266
        %1336 = vmatmul.bf16.gmra.mxu0 %v1272
        %v1337 = vpop.f32.mrf.mxu0
        %v1338 = vadd.f32 0.0, %v1337
        %v1339 = vpop.f32.mrf.mxu0
        %v1340 = vadd.f32 0.0, %v1339
        %1341 = vmatmul.bf16.gmra.mxu0 %v1275
        %v1342 = vpop.f32.mrf.mxu0
        %v1343 = vadd.f32 0.0, %v1342
        %v1344 = vpop.f32.mrf.mxu0
        %v1345 = vadd.f32 0.0, %v1344
        %1346 = vmatmul.bf16.gmra.mxu0 %v1278
        %v1347 = vpop.f32.mrf.mxu0
        %v1348 = vadd.f32 0.0, %v1347
        %v1349 = vpop.f32.mrf.mxu0
        %v1350 = vadd.f32 0.0, %v1349
        %1351 = vmatmul.bf16.gmra.mxu0 %v1281
        %v1352 = vpop.f32.mrf.mxu0
        %v1353 = vadd.f32 0.0, %v1352
        %v1354 = vpop.f32.mrf.mxu0
        %v1355 = vadd.f32 0.0, %v1354
        %1356 = vmatmul.bf16.gmra.mxu0 %v1284
        %v1357 = vpop.f32.mrf.mxu0
        %v1358 = vadd.f32 0.0, %v1357
        %v1359 = vpop.f32.mrf.mxu0
        %v1360 = vadd.f32 0.0, %v1359
        %1361 = vmatmul.bf16.gmra.mxu0 %v1287
        %v1362 = vpop.f32.mrf.mxu0
        %v1363 = vadd.f32 0.0, %v1362
        %v1364 = vpop.f32.mrf.mxu0
        %v1365 = vadd.f32 0.0, %v1364
        %1366 = vdwg.mxu0
        %1367 = vmatpush.bf16.msra.mxu0 0
        %1368 = vmatpush.bf16.msra.mxu0 0
        %1369 = vmatpush.bf16.msra.mxu0 0
        %1370 = vmatpush.bf16.msra.mxu0 0
        %1371 = vmatpush.bf16.msra.mxu0 0
        %1372 = vmatpush.bf16.msra.mxu0 0
        %1373 = vmatpush.bf16.msra.mxu0 0
        %1374 = vmatpush.bf16.msra.mxu0 %v1267
        %1375 = vmatmul.bf16.gmra.mxu0 %v1272
        %v1376 = vpop.f32.mrf.mxu0
        %v1377 = vadd.f32 0.0, %v1376
        %v1378 = vpop.f32.mrf.mxu0
        %v1379 = vadd.f32 0.0, %v1378
        %1380 = vmatmul.bf16.gmra.mxu0 %v1275
        %v1381 = vpop.f32.mrf.mxu0
        %v1382 = vadd.f32 0.0, %v1381
        %v1383 = vpop.f32.mrf.mxu0
        %v1384 = vadd.f32 0.0, %v1383
        %1385 = vmatmul.bf16.gmra.mxu0 %v1278
        %v1386 = vpop.f32.mrf.mxu0
        %v1387 = vadd.f32 0.0, %v1386
        %v1388 = vpop.f32.mrf.mxu0
        %v1389 = vadd.f32 0.0, %v1388
        %1390 = vmatmul.bf16.gmra.mxu0 %v1281
        %v1391 = vpop.f32.mrf.mxu0
        %v1392 = vadd.f32 0.0, %v1391
        %v1393 = vpop.f32.mrf.mxu0
        %v1394 = vadd.f32 0.0, %v1393
        %1395 = vmatmul.bf16.gmra.mxu0 %v1284
        %v1396 = vpop.f32.mrf.mxu0
        %v1397 = vadd.f32 0.0, %v1396
        %v1398 = vpop.f32.mrf.mxu0
        %v1399 = vadd.f32 0.0, %v1398
        %1400 = vmatmul.bf16.gmra.mxu0 %v1287
        %v1401 = vpop.f32.mrf.mxu0
        %v1402 = vadd.f32 0.0, %v1401
        %v1403 = vpop.f32.mrf.mxu0
        %v1404 = vadd.f32 0.0, %v1403
        %1405 = vdwg.mxu0
        %1406 = vst [vmem:[#allocation3] sm:$0xff] %v1299
        %1407 = vst [vmem:[#allocation3 + $0x8] sm:$0xff] %v1338
        %1408 = vst [vmem:[#allocation3 + $0x10] sm:$0xff] %v1377
        %1409 = vst [vmem:[#allocation3 + $0x18] sm:$0xff] %v1301
        %1410 = vst [vmem:[#allocation3 + $0x20] sm:$0xff] %v1340
        %1411 = vst [vmem:[#allocation3 + $0x28] sm:$0xff] %v1379
        %1412 = vst [vmem:[#allocation3 + $0x30] sm:$0xff] %v1304
        %1413 = vst [vmem:[#allocation3 + $0x38] sm:$0xff] %v1343
        %1414 = vst [vmem:[#allocation3 + $0x40] sm:$0xff] %v1382
        %1415 = vst [vmem:[#allocation3 + $0x48] sm:$0xff] %v1306
        %1416 = vst [vmem:[#allocation3 + $0x50] sm:$0xff] %v1345
        %1417 = vst [vmem:[#allocation3 + $0x58] sm:$0xff] %v1384
        %1418 = vst [vmem:[#allocation3 + $0x60] sm:$0xff] %v1309
        %1419 = vst [vmem:[#allocation3 + $0x68] sm:$0xff] %v1348
        %1420 = vst [vmem:[#allocation3 + $0x70] sm:$0xff] %v1387
        %1421 = vst [vmem:[#allocation3 + $0x78] sm:$0xff] %v1311
        %1422 = vst [vmem:[#allocation3 + $0x80] sm:$0xff] %v1350
        %1423 = vst [vmem:[#allocation3 + $0x88] sm:$0xff] %v1389
        %1424 = vst [vmem:[#allocation3 + $0x90] sm:$0xff] %v1314
        %1425 = vst [vmem:[#allocation3 + $0x98] sm:$0xff] %v1353
        %1426 = vst [vmem:[#allocation3 + $0xa0] sm:$0xff] %v1392
        %1427 = vst [vmem:[#allocation3 + $0xa8] sm:$0xff] %v1316
        %1428 = vst [vmem:[#allocation3 + $0xb0] sm:$0xff] %v1355
        %1429 = vst [vmem:[#allocation3 + $0xb8] sm:$0xff] %v1394
        %1430 = vst [vmem:[#allocation3 + $0xc0] sm:$0xff] %v1319
        %1431 = vst [vmem:[#allocation3 + $0xc8] sm:$0xff] %v1358
        %1432 = vst [vmem:[#allocation3 + $0xd0] sm:$0xff] %v1397
        %1433 = vst [vmem:[#allocation3 + $0xd8] sm:$0xff] %v1321
        %1434 = vst [vmem:[#allocation3 + $0xe0] sm:$0xff] %v1360
        %1435 = vst [vmem:[#allocation3 + $0xe8] sm:$0xff] %v1399
        %1436 = vst [vmem:[#allocation3 + $0xf0] sm:$0xff] %v1324
        %1437 = vst [vmem:[#allocation3 + $0xf8] sm:$0xff] %v1363
        %1438 = vst [vmem:[#allocation3 + $0x100] sm:$0xff] %v1402
        %1439 = vst [vmem:[#allocation3 + $0x108] sm:$0xff] %v1326
        %1440 = vst [vmem:[#allocation3 + $0x110] sm:$0xff] %v1365
        %1441 = vst [vmem:[#allocation3 + $0x118] sm:$0xff] %v1404
        %v1442 = vld [vmem:[#allocation3] sm:$0xff]
        %v1443 = vld [vmem:[#allocation3 + $0x8] sm:$0xff]
        %v1444 = vld [vmem:[#allocation3 + $0x10] sm:$0xff]
        %v1445 = vld [vmem:[#allocation3 + $0x18] sm:$0xff]
        %v1446 = vld [vmem:[#allocation3 + $0x20] sm:$0xff]
        %v1447 = vld [vmem:[#allocation3 + $0x28] sm:$0xff]
        %v1448 = vld [vmem:[#allocation3 + $0x30] sm:$0xff]
        %v1449 = vld [vmem:[#allocation3 + $0x38] sm:$0xff]
        %v1450 = vld [vmem:[#allocation3 + $0x40] sm:$0xff]
        %v1451 = vld [vmem:[#allocation3 + $0x48] sm:$0xff]
        %v1452 = vld [vmem:[#allocation3 + $0x50] sm:$0xff]
        %v1453 = vld [vmem:[#allocation3 + $0x58] sm:$0xff]
        %1466 = vrot.lane.b32.xlu0 %v1442, 111
        %v1467 = vpop.permute.xlu0 %1466
        %1468 = vrot.lane.b32.xlu0 %v1443, 111
        %v1469 = vpop.permute.xlu0 %1468
        %1470 = vrot.lane.b32.xlu0 %v1444, 111
        %v1471 = vpop.permute.xlu0 %1470
        %1472 = vrot.lane.b32.xlu0 %v1445, 111
        %v1473 = vpop.permute.xlu0 %1472
        %1474 = vrot.lane.b32.xlu0 %v1446, 111
        %v1475 = vpop.permute.xlu0 %1474
        %1476 = vrot.lane.b32.xlu0 %v1447, 111
        %v1477 = vpop.permute.xlu0 %1476
        %1478 = vrot.lane.b32.xlu0 %v1448, 111
        %v1479 = vpop.permute.xlu0 %1478
        %1480 = vrot.lane.b32.xlu0 %v1449, 111
        %v1481 = vpop.permute.xlu0 %1480
        %1482 = vrot.lane.b32.xlu0 %v1450, 111
        %v1483 = vpop.permute.xlu0 %1482
        %1484 = vrot.lane.b32.xlu0 %v1451, 111
        %v1485 = vpop.permute.xlu0 %1484
        %1486 = vrot.lane.b32.xlu0 %v1452, 111
        %v1487 = vpop.permute.xlu0 %1486
        %1488 = vrot.lane.b32.xlu0 %v1453, 111
        %v1489 = vpop.permute.xlu0 %1488
        %vm1490 = vcmask 908288
        %v1491 = vsel %vm1490, %v1467, %v1469
        %v1492 = vsel %vm1490, %v1469, %v1471
        %v1493 = vsel %vm1490, %v1473, %v1475
        %v1494 = vsel %vm1490, %v1475, %v1477
        %v1495 = vsel %vm1490, %v1479, %v1481
        %v1496 = vsel %vm1490, %v1481, %v1483
        %v1497 = vsel %vm1490, %v1485, %v1487
        %v1498 = vsel %vm1490, %v1487, %v1489
        %v1515 = vsel %vm1490, %v1471, %v1467
        %v1516 = vsel %vm1490, %v1477, %v1473
        %v1517 = vsel %vm1490, %v1483, %v1479
        %v1518 = vsel %vm1490, %v1489, %v1485
        %v1519 = vadd.f32 %v1197, %v1491
        %v1520 = vadd.f32 %v1198, %v1492
        %v1521 = vadd.f32 %v1199, %v1515
        %v1522 = vadd.f32 %v1200, %v1493
        %v1523 = vadd.f32 %v1201, %v1494
        %v1524 = vadd.f32 %v1202, %v1516
        %v1525 = vadd.f32 %v1203, %v1495
        %v1526 = vadd.f32 %v1204, %v1496
        %v1527 = vadd.f32 %v1205, %v1517
        %v1528 = vadd.f32 %v1206, %v1497
        %v1529 = vadd.f32 %v1207, %v1498
        %v1530 = vadd.f32 %v1208, %v1518
        %v1531 = vld [vmem:[#allocation3 + $0x60] sm:$0xff]
        %v1532 = vld [vmem:[#allocation3 + $0x68] sm:$0xff]
        %v1533 = vld [vmem:[#allocation3 + $0x70] sm:$0xff]
        %v1534 = vld [vmem:[#allocation3 + $0x78] sm:$0xff]
        %v1535 = vld [vmem:[#allocation3 + $0x80] sm:$0xff]
        %v1536 = vld [vmem:[#allocation3 + $0x88] sm:$0xff]
        %v1537 = vld [vmem:[#allocation3 + $0x90] sm:$0xff]
        %v1538 = vld [vmem:[#allocation3 + $0x98] sm:$0xff]
        %v1539 = vld [vmem:[#allocation3 + $0xa0] sm:$0xff]
        %v1540 = vld [vmem:[#allocation3 + $0xa8] sm:$0xff]
        %v1541 = vld [vmem:[#allocation3 + $0xb0] sm:$0xff]
        %v1542 = vld [vmem:[#allocation3 + $0xb8] sm:$0xff]
        %1555 = vrot.lane.b32.xlu0 %v1531, 110
        %v1556 = vpop.permute.xlu0 %1555
        %1557 = vrot.lane.b32.xlu0 %v1532, 110
        %v1558 = vpop.permute.xlu0 %1557
        %1559 = vrot.lane.b32.xlu0 %v1533, 110
        %v1560 = vpop.permute.xlu0 %1559
        %1561 = vrot.lane.b32.xlu0 %v1534, 110
        %v1562 = vpop.permute.xlu0 %1561
        %1563 = vrot.lane.b32.xlu0 %v1535, 110
        %v1564 = vpop.permute.xlu0 %1563
        %1565 = vrot.lane.b32.xlu0 %v1536, 110
        %v1566 = vpop.permute.xlu0 %1565
        %1567 = vrot.lane.b32.xlu0 %v1537, 110
        %v1568 = vpop.permute.xlu0 %1567
        %1569 = vrot.lane.b32.xlu0 %v1538, 110
        %v1570 = vpop.permute.xlu0 %1569
        %1571 = vrot.lane.b32.xlu0 %v1539, 110
        %v1572 = vpop.permute.xlu0 %1571
        %1573 = vrot.lane.b32.xlu0 %v1540, 110
        %v1574 = vpop.permute.xlu0 %1573
        %1575 = vrot.lane.b32.xlu0 %v1541, 110
        %v1576 = vpop.permute.xlu0 %1575
        %1577 = vrot.lane.b32.xlu0 %v1542, 110
        %v1578 = vpop.permute.xlu0 %1577
        %vm1579 = vcmask 900096
        %v1580 = vsel %vm1579, %v1556, %v1558
        %v1581 = vsel %vm1579, %v1558, %v1560
        %v1582 = vsel %vm1579, %v1562, %v1564
        %v1583 = vsel %vm1579, %v1564, %v1566
        %v1584 = vsel %vm1579, %v1568, %v1570
        %v1585 = vsel %vm1579, %v1570, %v1572
        %v1586 = vsel %vm1579, %v1574, %v1576
        %v1587 = vsel %vm1579, %v1576, %v1578
        %v1604 = vsel %vm1579, %v1560, %v1556
        %v1605 = vsel %vm1579, %v1566, %v1562
        %v1606 = vsel %vm1579, %v1572, %v1568
        %v1607 = vsel %vm1579, %v1578, %v1574
        %v1608 = vadd.f32 %v1519, %v1580
        %v1609 = vadd.f32 %v1520, %v1581
        %v1610 = vadd.f32 %v1521, %v1604
        %v1611 = vadd.f32 %v1522, %v1582
        %v1612 = vadd.f32 %v1523, %v1583
        %v1613 = vadd.f32 %v1524, %v1605
        %v1614 = vadd.f32 %v1525, %v1584
        %v1615 = vadd.f32 %v1526, %v1585
        %v1616 = vadd.f32 %v1527, %v1606
        %v1617 = vadd.f32 %v1528, %v1586
        %v1618 = vadd.f32 %v1529, %v1587
        %v1619 = vadd.f32 %v1530, %v1607
        %v1620 = vld [vmem:[#allocation3 + $0xc0] sm:$0xff]
        %v1621 = vld [vmem:[#allocation3 + $0xc8] sm:$0xff]
        %v1622 = vld [vmem:[#allocation3 + $0xd0] sm:$0xff]
        %v1623 = vld [vmem:[#allocation3 + $0xd8] sm:$0xff]
        %v1624 = vld [vmem:[#allocation3 + $0xe0] sm:$0xff]
        %v1625 = vld [vmem:[#allocation3 + $0xe8] sm:$0xff]
        %v1626 = vld [vmem:[#allocation3 + $0xf0] sm:$0xff]
        %v1627 = vld [vmem:[#allocation3 + $0xf8] sm:$0xff]
        %v1628 = vld [vmem:[#allocation3 + $0x100] sm:$0xff]
        %v1629 = vld [vmem:[#allocation3 + $0x108] sm:$0xff]
        %v1630 = vld [vmem:[#allocation3 + $0x110] sm:$0xff]
        %v1631 = vld [vmem:[#allocation3 + $0x118] sm:$0xff]
        %1644 = vrot.lane.b32.xlu0 %v1620, 109
        %v1645 = vpop.permute.xlu0 %1644
        %1646 = vrot.lane.b32.xlu0 %v1621, 109
        %v1647 = vpop.permute.xlu0 %1646
        %1648 = vrot.lane.b32.xlu0 %v1622, 109
        %v1649 = vpop.permute.xlu0 %1648
        %1650 = vrot.lane.b32.xlu0 %v1623, 109
        %v1651 = vpop.permute.xlu0 %1650
        %1652 = vrot.lane.b32.xlu0 %v1624, 109
        %v1653 = vpop.permute.xlu0 %1652
        %1654 = vrot.lane.b32.xlu0 %v1625, 109
        %v1655 = vpop.permute.xlu0 %1654
        %1656 = vrot.lane.b32.xlu0 %v1626, 109
        %v1657 = vpop.permute.xlu0 %1656
        %1658 = vrot.lane.b32.xlu0 %v1627, 109
        %v1659 = vpop.permute.xlu0 %1658
        %1660 = vrot.lane.b32.xlu0 %v1628, 109
        %v1661 = vpop.permute.xlu0 %1660
        %1662 = vrot.lane.b32.xlu0 %v1629, 109
        %v1663 = vpop.permute.xlu0 %1662
        %1664 = vrot.lane.b32.xlu0 %v1630, 109
        %v1665 = vpop.permute.xlu0 %1664
        %1666 = vrot.lane.b32.xlu0 %v1631, 109
        %v1667 = vpop.permute.xlu0 %1666
        %vm1668 = vcmask 891904
        %v1669 = vsel %vm1668, %v1645, %v1647
        %v1670 = vsel %vm1668, %v1647, %v1649
        %v1671 = vsel %vm1668, %v1651, %v1653
        %v1672 = vsel %vm1668, %v1653, %v1655
        %v1673 = vsel %vm1668, %v1657, %v1659
        %v1674 = vsel %vm1668, %v1659, %v1661
        %v1675 = vsel %vm1668, %v1663, %v1665
        %v1676 = vsel %vm1668, %v1665, %v1667
        %v1693 = vsel %vm1668, %v1649, %v1645
        %v1694 = vsel %vm1668, %v1655, %v1651
        %v1695 = vsel %vm1668, %v1661, %v1657
        %v1696 = vsel %vm1668, %v1667, %v1663
        %v1697 = vadd.f32 %v1608, %v1669
        %v1698 = vadd.f32 %v1609, %v1670
        %v1699 = vadd.f32 %v1610, %v1693
        %v1700 = vadd.f32 %v1611, %v1671
        %v1701 = vadd.f32 %v1612, %v1672
        %v1702 = vadd.f32 %v1613, %v1694
        %v1703 = vadd.f32 %v1614, %v1673
        %v1704 = vadd.f32 %v1615, %v1674
        %v1705 = vadd.f32 %v1616, %v1695
        %v1706 = vadd.f32 %v1617, %v1675
        %v1707 = vadd.f32 %v1618, %v1676
        %v1708 = vadd.f32 %v1619, %v1696
        %v1709 = vld [vmem:[%s3] sm:$0xff]
        %v1710 = vld [vmem:[%s3 + $0x8] sm:$0xff]
        %v1711 = vld [vmem:[%s3 + $0x10] sm:$0xff]
        %v1712 = vld [vmem:[%s3 + $0x18] sm:$0xff]
        %1714 = vset.pattern.permute.xlu0 0
        %1715 = vperm.xlu0 %1714, %v1709
        %v1716 = vpop.permute.xlu0 %1715
        %1719 = vset.pattern.permute.xlu0 0
        %1720 = vperm.xlu0 %1719, %v1710
        %v1721 = vpop.permute.xlu0 %1720
        %1724 = vset.pattern.permute.xlu0 0
        %1725 = vperm.xlu0 %1724, %v1711
        %v1726 = vpop.permute.xlu0 %1725
        %1729 = vset.pattern.permute.xlu0 0
        %1730 = vperm.xlu0 %1729, %v1712
        %v1731 = vpop.permute.xlu0 %1730
        %v1733 = vadd.f32 %v1697, %v1716
        %v1734 = vadd.f32 %v1698, %v1716
        %v1735 = vadd.f32 %v1699, %v1716
        %v1736 = vadd.f32 %v1700, %v1721
        %v1737 = vadd.f32 %v1701, %v1721
        %v1738 = vadd.f32 %v1702, %v1721
        %v1739 = vadd.f32 %v1703, %v1726
        %v1740 = vadd.f32 %v1704, %v1726
        %v1741 = vadd.f32 %v1705, %v1726
        %v1742 = vadd.f32 %v1706, %v1731
        %v1743 = vadd.f32 %v1707, %v1731
        %v1744 = vadd.f32 %v1708, %v1731
        %v1745 = vmax.f32 %v1733, 0.0
        %v1746 = vmax.f32 %v1734, 0.0
        %v1747 = vmax.f32 %v1735, 0.0
        %v1748 = vmax.f32 %v1736, 0.0
        %v1749 = vmax.f32 %v1737, 0.0
        %v1750 = vmax.f32 %v1738, 0.0
        %v1751 = vmax.f32 %v1739, 0.0
        %v1752 = vmax.f32 %v1740, 0.0
        %v1753 = vmax.f32 %v1741, 0.0
        %v1754 = vmax.f32 %v1742, 0.0
        %v1755 = vmax.f32 %v1743, 0.0
        %v1756 = vmax.f32 %v1744, 0.0
        %v1758 = vperm.slane %v251, 0
        %v1759 = vperm.slane %v251, 1
        %v1760 = vperm.slane %v251, 2
        %v1764 = vmul.f32 %v1745, %v1758
        %v1765 = vmul.f32 %v1746, %v1759
        %v1766 = vmul.f32 %v1747, %v1760
        %v1767 = vmul.f32 %v1748, %v1758
        %v1768 = vmul.f32 %v1749, %v1759
        %v1769 = vmul.f32 %v1750, %v1760
        %v1770 = vmul.f32 %v1751, %v1758
        %v1771 = vmul.f32 %v1752, %v1759
        %v1772 = vmul.f32 %v1753, %v1760
        %v1773 = vmul.f32 %v1754, %v1758
        %v1774 = vmul.f32 %v1755, %v1759
        %v1775 = vmul.f32 %v1756, %v1760
        %v1776 = vpack.c.bf16 %v1765, %v1764
        %v1777 = vpack.c.bf16 %v1766, %v1766
        %v1778 = vpack.c.bf16 %v1768, %v1767
        %v1779 = vpack.c.bf16 %v1769, %v1769
        %v1780 = vpack.c.bf16 %v1771, %v1770
        %v1781 = vpack.c.bf16 %v1772, %v1772
        %v1782 = vpack.c.bf16 %v1774, %v1773
        %v1783 = vpack.c.bf16 %v1775, %v1775
        %1784 = vst [vmem:[#allocation2 + $0x18] sm:$0xff] %v1776
        %1785 = vst [vmem:[#allocation2 + $0x20] sm:$0xf] %v1777
        %1786 = vst [vmem:[#allocation2 + $0x24] sm:$0xff] %v1778
        %1787 = vst [vmem:[#allocation2 + $0x2c] sm:$0xf] %v1779
        %1788 = vst [vmem:[#allocation2 + $0x30] sm:$0xff] %v1780
        %1789 = vst [vmem:[#allocation2 + $0x38] sm:$0xf] %v1781
        %1790 = vst [vmem:[#allocation2 + $0x3c] sm:$0xff] %v1782
        %1791 = vst [vmem:[#allocation2 + $0x44] sm:$0xf] %v1783
        %s1792 = scalar_lea.vmem %s2, 288
        %v1793 = vld [vmem:[%s1792] sm:$0xf]
        %v1794 = vld [vmem:[%s1792 + $0x8] sm:$0xf]
        %v1795 = vld [vmem:[%s1792 + $0x10] sm:$0xf]
        %v1796 = vld [vmem:[%s1792 + $0x18] sm:$0xf]
        %v1797 = vld [vmem:[%s1792 + $0x20] sm:$0xf]
        %v1798 = vld [vmem:[%s1792 + $0x28] sm:$0xf]
        %v1799 = vld [vmem:[%s1792 + $0x30] sm:$0xf]
        %v1800 = vld [vmem:[%s1792 + $0x38] sm:$0xf]
        %v1801 = vld [vmem:[%s1792 + $0x40] sm:$0xf]
        %v1802 = vld [vmem:[%s1792 + $0x48] sm:$0xf]
        %v1803 = vld [vmem:[%s1792 + $0x50] sm:$0xf]
        %v1804 = vld [vmem:[%s1792 + $0x58] sm:$0xf]
        %v1805 = vld [vmem:[#allocation2] sm:$0xff]
        %v1806 = vld [vmem:[#allocation2 + $0x8] sm:$0xf]
        %v1807 = vld [vmem:[#allocation2 + $0xc] sm:$0xff]
        %v1808 = vld [vmem:[#allocation2 + $0x14] sm:$0xf]
        %v1809 = vld [vmem:[#allocation2 + $0x18] sm:$0xff]
        %v1810 = vld [vmem:[#allocation2 + $0x20] sm:$0xf]
        %v1811 = vld [vmem:[#allocation2 + $0x24] sm:$0xff]
        %v1812 = vld [vmem:[#allocation2 + $0x2c] sm:$0xf]
        %v1813 = vld [vmem:[#allocation2 + $0x30] sm:$0xff]
        %v1814 = vld [vmem:[#allocation2 + $0x38] sm:$0xf]
        %v1815 = vld [vmem:[#allocation2 + $0x3c] sm:$0xff]
        %v1816 = vld [vmem:[#allocation2 + $0x44] sm:$0xf]
        %v1829 = vunpack.c.l.b16 %v1793
        %v1830 = vunpack.c.l.b16 %v1794
        %v1831 = vunpack.c.l.b16 %v1795
        %v1832 = vunpack.c.l.b16 %v1796
        %v1833 = vunpack.c.l.b16 %v1797
        %v1834 = vunpack.c.l.b16 %v1798
        %v1835 = vunpack.c.l.b16 %v1799
        %v1836 = vunpack.c.l.b16 %v1800
        %v1837 = vunpack.c.l.b16 %v1801
        %v1838 = vunpack.c.l.b16 %v1802
        %v1839 = vunpack.c.l.b16 %v1803
        %v1840 = vunpack.c.l.b16 %v1804
        %v1841 = vpack.c.b16 %v1830, %v1829
        %v1842 = vpack.c.b16 %v1832, %v1831
        %v1843 = vpack.c.b16 %v1834, %v1833
        %v1844 = vpack.c.b16 %v1836, %v1835
        %v1845 = vpack.c.b16 %v1838, %v1837
        %v1846 = vpack.c.b16 %v1840, %v1839
        %v1859 = vunpack.c.l.b16 %v1805
        %v1860 = vunpack.c.h.b16 %v1805
        %v1861 = vunpack.c.l.b16 %v1806
        %v1862 = vunpack.c.l.b16 %v1807
        %v1863 = vunpack.c.h.b16 %v1807
        %v1864 = vunpack.c.l.b16 %v1808
        %v1865 = vunpack.c.l.b16 %v1809
        %v1866 = vunpack.c.h.b16 %v1809
        %v1867 = vunpack.c.l.b16 %v1810
        %v1868 = vunpack.c.l.b16 %v1811
        %v1869 = vunpack.c.h.b16 %v1811
        %v1870 = vunpack.c.l.b16 %v1812
        %v1871 = vunpack.c.l.b16 %v1813
        %v1872 = vunpack.c.h.b16 %v1813
        %v1873 = vunpack.c.l.b16 %v1814
        %v1874 = vunpack.c.l.b16 %v1815
        %v1875 = vunpack.c.h.b16 %v1815
        %v1876 = vunpack.c.l.b16 %v1816
        %v1877 = vpack.c.b16 %v1862, %v1859
        %v1878 = vpack.c.b16 %v1863, %v1860
        %v1879 = vpack.c.b16 %v1864, %v1861
        %v1880 = vpack.c.b16 %v1868, %v1865
        %v1881 = vpack.c.b16 %v1869, %v1866
        %v1882 = vpack.c.b16 %v1870, %v1867
        %v1883 = vpack.c.b16 %v1874, %v1871
        %v1884 = vpack.c.b16 %v1875, %v1872
        %v1885 = vpack.c.b16 %v1876, %v1873
        %vm1895 = vcmask 392192
        %v1897 = vsel %vm1895, %v1841, 0
        %v1900 = vsel %vm1895, %v1842, 0
        %v1903 = vsel %vm1895, %v1843, 0
        %v1906 = vsel %vm1895, %v1844, 0
        %v1909 = vsel %vm1895, %v1845, 0
        %v1912 = vsel %vm1895, %v1846, 0
        %1914 = vmatpush.bf16.msra.mxu0 0
        %1915 = vmatpush.bf16.msra.mxu0 0
        %1916 = vmatpush.bf16.msra.mxu0 0
        %1917 = vmatpush.bf16.msra.mxu0 0
        %1918 = vmatpush.bf16.msra.mxu0 0
        %1919 = vmatpush.bf16.msra.mxu0 %v1883
        %1920 = vmatpush.bf16.msra.mxu0 %v1880
        %1921 = vmatpush.bf16.msra.mxu0 %v1877
        %1922 = vmatmul.bf16.gmra.mxu0 %v1897
        %v1923 = vpop.f32.mrf.mxu0
        %v1924 = vadd.f32 0.0, %v1923
        %v1925 = vpop.f32.mrf.mxu0
        %v1926 = vadd.f32 0.0, %v1925
        %1927 = vmatmul.bf16.gmra.mxu0 %v1900
        %v1928 = vpop.f32.mrf.mxu0
        %v1929 = vadd.f32 0.0, %v1928
        %v1930 = vpop.f32.mrf.mxu0
        %v1931 = vadd.f32 0.0, %v1930
        %1932 = vmatmul.bf16.gmra.mxu0 %v1903
        %v1933 = vpop.f32.mrf.mxu0
        %v1934 = vadd.f32 0.0, %v1933
        %v1935 = vpop.f32.mrf.mxu0
        %v1936 = vadd.f32 0.0, %v1935
        %1937 = vmatmul.bf16.gmra.mxu0 %v1906
        %v1938 = vpop.f32.mrf.mxu0
        %v1939 = vadd.f32 0.0, %v1938
        %v1940 = vpop.f32.mrf.mxu0
        %v1941 = vadd.f32 0.0, %v1940
        %1942 = vmatmul.bf16.gmra.mxu0 %v1909
        %v1943 = vpop.f32.mrf.mxu0
        %v1944 = vadd.f32 0.0, %v1943
        %v1945 = vpop.f32.mrf.mxu0
        %v1946 = vadd.f32 0.0, %v1945
        %1947 = vmatmul.bf16.gmra.mxu0 %v1912
        %v1948 = vpop.f32.mrf.mxu0
        %v1949 = vadd.f32 0.0, %v1948
        %v1950 = vpop.f32.mrf.mxu0
        %v1951 = vadd.f32 0.0, %v1950
        %1952 = vdwg.mxu0
        %1953 = vmatpush.bf16.msra.mxu0 0
        %1954 = vmatpush.bf16.msra.mxu0 0
        %1955 = vmatpush.bf16.msra.mxu0 0
        %1956 = vmatpush.bf16.msra.mxu0 0
        %1957 = vmatpush.bf16.msra.mxu0 0
        %1958 = vmatpush.bf16.msra.mxu0 %v1884
        %1959 = vmatpush.bf16.msra.mxu0 %v1881
        %1960 = vmatpush.bf16.msra.mxu0 %v1878
        %1961 = vmatmul.bf16.gmra.mxu0 %v1897
        %v1962 = vpop.f32.mrf.mxu0
        %v1963 = vadd.f32 0.0, %v1962
        %v1964 = vpop.f32.mrf.mxu0
        %v1965 = vadd.f32 0.0, %v1964
        %1966 = vmatmul.bf16.gmra.mxu0 %v1900
        %v1967 = vpop.f32.mrf.mxu0
        %v1968 = vadd.f32 0.0, %v1967
        %v1969 = vpop.f32.mrf.mxu0
        %v1970 = vadd.f32 0.0, %v1969
        %1971 = vmatmul.bf16.gmra.mxu0 %v1903
        %v1972 = vpop.f32.mrf.mxu0
        %v1973 = vadd.f32 0.0, %v1972
        %v1974 = vpop.f32.mrf.mxu0
        %v1975 = vadd.f32 0.0, %v1974
        %1976 = vmatmul.bf16.gmra.mxu0 %v1906
        %v1977 = vpop.f32.mrf.mxu0
        %v1978 = vadd.f32 0.0, %v1977
        %v1979 = vpop.f32.mrf.mxu0
        %v1980 = vadd.f32 0.0, %v1979
        %1981 = vmatmul.bf16.gmra.mxu0 %v1909
        %v1982 = vpop.f32.mrf.mxu0
        %v1983 = vadd.f32 0.0, %v1982
        %v1984 = vpop.f32.mrf.mxu0
        %v1985 = vadd.f32 0.0, %v1984
        %1986 = vmatmul.bf16.gmra.mxu0 %v1912
        %v1987 = vpop.f32.mrf.mxu0
        %v1988 = vadd.f32 0.0, %v1987
        %v1989 = vpop.f32.mrf.mxu0
        %v1990 = vadd.f32 0.0, %v1989
        %1991 = vdwg.mxu0
        %1992 = vmatpush.bf16.msra.mxu0 0
        %1993 = vmatpush.bf16.msra.mxu0 0
        %1994 = vmatpush.bf16.msra.mxu0 0
        %1995 = vmatpush.bf16.msra.mxu0 0
        %1996 = vmatpush.bf16.msra.mxu0 0
        %1997 = vmatpush.bf16.msra.mxu0 %v1885
        %1998 = vmatpush.bf16.msra.mxu0 %v1882
        %1999 = vmatpush.bf16.msra.mxu0 %v1879
        %2000 = vmatmul.bf16.gmra.mxu0 %v1897
        %v2001 = vpop.f32.mrf.mxu0
        %v2002 = vadd.f32 0.0, %v2001
        %v2003 = vpop.f32.mrf.mxu0
        %v2004 = vadd.f32 0.0, %v2003
        %2005 = vmatmul.bf16.gmra.mxu0 %v1900
        %v2006 = vpop.f32.mrf.mxu0
        %v2007 = vadd.f32 0.0, %v2006
        %v2008 = vpop.f32.mrf.mxu0
        %v2009 = vadd.f32 0.0, %v2008
        %2010 = vmatmul.bf16.gmra.mxu0 %v1903
        %v2011 = vpop.f32.mrf.mxu0
        %v2012 = vadd.f32 0.0, %v2011
        %v2013 = vpop.f32.mrf.mxu0
        %v2014 = vadd.f32 0.0, %v2013
        %2015 = vmatmul.bf16.gmra.mxu0 %v1906
        %v2016 = vpop.f32.mrf.mxu0
        %v2017 = vadd.f32 0.0, %v2016
        %v2018 = vpop.f32.mrf.mxu0
        %v2019 = vadd.f32 0.0, %v2018
        %2020 = vmatmul.bf16.gmra.mxu0 %v1909
        %v2021 = vpop.f32.mrf.mxu0
        %v2022 = vadd.f32 0.0, %v2021
        %v2023 = vpop.f32.mrf.mxu0
        %v2024 = vadd.f32 0.0, %v2023
        %2025 = vmatmul.bf16.gmra.mxu0 %v1912
        %v2026 = vpop.f32.mrf.mxu0
        %v2027 = vadd.f32 0.0, %v2026
        %v2028 = vpop.f32.mrf.mxu0
        %v2029 = vadd.f32 0.0, %v2028
        %2030 = vdwg.mxu0
        %2031 = vst [vmem:[#allocation3] sm:$0xff] %v1924
        %2032 = vst [vmem:[#allocation3 + $0x8] sm:$0xff] %v1963
        %2033 = vst [vmem:[#allocation3 + $0x10] sm:$0xff] %v2002
        %2034 = vst [vmem:[#allocation3 + $0x18] sm:$0xff] %v1926
        %2035 = vst [vmem:[#allocation3 + $0x20] sm:$0xff] %v1965
        %2036 = vst [vmem:[#allocation3 + $0x28] sm:$0xff] %v2004
        %2037 = vst [vmem:[#allocation3 + $0x30] sm:$0xff] %v1929
        %2038 = vst [vmem:[#allocation3 + $0x38] sm:$0xff] %v1968
        %2039 = vst [vmem:[#allocation3 + $0x40] sm:$0xff] %v2007
        %2040 = vst [vmem:[#allocation3 + $0x48] sm:$0xff] %v1931
        %2041 = vst [vmem:[#allocation3 + $0x50] sm:$0xff] %v1970
        %2042 = vst [vmem:[#allocation3 + $0x58] sm:$0xff] %v2009
        %2043 = vst [vmem:[#allocation3 + $0x60] sm:$0xff] %v1934
        %2044 = vst [vmem:[#allocation3 + $0x68] sm:$0xff] %v1973
        %2045 = vst [vmem:[#allocation3 + $0x70] sm:$0xff] %v2012
        %2046 = vst [vmem:[#allocation3 + $0x78] sm:$0xff] %v1936
        %2047 = vst [vmem:[#allocation3 + $0x80] sm:$0xff] %v1975
        %2048 = vst [vmem:[#allocation3 + $0x88] sm:$0xff] %v2014
        %2049 = vst [vmem:[#allocation3 + $0x90] sm:$0xff] %v1939
        %2050 = vst [vmem:[#allocation3 + $0x98] sm:$0xff] %v1978
        %2051 = vst [vmem:[#allocation3 + $0xa0] sm:$0xff] %v2017
        %2052 = vst [vmem:[#allocation3 + $0xa8] sm:$0xff] %v1941
        %2053 = vst [vmem:[#allocation3 + $0xb0] sm:$0xff] %v1980
        %2054 = vst [vmem:[#allocation3 + $0xb8] sm:$0xff] %v2019
        %2055 = vst [vmem:[#allocation3 + $0xc0] sm:$0xff] %v1944
        %2056 = vst [vmem:[#allocation3 + $0xc8] sm:$0xff] %v1983
        %2057 = vst [vmem:[#allocation3 + $0xd0] sm:$0xff] %v2022
        %2058 = vst [vmem:[#allocation3 + $0xd8] sm:$0xff] %v1946
        %2059 = vst [vmem:[#allocation3 + $0xe0] sm:$0xff] %v1985
        %2060 = vst [vmem:[#allocation3 + $0xe8] sm:$0xff] %v2024
        %2061 = vst [vmem:[#allocation3 + $0xf0] sm:$0xff] %v1949
        %2062 = vst [vmem:[#allocation3 + $0xf8] sm:$0xff] %v1988
        %2063 = vst [vmem:[#allocation3 + $0x100] sm:$0xff] %v2027
        %2064 = vst [vmem:[#allocation3 + $0x108] sm:$0xff] %v1951
        %2065 = vst [vmem:[#allocation3 + $0x110] sm:$0xff] %v1990
        %2066 = vst [vmem:[#allocation3 + $0x118] sm:$0xff] %v2029
        %v2067 = vld [vmem:[#allocation3] sm:$0xff]
        %v2068 = vld [vmem:[#allocation3 + $0x8] sm:$0xff]
        %v2069 = vld [vmem:[#allocation3 + $0x10] sm:$0xff]
        %v2070 = vld [vmem:[#allocation3 + $0x18] sm:$0xff]
        %v2071 = vld [vmem:[#allocation3 + $0x20] sm:$0xff]
        %v2072 = vld [vmem:[#allocation3 + $0x28] sm:$0xff]
        %v2073 = vld [vmem:[#allocation3 + $0x30] sm:$0xff]
        %v2074 = vld [vmem:[#allocation3 + $0x38] sm:$0xff]
        %v2075 = vld [vmem:[#allocation3 + $0x40] sm:$0xff]
        %v2076 = vld [vmem:[#allocation3 + $0x48] sm:$0xff]
        %v2077 = vld [vmem:[#allocation3 + $0x50] sm:$0xff]
        %v2078 = vld [vmem:[#allocation3 + $0x58] sm:$0xff]
        %2083 = vrot.lane.b32.xlu0 %v2069, 19
        %v2084 = vpop.permute.xlu0 %2083
        %2085 = vrot.lane.b32.xlu0 %v2072, 19
        %v2086 = vpop.permute.xlu0 %2085
        %2087 = vrot.lane.b32.xlu0 %v2075, 19
        %v2088 = vpop.permute.xlu0 %2087
        %2089 = vrot.lane.b32.xlu0 %v2078, 19
        %v2090 = vpop.permute.xlu0 %2089
        %2103 = vrot.lane.b32.xlu0 %v2067, 19
        %v2104 = vpop.permute.xlu0 %2103
        %2105 = vrot.lane.b32.xlu0 %v2068, 19
        %v2106 = vpop.permute.xlu0 %2105
        %2107 = vrot.lane.b32.xlu0 %v2070, 19
        %v2108 = vpop.permute.xlu0 %2107
        %2109 = vrot.lane.b32.xlu0 %v2071, 19
        %v2110 = vpop.permute.xlu0 %2109
        %2111 = vrot.lane.b32.xlu0 %v2073, 19
        %v2112 = vpop.permute.xlu0 %2111
        %2113 = vrot.lane.b32.xlu0 %v2074, 19
        %v2114 = vpop.permute.xlu0 %2113
        %2115 = vrot.lane.b32.xlu0 %v2076, 19
        %v2116 = vpop.permute.xlu0 %2115
        %2117 = vrot.lane.b32.xlu0 %v2077, 19
        %v2118 = vpop.permute.xlu0 %2117
        %v2119 = vsel %vm559, %v2104, %v2106
        %v2120 = vsel %vm559, %v2106, %v2084
        %v2121 = vsel %vm559, %v2108, %v2110
        %v2122 = vsel %vm559, %v2110, %v2086
        %v2123 = vsel %vm559, %v2112, %v2114
        %v2124 = vsel %vm559, %v2114, %v2088
        %v2125 = vsel %vm559, %v2116, %v2118
        %v2126 = vsel %vm559, %v2118, %v2090
        %v2139 = vsel %vm559, %v2084, %v2104
        %v2140 = vsel %vm559, %v2086, %v2108
        %v2141 = vsel %vm559, %v2088, %v2112
        %v2142 = vsel %vm559, %v2090, %v2116
        %v2143 = vadd.f32 %v2139, 0.0
        %v2144 = vadd.f32 %v2119, 0.0
        %v2145 = vadd.f32 %v2120, 0.0
        %v2146 = vadd.f32 %v2140, 0.0
        %v2147 = vadd.f32 %v2121, 0.0
        %v2148 = vadd.f32 %v2122, 0.0
        %v2149 = vadd.f32 %v2141, 0.0
        %v2150 = vadd.f32 %v2123, 0.0
        %v2151 = vadd.f32 %v2124, 0.0
        %v2152 = vadd.f32 %v2142, 0.0
        %v2153 = vadd.f32 %v2125, 0.0
        %v2154 = vadd.f32 %v2126, 0.0
        %v2155 = vld [vmem:[#allocation3 + $0x60] sm:$0xff]
        %v2156 = vld [vmem:[#allocation3 + $0x68] sm:$0xff]
        %v2157 = vld [vmem:[#allocation3 + $0x70] sm:$0xff]
        %v2158 = vld [vmem:[#allocation3 + $0x78] sm:$0xff]
        %v2159 = vld [vmem:[#allocation3 + $0x80] sm:$0xff]
        %v2160 = vld [vmem:[#allocation3 + $0x88] sm:$0xff]
        %v2161 = vld [vmem:[#allocation3 + $0x90] sm:$0xff]
        %v2162 = vld [vmem:[#allocation3 + $0x98] sm:$0xff]
        %v2163 = vld [vmem:[#allocation3 + $0xa0] sm:$0xff]
        %v2164 = vld [vmem:[#allocation3 + $0xa8] sm:$0xff]
        %v2165 = vld [vmem:[#allocation3 + $0xb0] sm:$0xff]
        %v2166 = vld [vmem:[#allocation3 + $0xb8] sm:$0xff]
        %2171 = vrot.lane.b32.xlu0 %v2157, 18
        %v2172 = vpop.permute.xlu0 %2171
        %2173 = vrot.lane.b32.xlu0 %v2160, 18
        %v2174 = vpop.permute.xlu0 %2173
        %2175 = vrot.lane.b32.xlu0 %v2163, 18
        %v2176 = vpop.permute.xlu0 %2175
        %2177 = vrot.lane.b32.xlu0 %v2166, 18
        %v2178 = vpop.permute.xlu0 %2177
        %2191 = vrot.lane.b32.xlu0 %v2155, 18
        %v2192 = vpop.permute.xlu0 %2191
        %2193 = vrot.lane.b32.xlu0 %v2156, 18
        %v2194 = vpop.permute.xlu0 %2193
        %2195 = vrot.lane.b32.xlu0 %v2158, 18
        %v2196 = vpop.permute.xlu0 %2195
        %2197 = vrot.lane.b32.xlu0 %v2159, 18
        %v2198 = vpop.permute.xlu0 %2197
        %2199 = vrot.lane.b32.xlu0 %v2161, 18
        %v2200 = vpop.permute.xlu0 %2199
        %2201 = vrot.lane.b32.xlu0 %v2162, 18
        %v2202 = vpop.permute.xlu0 %2201
        %2203 = vrot.lane.b32.xlu0 %v2164, 18
        %v2204 = vpop.permute.xlu0 %2203
        %2205 = vrot.lane.b32.xlu0 %v2165, 18
        %v2206 = vpop.permute.xlu0 %2205
        %v2207 = vsel %vm648, %v2192, %v2194
        %v2208 = vsel %vm648, %v2194, %v2172
        %v2209 = vsel %vm648, %v2196, %v2198
        %v2210 = vsel %vm648, %v2198, %v2174
        %v2211 = vsel %vm648, %v2200, %v2202
        %v2212 = vsel %vm648, %v2202, %v2176
        %v2213 = vsel %vm648, %v2204, %v2206
        %v2214 = vsel %vm648, %v2206, %v2178
        %v2227 = vsel %vm648, %v2172, %v2192
        %v2228 = vsel %vm648, %v2174, %v2196
        %v2229 = vsel %vm648, %v2176, %v2200
        %v2230 = vsel %vm648, %v2178, %v2204
        %v2231 = vadd.f32 %v2143, %v2227
        %v2232 = vadd.f32 %v2144, %v2207
        %v2233 = vadd.f32 %v2145, %v2208
        %v2234 = vadd.f32 %v2146, %v2228
        %v2235 = vadd.f32 %v2147, %v2209
        %v2236 = vadd.f32 %v2148, %v2210
        %v2237 = vadd.f32 %v2149, %v2229
        %v2238 = vadd.f32 %v2150, %v2211
        %v2239 = vadd.f32 %v2151, %v2212
        %v2240 = vadd.f32 %v2152, %v2230
        %v2241 = vadd.f32 %v2153, %v2213
        %v2242 = vadd.f32 %v2154, %v2214
        %v2243 = vld [vmem:[#allocation3 + $0xc0] sm:$0xff]
        %v2244 = vld [vmem:[#allocation3 + $0xc8] sm:$0xff]
        %v2245 = vld [vmem:[#allocation3 + $0xd0] sm:$0xff]
        %v2246 = vld [vmem:[#allocation3 + $0xd8] sm:$0xff]
        %v2247 = vld [vmem:[#allocation3 + $0xe0] sm:$0xff]
        %v2248 = vld [vmem:[#allocation3 + $0xe8] sm:$0xff]
        %v2249 = vld [vmem:[#allocation3 + $0xf0] sm:$0xff]
        %v2250 = vld [vmem:[#allocation3 + $0xf8] sm:$0xff]
        %v2251 = vld [vmem:[#allocation3 + $0x100] sm:$0xff]
        %v2252 = vld [vmem:[#allocation3 + $0x108] sm:$0xff]
        %v2253 = vld [vmem:[#allocation3 + $0x110] sm:$0xff]
        %v2254 = vld [vmem:[#allocation3 + $0x118] sm:$0xff]
        %2259 = vrot.lane.b32.xlu0 %v2245, 17
        %v2260 = vpop.permute.xlu0 %2259
        %2261 = vrot.lane.b32.xlu0 %v2248, 17
        %v2262 = vpop.permute.xlu0 %2261
        %2263 = vrot.lane.b32.xlu0 %v2251, 17
        %v2264 = vpop.permute.xlu0 %2263
        %2265 = vrot.lane.b32.xlu0 %v2254, 17
        %v2266 = vpop.permute.xlu0 %2265
        %2279 = vrot.lane.b32.xlu0 %v2243, 17
        %v2280 = vpop.permute.xlu0 %2279
        %2281 = vrot.lane.b32.xlu0 %v2244, 17
        %v2282 = vpop.permute.xlu0 %2281
        %2283 = vrot.lane.b32.xlu0 %v2246, 17
        %v2284 = vpop.permute.xlu0 %2283
        %2285 = vrot.lane.b32.xlu0 %v2247, 17
        %v2286 = vpop.permute.xlu0 %2285
        %2287 = vrot.lane.b32.xlu0 %v2249, 17
        %v2288 = vpop.permute.xlu0 %2287
        %2289 = vrot.lane.b32.xlu0 %v2250, 17
        %v2290 = vpop.permute.xlu0 %2289
        %2291 = vrot.lane.b32.xlu0 %v2252, 17
        %v2292 = vpop.permute.xlu0 %2291
        %2293 = vrot.lane.b32.xlu0 %v2253, 17
        %v2294 = vpop.permute.xlu0 %2293
        %v2295 = vsel %vm737, %v2280, %v2282
        %v2296 = vsel %vm737, %v2282, %v2260
        %v2297 = vsel %vm737, %v2284, %v2286
        %v2298 = vsel %vm737, %v2286, %v2262
        %v2299 = vsel %vm737, %v2288, %v2290
        %v2300 = vsel %vm737, %v2290, %v2264
        %v2301 = vsel %vm737, %v2292, %v2294
        %v2302 = vsel %vm737, %v2294, %v2266
        %v2315 = vsel %vm737, %v2260, %v2280
        %v2316 = vsel %vm737, %v2262, %v2284
        %v2317 = vsel %vm737, %v2264, %v2288
        %v2318 = vsel %vm737, %v2266, %v2292
        %v2319 = vadd.f32 %v2231, %v2315
        %v2320 = vadd.f32 %v2232, %v2295
        %v2321 = vadd.f32 %v2233, %v2296
        %v2322 = vadd.f32 %v2234, %v2316
        %v2323 = vadd.f32 %v2235, %v2297
        %v2324 = vadd.f32 %v2236, %v2298
        %v2325 = vadd.f32 %v2237, %v2317
        %v2326 = vadd.f32 %v2238, %v2299
        %v2327 = vadd.f32 %v2239, %v2300
        %v2328 = vadd.f32 %v2240, %v2318
        %v2329 = vadd.f32 %v2241, %v2301
        %v2330 = vadd.f32 %v2242, %v2302
        %v2331 = vld [vmem:[%s1792 + $0x60] sm:$0xf]
        %v2332 = vld [vmem:[%s1792 + $0x68] sm:$0xf]
        %v2333 = vld [vmem:[%s1792 + $0x70] sm:$0xf]
        %v2334 = vld [vmem:[%s1792 + $0x78] sm:$0xf]
        %v2335 = vld [vmem:[%s1792 + $0x80] sm:$0xf]
        %v2336 = vld [vmem:[%s1792 + $0x88] sm:$0xf]
        %v2337 = vld [vmem:[%s1792 + $0x90] sm:$0xf]
        %v2338 = vld [vmem:[%s1792 + $0x98] sm:$0xf]
        %v2339 = vld [vmem:[%s1792 + $0xa0] sm:$0xf]
        %v2340 = vld [vmem:[%s1792 + $0xa8] sm:$0xf]
        %v2341 = vld [vmem:[%s1792 + $0xb0] sm:$0xf]
        %v2342 = vld [vmem:[%s1792 + $0xb8] sm:$0xf]
        %v2343 = vld [vmem:[#allocation2] sm:$0xff]
        %v2344 = vld [vmem:[#allocation2 + $0x8] sm:$0xf]
        %v2345 = vld [vmem:[#allocation2 + $0xc] sm:$0xff]
        %v2346 = vld [vmem:[#allocation2 + $0x14] sm:$0xf]
        %v2347 = vld [vmem:[#allocation2 + $0x18] sm:$0xff]
        %v2348 = vld [vmem:[#allocation2 + $0x20] sm:$0xf]
        %v2349 = vld [vmem:[#allocation2 + $0x24] sm:$0xff]
        %v2350 = vld [vmem:[#allocation2 + $0x2c] sm:$0xf]
        %v2351 = vld [vmem:[#allocation2 + $0x30] sm:$0xff]
        %v2352 = vld [vmem:[#allocation2 + $0x38] sm:$0xf]
        %v2353 = vld [vmem:[#allocation2 + $0x3c] sm:$0xff]
        %v2354 = vld [vmem:[#allocation2 + $0x44] sm:$0xf]
        %v2367 = vunpack.c.l.b16 %v2331
        %v2368 = vunpack.c.l.b16 %v2332
        %v2369 = vunpack.c.l.b16 %v2333
        %v2370 = vunpack.c.l.b16 %v2334
        %v2371 = vunpack.c.l.b16 %v2335
        %v2372 = vunpack.c.l.b16 %v2336
        %v2373 = vunpack.c.l.b16 %v2337
        %v2374 = vunpack.c.l.b16 %v2338
        %v2375 = vunpack.c.l.b16 %v2339
        %v2376 = vunpack.c.l.b16 %v2340
        %v2377 = vunpack.c.l.b16 %v2341
        %v2378 = vunpack.c.l.b16 %v2342
        %v2379 = vpack.c.b16 %v2368, %v2367
        %v2380 = vpack.c.b16 %v2370, %v2369
        %v2381 = vpack.c.b16 %v2372, %v2371
        %v2382 = vpack.c.b16 %v2374, %v2373
        %v2383 = vpack.c.b16 %v2376, %v2375
        %v2384 = vpack.c.b16 %v2378, %v2377
        %v2397 = vunpack.c.l.b16 %v2343
        %v2398 = vunpack.c.h.b16 %v2343
        %v2399 = vunpack.c.l.b16 %v2344
        %v2400 = vunpack.c.l.b16 %v2345
        %v2401 = vunpack.c.h.b16 %v2345
        %v2402 = vunpack.c.l.b16 %v2346
        %v2403 = vunpack.c.l.b16 %v2347
        %v2404 = vunpack.c.h.b16 %v2347
        %v2405 = vunpack.c.l.b16 %v2348
        %v2406 = vunpack.c.l.b16 %v2349
        %v2407 = vunpack.c.h.b16 %v2349
        %v2408 = vunpack.c.l.b16 %v2350
        %v2409 = vunpack.c.l.b16 %v2351
        %v2410 = vunpack.c.h.b16 %v2351
        %v2411 = vunpack.c.l.b16 %v2352
        %v2412 = vunpack.c.l.b16 %v2353
        %v2413 = vunpack.c.h.b16 %v2353
        %v2414 = vunpack.c.l.b16 %v2354
        %v2415 = vpack.c.b16 %v2400, %v2397
        %v2416 = vpack.c.b16 %v2401, %v2398
        %v2417 = vpack.c.b16 %v2402, %v2399
        %v2418 = vpack.c.b16 %v2406, %v2403
        %v2419 = vpack.c.b16 %v2407, %v2404
        %v2420 = vpack.c.b16 %v2408, %v2405
        %v2421 = vpack.c.b16 %v2412, %v2409
        %v2422 = vpack.c.b16 %v2413, %v2410
        %v2423 = vpack.c.b16 %v2414, %v2411
        %v2434 = vsel %vm1895, %v2379, 0
        %v2437 = vsel %vm1895, %v2380, 0
        %v2440 = vsel %vm1895, %v2381, 0
        %v2443 = vsel %vm1895, %v2382, 0
        %v2446 = vsel %vm1895, %v2383, 0
        %v2449 = vsel %vm1895, %v2384, 0
        %2451 = vmatpush.bf16.msra.mxu0 0
        %2452 = vmatpush.bf16.msra.mxu0 0
        %2453 = vmatpush.bf16.msra.mxu0 0
        %2454 = vmatpush.bf16.msra.mxu0 0
        %2455 = vmatpush.bf16.msra.mxu0 0
        %2456 = vmatpush.bf16.msra.mxu0 %v2421
        %2457 = vmatpush.bf16.msra.mxu0 %v2418
        %2458 = vmatpush.bf16.msra.mxu0 %v2415
        %2459 = vmatmul.bf16.gmra.mxu0 %v2434
        %v2460 = vpop.f32.mrf.mxu0
        %v2461 = vadd.f32 0.0, %v2460
        %v2462 = vpop.f32.mrf.mxu0
        %v2463 = vadd.f32 0.0, %v2462
        %2464 = vmatmul.bf16.gmra.mxu0 %v2437
        %v2465 = vpop.f32.mrf.mxu0
        %v2466 = vadd.f32 0.0, %v2465
        %v2467 = vpop.f32.mrf.mxu0
        %v2468 = vadd.f32 0.0, %v2467
        %2469 = vmatmul.bf16.gmra.mxu0 %v2440
        %v2470 = vpop.f32.mrf.mxu0
        %v2471 = vadd.f32 0.0, %v2470
        %v2472 = vpop.f32.mrf.mxu0
        %v2473 = vadd.f32 0.0, %v2472
        %2474 = vmatmul.bf16.gmra.mxu0 %v2443
        %v2475 = vpop.f32.mrf.mxu0
        %v2476 = vadd.f32 0.0, %v2475
        %v2477 = vpop.f32.mrf.mxu0
        %v2478 = vadd.f32 0.0, %v2477
        %2479 = vmatmul.bf16.gmra.mxu0 %v2446
        %v2480 = vpop.f32.mrf.mxu0
        %v2481 = vadd.f32 0.0, %v2480
        %v2482 = vpop.f32.mrf.mxu0
        %v2483 = vadd.f32 0.0, %v2482
        %2484 = vmatmul.bf16.gmra.mxu0 %v2449
        %v2485 = vpop.f32.mrf.mxu0
        %v2486 = vadd.f32 0.0, %v2485
        %v2487 = vpop.f32.mrf.mxu0
        %v2488 = vadd.f32 0.0, %v2487
        %2489 = vdwg.mxu0
        %2490 = vmatpush.bf16.msra.mxu0 0
        %2491 = vmatpush.bf16.msra.mxu0 0
        %2492 = vmatpush.bf16.msra.mxu0 0
        %2493 = vmatpush.bf16.msra.mxu0 0
        %2494 = vmatpush.bf16.msra.mxu0 0
        %2495 = vmatpush.bf16.msra.mxu0 %v2422
        %2496 = vmatpush.bf16.msra.mxu0 %v2419
        %2497 = vmatpush.bf16.msra.mxu0 %v2416
        %2498 = vmatmul.bf16.gmra.mxu0 %v2434
        %v2499 = vpop.f32.mrf.mxu0
        %v2500 = vadd.f32 0.0, %v2499
        %v2501 = vpop.f32.mrf.mxu0
        %v2502 = vadd.f32 0.0, %v2501
        %2503 = vmatmul.bf16.gmra.mxu0 %v2437
        %v2504 = vpop.f32.mrf.mxu0
        %v2505 = vadd.f32 0.0, %v2504
        %v2506 = vpop.f32.mrf.mxu0
        %v2507 = vadd.f32 0.0, %v2506
        %2508 = vmatmul.bf16.gmra.mxu0 %v2440
        %v2509 = vpop.f32.mrf.mxu0
        %v2510 = vadd.f32 0.0, %v2509
        %v2511 = vpop.f32.mrf.mxu0
        %v2512 = vadd.f32 0.0, %v2511
        %2513 = vmatmul.bf16.gmra.mxu0 %v2443
        %v2514 = vpop.f32.mrf.mxu0
        %v2515 = vadd.f32 0.0, %v2514
        %v2516 = vpop.f32.mrf.mxu0
        %v2517 = vadd.f32 0.0, %v2516
        %2518 = vmatmul.bf16.gmra.mxu0 %v2446
        %v2519 = vpop.f32.mrf.mxu0
        %v2520 = vadd.f32 0.0, %v2519
        %v2521 = vpop.f32.mrf.mxu0
        %v2522 = vadd.f32 0.0, %v2521
        %2523 = vmatmul.bf16.gmra.mxu0 %v2449
        %v2524 = vpop.f32.mrf.mxu0
        %v2525 = vadd.f32 0.0, %v2524
        %v2526 = vpop.f32.mrf.mxu0
        %v2527 = vadd.f32 0.0, %v2526
        %2528 = vdwg.mxu0
        %2529 = vmatpush.bf16.msra.mxu0 0
        %2530 = vmatpush.bf16.msra.mxu0 0
        %2531 = vmatpush.bf16.msra.mxu0 0
        %2532 = vmatpush.bf16.msra.mxu0 0
        %2533 = vmatpush.bf16.msra.mxu0 0
        %2534 = vmatpush.bf16.msra.mxu0 %v2423
        %2535 = vmatpush.bf16.msra.mxu0 %v2420
        %2536 = vmatpush.bf16.msra.mxu0 %v2417
        %2537 = vmatmul.bf16.gmra.mxu0 %v2434
        %v2538 = vpop.f32.mrf.mxu0
        %v2539 = vadd.f32 0.0, %v2538
        %v2540 = vpop.f32.mrf.mxu0
        %v2541 = vadd.f32 0.0, %v2540
        %2542 = vmatmul.bf16.gmra.mxu0 %v2437
        %v2543 = vpop.f32.mrf.mxu0
        %v2544 = vadd.f32 0.0, %v2543
        %v2545 = vpop.f32.mrf.mxu0
        %v2546 = vadd.f32 0.0, %v2545
        %2547 = vmatmul.bf16.gmra.mxu0 %v2440
        %v2548 = vpop.f32.mrf.mxu0
        %v2549 = vadd.f32 0.0, %v2548
        %v2550 = vpop.f32.mrf.mxu0
        %v2551 = vadd.f32 0.0, %v2550
        %2552 = vmatmul.bf16.gmra.mxu0 %v2443
        %v2553 = vpop.f32.mrf.mxu0
        %v2554 = vadd.f32 0.0, %v2553
        %v2555 = vpop.f32.mrf.mxu0
        %v2556 = vadd.f32 0.0, %v2555
        %2557 = vmatmul.bf16.gmra.mxu0 %v2446
        %v2558 = vpop.f32.mrf.mxu0
        %v2559 = vadd.f32 0.0, %v2558
        %v2560 = vpop.f32.mrf.mxu0
        %v2561 = vadd.f32 0.0, %v2560
        %2562 = vmatmul.bf16.gmra.mxu0 %v2449
        %v2563 = vpop.f32.mrf.mxu0
        %v2564 = vadd.f32 0.0, %v2563
        %v2565 = vpop.f32.mrf.mxu0
        %v2566 = vadd.f32 0.0, %v2565
        %2567 = vdwg.mxu0
        %2568 = vst [vmem:[#allocation3] sm:$0xff] %v2461
        %2569 = vst [vmem:[#allocation3 + $0x8] sm:$0xff] %v2500
        %2570 = vst [vmem:[#allocation3 + $0x10] sm:$0xff] %v2539
        %2571 = vst [vmem:[#allocation3 + $0x18] sm:$0xff] %v2463
        %2572 = vst [vmem:[#allocation3 + $0x20] sm:$0xff] %v2502
        %2573 = vst [vmem:[#allocation3 + $0x28] sm:$0xff] %v2541
        %2574 = vst [vmem:[#allocation3 + $0x30] sm:$0xff] %v2466
        %2575 = vst [vmem:[#allocation3 + $0x38] sm:$0xff] %v2505
        %2576 = vst [vmem:[#allocation3 + $0x40] sm:$0xff] %v2544
        %2577 = vst [vmem:[#allocation3 + $0x48] sm:$0xff] %v2468
        %2578 = vst [vmem:[#allocation3 + $0x50] sm:$0xff] %v2507
        %2579 = vst [vmem:[#allocation3 + $0x58] sm:$0xff] %v2546
        %2580 = vst [vmem:[#allocation3 + $0x60] sm:$0xff] %v2471
        %2581 = vst [vmem:[#allocation3 + $0x68] sm:$0xff] %v2510
        %2582 = vst [vmem:[#allocation3 + $0x70] sm:$0xff] %v2549
        %2583 = vst [vmem:[#allocation3 + $0x78] sm:$0xff] %v2473
        %2584 = vst [vmem:[#allocation3 + $0x80] sm:$0xff] %v2512
        %2585 = vst [vmem:[#allocation3 + $0x88] sm:$0xff] %v2551
        %2586 = vst [vmem:[#allocation3 + $0x90] sm:$0xff] %v2476
        %2587 = vst [vmem:[#allocation3 + $0x98] sm:$0xff] %v2515
        %2588 = vst [vmem:[#allocation3 + $0xa0] sm:$0xff] %v2554
        %2589 = vst [vmem:[#allocation3 + $0xa8] sm:$0xff] %v2478
        %2590 = vst [vmem:[#allocation3 + $0xb0] sm:$0xff] %v2517
        %2591 = vst [vmem:[#allocation3 + $0xb8] sm:$0xff] %v2556
        %2592 = vst [vmem:[#allocation3 + $0xc0] sm:$0xff] %v2481
        %2593 = vst [vmem:[#allocation3 + $0xc8] sm:$0xff] %v2520
        %2594 = vst [vmem:[#allocation3 + $0xd0] sm:$0xff] %v2559
        %2595 = vst [vmem:[#allocation3 + $0xd8] sm:$0xff] %v2483
        %2596 = vst [vmem:[#allocation3 + $0xe0] sm:$0xff] %v2522
        %2597 = vst [vmem:[#allocation3 + $0xe8] sm:$0xff] %v2561
        %2598 = vst [vmem:[#allocation3 + $0xf0] sm:$0xff] %v2486
        %2599 = vst [vmem:[#allocation3 + $0xf8] sm:$0xff] %v2525
        %2600 = vst [vmem:[#allocation3 + $0x100] sm:$0xff] %v2564
        %2601 = vst [vmem:[#allocation3 + $0x108] sm:$0xff] %v2488
        %2602 = vst [vmem:[#allocation3 + $0x110] sm:$0xff] %v2527
        %2603 = vst [vmem:[#allocation3 + $0x118] sm:$0xff] %v2566
        %v2604 = vld [vmem:[#allocation3] sm:$0xff]
        %v2605 = vld [vmem:[#allocation3 + $0x8] sm:$0xff]
        %v2606 = vld [vmem:[#allocation3 + $0x10] sm:$0xff]
        %v2607 = vld [vmem:[#allocation3 + $0x18] sm:$0xff]
        %v2608 = vld [vmem:[#allocation3 + $0x20] sm:$0xff]
        %v2609 = vld [vmem:[#allocation3 + $0x28] sm:$0xff]
        %v2610 = vld [vmem:[#allocation3 + $0x30] sm:$0xff]
        %v2611 = vld [vmem:[#allocation3 + $0x38] sm:$0xff]
        %v2612 = vld [vmem:[#allocation3 + $0x40] sm:$0xff]
        %v2613 = vld [vmem:[#allocation3 + $0x48] sm:$0xff]
        %v2614 = vld [vmem:[#allocation3 + $0x50] sm:$0xff]
        %v2615 = vld [vmem:[#allocation3 + $0x58] sm:$0xff]
        %2620 = vrot.lane.b32.xlu0 %v2606, 1
        %v2621 = vpop.permute.xlu0 %2620
        %2622 = vrot.lane.b32.xlu0 %v2609, 1
        %v2623 = vpop.permute.xlu0 %2622
        %2624 = vrot.lane.b32.xlu0 %v2612, 1
        %v2625 = vpop.permute.xlu0 %2624
        %2626 = vrot.lane.b32.xlu0 %v2615, 1
        %v2627 = vpop.permute.xlu0 %2626
        %2640 = vrot.lane.b32.xlu0 %v2604, 1
        %v2641 = vpop.permute.xlu0 %2640
        %2642 = vrot.lane.b32.xlu0 %v2605, 1
        %v2643 = vpop.permute.xlu0 %2642
        %2644 = vrot.lane.b32.xlu0 %v2607, 1
        %v2645 = vpop.permute.xlu0 %2644
        %2646 = vrot.lane.b32.xlu0 %v2608, 1
        %v2647 = vpop.permute.xlu0 %2646
        %2648 = vrot.lane.b32.xlu0 %v2610, 1
        %v2649 = vpop.permute.xlu0 %2648
        %2650 = vrot.lane.b32.xlu0 %v2611, 1
        %v2651 = vpop.permute.xlu0 %2650
        %2652 = vrot.lane.b32.xlu0 %v2613, 1
        %v2653 = vpop.permute.xlu0 %2652
        %2654 = vrot.lane.b32.xlu0 %v2614, 1
        %v2655 = vpop.permute.xlu0 %2654
        %v2656 = vsel %vm1059, %v2641, %v2643
        %v2657 = vsel %vm1059, %v2643, %v2621
        %v2658 = vsel %vm1059, %v2645, %v2647
        %v2659 = vsel %vm1059, %v2647, %v2623
        %v2660 = vsel %vm1059, %v2649, %v2651
        %v2661 = vsel %vm1059, %v2651, %v2625
        %v2662 = vsel %vm1059, %v2653, %v2655
        %v2663 = vsel %vm1059, %v2655, %v2627
        %v2676 = vsel %vm1059, %v2621, %v2641
        %v2677 = vsel %vm1059, %v2623, %v2645
        %v2678 = vsel %vm1059, %v2625, %v2649
        %v2679 = vsel %vm1059, %v2627, %v2653
        %v2680 = vadd.f32 %v2319, %v2676
        %v2681 = vadd.f32 %v2320, %v2656
        %v2682 = vadd.f32 %v2321, %v2657
        %v2683 = vadd.f32 %v2322, %v2677
        %v2684 = vadd.f32 %v2323, %v2658
        %v2685 = vadd.f32 %v2324, %v2659
        %v2686 = vadd.f32 %v2325, %v2678
        %v2687 = vadd.f32 %v2326, %v2660
        %v2688 = vadd.f32 %v2327, %v2661
        %v2689 = vadd.f32 %v2328, %v2679
        %v2690 = vadd.f32 %v2329, %v2662
        %v2691 = vadd.f32 %v2330, %v2663
        %v2692 = vld [vmem:[#allocation3 + $0x60] sm:$0xff]
        %v2693 = vld [vmem:[#allocation3 + $0x68] sm:$0xff]
        %v2694 = vld [vmem:[#allocation3 + $0x70] sm:$0xff]
        %v2695 = vld [vmem:[#allocation3 + $0x78] sm:$0xff]
        %v2696 = vld [vmem:[#allocation3 + $0x80] sm:$0xff]
        %v2697 = vld [vmem:[#allocation3 + $0x88] sm:$0xff]
        %v2698 = vld [vmem:[#allocation3 + $0x90] sm:$0xff]
        %v2699 = vld [vmem:[#allocation3 + $0x98] sm:$0xff]
        %v2700 = vld [vmem:[#allocation3 + $0xa0] sm:$0xff]
        %v2701 = vld [vmem:[#allocation3 + $0xa8] sm:$0xff]
        %v2702 = vld [vmem:[#allocation3 + $0xb0] sm:$0xff]
        %v2703 = vld [vmem:[#allocation3 + $0xb8] sm:$0xff]
        %v2704 = vadd.f32 %v2680, %v2692
        %v2705 = vadd.f32 %v2681, %v2693
        %v2706 = vadd.f32 %v2682, %v2694
        %v2707 = vadd.f32 %v2683, %v2695
        %v2708 = vadd.f32 %v2684, %v2696
        %v2709 = vadd.f32 %v2685, %v2697
        %v2710 = vadd.f32 %v2686, %v2698
        %v2711 = vadd.f32 %v2687, %v2699
        %v2712 = vadd.f32 %v2688, %v2700
        %v2713 = vadd.f32 %v2689, %v2701
        %v2714 = vadd.f32 %v2690, %v2702
        %v2715 = vadd.f32 %v2691, %v2703
        %v2716 = vld [vmem:[#allocation3 + $0xc0] sm:$0xff]
        %v2717 = vld [vmem:[#allocation3 + $0xc8] sm:$0xff]
        %v2718 = vld [vmem:[#allocation3 + $0xd0] sm:$0xff]
        %v2719 = vld [vmem:[#allocation3 + $0xd8] sm:$0xff]
        %v2720 = vld [vmem:[#allocation3 + $0xe0] sm:$0xff]
        %v2721 = vld [vmem:[#allocation3 + $0xe8] sm:$0xff]
        %v2722 = vld [vmem:[#allocation3 + $0xf0] sm:$0xff]
        %v2723 = vld [vmem:[#allocation3 + $0xf8] sm:$0xff]
        %v2724 = vld [vmem:[#allocation3 + $0x100] sm:$0xff]
        %v2725 = vld [vmem:[#allocation3 + $0x108] sm:$0xff]
        %v2726 = vld [vmem:[#allocation3 + $0x110] sm:$0xff]
        %v2727 = vld [vmem:[#allocation3 + $0x118] sm:$0xff]
        %2740 = vrot.lane.b32.xlu0 %v2716, 127
        %v2741 = vpop.permute.xlu0 %2740
        %2742 = vrot.lane.b32.xlu0 %v2717, 127
        %v2743 = vpop.permute.xlu0 %2742
        %2744 = vrot.lane.b32.xlu0 %v2718, 127
        %v2745 = vpop.permute.xlu0 %2744
        %2746 = vrot.lane.b32.xlu0 %v2719, 127
        %v2747 = vpop.permute.xlu0 %2746
        %2748 = vrot.lane.b32.xlu0 %v2720, 127
        %v2749 = vpop.permute.xlu0 %2748
        %2750 = vrot.lane.b32.xlu0 %v2721, 127
        %v2751 = vpop.permute.xlu0 %2750
        %2752 = vrot.lane.b32.xlu0 %v2722, 127
        %v2753 = vpop.permute.xlu0 %2752
        %2754 = vrot.lane.b32.xlu0 %v2723, 127
        %v2755 = vpop.permute.xlu0 %2754
        %2756 = vrot.lane.b32.xlu0 %v2724, 127
        %v2757 = vpop.permute.xlu0 %2756
        %2758 = vrot.lane.b32.xlu0 %v2725, 127
        %v2759 = vpop.permute.xlu0 %2758
        %2760 = vrot.lane.b32.xlu0 %v2726, 127
        %v2761 = vpop.permute.xlu0 %2760
        %2762 = vrot.lane.b32.xlu0 %v2727, 127
        %v2763 = vpop.permute.xlu0 %2762
        %v2764 = vsel %vm1168, %v2741, %v2743
        %v2765 = vsel %vm1168, %v2743, %v2745
        %v2766 = vsel %vm1168, %v2747, %v2749
        %v2767 = vsel %vm1168, %v2749, %v2751
        %v2768 = vsel %vm1168, %v2753, %v2755
        %v2769 = vsel %vm1168, %v2755, %v2757
        %v2770 = vsel %vm1168, %v2759, %v2761
        %v2771 = vsel %vm1168, %v2761, %v2763
        %v2788 = vsel %vm1168, %v2745, %v2741
        %v2789 = vsel %vm1168, %v2751, %v2747
        %v2790 = vsel %vm1168, %v2757, %v2753
        %v2791 = vsel %vm1168, %v2763, %v2759
        %v2792 = vadd.f32 %v2704, %v2764
        %v2793 = vadd.f32 %v2705, %v2765
        %v2794 = vadd.f32 %v2706, %v2788
        %v2795 = vadd.f32 %v2707, %v2766
        %v2796 = vadd.f32 %v2708, %v2767
        %v2797 = vadd.f32 %v2709, %v2789
        %v2798 = vadd.f32 %v2710, %v2768
        %v2799 = vadd.f32 %v2711, %v2769
        %v2800 = vadd.f32 %v2712, %v2790
        %v2801 = vadd.f32 %v2713, %v2770
        %v2802 = vadd.f32 %v2714, %v2771
        %v2803 = vadd.f32 %v2715, %v2791
        %v2804 = vld [vmem:[%s1792 + $0xc0] sm:$0xf]
        %v2805 = vld [vmem:[%s1792 + $0xc8] sm:$0xf]
        %v2806 = vld [vmem:[%s1792 + $0xd0] sm:$0xf]
        %v2807 = vld [vmem:[%s1792 + $0xd8] sm:$0xf]
        %v2808 = vld [vmem:[%s1792 + $0xe0] sm:$0xf]
        %v2809 = vld [vmem:[%s1792 + $0xe8] sm:$0xf]
        %v2810 = vld [vmem:[%s1792 + $0xf0] sm:$0xf]
        %v2811 = vld [vmem:[%s1792 + $0xf8] sm:$0xf]
        %v2812 = vld [vmem:[%s1792 + $0x100] sm:$0xf]
        %v2813 = vld [vmem:[%s1792 + $0x108] sm:$0xf]
        %v2814 = vld [vmem:[%s1792 + $0x110] sm:$0xf]
        %v2815 = vld [vmem:[%s1792 + $0x118] sm:$0xf]
        %v2816 = vld [vmem:[#allocation2] sm:$0xff]
        %v2817 = vld [vmem:[#allocation2 + $0x8] sm:$0xf]
        %v2818 = vld [vmem:[#allocation2 + $0xc] sm:$0xff]
        %v2819 = vld [vmem:[#allocation2 + $0x14] sm:$0xf]
        %v2820 = vld [vmem:[#allocation2 + $0x18] sm:$0xff]
        %v2821 = vld [vmem:[#allocation2 + $0x20] sm:$0xf]
        %v2822 = vld [vmem:[#allocation2 + $0x24] sm:$0xff]
        %v2823 = vld [vmem:[#allocation2 + $0x2c] sm:$0xf]
        %v2824 = vld [vmem:[#allocation2 + $0x30] sm:$0xff]
        %v2825 = vld [vmem:[#allocation2 + $0x38] sm:$0xf]
        %v2826 = vld [vmem:[#allocation2 + $0x3c] sm:$0xff]
        %v2827 = vld [vmem:[#allocation2 + $0x44] sm:$0xf]
        %v2840 = vunpack.c.l.b16 %v2804
        %v2841 = vunpack.c.l.b16 %v2805
        %v2842 = vunpack.c.l.b16 %v2806
        %v2843 = vunpack.c.l.b16 %v2807
        %v2844 = vunpack.c.l.b16 %v2808
        %v2845 = vunpack.c.l.b16 %v2809
        %v2846 = vunpack.c.l.b16 %v2810
        %v2847 = vunpack.c.l.b16 %v2811
        %v2848 = vunpack.c.l.b16 %v2812
        %v2849 = vunpack.c.l.b16 %v2813
        %v2850 = vunpack.c.l.b16 %v2814
        %v2851 = vunpack.c.l.b16 %v2815
        %v2852 = vpack.c.b16 %v2841, %v2840
        %v2853 = vpack.c.b16 %v2843, %v2842
        %v2854 = vpack.c.b16 %v2845, %v2844
        %v2855 = vpack.c.b16 %v2847, %v2846
        %v2856 = vpack.c.b16 %v2849, %v2848
        %v2857 = vpack.c.b16 %v2851, %v2850
        %v2870 = vunpack.c.l.b16 %v2816
        %v2871 = vunpack.c.h.b16 %v2816
        %v2872 = vunpack.c.l.b16 %v2817
        %v2873 = vunpack.c.l.b16 %v2818
        %v2874 = vunpack.c.h.b16 %v2818
        %v2875 = vunpack.c.l.b16 %v2819
        %v2876 = vunpack.c.l.b16 %v2820
        %v2877 = vunpack.c.h.b16 %v2820
        %v2878 = vunpack.c.l.b16 %v2821
        %v2879 = vunpack.c.l.b16 %v2822
        %v2880 = vunpack.c.h.b16 %v2822
        %v2881 = vunpack.c.l.b16 %v2823
        %v2882 = vunpack.c.l.b16 %v2824
        %v2883 = vunpack.c.h.b16 %v2824
        %v2884 = vunpack.c.l.b16 %v2825
        %v2885 = vunpack.c.l.b16 %v2826
        %v2886 = vunpack.c.h.b16 %v2826
        %v2887 = vunpack.c.l.b16 %v2827
        %v2888 = vpack.c.b16 %v2873, %v2870
        %v2889 = vpack.c.b16 %v2874, %v2871
        %v2890 = vpack.c.b16 %v2875, %v2872
        %v2891 = vpack.c.b16 %v2879, %v2876
        %v2892 = vpack.c.b16 %v2880, %v2877
        %v2893 = vpack.c.b16 %v2881, %v2878
        %v2894 = vpack.c.b16 %v2885, %v2882
        %v2895 = vpack.c.b16 %v2886, %v2883
        %v2896 = vpack.c.b16 %v2887, %v2884
        %v2907 = vsel %vm1895, %v2852, 0
        %v2910 = vsel %vm1895, %v2853, 0
        %v2913 = vsel %vm1895, %v2854, 0
        %v2916 = vsel %vm1895, %v2855, 0
        %v2919 = vsel %vm1895, %v2856, 0
        %v2922 = vsel %vm1895, %v2857, 0
        %2924 = vmatpush.bf16.msra.mxu0 0
        %2925 = vmatpush.bf16.msra.mxu0 0
        %2926 = vmatpush.bf16.msra.mxu0 0
        %2927 = vmatpush.bf16.msra.mxu0 0
        %2928 = vmatpush.bf16.msra.mxu0 0
        %2929 = vmatpush.bf16.msra.mxu0 %v2894
        %2930 = vmatpush.bf16.msra.mxu0 %v2891
        %2931 = vmatpush.bf16.msra.mxu0 %v2888
        %2932 = vmatmul.bf16.gmra.mxu0 %v2907
        %v2933 = vpop.f32.mrf.mxu0
        %v2934 = vadd.f32 0.0, %v2933
        %v2935 = vpop.f32.mrf.mxu0
        %v2936 = vadd.f32 0.0, %v2935
        %2937 = vmatmul.bf16.gmra.mxu0 %v2910
        %v2938 = vpop.f32.mrf.mxu0
        %v2939 = vadd.f32 0.0, %v2938
        %v2940 = vpop.f32.mrf.mxu0
        %v2941 = vadd.f32 0.0, %v2940
        %2942 = vmatmul.bf16.gmra.mxu0 %v2913
        %v2943 = vpop.f32.mrf.mxu0
        %v2944 = vadd.f32 0.0, %v2943
        %v2945 = vpop.f32.mrf.mxu0
        %v2946 = vadd.f32 0.0, %v2945
        %2947 = vmatmul.bf16.gmra.mxu0 %v2916
        %v2948 = vpop.f32.mrf.mxu0
        %v2949 = vadd.f32 0.0, %v2948
        %v2950 = vpop.f32.mrf.mxu0
        %v2951 = vadd.f32 0.0, %v2950
        %2952 = vmatmul.bf16.gmra.mxu0 %v2919
        %v2953 = vpop.f32.mrf.mxu0
        %v2954 = vadd.f32 0.0, %v2953
        %v2955 = vpop.f32.mrf.mxu0
        %v2956 = vadd.f32 0.0, %v2955
        %2957 = vmatmul.bf16.gmra.mxu0 %v2922
        %v2958 = vpop.f32.mrf.mxu0
        %v2959 = vadd.f32 0.0, %v2958
        %v2960 = vpop.f32.mrf.mxu0
        %v2961 = vadd.f32 0.0, %v2960
        %2962 = vdwg.mxu0
        %2963 = vmatpush.bf16.msra.mxu0 0
        %2964 = vmatpush.bf16.msra.mxu0 0
        %2965 = vmatpush.bf16.msra.mxu0 0
        %2966 = vmatpush.bf16.msra.mxu0 0
        %2967 = vmatpush.bf16.msra.mxu0 0
        %2968 = vmatpush.bf16.msra.mxu0 %v2895
        %2969 = vmatpush.bf16.msra.mxu0 %v2892
        %2970 = vmatpush.bf16.msra.mxu0 %v2889
        %2971 = vmatmul.bf16.gmra.mxu0 %v2907
        %v2972 = vpop.f32.mrf.mxu0
        %v2973 = vadd.f32 0.0, %v2972
        %v2974 = vpop.f32.mrf.mxu0
        %v2975 = vadd.f32 0.0, %v2974
        %2976 = vmatmul.bf16.gmra.mxu0 %v2910
        %v2977 = vpop.f32.mrf.mxu0
        %v2978 = vadd.f32 0.0, %v2977
        %v2979 = vpop.f32.mrf.mxu0
        %v2980 = vadd.f32 0.0, %v2979
        %2981 = vmatmul.bf16.gmra.mxu0 %v2913
        %v2982 = vpop.f32.mrf.mxu0
        %v2983 = vadd.f32 0.0, %v2982
        %v2984 = vpop.f32.mrf.mxu0
        %v2985 = vadd.f32 0.0, %v2984
        %2986 = vmatmul.bf16.gmra.mxu0 %v2916
        %v2987 = vpop.f32.mrf.mxu0
        %v2988 = vadd.f32 0.0, %v2987
        %v2989 = vpop.f32.mrf.mxu0
        %v2990 = vadd.f32 0.0, %v2989
        %2991 = vmatmul.bf16.gmra.mxu0 %v2919
        %v2992 = vpop.f32.mrf.mxu0
        %v2993 = vadd.f32 0.0, %v2992
        %v2994 = vpop.f32.mrf.mxu0
        %v2995 = vadd.f32 0.0, %v2994
        %2996 = vmatmul.bf16.gmra.mxu0 %v2922
        %v2997 = vpop.f32.mrf.mxu0
        %v2998 = vadd.f32 0.0, %v2997
        %v2999 = vpop.f32.mrf.mxu0
        %v3000 = vadd.f32 0.0, %v2999
        %3001 = vdwg.mxu0
        %3002 = vmatpush.bf16.msra.mxu0 0
        %3003 = vmatpush.bf16.msra.mxu0 0
        %3004 = vmatpush.bf16.msra.mxu0 0
        %3005 = vmatpush.bf16.msra.mxu0 0
        %3006 = vmatpush.bf16.msra.mxu0 0
        %3007 = vmatpush.bf16.msra.mxu0 %v2896
        %3008 = vmatpush.bf16.msra.mxu0 %v2893
        %3009 = vmatpush.bf16.msra.mxu0 %v2890
        %3010 = vmatmul.bf16.gmra.mxu0 %v2907
        %v3011 = vpop.f32.mrf.mxu0
        %v3012 = vadd.f32 0.0, %v3011
        %v3013 = vpop.f32.mrf.mxu0
        %v3014 = vadd.f32 0.0, %v3013
        %3015 = vmatmul.bf16.gmra.mxu0 %v2910
        %v3016 = vpop.f32.mrf.mxu0
        %v3017 = vadd.f32 0.0, %v3016
        %v3018 = vpop.f32.mrf.mxu0
        %v3019 = vadd.f32 0.0, %v3018
        %3020 = vmatmul.bf16.gmra.mxu0 %v2913
        %v3021 = vpop.f32.mrf.mxu0
        %v3022 = vadd.f32 0.0, %v3021
        %v3023 = vpop.f32.mrf.mxu0
        %v3024 = vadd.f32 0.0, %v3023
        %3025 = vmatmul.bf16.gmra.mxu0 %v2916
        %v3026 = vpop.f32.mrf.mxu0
        %v3027 = vadd.f32 0.0, %v3026
        %v3028 = vpop.f32.mrf.mxu0
        %v3029 = vadd.f32 0.0, %v3028
        %3030 = vmatmul.bf16.gmra.mxu0 %v2919
        %v3031 = vpop.f32.mrf.mxu0
        %v3032 = vadd.f32 0.0, %v3031
        %v3033 = vpop.f32.mrf.mxu0
        %v3034 = vadd.f32 0.0, %v3033
        %3035 = vmatmul.bf16.gmra.mxu0 %v2922
        %v3036 = vpop.f32.mrf.mxu0
        %v3037 = vadd.f32 0.0, %v3036
        %v3038 = vpop.f32.mrf.mxu0
        %v3039 = vadd.f32 0.0, %v3038
        %3040 = vdwg.mxu0
        %3041 = vst [vmem:[#allocation3] sm:$0xff] %v2934
        %3042 = vst [vmem:[#allocation3 + $0x8] sm:$0xff] %v2973
        %3043 = vst [vmem:[#allocation3 + $0x10] sm:$0xff] %v3012
        %3044 = vst [vmem:[#allocation3 + $0x18] sm:$0xff] %v2936
        %3045 = vst [vmem:[#allocation3 + $0x20] sm:$0xff] %v2975
        %3046 = vst [vmem:[#allocation3 + $0x28] sm:$0xff] %v3014
        %3047 = vst [vmem:[#allocation3 + $0x30] sm:$0xff] %v2939
        %3048 = vst [vmem:[#allocation3 + $0x38] sm:$0xff] %v2978
        %3049 = vst [vmem:[#allocation3 + $0x40] sm:$0xff] %v3017
        %3050 = vst [vmem:[#allocation3 + $0x48] sm:$0xff] %v2941
        %3051 = vst [vmem:[#allocation3 + $0x50] sm:$0xff] %v2980
        %3052 = vst [vmem:[#allocation3 + $0x58] sm:$0xff] %v3019
        %3053 = vst [vmem:[#allocation3 + $0x60] sm:$0xff] %v2944
        %3054 = vst [vmem:[#allocation3 + $0x68] sm:$0xff] %v2983
        %3055 = vst [vmem:[#allocation3 + $0x70] sm:$0xff] %v3022
        %3056 = vst [vmem:[#allocation3 + $0x78] sm:$0xff] %v2946
        %3057 = vst [vmem:[#allocation3 + $0x80] sm:$0xff] %v2985
        %3058 = vst [vmem:[#allocation3 + $0x88] sm:$0xff] %v3024
        %3059 = vst [vmem:[#allocation3 + $0x90] sm:$0xff] %v2949
        %3060 = vst [vmem:[#allocation3 + $0x98] sm:$0xff] %v2988
        %3061 = vst [vmem:[#allocation3 + $0xa0] sm:$0xff] %v3027
        %3062 = vst [vmem:[#allocation3 + $0xa8] sm:$0xff] %v2951
        %3063 = vst [vmem:[#allocation3 + $0xb0] sm:$0xff] %v2990
        %3064 = vst [vmem:[#allocation3 + $0xb8] sm:$0xff] %v3029
        %3065 = vst [vmem:[#allocation3 + $0xc0] sm:$0xff] %v2954
        %3066 = vst [vmem:[#allocation3 + $0xc8] sm:$0xff] %v2993
        %3067 = vst [vmem:[#allocation3 + $0xd0] sm:$0xff] %v3032
        %3068 = vst [vmem:[#allocation3 + $0xd8] sm:$0xff] %v2956
        %3069 = vst [vmem:[#allocation3 + $0xe0] sm:$0xff] %v2995
        %3070 = vst [vmem:[#allocation3 + $0xe8] sm:$0xff] %v3034
        %3071 = vst [vmem:[#allocation3 + $0xf0] sm:$0xff] %v2959
        %3072 = vst [vmem:[#allocation3 + $0xf8] sm:$0xff] %v2998
        %3073 = vst [vmem:[#allocation3 + $0x100] sm:$0xff] %v3037
        %3074 = vst [vmem:[#allocation3 + $0x108] sm:$0xff] %v2961
        %3075 = vst [vmem:[#allocation3 + $0x110] sm:$0xff] %v3000
        %3076 = vst [vmem:[#allocation3 + $0x118] sm:$0xff] %v3039
        %v3077 = vld [vmem:[#allocation3] sm:$0xff]
        %v3078 = vld [vmem:[#allocation3 + $0x8] sm:$0xff]
        %v3079 = vld [vmem:[#allocation3 + $0x10] sm:$0xff]
        %v3080 = vld [vmem:[#allocation3 + $0x18] sm:$0xff]
        %v3081 = vld [vmem:[#allocation3 + $0x20] sm:$0xff]
        %v3082 = vld [vmem:[#allocation3 + $0x28] sm:$0xff]
        %v3083 = vld [vmem:[#allocation3 + $0x30] sm:$0xff]
        %v3084 = vld [vmem:[#allocation3 + $0x38] sm:$0xff]
        %v3085 = vld [vmem:[#allocation3 + $0x40] sm:$0xff]
        %v3086 = vld [vmem:[#allocation3 + $0x48] sm:$0xff]
        %v3087 = vld [vmem:[#allocation3 + $0x50] sm:$0xff]
        %v3088 = vld [vmem:[#allocation3 + $0x58] sm:$0xff]
        %3101 = vrot.lane.b32.xlu0 %v3077, 111
        %v3102 = vpop.permute.xlu0 %3101
        %3103 = vrot.lane.b32.xlu0 %v3078, 111
        %v3104 = vpop.permute.xlu0 %3103
        %3105 = vrot.lane.b32.xlu0 %v3079, 111
        %v3106 = vpop.permute.xlu0 %3105
        %3107 = vrot.lane.b32.xlu0 %v3080, 111
        %v3108 = vpop.permute.xlu0 %3107
        %3109 = vrot.lane.b32.xlu0 %v3081, 111
        %v3110 = vpop.permute.xlu0 %3109
        %3111 = vrot.lane.b32.xlu0 %v3082, 111
        %v3112 = vpop.permute.xlu0 %3111
        %3113 = vrot.lane.b32.xlu0 %v3083, 111
        %v3114 = vpop.permute.xlu0 %3113
        %3115 = vrot.lane.b32.xlu0 %v3084, 111
        %v3116 = vpop.permute.xlu0 %3115
        %3117 = vrot.lane.b32.xlu0 %v3085, 111
        %v3118 = vpop.permute.xlu0 %3117
        %3119 = vrot.lane.b32.xlu0 %v3086, 111
        %v3120 = vpop.permute.xlu0 %3119
        %3121 = vrot.lane.b32.xlu0 %v3087, 111
        %v3122 = vpop.permute.xlu0 %3121
        %3123 = vrot.lane.b32.xlu0 %v3088, 111
        %v3124 = vpop.permute.xlu0 %3123
        %v3125 = vsel %vm1490, %v3102, %v3104
        %v3126 = vsel %vm1490, %v3104, %v3106
        %v3127 = vsel %vm1490, %v3108, %v3110
        %v3128 = vsel %vm1490, %v3110, %v3112
        %v3129 = vsel %vm1490, %v3114, %v3116
        %v3130 = vsel %vm1490, %v3116, %v3118
        %v3131 = vsel %vm1490, %v3120, %v3122
        %v3132 = vsel %vm1490, %v3122, %v3124
        %v3149 = vsel %vm1490, %v3106, %v3102
        %v3150 = vsel %vm1490, %v3112, %v3108
        %v3151 = vsel %vm1490, %v3118, %v3114
        %v3152 = vsel %vm1490, %v3124, %v3120
        %v3153 = vadd.f32 %v2792, %v3125
        %v3154 = vadd.f32 %v2793, %v3126
        %v3155 = vadd.f32 %v2794, %v3149
        %v3156 = vadd.f32 %v2795, %v3127
        %v3157 = vadd.f32 %v2796, %v3128
        %v3158 = vadd.f32 %v2797, %v3150
        %v3159 = vadd.f32 %v2798, %v3129
        %v3160 = vadd.f32 %v2799, %v3130
        %v3161 = vadd.f32 %v2800, %v3151
        %v3162 = vadd.f32 %v2801, %v3131
        %v3163 = vadd.f32 %v2802, %v3132
        %v3164 = vadd.f32 %v2803, %v3152
        %v3165 = vld [vmem:[#allocation3 + $0x60] sm:$0xff]
        %v3166 = vld [vmem:[#allocation3 + $0x68] sm:$0xff]
        %v3167 = vld [vmem:[#allocation3 + $0x70] sm:$0xff]
        %v3168 = vld [vmem:[#allocation3 + $0x78] sm:$0xff]
        %v3169 = vld [vmem:[#allocation3 + $0x80] sm:$0xff]
        %v3170 = vld [vmem:[#allocation3 + $0x88] sm:$0xff]
        %v3171 = vld [vmem:[#allocation3 + $0x90] sm:$0xff]
        %v3172 = vld [vmem:[#allocation3 + $0x98] sm:$0xff]
        %v3173 = vld [vmem:[#allocation3 + $0xa0] sm:$0xff]
        %v3174 = vld [vmem:[#allocation3 + $0xa8] sm:$0xff]
        %v3175 = vld [vmem:[#allocation3 + $0xb0] sm:$0xff]
        %v3176 = vld [vmem:[#allocation3 + $0xb8] sm:$0xff]
        %3189 = vrot.lane.b32.xlu0 %v3165, 110
        %v3190 = vpop.permute.xlu0 %3189
        %3191 = vrot.lane.b32.xlu0 %v3166, 110
        %v3192 = vpop.permute.xlu0 %3191
        %3193 = vrot.lane.b32.xlu0 %v3167, 110
        %v3194 = vpop.permute.xlu0 %3193
        %3195 = vrot.lane.b32.xlu0 %v3168, 110
        %v3196 = vpop.permute.xlu0 %3195
        %3197 = vrot.lane.b32.xlu0 %v3169, 110
        %v3198 = vpop.permute.xlu0 %3197
        %3199 = vrot.lane.b32.xlu0 %v3170, 110
        %v3200 = vpop.permute.xlu0 %3199
        %3201 = vrot.lane.b32.xlu0 %v3171, 110
        %v3202 = vpop.permute.xlu0 %3201
        %3203 = vrot.lane.b32.xlu0 %v3172, 110
        %v3204 = vpop.permute.xlu0 %3203
        %3205 = vrot.lane.b32.xlu0 %v3173, 110
        %v3206 = vpop.permute.xlu0 %3205
        %3207 = vrot.lane.b32.xlu0 %v3174, 110
        %v3208 = vpop.permute.xlu0 %3207
        %3209 = vrot.lane.b32.xlu0 %v3175, 110
        %v3210 = vpop.permute.xlu0 %3209
        %3211 = vrot.lane.b32.xlu0 %v3176, 110
        %v3212 = vpop.permute.xlu0 %3211
        %v3213 = vsel %vm1579, %v3190, %v3192
        %v3214 = vsel %vm1579, %v3192, %v3194
        %v3215 = vsel %vm1579, %v3196, %v3198
        %v3216 = vsel %vm1579, %v3198, %v3200
        %v3217 = vsel %vm1579, %v3202, %v3204
        %v3218 = vsel %vm1579, %v3204, %v3206
        %v3219 = vsel %vm1579, %v3208, %v3210
        %v3220 = vsel %vm1579, %v3210, %v3212
        %v3237 = vsel %vm1579, %v3194, %v3190
        %v3238 = vsel %vm1579, %v3200, %v3196
        %v3239 = vsel %vm1579, %v3206, %v3202
        %v3240 = vsel %vm1579, %v3212, %v3208
        %v3241 = vadd.f32 %v3153, %v3213
        %v3242 = vadd.f32 %v3154, %v3214
        %v3243 = vadd.f32 %v3155, %v3237
        %v3244 = vadd.f32 %v3156, %v3215
        %v3245 = vadd.f32 %v3157, %v3216
        %v3246 = vadd.f32 %v3158, %v3238
        %v3247 = vadd.f32 %v3159, %v3217
        %v3248 = vadd.f32 %v3160, %v3218
        %v3249 = vadd.f32 %v3161, %v3239
        %v3250 = vadd.f32 %v3162, %v3219
        %v3251 = vadd.f32 %v3163, %v3220
        %v3252 = vadd.f32 %v3164, %v3240
        %v3253 = vld [vmem:[#allocation3 + $0xc0] sm:$0xff]
        %v3254 = vld [vmem:[#allocation3 + $0xc8] sm:$0xff]
        %v3255 = vld [vmem:[#allocation3 + $0xd0] sm:$0xff]
        %v3256 = vld [vmem:[#allocation3 + $0xd8] sm:$0xff]
        %v3257 = vld [vmem:[#allocation3 + $0xe0] sm:$0xff]
        %v3258 = vld [vmem:[#allocation3 + $0xe8] sm:$0xff]
        %v3259 = vld [vmem:[#allocation3 + $0xf0] sm:$0xff]
        %v3260 = vld [vmem:[#allocation3 + $0xf8] sm:$0xff]
        %v3261 = vld [vmem:[#allocation3 + $0x100] sm:$0xff]
        %v3262 = vld [vmem:[#allocation3 + $0x108] sm:$0xff]
        %v3263 = vld [vmem:[#allocation3 + $0x110] sm:$0xff]
        %v3264 = vld [vmem:[#allocation3 + $0x118] sm:$0xff]
        %3277 = vrot.lane.b32.xlu0 %v3253, 109
        %v3278 = vpop.permute.xlu0 %3277
        %3279 = vrot.lane.b32.xlu0 %v3254, 109
        %v3280 = vpop.permute.xlu0 %3279
        %3281 = vrot.lane.b32.xlu0 %v3255, 109
        %v3282 = vpop.permute.xlu0 %3281
        %3283 = vrot.lane.b32.xlu0 %v3256, 109
        %v3284 = vpop.permute.xlu0 %3283
        %3285 = vrot.lane.b32.xlu0 %v3257, 109
        %v3286 = vpop.permute.xlu0 %3285
        %3287 = vrot.lane.b32.xlu0 %v3258, 109
        %v3288 = vpop.permute.xlu0 %3287
        %3289 = vrot.lane.b32.xlu0 %v3259, 109
        %v3290 = vpop.permute.xlu0 %3289
        %3291 = vrot.lane.b32.xlu0 %v3260, 109
        %v3292 = vpop.permute.xlu0 %3291
        %3293 = vrot.lane.b32.xlu0 %v3261, 109
        %v3294 = vpop.permute.xlu0 %3293
        %3295 = vrot.lane.b32.xlu0 %v3262, 109
        %v3296 = vpop.permute.xlu0 %3295
        %3297 = vrot.lane.b32.xlu0 %v3263, 109
        %v3298 = vpop.permute.xlu0 %3297
        %3299 = vrot.lane.b32.xlu0 %v3264, 109
        %v3300 = vpop.permute.xlu0 %3299
        %v3301 = vsel %vm1668, %v3278, %v3280
        %v3302 = vsel %vm1668, %v3280, %v3282
        %v3303 = vsel %vm1668, %v3284, %v3286
        %v3304 = vsel %vm1668, %v3286, %v3288
        %v3305 = vsel %vm1668, %v3290, %v3292
        %v3306 = vsel %vm1668, %v3292, %v3294
        %v3307 = vsel %vm1668, %v3296, %v3298
        %v3308 = vsel %vm1668, %v3298, %v3300
        %v3325 = vsel %vm1668, %v3282, %v3278
        %v3326 = vsel %vm1668, %v3288, %v3284
        %v3327 = vsel %vm1668, %v3294, %v3290
        %v3328 = vsel %vm1668, %v3300, %v3296
        %v3329 = vadd.f32 %v3241, %v3301
        %v3330 = vadd.f32 %v3242, %v3302
        %v3331 = vadd.f32 %v3243, %v3325
        %v3332 = vadd.f32 %v3244, %v3303
        %v3333 = vadd.f32 %v3245, %v3304
        %v3334 = vadd.f32 %v3246, %v3326
        %v3335 = vadd.f32 %v3247, %v3305
        %v3336 = vadd.f32 %v3248, %v3306
        %v3337 = vadd.f32 %v3249, %v3327
        %v3338 = vadd.f32 %v3250, %v3307
        %v3339 = vadd.f32 %v3251, %v3308
        %v3340 = vadd.f32 %v3252, %v3328
        %s3341 = scalar_lea.vmem %s3, 32
        %v3342 = vld [vmem:[%s3341] sm:$0xff]
        %v3343 = vld [vmem:[%s3341 + $0x8] sm:$0xff]
        %v3344 = vld [vmem:[%s3341 + $0x10] sm:$0xff]
        %v3345 = vld [vmem:[%s3341 + $0x18] sm:$0xff]
        %3347 = vset.pattern.permute.xlu0 0
        %3348 = vperm.xlu0 %3347, %v3342
        %v3349 = vpop.permute.xlu0 %3348
        %3352 = vset.pattern.permute.xlu0 0
        %3353 = vperm.xlu0 %3352, %v3343
        %v3354 = vpop.permute.xlu0 %3353
        %3357 = vset.pattern.permute.xlu0 0
        %3358 = vperm.xlu0 %3357, %v3344
        %v3359 = vpop.permute.xlu0 %3358
        %3362 = vset.pattern.permute.xlu0 0
        %3363 = vperm.xlu0 %3362, %v3345
        %v3364 = vpop.permute.xlu0 %3363
        %v3366 = vadd.f32 %v3329, %v3349
        %v3367 = vadd.f32 %v3330, %v3349
        %v3368 = vadd.f32 %v3331, %v3349
        %v3369 = vadd.f32 %v3332, %v3354
        %v3370 = vadd.f32 %v3333, %v3354
        %v3371 = vadd.f32 %v3334, %v3354
        %v3372 = vadd.f32 %v3335, %v3359
        %v3373 = vadd.f32 %v3336, %v3359
        %v3374 = vadd.f32 %v3337, %v3359
        %v3375 = vadd.f32 %v3338, %v3364
        %v3376 = vadd.f32 %v3339, %v3364
        %v3377 = vadd.f32 %v3340, %v3364
        %v3378 = vmax.f32 %v3366, 0.0
        %v3379 = vmax.f32 %v3367, 0.0
        %v3380 = vmax.f32 %v3368, 0.0
        %v3381 = vmax.f32 %v3369, 0.0
        %v3382 = vmax.f32 %v3370, 0.0
        %v3383 = vmax.f32 %v3371, 0.0
        %v3384 = vmax.f32 %v3372, 0.0
        %v3385 = vmax.f32 %v3373, 0.0
        %v3386 = vmax.f32 %v3374, 0.0
        %v3387 = vmax.f32 %v3375, 0.0
        %v3388 = vmax.f32 %v3376, 0.0
        %v3389 = vmax.f32 %v3377, 0.0
        %v3390 = vmul.f32 %v3378, %v1758
        %v3391 = vmul.f32 %v3379, %v1759
        %v3392 = vmul.f32 %v3380, %v1760
        %v3393 = vmul.f32 %v3381, %v1758
        %v3394 = vmul.f32 %v3382, %v1759
        %v3395 = vmul.f32 %v3383, %v1760
        %v3396 = vmul.f32 %v3384, %v1758
        %v3397 = vmul.f32 %v3385, %v1759
        %v3398 = vmul.f32 %v3386, %v1760
        %v3399 = vmul.f32 %v3387, %v1758
        %v3400 = vmul.f32 %v3388, %v1759
        %v3401 = vmul.f32 %v3389, %v1760
        %v3402 = vpack.c.bf16 %v3391, %v3390
        %v3403 = vpack.c.bf16 %v3392, %v3392
        %v3404 = vpack.c.bf16 %v3394, %v3393
        %v3405 = vpack.c.bf16 %v3395, %v3395
        %v3406 = vpack.c.bf16 %v3397, %v3396
        %v3407 = vpack.c.bf16 %v3398, %v3398
        %v3408 = vpack.c.bf16 %v3400, %v3399
        %v3409 = vpack.c.bf16 %v3401, %v3401
        %3410 = vst [vmem:[#allocation2 + $0x48] sm:$0xff] %v3402
        %3411 = vst [vmem:[#allocation2 + $0x50] sm:$0xf] %v3403
        %3412 = vst [vmem:[#allocation2 + $0x54] sm:$0xff] %v3404
        %3413 = vst [vmem:[#allocation2 + $0x5c] sm:$0xf] %v3405
        %3414 = vst [vmem:[#allocation2 + $0x60] sm:$0xff] %v3406
        %3415 = vst [vmem:[#allocation2 + $0x68] sm:$0xf] %v3407
        %3416 = vst [vmem:[#allocation2 + $0x6c] sm:$0xff] %v3408
        %3417 = vst [vmem:[#allocation2 + $0x74] sm:$0xf] %v3409
        %s3418 = scalar_lea.vmem %s2, 576
        %v3419 = vld [vmem:[%s3418] sm:$0xf]
        %v3420 = vld [vmem:[%s3418 + $0x8] sm:$0xf]
        %v3421 = vld [vmem:[%s3418 + $0x10] sm:$0xf]
        %v3422 = vld [vmem:[%s3418 + $0x18] sm:$0xf]
        %v3423 = vld [vmem:[%s3418 + $0x20] sm:$0xf]
        %v3424 = vld [vmem:[%s3418 + $0x28] sm:$0xf]
        %v3425 = vld [vmem:[%s3418 + $0x30] sm:$0xf]
        %v3426 = vld [vmem:[%s3418 + $0x38] sm:$0xf]
        %v3427 = vld [vmem:[%s3418 + $0x40] sm:$0xf]
        %v3428 = vld [vmem:[%s3418 + $0x48] sm:$0xf]
        %v3429 = vld [vmem:[%s3418 + $0x50] sm:$0xf]
        %v3430 = vld [vmem:[%s3418 + $0x58] sm:$0xf]
        %v3431 = vld [vmem:[#allocation2] sm:$0xff]
        %v3432 = vld [vmem:[#allocation2 + $0x8] sm:$0xf]
        %v3433 = vld [vmem:[#allocation2 + $0xc] sm:$0xff]
        %v3434 = vld [vmem:[#allocation2 + $0x14] sm:$0xf]
        %v3435 = vld [vmem:[#allocation2 + $0x18] sm:$0xff]
        %v3436 = vld [vmem:[#allocation2 + $0x20] sm:$0xf]
        %v3437 = vld [vmem:[#allocation2 + $0x24] sm:$0xff]
        %v3438 = vld [vmem:[#allocation2 + $0x2c] sm:$0xf]
        %v3439 = vld [vmem:[#allocation2 + $0x30] sm:$0xff]
        %v3440 = vld [vmem:[#allocation2 + $0x38] sm:$0xf]
        %v3441 = vld [vmem:[#allocation2 + $0x3c] sm:$0xff]
        %v3442 = vld [vmem:[#allocation2 + $0x44] sm:$0xf]
        %v3443 = vld [vmem:[#allocation2 + $0x48] sm:$0xff]
        %v3444 = vld [vmem:[#allocation2 + $0x50] sm:$0xf]
        %v3445 = vld [vmem:[#allocation2 + $0x54] sm:$0xff]
        %v3446 = vld [vmem:[#allocation2 + $0x5c] sm:$0xf]
        %v3447 = vld [vmem:[#allocation2 + $0x60] sm:$0xff]
        %v3448 = vld [vmem:[#allocation2 + $0x68] sm:$0xf]
        %v3449 = vld [vmem:[#allocation2 + $0x6c] sm:$0xff]
        %v3450 = vld [vmem:[#allocation2 + $0x74] sm:$0xf]
        %v3463 = vunpack.c.l.b16 %v3419
        %v3464 = vunpack.c.l.b16 %v3420
        %v3465 = vunpack.c.l.b16 %v3421
        %v3466 = vunpack.c.l.b16 %v3422
        %v3467 = vunpack.c.l.b16 %v3423
        %v3468 = vunpack.c.l.b16 %v3424
        %v3469 = vunpack.c.l.b16 %v3425
        %v3470 = vunpack.c.l.b16 %v3426
        %v3471 = vunpack.c.l.b16 %v3427
        %v3472 = vunpack.c.l.b16 %v3428
        %v3473 = vunpack.c.l.b16 %v3429
        %v3474 = vunpack.c.l.b16 %v3430
        %v3475 = vpack.c.b16 %v3464, %v3463
        %v3476 = vpack.c.b16 %v3466, %v3465
        %v3477 = vpack.c.b16 %v3468, %v3467
        %v3478 = vpack.c.b16 %v3470, %v3469
        %v3479 = vpack.c.b16 %v3472, %v3471
        %v3480 = vpack.c.b16 %v3474, %v3473
        %v3501 = vunpack.c.l.b16 %v3431
        %v3502 = vunpack.c.h.b16 %v3431
        %v3503 = vunpack.c.l.b16 %v3432
        %v3504 = vunpack.c.l.b16 %v3433
        %v3505 = vunpack.c.h.b16 %v3433
        %v3506 = vunpack.c.l.b16 %v3434
        %v3507 = vunpack.c.l.b16 %v3435
        %v3508 = vunpack.c.h.b16 %v3435
        %v3509 = vunpack.c.l.b16 %v3436
        %v3510 = vunpack.c.l.b16 %v3437
        %v3511 = vunpack.c.h.b16 %v3437
        %v3512 = vunpack.c.l.b16 %v3438
        %v3513 = vunpack.c.l.b16 %v3439
        %v3514 = vunpack.c.h.b16 %v3439
        %v3515 = vunpack.c.l.b16 %v3440
        %v3516 = vunpack.c.l.b16 %v3441
        %v3517 = vunpack.c.h.b16 %v3441
        %v3518 = vunpack.c.l.b16 %v3442
        %v3519 = vunpack.c.l.b16 %v3443
        %v3520 = vunpack.c.h.b16 %v3443
        %v3521 = vunpack.c.l.b16 %v3444
        %v3522 = vunpack.c.l.b16 %v3445
        %v3523 = vunpack.c.h.b16 %v3445
        %v3524 = vunpack.c.l.b16 %v3446
        %v3525 = vunpack.c.l.b16 %v3447
        %v3526 = vunpack.c.h.b16 %v3447
        %v3527 = vunpack.c.l.b16 %v3448
        %v3528 = vunpack.c.l.b16 %v3449
        %v3529 = vunpack.c.h.b16 %v3449
        %v3530 = vunpack.c.l.b16 %v3450
        %v3531 = vpack.c.b16 %v3504, %v3501
        %v3532 = vpack.c.b16 %v3505, %v3502
        %v3533 = vpack.c.b16 %v3506, %v3503
        %v3534 = vpack.c.b16 %v3510, %v3507
        %v3535 = vpack.c.b16 %v3511, %v3508
        %v3536 = vpack.c.b16 %v3512, %v3509
        %v3537 = vpack.c.b16 %v3516, %v3513
        %v3538 = vpack.c.b16 %v3517, %v3514
        %v3539 = vpack.c.b16 %v3518, %v3515
        %v3540 = vpack.c.b16 %v3522, %v3519
        %v3541 = vpack.c.b16 %v3523, %v3520
        %v3542 = vpack.c.b16 %v3524, %v3521
        %v3543 = vpack.c.b16 %v3528, %v3525
        %v3544 = vpack.c.b16 %v3529, %v3526
        %v3545 = vpack.c.b16 %v3530, %v3527
        %vm3561 = vcmask 654336
        %v3563 = vsel %vm3561, %v3475, 0
        %v3566 = vsel %vm3561, %v3476, 0
        %v3569 = vsel %vm3561, %v3477, 0
        %v3572 = vsel %vm3561, %v3478, 0
        %v3575 = vsel %vm3561, %v3479, 0
        %v3578 = vsel %vm3561, %v3480, 0
        %3580 = vmatpush.bf16.msra.mxu0 0
        %3581 = vmatpush.bf16.msra.mxu0 0
        %3582 = vmatpush.bf16.msra.mxu0 0
        %3583 = vmatpush.bf16.msra.mxu0 %v3543
        %3584 = vmatpush.bf16.msra.mxu0 %v3540
        %3585 = vmatpush.bf16.msra.mxu0 %v3537
        %3586 = vmatpush.bf16.msra.mxu0 %v3534
        %3587 = vmatpush.bf16.msra.mxu0 %v3531
        %3588 = vmatmul.bf16.gmra.mxu0 %v3563
        %v3589 = vpop.f32.mrf.mxu0
        %v3590 = vadd.f32 0.0, %v3589
        %v3591 = vpop.f32.mrf.mxu0
        %v3592 = vadd.f32 0.0, %v3591
        %3593 = vmatmul.bf16.gmra.mxu0 %v3566
        %v3594 = vpop.f32.mrf.mxu0
        %v3595 = vadd.f32 0.0, %v3594
        %v3596 = vpop.f32.mrf.mxu0
        %v3597 = vadd.f32 0.0, %v3596
        %3598 = vmatmul.bf16.gmra.mxu0 %v3569
        %v3599 = vpop.f32.mrf.mxu0
        %v3600 = vadd.f32 0.0, %v3599
        %v3601 = vpop.f32.mrf.mxu0
        %v3602 = vadd.f32 0.0, %v3601
        %3603 = vmatmul.bf16.gmra.mxu0 %v3572
        %v3604 = vpop.f32.mrf.mxu0
        %v3605 = vadd.f32 0.0, %v3604
        %v3606 = vpop.f32.mrf.mxu0
        %v3607 = vadd.f32 0.0, %v3606
        %3608 = vmatmul.bf16.gmra.mxu0 %v3575
        %v3609 = vpop.f32.mrf.mxu0
        %v3610 = vadd.f32 0.0, %v3609
        %v3611 = vpop.f32.mrf.mxu0
        %v3612 = vadd.f32 0.0, %v3611
        %3613 = vmatmul.bf16.gmra.mxu0 %v3578
        %v3614 = vpop.f32.mrf.mxu0
        %v3615 = vadd.f32 0.0, %v3614
        %v3616 = vpop.f32.mrf.mxu0
        %v3617 = vadd.f32 0.0, %v3616
        %3618 = vdwg.mxu0
        %3619 = vmatpush.bf16.msra.mxu0 0
        %3620 = vmatpush.bf16.msra.mxu0 0
        %3621 = vmatpush.bf16.msra.mxu0 0
        %3622 = vmatpush.bf16.msra.mxu0 %v3544
        %3623 = vmatpush.bf16.msra.mxu0 %v3541
        %3624 = vmatpush.bf16.msra.mxu0 %v3538
        %3625 = vmatpush.bf16.msra.mxu0 %v3535
        %3626 = vmatpush.bf16.msra.mxu0 %v3532
        %3627 = vmatmul.bf16.gmra.mxu0 %v3563
        %v3628 = vpop.f32.mrf.mxu0
        %v3629 = vadd.f32 0.0, %v3628
        %v3630 = vpop.f32.mrf.mxu0
        %v3631 = vadd.f32 0.0, %v3630
        %3632 = vmatmul.bf16.gmra.mxu0 %v3566
        %v3633 = vpop.f32.mrf.mxu0
        %v3634 = vadd.f32 0.0, %v3633
        %v3635 = vpop.f32.mrf.mxu0
        %v3636 = vadd.f32 0.0, %v3635
        %3637 = vmatmul.bf16.gmra.mxu0 %v3569
        %v3638 = vpop.f32.mrf.mxu0
        %v3639 = vadd.f32 0.0, %v3638
        %v3640 = vpop.f32.mrf.mxu0
        %v3641 = vadd.f32 0.0, %v3640
        %3642 = vmatmul.bf16.gmra.mxu0 %v3572
        %v3643 = vpop.f32.mrf.mxu0
        %v3644 = vadd.f32 0.0, %v3643
        %v3645 = vpop.f32.mrf.mxu0
        %v3646 = vadd.f32 0.0, %v3645
        %3647 = vmatmul.bf16.gmra.mxu0 %v3575
        %v3648 = vpop.f32.mrf.mxu0
        %v3649 = vadd.f32 0.0, %v3648
        %v3650 = vpop.f32.mrf.mxu0
        %v3651 = vadd.f32 0.0, %v3650
        %3652 = vmatmul.bf16.gmra.mxu0 %v3578
        %v3653 = vpop.f32.mrf.mxu0
        %v3654 = vadd.f32 0.0, %v3653
        %v3655 = vpop.f32.mrf.mxu0
        %v3656 = vadd.f32 0.0, %v3655
        %3657 = vdwg.mxu0
        %3658 = vmatpush.bf16.msra.mxu0 0
        %3659 = vmatpush.bf16.msra.mxu0 0
        %3660 = vmatpush.bf16.msra.mxu0 0
        %3661 = vmatpush.bf16.msra.mxu0 %v3545
        %3662 = vmatpush.bf16.msra.mxu0 %v3542
        %3663 = vmatpush.bf16.msra.mxu0 %v3539
        %3664 = vmatpush.bf16.msra.mxu0 %v3536
        %3665 = vmatpush.bf16.msra.mxu0 %v3533
        %3666 = vmatmul.bf16.gmra.mxu0 %v3563
        %v3667 = vpop.f32.mrf.mxu0
        %v3668 = vadd.f32 0.0, %v3667
        %v3669 = vpop.f32.mrf.mxu0
        %v3670 = vadd.f32 0.0, %v3669
        %3671 = vmatmul.bf16.gmra.mxu0 %v3566
        %v3672 = vpop.f32.mrf.mxu0
        %v3673 = vadd.f32 0.0, %v3672
        %v3674 = vpop.f32.mrf.mxu0
        %v3675 = vadd.f32 0.0, %v3674
        %3676 = vmatmul.bf16.gmra.mxu0 %v3569
        %v3677 = vpop.f32.mrf.mxu0
        %v3678 = vadd.f32 0.0, %v3677
        %v3679 = vpop.f32.mrf.mxu0
        %v3680 = vadd.f32 0.0, %v3679
        %3681 = vmatmul.bf16.gmra.mxu0 %v3572
        %v3682 = vpop.f32.mrf.mxu0
        %v3683 = vadd.f32 0.0, %v3682
        %v3684 = vpop.f32.mrf.mxu0
        %v3685 = vadd.f32 0.0, %v3684
        %3686 = vmatmul.bf16.gmra.mxu0 %v3575
        %v3687 = vpop.f32.mrf.mxu0
        %v3688 = vadd.f32 0.0, %v3687
        %v3689 = vpop.f32.mrf.mxu0
        %v3690 = vadd.f32 0.0, %v3689
        %3691 = vmatmul.bf16.gmra.mxu0 %v3578
        %v3692 = vpop.f32.mrf.mxu0
        %v3693 = vadd.f32 0.0, %v3692
        %v3694 = vpop.f32.mrf.mxu0
        %v3695 = vadd.f32 0.0, %v3694
        %3696 = vdwg.mxu0
        %3697 = vst [vmem:[#allocation3] sm:$0xff] %v3590
        %3698 = vst [vmem:[#allocation3 + $0x8] sm:$0xff] %v3629
        %3699 = vst [vmem:[#allocation3 + $0x10] sm:$0xff] %v3668
        %3700 = vst [vmem:[#allocation3 + $0x18] sm:$0xff] %v3592
        %3701 = vst [vmem:[#allocation3 + $0x20] sm:$0xff] %v3631
        %3702 = vst [vmem:[#allocation3 + $0x28] sm:$0xff] %v3670
        %3703 = vst [vmem:[#allocation3 + $0x30] sm:$0xff] %v3595
        %3704 = vst [vmem:[#allocation3 + $0x38] sm:$0xff] %v3634
        %3705 = vst [vmem:[#allocation3 + $0x40] sm:$0xff] %v3673
        %3706 = vst [vmem:[#allocation3 + $0x48] sm:$0xff] %v3597
        %3707 = vst [vmem:[#allocation3 + $0x50] sm:$0xff] %v3636
        %3708 = vst [vmem:[#allocation3 + $0x58] sm:$0xff] %v3675
        %3709 = vst [vmem:[#allocation3 + $0x60] sm:$0xff] %v3600
        %3710 = vst [vmem:[#allocation3 + $0x68] sm:$0xff] %v3639
        %3711 = vst [vmem:[#allocation3 + $0x70] sm:$0xff] %v3678
        %3712 = vst [vmem:[#allocation3 + $0x78] sm:$0xff] %v3602
        %3713 = vst [vmem:[#allocation3 + $0x80] sm:$0xff] %v3641
        %3714 = vst [vmem:[#allocation3 + $0x88] sm:$0xff] %v3680
        %3715 = vst [vmem:[#allocation3 + $0x90] sm:$0xff] %v3605
        %3716 = vst [vmem:[#allocation3 + $0x98] sm:$0xff] %v3644
        %3717 = vst [vmem:[#allocation3 + $0xa0] sm:$0xff] %v3683
        %3718 = vst [vmem:[#allocation3 + $0xa8] sm:$0xff] %v3607
        %3719 = vst [vmem:[#allocation3 + $0xb0] sm:$0xff] %v3646
        %3720 = vst [vmem:[#allocation3 + $0xb8] sm:$0xff] %v3685
        %3721 = vst [vmem:[#allocation3 + $0xc0] sm:$0xff] %v3610
        %3722 = vst [vmem:[#allocation3 + $0xc8] sm:$0xff] %v3649
        %3723 = vst [vmem:[#allocation3 + $0xd0] sm:$0xff] %v3688
        %3724 = vst [vmem:[#allocation3 + $0xd8] sm:$0xff] %v3612
        %3725 = vst [vmem:[#allocation3 + $0xe0] sm:$0xff] %v3651
        %3726 = vst [vmem:[#allocation3 + $0xe8] sm:$0xff] %v3690
        %3727 = vst [vmem:[#allocation3 + $0xf0] sm:$0xff] %v3615
        %3728 = vst [vmem:[#allocation3 + $0xf8] sm:$0xff] %v3654
        %3729 = vst [vmem:[#allocation3 + $0x100] sm:$0xff] %v3693
        %3730 = vst [vmem:[#allocation3 + $0x108] sm:$0xff] %v3617
        %3731 = vst [vmem:[#allocation3 + $0x110] sm:$0xff] %v3656
        %3732 = vst [vmem:[#allocation3 + $0x118] sm:$0xff] %v3695
        %v3733 = vld [vmem:[#allocation3] sm:$0xff]
        %v3734 = vld [vmem:[#allocation3 + $0x8] sm:$0xff]
        %v3735 = vld [vmem:[#allocation3 + $0x10] sm:$0xff]
        %v3736 = vld [vmem:[#allocation3 + $0x18] sm:$0xff]
        %v3737 = vld [vmem:[#allocation3 + $0x20] sm:$0xff]
        %v3738 = vld [vmem:[#allocation3 + $0x28] sm:$0xff]
        %v3739 = vld [vmem:[#allocation3 + $0x30] sm:$0xff]
        %v3740 = vld [vmem:[#allocation3 + $0x38] sm:$0xff]
        %v3741 = vld [vmem:[#allocation3 + $0x40] sm:$0xff]
        %v3742 = vld [vmem:[#allocation3 + $0x48] sm:$0xff]
        %v3743 = vld [vmem:[#allocation3 + $0x50] sm:$0xff]
        %v3744 = vld [vmem:[#allocation3 + $0x58] sm:$0xff]
        %3749 = vrot.lane.b32.xlu0 %v3735, 19
        %v3750 = vpop.permute.xlu0 %3749
        %3751 = vrot.lane.b32.xlu0 %v3738, 19
        %v3752 = vpop.permute.xlu0 %3751
        %3753 = vrot.lane.b32.xlu0 %v3741, 19
        %v3754 = vpop.permute.xlu0 %3753
        %3755 = vrot.lane.b32.xlu0 %v3744, 19
        %v3756 = vpop.permute.xlu0 %3755
        %3769 = vrot.lane.b32.xlu0 %v3733, 19
        %v3770 = vpop.permute.xlu0 %3769
        %3771 = vrot.lane.b32.xlu0 %v3734, 19
        %v3772 = vpop.permute.xlu0 %3771
        %3773 = vrot.lane.b32.xlu0 %v3736, 19
        %v3774 = vpop.permute.xlu0 %3773
        %3775 = vrot.lane.b32.xlu0 %v3737, 19
        %v3776 = vpop.permute.xlu0 %3775
        %3777 = vrot.lane.b32.xlu0 %v3739, 19
        %v3778 = vpop.permute.xlu0 %3777
        %3779 = vrot.lane.b32.xlu0 %v3740, 19
        %v3780 = vpop.permute.xlu0 %3779
        %3781 = vrot.lane.b32.xlu0 %v3742, 19
        %v3782 = vpop.permute.xlu0 %3781
        %3783 = vrot.lane.b32.xlu0 %v3743, 19
        %v3784 = vpop.permute.xlu0 %3783
        %v3785 = vsel %vm559, %v3770, %v3772
        %v3786 = vsel %vm559, %v3772, %v3750
        %v3787 = vsel %vm559, %v3774, %v3776
        %v3788 = vsel %vm559, %v3776, %v3752
        %v3789 = vsel %vm559, %v3778, %v3780
        %v3790 = vsel %vm559, %v3780, %v3754
        %v3791 = vsel %vm559, %v3782, %v3784
        %v3792 = vsel %vm559, %v3784, %v3756
        %v3805 = vsel %vm559, %v3750, %v3770
        %v3806 = vsel %vm559, %v3752, %v3774
        %v3807 = vsel %vm559, %v3754, %v3778
        %v3808 = vsel %vm559, %v3756, %v3782
        %v3809 = vadd.f32 %v3805, 0.0
        %v3810 = vadd.f32 %v3785, 0.0
        %v3811 = vadd.f32 %v3786, 0.0
        %v3812 = vadd.f32 %v3806, 0.0
        %v3813 = vadd.f32 %v3787, 0.0
        %v3814 = vadd.f32 %v3788, 0.0
        %v3815 = vadd.f32 %v3807, 0.0
        %v3816 = vadd.f32 %v3789, 0.0
        %v3817 = vadd.f32 %v3790, 0.0
        %v3818 = vadd.f32 %v3808, 0.0
        %v3819 = vadd.f32 %v3791, 0.0
        %v3820 = vadd.f32 %v3792, 0.0
        %v3821 = vld [vmem:[#allocation3 + $0x60] sm:$0xff]
        %v3822 = vld [vmem:[#allocation3 + $0x68] sm:$0xff]
        %v3823 = vld [vmem:[#allocation3 + $0x70] sm:$0xff]
        %v3824 = vld [vmem:[#allocation3 + $0x78] sm:$0xff]
        %v3825 = vld [vmem:[#allocation3 + $0x80] sm:$0xff]
        %v3826 = vld [vmem:[#allocation3 + $0x88] sm:$0xff]
        %v3827 = vld [vmem:[#allocation3 + $0x90] sm:$0xff]
        %v3828 = vld [vmem:[#allocation3 + $0x98] sm:$0xff]
        %v3829 = vld [vmem:[#allocation3 + $0xa0] sm:$0xff]
        %v3830 = vld [vmem:[#allocation3 + $0xa8] sm:$0xff]
        %v3831 = vld [vmem:[#allocation3 + $0xb0] sm:$0xff]
        %v3832 = vld [vmem:[#allocation3 + $0xb8] sm:$0xff]
        %3837 = vrot.lane.b32.xlu0 %v3823, 18
        %v3838 = vpop.permute.xlu0 %3837
        %3839 = vrot.lane.b32.xlu0 %v3826, 18
        %v3840 = vpop.permute.xlu0 %3839
        %3841 = vrot.lane.b32.xlu0 %v3829, 18
        %v3842 = vpop.permute.xlu0 %3841
        %3843 = vrot.lane.b32.xlu0 %v3832, 18
        %v3844 = vpop.permute.xlu0 %3843
        %3857 = vrot.lane.b32.xlu0 %v3821, 18
        %v3858 = vpop.permute.xlu0 %3857
        %3859 = vrot.lane.b32.xlu0 %v3822, 18
        %v3860 = vpop.permute.xlu0 %3859
        %3861 = vrot.lane.b32.xlu0 %v3824, 18
        %v3862 = vpop.permute.xlu0 %3861
        %3863 = vrot.lane.b32.xlu0 %v3825, 18
        %v3864 = vpop.permute.xlu0 %3863
        %3865 = vrot.lane.b32.xlu0 %v3827, 18
        %v3866 = vpop.permute.xlu0 %3865
        %3867 = vrot.lane.b32.xlu0 %v3828, 18
        %v3868 = vpop.permute.xlu0 %3867
        %3869 = vrot.lane.b32.xlu0 %v3830, 18
        %v3870 = vpop.permute.xlu0 %3869
        %3871 = vrot.lane.b32.xlu0 %v3831, 18
        %v3872 = vpop.permute.xlu0 %3871
        %v3873 = vsel %vm648, %v3858, %v3860
        %v3874 = vsel %vm648, %v3860, %v3838
        %v3875 = vsel %vm648, %v3862, %v3864
        %v3876 = vsel %vm648, %v3864, %v3840
        %v3877 = vsel %vm648, %v3866, %v3868
        %v3878 = vsel %vm648, %v3868, %v3842
        %v3879 = vsel %vm648, %v3870, %v3872
        %v3880 = vsel %vm648, %v3872, %v3844
        %v3893 = vsel %vm648, %v3838, %v3858
        %v3894 = vsel %vm648, %v3840, %v3862
        %v3895 = vsel %vm648, %v3842, %v3866
        %v3896 = vsel %vm648, %v3844, %v3870
        %v3897 = vadd.f32 %v3809, %v3893
        %v3898 = vadd.f32 %v3810, %v3873
        %v3899 = vadd.f32 %v3811, %v3874
        %v3900 = vadd.f32 %v3812, %v3894
        %v3901 = vadd.f32 %v3813, %v3875
        %v3902 = vadd.f32 %v3814, %v3876
        %v3903 = vadd.f32 %v3815, %v3895
        %v3904 = vadd.f32 %v3816, %v3877
        %v3905 = vadd.f32 %v3817, %v3878
        %v3906 = vadd.f32 %v3818, %v3896
        %v3907 = vadd.f32 %v3819, %v3879
        %v3908 = vadd.f32 %v3820, %v3880
        %v3909 = vld [vmem:[#allocation3 + $0xc0] sm:$0xff]
        %v3910 = vld [vmem:[#allocation3 + $0xc8] sm:$0xff]
        %v3911 = vld [vmem:[#allocation3 + $0xd0] sm:$0xff]
        %v3912 = vld [vmem:[#allocation3 + $0xd8] sm:$0xff]
        %v3913 = vld [vmem:[#allocation3 + $0xe0] sm:$0xff]
        %v3914 = vld [vmem:[#allocation3 + $0xe8] sm:$0xff]
        %v3915 = vld [vmem:[#allocation3 + $0xf0] sm:$0xff]
        %v3916 = vld [vmem:[#allocation3 + $0xf8] sm:$0xff]
        %v3917 = vld [vmem:[#allocation3 + $0x100] sm:$0xff]
        %v3918 = vld [vmem:[#allocation3 + $0x108] sm:$0xff]
        %v3919 = vld [vmem:[#allocation3 + $0x110] sm:$0xff]
        %v3920 = vld [vmem:[#allocation3 + $0x118] sm:$0xff]
        %3925 = vrot.lane.b32.xlu0 %v3911, 17
        %v3926 = vpop.permute.xlu0 %3925
        %3927 = vrot.lane.b32.xlu0 %v3914, 17
        %v3928 = vpop.permute.xlu0 %3927
        %3929 = vrot.lane.b32.xlu0 %v3917, 17
        %v3930 = vpop.permute.xlu0 %3929
        %3931 = vrot.lane.b32.xlu0 %v3920, 17
        %v3932 = vpop.permute.xlu0 %3931
        %3945 = vrot.lane.b32.xlu0 %v3909, 17
        %v3946 = vpop.permute.xlu0 %3945
        %3947 = vrot.lane.b32.xlu0 %v3910, 17
        %v3948 = vpop.permute.xlu0 %3947
        %3949 = vrot.lane.b32.xlu0 %v3912, 17
        %v3950 = vpop.permute.xlu0 %3949
        %3951 = vrot.lane.b32.xlu0 %v3913, 17
        %v3952 = vpop.permute.xlu0 %3951
        %3953 = vrot.lane.b32.xlu0 %v3915, 17
        %v3954 = vpop.permute.xlu0 %3953
        %3955 = vrot.lane.b32.xlu0 %v3916, 17
        %v3956 = vpop.permute.xlu0 %3955
        %3957 = vrot.lane.b32.xlu0 %v3918, 17
        %v3958 = vpop.permute.xlu0 %3957
        %3959 = vrot.lane.b32.xlu0 %v3919, 17
        %v3960 = vpop.permute.xlu0 %3959
        %v3961 = vsel %vm737, %v3946, %v3948
        %v3962 = vsel %vm737, %v3948, %v3926
        %v3963 = vsel %vm737, %v3950, %v3952
        %v3964 = vsel %vm737, %v3952, %v3928
        %v3965 = vsel %vm737, %v3954, %v3956
        %v3966 = vsel %vm737, %v3956, %v3930
        %v3967 = vsel %vm737, %v3958, %v3960
        %v3968 = vsel %vm737, %v3960, %v3932
        %v3981 = vsel %vm737, %v3926, %v3946
        %v3982 = vsel %vm737, %v3928, %v3950
        %v3983 = vsel %vm737, %v3930, %v3954
        %v3984 = vsel %vm737, %v3932, %v3958
        %v3985 = vadd.f32 %v3897, %v3981
        %v3986 = vadd.f32 %v3898, %v3961
        %v3987 = vadd.f32 %v3899, %v3962
        %v3988 = vadd.f32 %v3900, %v3982
        %v3989 = vadd.f32 %v3901, %v3963
        %v3990 = vadd.f32 %v3902, %v3964
        %v3991 = vadd.f32 %v3903, %v3983
        %v3992 = vadd.f32 %v3904, %v3965
        %v3993 = vadd.f32 %v3905, %v3966
        %v3994 = vadd.f32 %v3906, %v3984
        %v3995 = vadd.f32 %v3907, %v3967
        %v3996 = vadd.f32 %v3908, %v3968
        %v3997 = vld [vmem:[%s3418 + $0x60] sm:$0xf]
        %v3998 = vld [vmem:[%s3418 + $0x68] sm:$0xf]
        %v3999 = vld [vmem:[%s3418 + $0x70] sm:$0xf]
        %v4000 = vld [vmem:[%s3418 + $0x78] sm:$0xf]
        %v4001 = vld [vmem:[%s3418 + $0x80] sm:$0xf]
        %v4002 = vld [vmem:[%s3418 + $0x88] sm:$0xf]
        %v4003 = vld [vmem:[%s3418 + $0x90] sm:$0xf]
        %v4004 = vld [vmem:[%s3418 + $0x98] sm:$0xf]
        %v4005 = vld [vmem:[%s3418 + $0xa0] sm:$0xf]
        %v4006 = vld [vmem:[%s3418 + $0xa8] sm:$0xf]
        %v4007 = vld [vmem:[%s3418 + $0xb0] sm:$0xf]
        %v4008 = vld [vmem:[%s3418 + $0xb8] sm:$0xf]
        %v4009 = vld [vmem:[#allocation2] sm:$0xff]
        %v4010 = vld [vmem:[#allocation2 + $0x8] sm:$0xf]
        %v4011 = vld [vmem:[#allocation2 + $0xc] sm:$0xff]
        %v4012 = vld [vmem:[#allocation2 + $0x14] sm:$0xf]
        %v4013 = vld [vmem:[#allocation2 + $0x18] sm:$0xff]
        %v4014 = vld [vmem:[#allocation2 + $0x20] sm:$0xf]
        %v4015 = vld [vmem:[#allocation2 + $0x24] sm:$0xff]
        %v4016 = vld [vmem:[#allocation2 + $0x2c] sm:$0xf]
        %v4017 = vld [vmem:[#allocation2 + $0x30] sm:$0xff]
        %v4018 = vld [vmem:[#allocation2 + $0x38] sm:$0xf]
        %v4019 = vld [vmem:[#allocation2 + $0x3c] sm:$0xff]
        %v4020 = vld [vmem:[#allocation2 + $0x44] sm:$0xf]
        %v4021 = vld [vmem:[#allocation2 + $0x48] sm:$0xff]
        %v4022 = vld [vmem:[#allocation2 + $0x50] sm:$0xf]
        %v4023 = vld [vmem:[#allocation2 + $0x54] sm:$0xff]
        %v4024 = vld [vmem:[#allocation2 + $0x5c] sm:$0xf]
        %v4025 = vld [vmem:[#allocation2 + $0x60] sm:$0xff]
        %v4026 = vld [vmem:[#allocation2 + $0x68] sm:$0xf]
        %v4027 = vld [vmem:[#allocation2 + $0x6c] sm:$0xff]
        %v4028 = vld [vmem:[#allocation2 + $0x74] sm:$0xf]
        %v4041 = vunpack.c.l.b16 %v3997
        %v4042 = vunpack.c.l.b16 %v3998
        %v4043 = vunpack.c.l.b16 %v3999
        %v4044 = vunpack.c.l.b16 %v4000
        %v4045 = vunpack.c.l.b16 %v4001
        %v4046 = vunpack.c.l.b16 %v4002
        %v4047 = vunpack.c.l.b16 %v4003
        %v4048 = vunpack.c.l.b16 %v4004
        %v4049 = vunpack.c.l.b16 %v4005
        %v4050 = vunpack.c.l.b16 %v4006
        %v4051 = vunpack.c.l.b16 %v4007
        %v4052 = vunpack.c.l.b16 %v4008
        %v4053 = vpack.c.b16 %v4042, %v4041
        %v4054 = vpack.c.b16 %v4044, %v4043
        %v4055 = vpack.c.b16 %v4046, %v4045
        %v4056 = vpack.c.b16 %v4048, %v4047
        %v4057 = vpack.c.b16 %v4050, %v4049
        %v4058 = vpack.c.b16 %v4052, %v4051
        %v4079 = vunpack.c.l.b16 %v4009
        %v4080 = vunpack.c.h.b16 %v4009
        %v4081 = vunpack.c.l.b16 %v4010
        %v4082 = vunpack.c.l.b16 %v4011
        %v4083 = vunpack.c.h.b16 %v4011
        %v4084 = vunpack.c.l.b16 %v4012
        %v4085 = vunpack.c.l.b16 %v4013
        %v4086 = vunpack.c.h.b16 %v4013
        %v4087 = vunpack.c.l.b16 %v4014
        %v4088 = vunpack.c.l.b16 %v4015
        %v4089 = vunpack.c.h.b16 %v4015
        %v4090 = vunpack.c.l.b16 %v4016
        %v4091 = vunpack.c.l.b16 %v4017
        %v4092 = vunpack.c.h.b16 %v4017
        %v4093 = vunpack.c.l.b16 %v4018
        %v4094 = vunpack.c.l.b16 %v4019
        %v4095 = vunpack.c.h.b16 %v4019
        %v4096 = vunpack.c.l.b16 %v4020
        %v4097 = vunpack.c.l.b16 %v4021
        %v4098 = vunpack.c.h.b16 %v4021
        %v4099 = vunpack.c.l.b16 %v4022
        %v4100 = vunpack.c.l.b16 %v4023
        %v4101 = vunpack.c.h.b16 %v4023
        %v4102 = vunpack.c.l.b16 %v4024
        %v4103 = vunpack.c.l.b16 %v4025
        %v4104 = vunpack.c.h.b16 %v4025
        %v4105 = vunpack.c.l.b16 %v4026
        %v4106 = vunpack.c.l.b16 %v4027
        %v4107 = vunpack.c.h.b16 %v4027
        %v4108 = vunpack.c.l.b16 %v4028
        %v4109 = vpack.c.b16 %v4082, %v4079
        %v4110 = vpack.c.b16 %v4083, %v4080
        %v4111 = vpack.c.b16 %v4084, %v4081
        %v4112 = vpack.c.b16 %v4088, %v4085
        %v4113 = vpack.c.b16 %v4089, %v4086
        %v4114 = vpack.c.b16 %v4090, %v4087
        %v4115 = vpack.c.b16 %v4094, %v4091
        %v4116 = vpack.c.b16 %v4095, %v4092
        %v4117 = vpack.c.b16 %v4096, %v4093
        %v4118 = vpack.c.b16 %v4100, %v4097
        %v4119 = vpack.c.b16 %v4101, %v4098
        %v4120 = vpack.c.b16 %v4102, %v4099
        %v4121 = vpack.c.b16 %v4106, %v4103
        %v4122 = vpack.c.b16 %v4107, %v4104
        %v4123 = vpack.c.b16 %v4108, %v4105
        %v4140 = vsel %vm3561, %v4053, 0
        %v4143 = vsel %vm3561, %v4054, 0
        %v4146 = vsel %vm3561, %v4055, 0
        %v4149 = vsel %vm3561, %v4056, 0
        %v4152 = vsel %vm3561, %v4057, 0
        %v4155 = vsel %vm3561, %v4058, 0
        %4157 = vmatpush.bf16.msra.mxu0 0
        %4158 = vmatpush.bf16.msra.mxu0 0
        %4159 = vmatpush.bf16.msra.mxu0 0
        %4160 = vmatpush.bf16.msra.mxu0 %v4121
        %4161 = vmatpush.bf16.msra.mxu0 %v4118
        %4162 = vmatpush.bf16.msra.mxu0 %v4115
        %4163 = vmatpush.bf16.msra.mxu0 %v4112
        %4164 = vmatpush.bf16.msra.mxu0 %v4109
        %4165 = vmatmul.bf16.gmra.mxu0 %v4140
        %v4166 = vpop.f32.mrf.mxu0
        %v4167 = vadd.f32 0.0, %v4166
        %v4168 = vpop.f32.mrf.mxu0
        %v4169 = vadd.f32 0.0, %v4168
        %4170 = vmatmul.bf16.gmra.mxu0 %v4143
        %v4171 = vpop.f32.mrf.mxu0
        %v4172 = vadd.f32 0.0, %v4171
        %v4173 = vpop.f32.mrf.mxu0
        %v4174 = vadd.f32 0.0, %v4173
        %4175 = vmatmul.bf16.gmra.mxu0 %v4146
        %v4176 = vpop.f32.mrf.mxu0
        %v4177 = vadd.f32 0.0, %v4176
        %v4178 = vpop.f32.mrf.mxu0
        %v4179 = vadd.f32 0.0, %v4178
        %4180 = vmatmul.bf16.gmra.mxu0 %v4149
        %v4181 = vpop.f32.mrf.mxu0
        %v4182 = vadd.f32 0.0, %v4181
        %v4183 = vpop.f32.mrf.mxu0
        %v4184 = vadd.f32 0.0, %v4183
        %4185 = vmatmul.bf16.gmra.mxu0 %v4152
        %v4186 = vpop.f32.mrf.mxu0
        %v4187 = vadd.f32 0.0, %v4186
        %v4188 = vpop.f32.mrf.mxu0
        %v4189 = vadd.f32 0.0, %v4188
        %4190 = vmatmul.bf16.gmra.mxu0 %v4155
        %v4191 = vpop.f32.mrf.mxu0
        %v4192 = vadd.f32 0.0, %v4191
        %v4193 = vpop.f32.mrf.mxu0
        %v4194 = vadd.f32 0.0, %v4193
        %4195 = vdwg.mxu0
        %4196 = vmatpush.bf16.msra.mxu0 0
        %4197 = vmatpush.bf16.msra.mxu0 0
        %4198 = vmatpush.bf16.msra.mxu0 0
        %4199 = vmatpush.bf16.msra.mxu0 %v4122
        %4200 = vmatpush.bf16.msra.mxu0 %v4119
        %4201 = vmatpush.bf16.msra.mxu0 %v4116
        %4202 = vmatpush.bf16.msra.mxu0 %v4113
        %4203 = vmatpush.bf16.msra.mxu0 %v4110
        %4204 = vmatmul.bf16.gmra.mxu0 %v4140
        %v4205 = vpop.f32.mrf.mxu0
        %v4206 = vadd.f32 0.0, %v4205
        %v4207 = vpop.f32.mrf.mxu0
        %v4208 = vadd.f32 0.0, %v4207
        %4209 = vmatmul.bf16.gmra.mxu0 %v4143
        %v4210 = vpop.f32.mrf.mxu0
        %v4211 = vadd.f32 0.0, %v4210
        %v4212 = vpop.f32.mrf.mxu0
        %v4213 = vadd.f32 0.0, %v4212
        %4214 = vmatmul.bf16.gmra.mxu0 %v4146
        %v4215 = vpop.f32.mrf.mxu0
        %v4216 = vadd.f32 0.0, %v4215
        %v4217 = vpop.f32.mrf.mxu0
        %v4218 = vadd.f32 0.0, %v4217
        %4219 = vmatmul.bf16.gmra.mxu0 %v4149
        %v4220 = vpop.f32.mrf.mxu0
        %v4221 = vadd.f32 0.0, %v4220
        %v4222 = vpop.f32.mrf.mxu0
        %v4223 = vadd.f32 0.0, %v4222
        %4224 = vmatmul.bf16.gmra.mxu0 %v4152
        %v4225 = vpop.f32.mrf.mxu0
        %v4226 = vadd.f32 0.0, %v4225
        %v4227 = vpop.f32.mrf.mxu0
        %v4228 = vadd.f32 0.0, %v4227
        %4229 = vmatmul.bf16.gmra.mxu0 %v4155
        %v4230 = vpop.f32.mrf.mxu0
        %v4231 = vadd.f32 0.0, %v4230
        %v4232 = vpop.f32.mrf.mxu0
        %v4233 = vadd.f32 0.0, %v4232
        %4234 = vdwg.mxu0
        %4235 = vmatpush.bf16.msra.mxu0 0
        %4236 = vmatpush.bf16.msra.mxu0 0
        %4237 = vmatpush.bf16.msra.mxu0 0
        %4238 = vmatpush.bf16.msra.mxu0 %v4123
        %4239 = vmatpush.bf16.msra.mxu0 %v4120
        %4240 = vmatpush.bf16.msra.mxu0 %v4117
        %4241 = vmatpush.bf16.msra.mxu0 %v4114
        %4242 = vmatpush.bf16.msra.mxu0 %v4111
        %4243 = vmatmul.bf16.gmra.mxu0 %v4140
        %v4244 = vpop.f32.mrf.mxu0
        %v4245 = vadd.f32 0.0, %v4244
        %v4246 = vpop.f32.mrf.mxu0
        %v4247 = vadd.f32 0.0, %v4246
        %4248 = vmatmul.bf16.gmra.mxu0 %v4143
        %v4249 = vpop.f32.mrf.mxu0
        %v4250 = vadd.f32 0.0, %v4249
        %v4251 = vpop.f32.mrf.mxu0
        %v4252 = vadd.f32 0.0, %v4251
        %4253 = vmatmul.bf16.gmra.mxu0 %v4146
        %v4254 = vpop.f32.mrf.mxu0
        %v4255 = vadd.f32 0.0, %v4254
        %v4256 = vpop.f32.mrf.mxu0
        %v4257 = vadd.f32 0.0, %v4256
        %4258 = vmatmul.bf16.gmra.mxu0 %v4149
        %v4259 = vpop.f32.mrf.mxu0
        %v4260 = vadd.f32 0.0, %v4259
        %v4261 = vpop.f32.mrf.mxu0
        %v4262 = vadd.f32 0.0, %v4261
        %4263 = vmatmul.bf16.gmra.mxu0 %v4152
        %v4264 = vpop.f32.mrf.mxu0
        %v4265 = vadd.f32 0.0, %v4264
        %v4266 = vpop.f32.mrf.mxu0
        %v4267 = vadd.f32 0.0, %v4266
        %4268 = vmatmul.bf16.gmra.mxu0 %v4155
        %v4269 = vpop.f32.mrf.mxu0
        %v4270 = vadd.f32 0.0, %v4269
        %v4271 = vpop.f32.mrf.mxu0
        %v4272 = vadd.f32 0.0, %v4271
        %4273 = vdwg.mxu0
        %4274 = vst [vmem:[#allocation3] sm:$0xff] %v4167
        %4275 = vst [vmem:[#allocation3 + $0x8] sm:$0xff] %v4206
        %4276 = vst [vmem:[#allocation3 + $0x10] sm:$0xff] %v4245
        %4277 = vst [vmem:[#allocation3 + $0x18] sm:$0xff] %v4169
        %4278 = vst [vmem:[#allocation3 + $0x20] sm:$0xff] %v4208
        %4279 = vst [vmem:[#allocation3 + $0x28] sm:$0xff] %v4247
        %4280 = vst [vmem:[#allocation3 + $0x30] sm:$0xff] %v4172
        %4281 = vst [vmem:[#allocation3 + $0x38] sm:$0xff] %v4211
        %4282 = vst [vmem:[#allocation3 + $0x40] sm:$0xff] %v4250
        %4283 = vst [vmem:[#allocation3 + $0x48] sm:$0xff] %v4174
        %4284 = vst [vmem:[#allocation3 + $0x50] sm:$0xff] %v4213
        %4285 = vst [vmem:[#allocation3 + $0x58] sm:$0xff] %v4252
        %4286 = vst [vmem:[#allocation3 + $0x60] sm:$0xff] %v4177
        %4287 = vst [vmem:[#allocation3 + $0x68] sm:$0xff] %v4216
        %4288 = vst [vmem:[#allocation3 + $0x70] sm:$0xff] %v4255
        %4289 = vst [vmem:[#allocation3 + $0x78] sm:$0xff] %v4179
        %4290 = vst [vmem:[#allocation3 + $0x80] sm:$0xff] %v4218
        %4291 = vst [vmem:[#allocation3 + $0x88] sm:$0xff] %v4257
        %4292 = vst [vmem:[#allocation3 + $0x90] sm:$0xff] %v4182
        %4293 = vst [vmem:[#allocation3 + $0x98] sm:$0xff] %v4221
        %4294 = vst [vmem:[#allocation3 + $0xa0] sm:$0xff] %v4260
        %4295 = vst [vmem:[#allocation3 + $0xa8] sm:$0xff] %v4184
        %4296 = vst [vmem:[#allocation3 + $0xb0] sm:$0xff] %v4223
        %4297 = vst [vmem:[#allocation3 + $0xb8] sm:$0xff] %v4262
        %4298 = vst [vmem:[#allocation3 + $0xc0] sm:$0xff] %v4187
        %4299 = vst [vmem:[#allocation3 + $0xc8] sm:$0xff] %v4226
        %4300 = vst [vmem:[#allocation3 + $0xd0] sm:$0xff] %v4265
        %4301 = vst [vmem:[#allocation3 + $0xd8] sm:$0xff] %v4189
        %4302 = vst [vmem:[#allocation3 + $0xe0] sm:$0xff] %v4228
        %4303 = vst [vmem:[#allocation3 + $0xe8] sm:$0xff] %v4267
        %4304 = vst [vmem:[#allocation3 + $0xf0] sm:$0xff] %v4192
        %4305 = vst [vmem:[#allocation3 + $0xf8] sm:$0xff] %v4231
        %4306 = vst [vmem:[#allocation3 + $0x100] sm:$0xff] %v4270
        %4307 = vst [vmem:[#allocation3 + $0x108] sm:$0xff] %v4194
        %4308 = vst [vmem:[#allocation3 + $0x110] sm:$0xff] %v4233
        %4309 = vst [vmem:[#allocation3 + $0x118] sm:$0xff] %v4272
        %v4310 = vld [vmem:[#allocation3] sm:$0xff]
        %v4311 = vld [vmem:[#allocation3 + $0x8] sm:$0xff]
        %v4312 = vld [vmem:[#allocation3 + $0x10] sm:$0xff]
        %v4313 = vld [vmem:[#allocation3 + $0x18] sm:$0xff]
        %v4314 = vld [vmem:[#allocation3 + $0x20] sm:$0xff]
        %v4315 = vld [vmem:[#allocation3 + $0x28] sm:$0xff]
        %v4316 = vld [vmem:[#allocation3 + $0x30] sm:$0xff]
        %v4317 = vld [vmem:[#allocation3 + $0x38] sm:$0xff]
        %v4318 = vld [vmem:[#allocation3 + $0x40] sm:$0xff]
        %v4319 = vld [vmem:[#allocation3 + $0x48] sm:$0xff]
        %v4320 = vld [vmem:[#allocation3 + $0x50] sm:$0xff]
        %v4321 = vld [vmem:[#allocation3 + $0x58] sm:$0xff]
        %4326 = vrot.lane.b32.xlu0 %v4312, 1
        %v4327 = vpop.permute.xlu0 %4326
        %4328 = vrot.lane.b32.xlu0 %v4315, 1
        %v4329 = vpop.permute.xlu0 %4328
        %4330 = vrot.lane.b32.xlu0 %v4318, 1
        %v4331 = vpop.permute.xlu0 %4330
        %4332 = vrot.lane.b32.xlu0 %v4321, 1
        %v4333 = vpop.permute.xlu0 %4332
        %4346 = vrot.lane.b32.xlu0 %v4310, 1
        %v4347 = vpop.permute.xlu0 %4346
        %4348 = vrot.lane.b32.xlu0 %v4311, 1
        %v4349 = vpop.permute.xlu0 %4348
        %4350 = vrot.lane.b32.xlu0 %v4313, 1
        %v4351 = vpop.permute.xlu0 %4350
        %4352 = vrot.lane.b32.xlu0 %v4314, 1
        %v4353 = vpop.permute.xlu0 %4352
        %4354 = vrot.lane.b32.xlu0 %v4316, 1
        %v4355 = vpop.permute.xlu0 %4354
        %4356 = vrot.lane.b32.xlu0 %v4317, 1
        %v4357 = vpop.permute.xlu0 %4356
        %4358 = vrot.lane.b32.xlu0 %v4319, 1
        %v4359 = vpop.permute.xlu0 %4358
        %4360 = vrot.lane.b32.xlu0 %v4320, 1
        %v4361 = vpop.permute.xlu0 %4360
        %v4362 = vsel %vm1059, %v4347, %v4349
        %v4363 = vsel %vm1059, %v4349, %v4327
        %v4364 = vsel %vm1059, %v4351, %v4353
        %v4365 = vsel %vm1059, %v4353, %v4329
        %v4366 = vsel %vm1059, %v4355, %v4357
        %v4367 = vsel %vm1059, %v4357, %v4331
        %v4368 = vsel %vm1059, %v4359, %v4361
        %v4369 = vsel %vm1059, %v4361, %v4333
        %v4382 = vsel %vm1059, %v4327, %v4347
        %v4383 = vsel %vm1059, %v4329, %v4351
        %v4384 = vsel %vm1059, %v4331, %v4355
        %v4385 = vsel %vm1059, %v4333, %v4359
        %v4386 = vadd.f32 %v3985, %v4382
        %v4387 = vadd.f32 %v3986, %v4362
        %v4388 = vadd.f32 %v3987, %v4363
        %v4389 = vadd.f32 %v3988, %v4383
        %v4390 = vadd.f32 %v3989, %v4364
        %v4391 = vadd.f32 %v3990, %v4365
        %v4392 = vadd.f32 %v3991, %v4384
        %v4393 = vadd.f32 %v3992, %v4366
        %v4394 = vadd.f32 %v3993, %v4367
        %v4395 = vadd.f32 %v3994, %v4385
        %v4396 = vadd.f32 %v3995, %v4368
        %v4397 = vadd.f32 %v3996, %v4369
        %v4398 = vld [vmem:[#allocation3 + $0x60] sm:$0xff]
        %v4399 = vld [vmem:[#allocation3 + $0x68] sm:$0xff]
        %v4400 = vld [vmem:[#allocation3 + $0x70] sm:$0xff]
        %v4401 = vld [vmem:[#allocation3 + $0x78] sm:$0xff]
        %v4402 = vld [vmem:[#allocation3 + $0x80] sm:$0xff]
        %v4403 = vld [vmem:[#allocation3 + $0x88] sm:$0xff]
        %v4404 = vld [vmem:[#allocation3 + $0x90] sm:$0xff]
        %v4405 = vld [vmem:[#allocation3 + $0x98] sm:$0xff]
        %v4406 = vld [vmem:[#allocation3 + $0xa0] sm:$0xff]
        %v4407 = vld [vmem:[#allocation3 + $0xa8] sm:$0xff]
        %v4408 = vld [vmem:[#allocation3 + $0xb0] sm:$0xff]
        %v4409 = vld [vmem:[#allocation3 + $0xb8] sm:$0xff]
        %v4410 = vadd.f32 %v4386, %v4398
        %v4411 = vadd.f32 %v4387, %v4399
        %v4412 = vadd.f32 %v4388, %v4400
        %v4413 = vadd.f32 %v4389, %v4401
        %v4414 = vadd.f32 %v4390, %v4402
        %v4415 = vadd.f32 %v4391, %v4403
        %v4416 = vadd.f32 %v4392, %v4404
        %v4417 = vadd.f32 %v4393, %v4405
        %v4418 = vadd.f32 %v4394, %v4406
        %v4419 = vadd.f32 %v4395, %v4407
        %v4420 = vadd.f32 %v4396, %v4408
        %v4421 = vadd.f32 %v4397, %v4409
        %v4422 = vld [vmem:[#allocation3 + $0xc0] sm:$0xff]
        %v4423 = vld [vmem:[#allocation3 + $0xc8] sm:$0xff]
        %v4424 = vld [vmem:[#allocation3 + $0xd0] sm:$0xff]
        %v4425 = vld [vmem:[#allocation3 + $0xd8] sm:$0xff]
        %v4426 = vld [vmem:[#allocation3 + $0xe0] sm:$0xff]
        %v4427 = vld [vmem:[#allocation3 + $0xe8] sm:$0xff]
        %v4428 = vld [vmem:[#allocation3 + $0xf0] sm:$0xff]
        %v4429 = vld [vmem:[#allocation3 + $0xf8] sm:$0xff]
        %v4430 = vld [vmem:[#allocation3 + $0x100] sm:$0xff]
        %v4431 = vld [vmem:[#allocation3 + $0x108] sm:$0xff]
        %v4432 = vld [vmem:[#allocation3 + $0x110] sm:$0xff]
        %v4433 = vld [vmem:[#allocation3 + $0x118] sm:$0xff]
        %4446 = vrot.lane.b32.xlu0 %v4422, 127
        %v4447 = vpop.permute.xlu0 %4446
        %4448 = vrot.lane.b32.xlu0 %v4423, 127
        %v4449 = vpop.permute.xlu0 %4448
        %4450 = vrot.lane.b32.xlu0 %v4424, 127
        %v4451 = vpop.permute.xlu0 %4450
        %4452 = vrot.lane.b32.xlu0 %v4425, 127
        %v4453 = vpop.permute.xlu0 %4452
        %4454 = vrot.lane.b32.xlu0 %v4426, 127
        %v4455 = vpop.permute.xlu0 %4454
        %4456 = vrot.lane.b32.xlu0 %v4427, 127
        %v4457 = vpop.permute.xlu0 %4456
        %4458 = vrot.lane.b32.xlu0 %v4428, 127
        %v4459 = vpop.permute.xlu0 %4458
        %4460 = vrot.lane.b32.xlu0 %v4429, 127
        %v4461 = vpop.permute.xlu0 %4460
        %4462 = vrot.lane.b32.xlu0 %v4430, 127
        %v4463 = vpop.permute.xlu0 %4462
        %4464 = vrot.lane.b32.xlu0 %v4431, 127
        %v4465 = vpop.permute.xlu0 %4464
        %4466 = vrot.lane.b32.xlu0 %v4432, 127
        %v4467 = vpop.permute.xlu0 %4466
        %4468 = vrot.lane.b32.xlu0 %v4433, 127
        %v4469 = vpop.permute.xlu0 %4468
        %v4470 = vsel %vm1168, %v4447, %v4449
        %v4471 = vsel %vm1168, %v4449, %v4451
        %v4472 = vsel %vm1168, %v4453, %v4455
        %v4473 = vsel %vm1168, %v4455, %v4457
        %v4474 = vsel %vm1168, %v4459, %v4461
        %v4475 = vsel %vm1168, %v4461, %v4463
        %v4476 = vsel %vm1168, %v4465, %v4467
        %v4477 = vsel %vm1168, %v4467, %v4469
        %v4494 = vsel %vm1168, %v4451, %v4447
        %v4495 = vsel %vm1168, %v4457, %v4453
        %v4496 = vsel %vm1168, %v4463, %v4459
        %v4497 = vsel %vm1168, %v4469, %v4465
        %v4498 = vadd.f32 %v4410, %v4470
        %v4499 = vadd.f32 %v4411, %v4471
        %v4500 = vadd.f32 %v4412, %v4494
        %v4501 = vadd.f32 %v4413, %v4472
        %v4502 = vadd.f32 %v4414, %v4473
        %v4503 = vadd.f32 %v4415, %v4495
        %v4504 = vadd.f32 %v4416, %v4474
        %v4505 = vadd.f32 %v4417, %v4475
        %v4506 = vadd.f32 %v4418, %v4496
        %v4507 = vadd.f32 %v4419, %v4476
        %v4508 = vadd.f32 %v4420, %v4477
        %v4509 = vadd.f32 %v4421, %v4497
        %v4510 = vld [vmem:[%s3418 + $0xc0] sm:$0xf]
        %v4511 = vld [vmem:[%s3418 + $0xc8] sm:$0xf]
        %v4512 = vld [vmem:[%s3418 + $0xd0] sm:$0xf]
        %v4513 = vld [vmem:[%s3418 + $0xd8] sm:$0xf]
        %v4514 = vld [vmem:[%s3418 + $0xe0] sm:$0xf]
        %v4515 = vld [vmem:[%s3418 + $0xe8] sm:$0xf]
        %v4516 = vld [vmem:[%s3418 + $0xf0] sm:$0xf]
        %v4517 = vld [vmem:[%s3418 + $0xf8] sm:$0xf]
        %v4518 = vld [vmem:[%s3418 + $0x100] sm:$0xf]
        %v4519 = vld [vmem:[%s3418 + $0x108] sm:$0xf]
        %v4520 = vld [vmem:[%s3418 + $0x110] sm:$0xf]
        %v4521 = vld [vmem:[%s3418 + $0x118] sm:$0xf]
        %v4522 = vld [vmem:[#allocation2] sm:$0xff]
        %v4523 = vld [vmem:[#allocation2 + $0x8] sm:$0xf]
        %v4524 = vld [vmem:[#allocation2 + $0xc] sm:$0xff]
        %v4525 = vld [vmem:[#allocation2 + $0x14] sm:$0xf]
        %v4526 = vld [vmem:[#allocation2 + $0x18] sm:$0xff]
        %v4527 = vld [vmem:[#allocation2 + $0x20] sm:$0xf]
        %v4528 = vld [vmem:[#allocation2 + $0x24] sm:$0xff]
        %v4529 = vld [vmem:[#allocation2 + $0x2c] sm:$0xf]
        %v4530 = vld [vmem:[#allocation2 + $0x30] sm:$0xff]
        %v4531 = vld [vmem:[#allocation2 + $0x38] sm:$0xf]
        %v4532 = vld [vmem:[#allocation2 + $0x3c] sm:$0xff]
        %v4533 = vld [vmem:[#allocation2 + $0x44] sm:$0xf]
        %v4534 = vld [vmem:[#allocation2 + $0x48] sm:$0xff]
        %v4535 = vld [vmem:[#allocation2 + $0x50] sm:$0xf]
        %v4536 = vld [vmem:[#allocation2 + $0x54] sm:$0xff]
        %v4537 = vld [vmem:[#allocation2 + $0x5c] sm:$0xf]
        %v4538 = vld [vmem:[#allocation2 + $0x60] sm:$0xff]
        %v4539 = vld [vmem:[#allocation2 + $0x68] sm:$0xf]
        %v4540 = vld [vmem:[#allocation2 + $0x6c] sm:$0xff]
        %v4541 = vld [vmem:[#allocation2 + $0x74] sm:$0xf]
        %v4554 = vunpack.c.l.b16 %v4510
        %v4555 = vunpack.c.l.b16 %v4511
        %v4556 = vunpack.c.l.b16 %v4512
        %v4557 = vunpack.c.l.b16 %v4513
        %v4558 = vunpack.c.l.b16 %v4514
        %v4559 = vunpack.c.l.b16 %v4515
        %v4560 = vunpack.c.l.b16 %v4516
        %v4561 = vunpack.c.l.b16 %v4517
        %v4562 = vunpack.c.l.b16 %v4518
        %v4563 = vunpack.c.l.b16 %v4519
        %v4564 = vunpack.c.l.b16 %v4520
        %v4565 = vunpack.c.l.b16 %v4521
        %v4566 = vpack.c.b16 %v4555, %v4554
        %v4567 = vpack.c.b16 %v4557, %v4556
        %v4568 = vpack.c.b16 %v4559, %v4558
        %v4569 = vpack.c.b16 %v4561, %v4560
        %v4570 = vpack.c.b16 %v4563, %v4562
        %v4571 = vpack.c.b16 %v4565, %v4564
        %v4592 = vunpack.c.l.b16 %v4522
        %v4593 = vunpack.c.h.b16 %v4522
        %v4594 = vunpack.c.l.b16 %v4523
        %v4595 = vunpack.c.l.b16 %v4524
        %v4596 = vunpack.c.h.b16 %v4524
        %v4597 = vunpack.c.l.b16 %v4525
        %v4598 = vunpack.c.l.b16 %v4526
        %v4599 = vunpack.c.h.b16 %v4526
        %v4600 = vunpack.c.l.b16 %v4527
        %v4601 = vunpack.c.l.b16 %v4528
        %v4602 = vunpack.c.h.b16 %v4528
        %v4603 = vunpack.c.l.b16 %v4529
        %v4604 = vunpack.c.l.b16 %v4530
        %v4605 = vunpack.c.h.b16 %v4530
        %v4606 = vunpack.c.l.b16 %v4531
        %v4607 = vunpack.c.l.b16 %v4532
        %v4608 = vunpack.c.h.b16 %v4532
        %v4609 = vunpack.c.l.b16 %v4533
        %v4610 = vunpack.c.l.b16 %v4534
        %v4611 = vunpack.c.h.b16 %v4534
        %v4612 = vunpack.c.l.b16 %v4535
        %v4613 = vunpack.c.l.b16 %v4536
        %v4614 = vunpack.c.h.b16 %v4536
        %v4615 = vunpack.c.l.b16 %v4537
        %v4616 = vunpack.c.l.b16 %v4538
        %v4617 = vunpack.c.h.b16 %v4538
        %v4618 = vunpack.c.l.b16 %v4539
        %v4619 = vunpack.c.l.b16 %v4540
        %v4620 = vunpack.c.h.b16 %v4540
        %v4621 = vunpack.c.l.b16 %v4541
        %v4622 = vpack.c.b16 %v4595, %v4592
        %v4623 = vpack.c.b16 %v4596, %v4593
        %v4624 = vpack.c.b16 %v4597, %v4594
        %v4625 = vpack.c.b16 %v4601, %v4598
        %v4626 = vpack.c.b16 %v4602, %v4599
        %v4627 = vpack.c.b16 %v4603, %v4600
        %v4628 = vpack.c.b16 %v4607, %v4604
        %v4629 = vpack.c.b16 %v4608, %v4605
        %v4630 = vpack.c.b16 %v4609, %v4606
        %v4631 = vpack.c.b16 %v4613, %v4610
        %v4632 = vpack.c.b16 %v4614, %v4611
        %v4633 = vpack.c.b16 %v4615, %v4612
        %v4634 = vpack.c.b16 %v4619, %v4616
        %v4635 = vpack.c.b16 %v4620, %v4617
        %v4636 = vpack.c.b16 %v4621, %v4618
        %v4653 = vsel %vm3561, %v4566, 0
        %v4656 = vsel %vm3561, %v4567, 0
        %v4659 = vsel %vm3561, %v4568, 0
        %v4662 = vsel %vm3561, %v4569, 0
        %v4665 = vsel %vm3561, %v4570, 0
        %v4668 = vsel %vm3561, %v4571, 0
        %4670 = vmatpush.bf16.msra.mxu0 0
        %4671 = vmatpush.bf16.msra.mxu0 0
        %4672 = vmatpush.bf16.msra.mxu0 0
        %4673 = vmatpush.bf16.msra.mxu0 %v4634
        %4674 = vmatpush.bf16.msra.mxu0 %v4631
        %4675 = vmatpush.bf16.msra.mxu0 %v4628
        %4676 = vmatpush.bf16.msra.mxu0 %v4625
        %4677 = vmatpush.bf16.msra.mxu0 %v4622
        %4678 = vmatmul.bf16.gmra.mxu0 %v4653
        %v4679 = vpop.f32.mrf.mxu0
        %v4680 = vadd.f32 0.0, %v4679
        %v4681 = vpop.f32.mrf.mxu0
        %v4682 = vadd.f32 0.0, %v4681
        %4683 = vmatmul.bf16.gmra.mxu0 %v4656
        %v4684 = vpop.f32.mrf.mxu0
        %v4685 = vadd.f32 0.0, %v4684
        %v4686 = vpop.f32.mrf.mxu0
        %v4687 = vadd.f32 0.0, %v4686
        %4688 = vmatmul.bf16.gmra.mxu0 %v4659
        %v4689 = vpop.f32.mrf.mxu0
        %v4690 = vadd.f32 0.0, %v4689
        %v4691 = vpop.f32.mrf.mxu0
        %v4692 = vadd.f32 0.0, %v4691
        %4693 = vmatmul.bf16.gmra.mxu0 %v4662
        %v4694 = vpop.f32.mrf.mxu0
        %v4695 = vadd.f32 0.0, %v4694
        %v4696 = vpop.f32.mrf.mxu0
        %v4697 = vadd.f32 0.0, %v4696
        %4698 = vmatmul.bf16.gmra.mxu0 %v4665
        %v4699 = vpop.f32.mrf.mxu0
        %v4700 = vadd.f32 0.0, %v4699
        %v4701 = vpop.f32.mrf.mxu0
        %v4702 = vadd.f32 0.0, %v4701
        %4703 = vmatmul.bf16.gmra.mxu0 %v4668
        %v4704 = vpop.f32.mrf.mxu0
        %v4705 = vadd.f32 0.0, %v4704
        %v4706 = vpop.f32.mrf.mxu0
        %v4707 = vadd.f32 0.0, %v4706
        %4708 = vdwg.mxu0
        %4709 = vmatpush.bf16.msra.mxu0 0
        %4710 = vmatpush.bf16.msra.mxu0 0
        %4711 = vmatpush.bf16.msra.mxu0 0
        %4712 = vmatpush.bf16.msra.mxu0 %v4635
        %4713 = vmatpush.bf16.msra.mxu0 %v4632
        %4714 = vmatpush.bf16.msra.mxu0 %v4629
        %4715 = vmatpush.bf16.msra.mxu0 %v4626
        %4716 = vmatpush.bf16.msra.mxu0 %v4623
        %4717 = vmatmul.bf16.gmra.mxu0 %v4653
        %v4718 = vpop.f32.mrf.mxu0
        %v4719 = vadd.f32 0.0, %v4718
        %v4720 = vpop.f32.mrf.mxu0
        %v4721 = vadd.f32 0.0, %v4720
        %4722 = vmatmul.bf16.gmra.mxu0 %v4656
        %v4723 = vpop.f32.mrf.mxu0
        %v4724 = vadd.f32 0.0, %v4723
        %v4725 = vpop.f32.mrf.mxu0
        %v4726 = vadd.f32 0.0, %v4725
        %4727 = vmatmul.bf16.gmra.mxu0 %v4659
        %v4728 = vpop.f32.mrf.mxu0
        %v4729 = vadd.f32 0.0, %v4728
        %v4730 = vpop.f32.mrf.mxu0
        %v4731 = vadd.f32 0.0, %v4730
        %4732 = vmatmul.bf16.gmra.mxu0 %v4662
        %v4733 = vpop.f32.mrf.mxu0
        %v4734 = vadd.f32 0.0, %v4733
        %v4735 = vpop.f32.mrf.mxu0
        %v4736 = vadd.f32 0.0, %v4735
        %4737 = vmatmul.bf16.gmra.mxu0 %v4665
        %v4738 = vpop.f32.mrf.mxu0
        %v4739 = vadd.f32 0.0, %v4738
        %v4740 = vpop.f32.mrf.mxu0
        %v4741 = vadd.f32 0.0, %v4740
        %4742 = vmatmul.bf16.gmra.mxu0 %v4668
        %v4743 = vpop.f32.mrf.mxu0
        %v4744 = vadd.f32 0.0, %v4743
        %v4745 = vpop.f32.mrf.mxu0
        %v4746 = vadd.f32 0.0, %v4745
        %4747 = vdwg.mxu0
        %4748 = vmatpush.bf16.msra.mxu0 0
        %4749 = vmatpush.bf16.msra.mxu0 0
        %4750 = vmatpush.bf16.msra.mxu0 0
        %4751 = vmatpush.bf16.msra.mxu0 %v4636
        %4752 = vmatpush.bf16.msra.mxu0 %v4633
        %4753 = vmatpush.bf16.msra.mxu0 %v4630
        %4754 = vmatpush.bf16.msra.mxu0 %v4627
        %4755 = vmatpush.bf16.msra.mxu0 %v4624
        %4756 = vmatmul.bf16.gmra.mxu0 %v4653
        %v4757 = vpop.f32.mrf.mxu0
        %v4758 = vadd.f32 0.0, %v4757
        %v4759 = vpop.f32.mrf.mxu0
        %v4760 = vadd.f32 0.0, %v4759
        %4761 = vmatmul.bf16.gmra.mxu0 %v4656
        %v4762 = vpop.f32.mrf.mxu0
        %v4763 = vadd.f32 0.0, %v4762
        %v4764 = vpop.f32.mrf.mxu0
        %v4765 = vadd.f32 0.0, %v4764
        %4766 = vmatmul.bf16.gmra.mxu0 %v4659
        %v4767 = vpop.f32.mrf.mxu0
        %v4768 = vadd.f32 0.0, %v4767
        %v4769 = vpop.f32.mrf.mxu0
        %v4770 = vadd.f32 0.0, %v4769
        %4771 = vmatmul.bf16.gmra.mxu0 %v4662
        %v4772 = vpop.f32.mrf.mxu0
        %v4773 = vadd.f32 0.0, %v4772
        %v4774 = vpop.f32.mrf.mxu0
        %v4775 = vadd.f32 0.0, %v4774
        %4776 = vmatmul.bf16.gmra.mxu0 %v4665
        %v4777 = vpop.f32.mrf.mxu0
        %v4778 = vadd.f32 0.0, %v4777
        %v4779 = vpop.f32.mrf.mxu0
        %v4780 = vadd.f32 0.0, %v4779
        %4781 = vmatmul.bf16.gmra.mxu0 %v4668
        %v4782 = vpop.f32.mrf.mxu0
        %v4783 = vadd.f32 0.0, %v4782
        %v4784 = vpop.f32.mrf.mxu0
        %v4785 = vadd.f32 0.0, %v4784
        %4786 = vdwg.mxu0
        %4787 = vst [vmem:[#allocation3] sm:$0xff] %v4680
        %4788 = vst [vmem:[#allocation3 + $0x8] sm:$0xff] %v4719
        %4789 = vst [vmem:[#allocation3 + $0x10] sm:$0xff] %v4758
        %4790 = vst [vmem:[#allocation3 + $0x18] sm:$0xff] %v4682
        %4791 = vst [vmem:[#allocation3 + $0x20] sm:$0xff] %v4721
        %4792 = vst [vmem:[#allocation3 + $0x28] sm:$0xff] %v4760
        %4793 = vst [vmem:[#allocation3 + $0x30] sm:$0xff] %v4685
        %4794 = vst [vmem:[#allocation3 + $0x38] sm:$0xff] %v4724
        %4795 = vst [vmem:[#allocation3 + $0x40] sm:$0xff] %v4763
        %4796 = vst [vmem:[#allocation3 + $0x48] sm:$0xff] %v4687
        %4797 = vst [vmem:[#allocation3 + $0x50] sm:$0xff] %v4726
        %4798 = vst [vmem:[#allocation3 + $0x58] sm:$0xff] %v4765
        %4799 = vst [vmem:[#allocation3 + $0x60] sm:$0xff] %v4690
        %4800 = vst [vmem:[#allocation3 + $0x68] sm:$0xff] %v4729
        %4801 = vst [vmem:[#allocation3 + $0x70] sm:$0xff] %v4768
        %4802 = vst [vmem:[#allocation3 + $0x78] sm:$0xff] %v4692
        %4803 = vst [vmem:[#allocation3 + $0x80] sm:$0xff] %v4731
        %4804 = vst [vmem:[#allocation3 + $0x88] sm:$0xff] %v4770
        %4805 = vst [vmem:[#allocation3 + $0x90] sm:$0xff] %v4695
        %4806 = vst [vmem:[#allocation3 + $0x98] sm:$0xff] %v4734
        %4807 = vst [vmem:[#allocation3 + $0xa0] sm:$0xff] %v4773
        %4808 = vst [vmem:[#allocation3 + $0xa8] sm:$0xff] %v4697
        %4809 = vst [vmem:[#allocation3 + $0xb0] sm:$0xff] %v4736
        %4810 = vst [vmem:[#allocation3 + $0xb8] sm:$0xff] %v4775
        %4811 = vst [vmem:[#allocation3 + $0xc0] sm:$0xff] %v4700
        %4812 = vst [vmem:[#allocation3 + $0xc8] sm:$0xff] %v4739
        %4813 = vst [vmem:[#allocation3 + $0xd0] sm:$0xff] %v4778
        %4814 = vst [vmem:[#allocation3 + $0xd8] sm:$0xff] %v4702
        %4815 = vst [vmem:[#allocation3 + $0xe0] sm:$0xff] %v4741
        %4816 = vst [vmem:[#allocation3 + $0xe8] sm:$0xff] %v4780
        %4817 = vst [vmem:[#allocation3 + $0xf0] sm:$0xff] %v4705
        %4818 = vst [vmem:[#allocation3 + $0xf8] sm:$0xff] %v4744
        %4819 = vst [vmem:[#allocation3 + $0x100] sm:$0xff] %v4783
        %4820 = vst [vmem:[#allocation3 + $0x108] sm:$0xff] %v4707
        %4821 = vst [vmem:[#allocation3 + $0x110] sm:$0xff] %v4746
        %4822 = vst [vmem:[#allocation3 + $0x118] sm:$0xff] %v4785
        %v4823 = vld [vmem:[#allocation3] sm:$0xff]
        %v4824 = vld [vmem:[#allocation3 + $0x8] sm:$0xff]
        %v4825 = vld [vmem:[#allocation3 + $0x10] sm:$0xff]
        %v4826 = vld [vmem:[#allocation3 + $0x18] sm:$0xff]
        %v4827 = vld [vmem:[#allocation3 + $0x20] sm:$0xff]
        %v4828 = vld [vmem:[#allocation3 + $0x28] sm:$0xff]
        %v4829 = vld [vmem:[#allocation3 + $0x30] sm:$0xff]
        %v4830 = vld [vmem:[#allocation3 + $0x38] sm:$0xff]
        %v4831 = vld [vmem:[#allocation3 + $0x40] sm:$0xff]
        %v4832 = vld [vmem:[#allocation3 + $0x48] sm:$0xff]
        %v4833 = vld [vmem:[#allocation3 + $0x50] sm:$0xff]
        %v4834 = vld [vmem:[#allocation3 + $0x58] sm:$0xff]
        %4847 = vrot.lane.b32.xlu0 %v4823, 111
        %v4848 = vpop.permute.xlu0 %4847
        %4849 = vrot.lane.b32.xlu0 %v4824, 111
        %v4850 = vpop.permute.xlu0 %4849
        %4851 = vrot.lane.b32.xlu0 %v4825, 111
        %v4852 = vpop.permute.xlu0 %4851
        %4853 = vrot.lane.b32.xlu0 %v4826, 111
        %v4854 = vpop.permute.xlu0 %4853
        %4855 = vrot.lane.b32.xlu0 %v4827, 111
        %v4856 = vpop.permute.xlu0 %4855
        %4857 = vrot.lane.b32.xlu0 %v4828, 111
        %v4858 = vpop.permute.xlu0 %4857
        %4859 = vrot.lane.b32.xlu0 %v4829, 111
        %v4860 = vpop.permute.xlu0 %4859
        %4861 = vrot.lane.b32.xlu0 %v4830, 111
        %v4862 = vpop.permute.xlu0 %4861
        %4863 = vrot.lane.b32.xlu0 %v4831, 111
        %v4864 = vpop.permute.xlu0 %4863
        %4865 = vrot.lane.b32.xlu0 %v4832, 111
        %v4866 = vpop.permute.xlu0 %4865
        %4867 = vrot.lane.b32.xlu0 %v4833, 111
        %v4868 = vpop.permute.xlu0 %4867
        %4869 = vrot.lane.b32.xlu0 %v4834, 111
        %v4870 = vpop.permute.xlu0 %4869
        %v4871 = vsel %vm1490, %v4848, %v4850
        %v4872 = vsel %vm1490, %v4850, %v4852
        %v4873 = vsel %vm1490, %v4854, %v4856
        %v4874 = vsel %vm1490, %v4856, %v4858
        %v4875 = vsel %vm1490, %v4860, %v4862
        %v4876 = vsel %vm1490, %v4862, %v4864
        %v4877 = vsel %vm1490, %v4866, %v4868
        %v4878 = vsel %vm1490, %v4868, %v4870
        %v4895 = vsel %vm1490, %v4852, %v4848
        %v4896 = vsel %vm1490, %v4858, %v4854
        %v4897 = vsel %vm1490, %v4864, %v4860
        %v4898 = vsel %vm1490, %v4870, %v4866
        %v4899 = vadd.f32 %v4498, %v4871
        %v4900 = vadd.f32 %v4499, %v4872
        %v4901 = vadd.f32 %v4500, %v4895
        %v4902 = vadd.f32 %v4501, %v4873
        %v4903 = vadd.f32 %v4502, %v4874
        %v4904 = vadd.f32 %v4503, %v4896
        %v4905 = vadd.f32 %v4504, %v4875
        %v4906 = vadd.f32 %v4505, %v4876
        %v4907 = vadd.f32 %v4506, %v4897
        %v4908 = vadd.f32 %v4507, %v4877
        %v4909 = vadd.f32 %v4508, %v4878
        %v4910 = vadd.f32 %v4509, %v4898
        %v4911 = vld [vmem:[#allocation3 + $0x60] sm:$0xff]
        %v4912 = vld [vmem:[#allocation3 + $0x68] sm:$0xff]
        %v4913 = vld [vmem:[#allocation3 + $0x70] sm:$0xff]
        %v4914 = vld [vmem:[#allocation3 + $0x78] sm:$0xff]
        %v4915 = vld [vmem:[#allocation3 + $0x80] sm:$0xff]
        %v4916 = vld [vmem:[#allocation3 + $0x88] sm:$0xff]
        %v4917 = vld [vmem:[#allocation3 + $0x90] sm:$0xff]
        %v4918 = vld [vmem:[#allocation3 + $0x98] sm:$0xff]
        %v4919 = vld [vmem:[#allocation3 + $0xa0] sm:$0xff]
        %v4920 = vld [vmem:[#allocation3 + $0xa8] sm:$0xff]
        %v4921 = vld [vmem:[#allocation3 + $0xb0] sm:$0xff]
        %v4922 = vld [vmem:[#allocation3 + $0xb8] sm:$0xff]
        %4935 = vrot.lane.b32.xlu0 %v4911, 110
        %v4936 = vpop.permute.xlu0 %4935
        %4937 = vrot.lane.b32.xlu0 %v4912, 110
        %v4938 = vpop.permute.xlu0 %4937
        %4939 = vrot.lane.b32.xlu0 %v4913, 110
        %v4940 = vpop.permute.xlu0 %4939
        %4941 = vrot.lane.b32.xlu0 %v4914, 110
        %v4942 = vpop.permute.xlu0 %4941
        %4943 = vrot.lane.b32.xlu0 %v4915, 110
        %v4944 = vpop.permute.xlu0 %4943
        %4945 = vrot.lane.b32.xlu0 %v4916, 110
        %v4946 = vpop.permute.xlu0 %4945
        %4947 = vrot.lane.b32.xlu0 %v4917, 110
        %v4948 = vpop.permute.xlu0 %4947
        %4949 = vrot.lane.b32.xlu0 %v4918, 110
        %v4950 = vpop.permute.xlu0 %4949
        %4951 = vrot.lane.b32.xlu0 %v4919, 110
        %v4952 = vpop.permute.xlu0 %4951
        %4953 = vrot.lane.b32.xlu0 %v4920, 110
        %v4954 = vpop.permute.xlu0 %4953
        %4955 = vrot.lane.b32.xlu0 %v4921, 110
        %v4956 = vpop.permute.xlu0 %4955
        %4957 = vrot.lane.b32.xlu0 %v4922, 110
        %v4958 = vpop.permute.xlu0 %4957
        %v4959 = vsel %vm1579, %v4936, %v4938
        %v4960 = vsel %vm1579, %v4938, %v4940
        %v4961 = vsel %vm1579, %v4942, %v4944
        %v4962 = vsel %vm1579, %v4944, %v4946
        %v4963 = vsel %vm1579, %v4948, %v4950
        %v4964 = vsel %vm1579, %v4950, %v4952
        %v4965 = vsel %vm1579, %v4954, %v4956
        %v4966 = vsel %vm1579, %v4956, %v4958
        %v4983 = vsel %vm1579, %v4940, %v4936
        %v4984 = vsel %vm1579, %v4946, %v4942
        %v4985 = vsel %vm1579, %v4952, %v4948
        %v4986 = vsel %vm1579, %v4958, %v4954
        %v4987 = vadd.f32 %v4899, %v4959
        %v4988 = vadd.f32 %v4900, %v4960
        %v4989 = vadd.f32 %v4901, %v4983
        %v4990 = vadd.f32 %v4902, %v4961
        %v4991 = vadd.f32 %v4903, %v4962
        %v4992 = vadd.f32 %v4904, %v4984
        %v4993 = vadd.f32 %v4905, %v4963
        %v4994 = vadd.f32 %v4906, %v4964
        %v4995 = vadd.f32 %v4907, %v4985
        %v4996 = vadd.f32 %v4908, %v4965
        %v4997 = vadd.f32 %v4909, %v4966
        %v4998 = vadd.f32 %v4910, %v4986
        %v4999 = vld [vmem:[#allocation3 + $0xc0] sm:$0xff]
        %v5000 = vld [vmem:[#allocation3 + $0xc8] sm:$0xff]
        %v5001 = vld [vmem:[#allocation3 + $0xd0] sm:$0xff]
        %v5002 = vld [vmem:[#allocation3 + $0xd8] sm:$0xff]
        %v5003 = vld [vmem:[#allocation3 + $0xe0] sm:$0xff]
        %v5004 = vld [vmem:[#allocation3 + $0xe8] sm:$0xff]
        %v5005 = vld [vmem:[#allocation3 + $0xf0] sm:$0xff]
        %v5006 = vld [vmem:[#allocation3 + $0xf8] sm:$0xff]
        %v5007 = vld [vmem:[#allocation3 + $0x100] sm:$0xff]
        %v5008 = vld [vmem:[#allocation3 + $0x108] sm:$0xff]
        %v5009 = vld [vmem:[#allocation3 + $0x110] sm:$0xff]
        %v5010 = vld [vmem:[#allocation3 + $0x118] sm:$0xff]
        %5023 = vrot.lane.b32.xlu0 %v4999, 109
        %v5024 = vpop.permute.xlu0 %5023
        %5025 = vrot.lane.b32.xlu0 %v5000, 109
        %v5026 = vpop.permute.xlu0 %5025
        %5027 = vrot.lane.b32.xlu0 %v5001, 109
        %v5028 = vpop.permute.xlu0 %5027
        %5029 = vrot.lane.b32.xlu0 %v5002, 109
        %v5030 = vpop.permute.xlu0 %5029
        %5031 = vrot.lane.b32.xlu0 %v5003, 109
        %v5032 = vpop.permute.xlu0 %5031
        %5033 = vrot.lane.b32.xlu0 %v5004, 109
        %v5034 = vpop.permute.xlu0 %5033
        %5035 = vrot.lane.b32.xlu0 %v5005, 109
        %v5036 = vpop.permute.xlu0 %5035
        %5037 = vrot.lane.b32.xlu0 %v5006, 109
        %v5038 = vpop.permute.xlu0 %5037
        %5039 = vrot.lane.b32.xlu0 %v5007, 109
        %v5040 = vpop.permute.xlu0 %5039
        %5041 = vrot.lane.b32.xlu0 %v5008, 109
        %v5042 = vpop.permute.xlu0 %5041
        %5043 = vrot.lane.b32.xlu0 %v5009, 109
        %v5044 = vpop.permute.xlu0 %5043
        %5045 = vrot.lane.b32.xlu0 %v5010, 109
        %v5046 = vpop.permute.xlu0 %5045
        %v5047 = vsel %vm1668, %v5024, %v5026
        %v5048 = vsel %vm1668, %v5026, %v5028
        %v5049 = vsel %vm1668, %v5030, %v5032
        %v5050 = vsel %vm1668, %v5032, %v5034
        %v5051 = vsel %vm1668, %v5036, %v5038
        %v5052 = vsel %vm1668, %v5038, %v5040
        %v5053 = vsel %vm1668, %v5042, %v5044
        %v5054 = vsel %vm1668, %v5044, %v5046
        %v5071 = vsel %vm1668, %v5028, %v5024
        %v5072 = vsel %vm1668, %v5034, %v5030
        %v5073 = vsel %vm1668, %v5040, %v5036
        %v5074 = vsel %vm1668, %v5046, %v5042
        %v5075 = vadd.f32 %v4987, %v5047
        %v5076 = vadd.f32 %v4988, %v5048
        %v5077 = vadd.f32 %v4989, %v5071
        %v5078 = vadd.f32 %v4990, %v5049
        %v5079 = vadd.f32 %v4991, %v5050
        %v5080 = vadd.f32 %v4992, %v5072
        %v5081 = vadd.f32 %v4993, %v5051
        %v5082 = vadd.f32 %v4994, %v5052
        %v5083 = vadd.f32 %v4995, %v5073
        %v5084 = vadd.f32 %v4996, %v5053
        %v5085 = vadd.f32 %v4997, %v5054
        %v5086 = vadd.f32 %v4998, %v5074
        %s5087 = scalar_lea.vmem %s3, 64
        %v5088 = vld [vmem:[%s5087] sm:$0xff]
        %v5089 = vld [vmem:[%s5087 + $0x8] sm:$0xff]
        %v5090 = vld [vmem:[%s5087 + $0x10] sm:$0xff]
        %v5091 = vld [vmem:[%s5087 + $0x18] sm:$0xff]
        %5093 = vset.pattern.permute.xlu0 0
        %5094 = vperm.xlu0 %5093, %v5088
        %v5095 = vpop.permute.xlu0 %5094
        %5098 = vset.pattern.permute.xlu0 0
        %5099 = vperm.xlu0 %5098, %v5089
        %v5100 = vpop.permute.xlu0 %5099
        %5103 = vset.pattern.permute.xlu0 0
        %5104 = vperm.xlu0 %5103, %v5090
        %v5105 = vpop.permute.xlu0 %5104
        %5108 = vset.pattern.permute.xlu0 0
        %5109 = vperm.xlu0 %5108, %v5091
        %v5110 = vpop.permute.xlu0 %5109
        %v5112 = vadd.f32 %v5075, %v5095
        %v5113 = vadd.f32 %v5076, %v5095
        %v5114 = vadd.f32 %v5077, %v5095
        %v5115 = vadd.f32 %v5078, %v5100
        %v5116 = vadd.f32 %v5079, %v5100
        %v5117 = vadd.f32 %v5080, %v5100
        %v5118 = vadd.f32 %v5081, %v5105
        %v5119 = vadd.f32 %v5082, %v5105
        %v5120 = vadd.f32 %v5083, %v5105
        %v5121 = vadd.f32 %v5084, %v5110
        %v5122 = vadd.f32 %v5085, %v5110
        %v5123 = vadd.f32 %v5086, %v5110
        %v5124 = vmax.f32 %v5112, 0.0
        %v5125 = vmax.f32 %v5113, 0.0
        %v5126 = vmax.f32 %v5114, 0.0
        %v5127 = vmax.f32 %v5115, 0.0
        %v5128 = vmax.f32 %v5116, 0.0
        %v5129 = vmax.f32 %v5117, 0.0
        %v5130 = vmax.f32 %v5118, 0.0
        %v5131 = vmax.f32 %v5119, 0.0
        %v5132 = vmax.f32 %v5120, 0.0
        %v5133 = vmax.f32 %v5121, 0.0
        %v5134 = vmax.f32 %v5122, 0.0
        %v5135 = vmax.f32 %v5123, 0.0
        %v5136 = vmul.f32 %v5124, %v1758
        %v5137 = vmul.f32 %v5125, %v1759
        %v5138 = vmul.f32 %v5126, %v1760
        %v5139 = vmul.f32 %v5127, %v1758
        %v5140 = vmul.f32 %v5128, %v1759
        %v5141 = vmul.f32 %v5129, %v1760
        %v5142 = vmul.f32 %v5130, %v1758
        %v5143 = vmul.f32 %v5131, %v1759
        %v5144 = vmul.f32 %v5132, %v1760
        %v5145 = vmul.f32 %v5133, %v1758
        %v5146 = vmul.f32 %v5134, %v1759
        %v5147 = vmul.f32 %v5135, %v1760
        %v5148 = vpack.c.bf16 %v5137, %v5136
        %v5149 = vpack.c.bf16 %v5138, %v5138
        %v5150 = vpack.c.bf16 %v5140, %v5139
        %v5151 = vpack.c.bf16 %v5141, %v5141
        %v5152 = vpack.c.bf16 %v5143, %v5142
        %v5153 = vpack.c.bf16 %v5144, %v5144
        %v5154 = vpack.c.bf16 %v5146, %v5145
        %v5155 = vpack.c.bf16 %v5147, %v5147
        %5156 = vst [vmem:[#allocation2 + $0x78] sm:$0xff] %v5148
        %5157 = vst [vmem:[#allocation2 + $0x80] sm:$0xf] %v5149
        %5158 = vst [vmem:[#allocation2 + $0x84] sm:$0xff] %v5150
        %5159 = vst [vmem:[#allocation2 + $0x8c] sm:$0xf] %v5151
        %5160 = vst [vmem:[#allocation2 + $0x90] sm:$0xff] %v5152
        %5161 = vst [vmem:[#allocation2 + $0x98] sm:$0xf] %v5153
        %5162 = vst [vmem:[#allocation2 + $0x9c] sm:$0xff] %v5154
        %5163 = vst [vmem:[#allocation2 + $0xa4] sm:$0xf] %v5155
        %s5164 = scalar_lea.vmem %s2, 864
        %v5165 = vld [vmem:[%s5164] sm:$0xf]
        %v5166 = vld [vmem:[%s5164 + $0x8] sm:$0xf]
        %v5167 = vld [vmem:[%s5164 + $0x10] sm:$0xf]
        %v5168 = vld [vmem:[%s5164 + $0x18] sm:$0xf]
        %v5169 = vld [vmem:[%s5164 + $0x20] sm:$0xf]
        %v5170 = vld [vmem:[%s5164 + $0x28] sm:$0xf]
        %v5171 = vld [vmem:[%s5164 + $0x30] sm:$0xf]
        %v5172 = vld [vmem:[%s5164 + $0x38] sm:$0xf]
        %v5173 = vld [vmem:[%s5164 + $0x40] sm:$0xf]
        %v5174 = vld [vmem:[%s5164 + $0x48] sm:$0xf]
        %v5175 = vld [vmem:[%s5164 + $0x50] sm:$0xf]
        %v5176 = vld [vmem:[%s5164 + $0x58] sm:$0xf]
        %v5177 = vld [vmem:[#allocation2] sm:$0xff]
        %v5178 = vld [vmem:[#allocation2 + $0x8] sm:$0xf]
        %v5179 = vld [vmem:[#allocation2 + $0xc] sm:$0xff]
        %v5180 = vld [vmem:[#allocation2 + $0x14] sm:$0xf]
        %v5181 = vld [vmem:[#allocation2 + $0x18] sm:$0xff]
        %v5182 = vld [vmem:[#allocation2 + $0x20] sm:$0xf]
        %v5183 = vld [vmem:[#allocation2 + $0x24] sm:$0xff]
        %v5184 = vld [vmem:[#allocation2 + $0x2c] sm:$0xf]
        %v5185 = vld [vmem:[#allocation2 + $0x30] sm:$0xff]
        %v5186 = vld [vmem:[#allocation2 + $0x38] sm:$0xf]
        %v5187 = vld [vmem:[#allocation2 + $0x3c] sm:$0xff]
        %v5188 = vld [vmem:[#allocation2 + $0x44] sm:$0xf]
        %v5189 = vld [vmem:[#allocation2 + $0x48] sm:$0xff]
        %v5190 = vld [vmem:[#allocation2 + $0x50] sm:$0xf]
        %v5191 = vld [vmem:[#allocation2 + $0x54] sm:$0xff]
        %v5192 = vld [vmem:[#allocation2 + $0x5c] sm:$0xf]
        %v5193 = vld [vmem:[#allocation2 + $0x60] sm:$0xff]
        %v5194 = vld [vmem:[#allocation2 + $0x68] sm:$0xf]
        %v5195 = vld [vmem:[#allocation2 + $0x6c] sm:$0xff]
        %v5196 = vld [vmem:[#allocation2 + $0x74] sm:$0xf]
        %v5197 = vld [vmem:[#allocation2 + $0x78] sm:$0xff]
        %v5198 = vld [vmem:[#allocation2 + $0x80] sm:$0xf]
        %v5199 = vld [vmem:[#allocation2 + $0x84] sm:$0xff]
        %v5200 = vld [vmem:[#allocation2 + $0x8c] sm:$0xf]
        %v5201 = vld [vmem:[#allocation2 + $0x90] sm:$0xff]
        %v5202 = vld [vmem:[#allocation2 + $0x98] sm:$0xf]
        %v5203 = vld [vmem:[#allocation2 + $0x9c] sm:$0xff]
        %v5204 = vld [vmem:[#allocation2 + $0xa4] sm:$0xf]
        %v5217 = vunpack.c.l.b16 %v5165
        %v5218 = vunpack.c.l.b16 %v5166
        %v5219 = vunpack.c.l.b16 %v5167
        %v5220 = vunpack.c.l.b16 %v5168
        %v5221 = vunpack.c.l.b16 %v5169
        %v5222 = vunpack.c.l.b16 %v5170
        %v5223 = vunpack.c.l.b16 %v5171
        %v5224 = vunpack.c.l.b16 %v5172
        %v5225 = vunpack.c.l.b16 %v5173
        %v5226 = vunpack.c.l.b16 %v5174
        %v5227 = vunpack.c.l.b16 %v5175
        %v5228 = vunpack.c.l.b16 %v5176
        %v5229 = vpack.c.b16 %v5218, %v5217
        %v5230 = vpack.c.b16 %v5220, %v5219
        %v5231 = vpack.c.b16 %v5222, %v5221
        %v5232 = vpack.c.b16 %v5224, %v5223
        %v5233 = vpack.c.b16 %v5226, %v5225
        %v5234 = vpack.c.b16 %v5228, %v5227
        %v5263 = vunpack.c.l.b16 %v5177
        %v5264 = vunpack.c.h.b16 %v5177
        %v5265 = vunpack.c.l.b16 %v5178
        %v5266 = vunpack.c.l.b16 %v5179
        %v5267 = vunpack.c.h.b16 %v5179
        %v5268 = vunpack.c.l.b16 %v5180
        %v5269 = vunpack.c.l.b16 %v5181
        %v5270 = vunpack.c.h.b16 %v5181
        %v5271 = vunpack.c.l.b16 %v5182
        %v5272 = vunpack.c.l.b16 %v5183
        %v5273 = vunpack.c.h.b16 %v5183
        %v5274 = vunpack.c.l.b16 %v5184
        %v5275 = vunpack.c.l.b16 %v5185
        %v5276 = vunpack.c.h.b16 %v5185
        %v5277 = vunpack.c.l.b16 %v5186
        %v5278 = vunpack.c.l.b16 %v5187
        %v5279 = vunpack.c.h.b16 %v5187
        %v5280 = vunpack.c.l.b16 %v5188
        %v5281 = vunpack.c.l.b16 %v5189
        %v5282 = vunpack.c.h.b16 %v5189
        %v5283 = vunpack.c.l.b16 %v5190
        %v5284 = vunpack.c.l.b16 %v5191
        %v5285 = vunpack.c.h.b16 %v5191
        %v5286 = vunpack.c.l.b16 %v5192
        %v5287 = vunpack.c.l.b16 %v5193
        %v5288 = vunpack.c.h.b16 %v5193
        %v5289 = vunpack.c.l.b16 %v5194
        %v5290 = vunpack.c.l.b16 %v5195
        %v5291 = vunpack.c.h.b16 %v5195
        %v5292 = vunpack.c.l.b16 %v5196
        %v5293 = vunpack.c.l.b16 %v5197
        %v5294 = vunpack.c.h.b16 %v5197
        %v5295 = vunpack.c.l.b16 %v5198
        %v5296 = vunpack.c.l.b16 %v5199
        %v5297 = vunpack.c.h.b16 %v5199
        %v5298 = vunpack.c.l.b16 %v5200
        %v5299 = vunpack.c.l.b16 %v5201
        %v5300 = vunpack.c.h.b16 %v5201
        %v5301 = vunpack.c.l.b16 %v5202
        %v5302 = vunpack.c.l.b16 %v5203
        %v5303 = vunpack.c.h.b16 %v5203
        %v5304 = vunpack.c.l.b16 %v5204
        %v5305 = vpack.c.b16 %v5266, %v5263
        %v5306 = vpack.c.b16 %v5267, %v5264
        %v5307 = vpack.c.b16 %v5268, %v5265
        %v5308 = vpack.c.b16 %v5272, %v5269
        %v5309 = vpack.c.b16 %v5273, %v5270
        %v5310 = vpack.c.b16 %v5274, %v5271
        %v5311 = vpack.c.b16 %v5278, %v5275
        %v5312 = vpack.c.b16 %v5279, %v5276
        %v5313 = vpack.c.b16 %v5280, %v5277
        %v5314 = vpack.c.b16 %v5284, %v5281
        %v5315 = vpack.c.b16 %v5285, %v5282
        %v5316 = vpack.c.b16 %v5286, %v5283
        %v5317 = vpack.c.b16 %v5290, %v5287
        %v5318 = vpack.c.b16 %v5291, %v5288
        %v5319 = vpack.c.b16 %v5292, %v5289
        %v5320 = vpack.c.b16 %v5296, %v5293
        %v5321 = vpack.c.b16 %v5297, %v5294
        %v5322 = vpack.c.b16 %v5298, %v5295
        %v5323 = vpack.c.b16 %v5302, %v5299
        %v5324 = vpack.c.b16 %v5303, %v5300
        %v5325 = vpack.c.b16 %v5304, %v5301
        %vm5347 = vcmask 916480
        %v5349 = vsel %vm5347, %v5229, 0
        %v5352 = vsel %vm5347, %v5230, 0
        %v5355 = vsel %vm5347, %v5231, 0
        %v5358 = vsel %vm5347, %v5232, 0
        %v5361 = vsel %vm5347, %v5233, 0
        %v5364 = vsel %vm5347, %v5234, 0
        %5366 = vmatpush.bf16.msra.mxu0 0
        %5367 = vmatpush.bf16.msra.mxu0 %v5323
        %5368 = vmatpush.bf16.msra.mxu0 %v5320
        %5369 = vmatpush.bf16.msra.mxu0 %v5317
        %5370 = vmatpush.bf16.msra.mxu0 %v5314
        %5371 = vmatpush.bf16.msra.mxu0 %v5311
        %5372 = vmatpush.bf16.msra.mxu0 %v5308
        %5373 = vmatpush.bf16.msra.mxu0 %v5305
        %5374 = vmatmul.bf16.gmra.mxu0 %v5349
        %v5375 = vpop.f32.mrf.mxu0
        %v5376 = vadd.f32 0.0, %v5375
        %v5377 = vpop.f32.mrf.mxu0
        %v5378 = vadd.f32 0.0, %v5377
        %5379 = vmatmul.bf16.gmra.mxu0 %v5352
        %v5380 = vpop.f32.mrf.mxu0
        %v5381 = vadd.f32 0.0, %v5380
        %v5382 = vpop.f32.mrf.mxu0
        %v5383 = vadd.f32 0.0, %v5382
        %5384 = vmatmul.bf16.gmra.mxu0 %v5355
        %v5385 = vpop.f32.mrf.mxu0
        %v5386 = vadd.f32 0.0, %v5385
        %v5387 = vpop.f32.mrf.mxu0
        %v5388 = vadd.f32 0.0, %v5387
        %5389 = vmatmul.bf16.gmra.mxu0 %v5358
        %v5390 = vpop.f32.mrf.mxu0
        %v5391 = vadd.f32 0.0, %v5390
        %v5392 = vpop.f32.mrf.mxu0
        %v5393 = vadd.f32 0.0, %v5392
        %5394 = vmatmul.bf16.gmra.mxu0 %v5361
        %v5395 = vpop.f32.mrf.mxu0
        %v5396 = vadd.f32 0.0, %v5395
        %v5397 = vpop.f32.mrf.mxu0
        %v5398 = vadd.f32 0.0, %v5397
        %5399 = vmatmul.bf16.gmra.mxu0 %v5364
        %v5400 = vpop.f32.mrf.mxu0
        %v5401 = vadd.f32 0.0, %v5400
        %v5402 = vpop.f32.mrf.mxu0
        %v5403 = vadd.f32 0.0, %v5402
        %5404 = vdwg.mxu0
        %5405 = vmatpush.bf16.msra.mxu0 0
        %5406 = vmatpush.bf16.msra.mxu0 %v5324
        %5407 = vmatpush.bf16.msra.mxu0 %v5321
        %5408 = vmatpush.bf16.msra.mxu0 %v5318
        %5409 = vmatpush.bf16.msra.mxu0 %v5315
        %5410 = vmatpush.bf16.msra.mxu0 %v5312
        %5411 = vmatpush.bf16.msra.mxu0 %v5309
        %5412 = vmatpush.bf16.msra.mxu0 %v5306
        %5413 = vmatmul.bf16.gmra.mxu0 %v5349
        %v5414 = vpop.f32.mrf.mxu0
        %v5415 = vadd.f32 0.0, %v5414
        %v5416 = vpop.f32.mrf.mxu0
        %v5417 = vadd.f32 0.0, %v5416
        %5418 = vmatmul.bf16.gmra.mxu0 %v5352
        %v5419 = vpop.f32.mrf.mxu0
        %v5420 = vadd.f32 0.0, %v5419
        %v5421 = vpop.f32.mrf.mxu0
        %v5422 = vadd.f32 0.0, %v5421
        %5423 = vmatmul.bf16.gmra.mxu0 %v5355
        %v5424 = vpop.f32.mrf.mxu0
        %v5425 = vadd.f32 0.0, %v5424
        %v5426 = vpop.f32.mrf.mxu0
        %v5427 = vadd.f32 0.0, %v5426
        %5428 = vmatmul.bf16.gmra.mxu0 %v5358
        %v5429 = vpop.f32.mrf.mxu0
        %v5430 = vadd.f32 0.0, %v5429
        %v5431 = vpop.f32.mrf.mxu0
        %v5432 = vadd.f32 0.0, %v5431
        %5433 = vmatmul.bf16.gmra.mxu0 %v5361
        %v5434 = vpop.f32.mrf.mxu0
        %v5435 = vadd.f32 0.0, %v5434
        %v5436 = vpop.f32.mrf.mxu0
        %v5437 = vadd.f32 0.0, %v5436
        %5438 = vmatmul.bf16.gmra.mxu0 %v5364
        %v5439 = vpop.f32.mrf.mxu0
        %v5440 = vadd.f32 0.0, %v5439
        %v5441 = vpop.f32.mrf.mxu0
        %v5442 = vadd.f32 0.0, %v5441
        %5443 = vdwg.mxu0
        %5444 = vmatpush.bf16.msra.mxu0 0
        %5445 = vmatpush.bf16.msra.mxu0 %v5325
        %5446 = vmatpush.bf16.msra.mxu0 %v5322
        %5447 = vmatpush.bf16.msra.mxu0 %v5319
        %5448 = vmatpush.bf16.msra.mxu0 %v5316
        %5449 = vmatpush.bf16.msra.mxu0 %v5313
        %5450 = vmatpush.bf16.msra.mxu0 %v5310
        %5451 = vmatpush.bf16.msra.mxu0 %v5307
        %5452 = vmatmul.bf16.gmra.mxu0 %v5349
        %v5453 = vpop.f32.mrf.mxu0
        %v5454 = vadd.f32 0.0, %v5453
        %v5455 = vpop.f32.mrf.mxu0
        %v5456 = vadd.f32 0.0, %v5455
        %5457 = vmatmul.bf16.gmra.mxu0 %v5352
        %v5458 = vpop.f32.mrf.mxu0
        %v5459 = vadd.f32 0.0, %v5458
        %v5460 = vpop.f32.mrf.mxu0
        %v5461 = vadd.f32 0.0, %v5460
        %5462 = vmatmul.bf16.gmra.mxu0 %v5355
        %v5463 = vpop.f32.mrf.mxu0
        %v5464 = vadd.f32 0.0, %v5463
        %v5465 = vpop.f32.mrf.mxu0
        %v5466 = vadd.f32 0.0, %v5465
        %5467 = vmatmul.bf16.gmra.mxu0 %v5358
        %v5468 = vpop.f32.mrf.mxu0
        %v5469 = vadd.f32 0.0, %v5468
        %v5470 = vpop.f32.mrf.mxu0
        %v5471 = vadd.f32 0.0, %v5470
        %5472 = vmatmul.bf16.gmra.mxu0 %v5361
        %v5473 = vpop.f32.mrf.mxu0
        %v5474 = vadd.f32 0.0, %v5473
        %v5475 = vpop.f32.mrf.mxu0
        %v5476 = vadd.f32 0.0, %v5475
        %5477 = vmatmul.bf16.gmra.mxu0 %v5364
        %v5478 = vpop.f32.mrf.mxu0
        %v5479 = vadd.f32 0.0, %v5478
        %v5480 = vpop.f32.mrf.mxu0
        %v5481 = vadd.f32 0.0, %v5480
        %5482 = vdwg.mxu0
        %5483 = vst [vmem:[#allocation3] sm:$0xff] %v5376
        %5484 = vst [vmem:[#allocation3 + $0x8] sm:$0xff] %v5415
        %5485 = vst [vmem:[#allocation3 + $0x10] sm:$0xff] %v5454
        %5486 = vst [vmem:[#allocation3 + $0x18] sm:$0xff] %v5378
        %5487 = vst [vmem:[#allocation3 + $0x20] sm:$0xff] %v5417
        %5488 = vst [vmem:[#allocation3 + $0x28] sm:$0xff] %v5456
        %5489 = vst [vmem:[#allocation3 + $0x30] sm:$0xff] %v5381
        %5490 = vst [vmem:[#allocation3 + $0x38] sm:$0xff] %v5420
        %5491 = vst [vmem:[#allocation3 + $0x40] sm:$0xff] %v5459
        %5492 = vst [vmem:[#allocation3 + $0x48] sm:$0xff] %v5383
        %5493 = vst [vmem:[#allocation3 + $0x50] sm:$0xff] %v5422
        %5494 = vst [vmem:[#allocation3 + $0x58] sm:$0xff] %v5461
        %5495 = vst [vmem:[#allocation3 + $0x60] sm:$0xff] %v5386
        %5496 = vst [vmem:[#allocation3 + $0x68] sm:$0xff] %v5425
        %5497 = vst [vmem:[#allocation3 + $0x70] sm:$0xff] %v5464
        %5498 = vst [vmem:[#allocation3 + $0x78] sm:$0xff] %v5388
        %5499 = vst [vmem:[#allocation3 + $0x80] sm:$0xff] %v5427
        %5500 = vst [vmem:[#allocation3 + $0x88] sm:$0xff] %v5466
        %5501 = vst [vmem:[#allocation3 + $0x90] sm:$0xff] %v5391
        %5502 = vst [vmem:[#allocation3 + $0x98] sm:$0xff] %v5430
        %5503 = vst [vmem:[#allocation3 + $0xa0] sm:$0xff] %v5469
        %5504 = vst [vmem:[#allocation3 + $0xa8] sm:$0xff] %v5393
        %5505 = vst [vmem:[#allocation3 + $0xb0] sm:$0xff] %v5432
        %5506 = vst [vmem:[#allocation3 + $0xb8] sm:$0xff] %v5471
        %5507 = vst [vmem:[#allocation3 + $0xc0] sm:$0xff] %v5396
        %5508 = vst [vmem:[#allocation3 + $0xc8] sm:$0xff] %v5435
        %5509 = vst [vmem:[#allocation3 + $0xd0] sm:$0xff] %v5474
        %5510 = vst [vmem:[#allocation3 + $0xd8] sm:$0xff] %v5398
        %5511 = vst [vmem:[#allocation3 + $0xe0] sm:$0xff] %v5437
        %5512 = vst [vmem:[#allocation3 + $0xe8] sm:$0xff] %v5476
        %5513 = vst [vmem:[#allocation3 + $0xf0] sm:$0xff] %v5401
        %5514 = vst [vmem:[#allocation3 + $0xf8] sm:$0xff] %v5440
        %5515 = vst [vmem:[#allocation3 + $0x100] sm:$0xff] %v5479
        %5516 = vst [vmem:[#allocation3 + $0x108] sm:$0xff] %v5403
        %5517 = vst [vmem:[#allocation3 + $0x110] sm:$0xff] %v5442
        %5518 = vst [vmem:[#allocation3 + $0x118] sm:$0xff] %v5481
        %v5519 = vld [vmem:[#allocation3] sm:$0xff]
        %v5520 = vld [vmem:[#allocation3 + $0x8] sm:$0xff]
        %v5521 = vld [vmem:[#allocation3 + $0x10] sm:$0xff]
        %v5522 = vld [vmem:[#allocation3 + $0x18] sm:$0xff]
        %v5523 = vld [vmem:[#allocation3 + $0x20] sm:$0xff]
        %v5524 = vld [vmem:[#allocation3 + $0x28] sm:$0xff]
        %v5525 = vld [vmem:[#allocation3 + $0x30] sm:$0xff]
        %v5526 = vld [vmem:[#allocation3 + $0x38] sm:$0xff]
        %v5527 = vld [vmem:[#allocation3 + $0x40] sm:$0xff]
        %v5528 = vld [vmem:[#allocation3 + $0x48] sm:$0xff]
        %v5529 = vld [vmem:[#allocation3 + $0x50] sm:$0xff]
        %v5530 = vld [vmem:[#allocation3 + $0x58] sm:$0xff]
        %5535 = vrot.lane.b32.xlu0 %v5521, 19
        %v5536 = vpop.permute.xlu0 %5535
        %5537 = vrot.lane.b32.xlu0 %v5524, 19
        %v5538 = vpop.permute.xlu0 %5537
        %5539 = vrot.lane.b32.xlu0 %v5527, 19
        %v5540 = vpop.permute.xlu0 %5539
        %5541 = vrot.lane.b32.xlu0 %v5530, 19
        %v5542 = vpop.permute.xlu0 %5541
        %5555 = vrot.lane.b32.xlu0 %v5519, 19
        %v5556 = vpop.permute.xlu0 %5555
        %5557 = vrot.lane.b32.xlu0 %v5520, 19
        %v5558 = vpop.permute.xlu0 %5557
        %5559 = vrot.lane.b32.xlu0 %v5522, 19
        %v5560 = vpop.permute.xlu0 %5559
        %5561 = vrot.lane.b32.xlu0 %v5523, 19
        %v5562 = vpop.permute.xlu0 %5561
        %5563 = vrot.lane.b32.xlu0 %v5525, 19
        %v5564 = vpop.permute.xlu0 %5563
        %5565 = vrot.lane.b32.xlu0 %v5526, 19
        %v5566 = vpop.permute.xlu0 %5565
        %5567 = vrot.lane.b32.xlu0 %v5528, 19
        %v5568 = vpop.permute.xlu0 %5567
        %5569 = vrot.lane.b32.xlu0 %v5529, 19
        %v5570 = vpop.permute.xlu0 %5569
        %v5571 = vsel %vm559, %v5556, %v5558
        %v5572 = vsel %vm559, %v5558, %v5536
        %v5573 = vsel %vm559, %v5560, %v5562
        %v5574 = vsel %vm559, %v5562, %v5538
        %v5575 = vsel %vm559, %v5564, %v5566
        %v5576 = vsel %vm559, %v5566, %v5540
        %v5577 = vsel %vm559, %v5568, %v5570
        %v5578 = vsel %vm559, %v5570, %v5542
        %v5591 = vsel %vm559, %v5536, %v5556
        %v5592 = vsel %vm559, %v5538, %v5560
        %v5593 = vsel %vm559, %v5540, %v5564
        %v5594 = vsel %vm559, %v5542, %v5568
        %v5595 = vadd.f32 %v5591, 0.0
        %v5596 = vadd.f32 %v5571, 0.0
        %v5597 = vadd.f32 %v5572, 0.0
        %v5598 = vadd.f32 %v5592, 0.0
        %v5599 = vadd.f32 %v5573, 0.0
        %v5600 = vadd.f32 %v5574, 0.0
        %v5601 = vadd.f32 %v5593, 0.0
        %v5602 = vadd.f32 %v5575, 0.0
        %v5603 = vadd.f32 %v5576, 0.0
        %v5604 = vadd.f32 %v5594, 0.0
        %v5605 = vadd.f32 %v5577, 0.0
        %v5606 = vadd.f32 %v5578, 0.0
        %v5607 = vld [vmem:[#allocation3 + $0x60] sm:$0xff]
        %v5608 = vld [vmem:[#allocation3 + $0x68] sm:$0xff]
        %v5609 = vld [vmem:[#allocation3 + $0x70] sm:$0xff]
        %v5610 = vld [vmem:[#allocation3 + $0x78] sm:$0xff]
        %v5611 = vld [vmem:[#allocation3 + $0x80] sm:$0xff]
        %v5612 = vld [vmem:[#allocation3 + $0x88] sm:$0xff]
        %v5613 = vld [vmem:[#allocation3 + $0x90] sm:$0xff]
        %v5614 = vld [vmem:[#allocation3 + $0x98] sm:$0xff]
        %v5615 = vld [vmem:[#allocation3 + $0xa0] sm:$0xff]
        %v5616 = vld [vmem:[#allocation3 + $0xa8] sm:$0xff]
        %v5617 = vld [vmem:[#allocation3 + $0xb0] sm:$0xff]
        %v5618 = vld [vmem:[#allocation3 + $0xb8] sm:$0xff]
        %5623 = vrot.lane.b32.xlu0 %v5609, 18
        %v5624 = vpop.permute.xlu0 %5623
        %5625 = vrot.lane.b32.xlu0 %v5612, 18
        %v5626 = vpop.permute.xlu0 %5625
        %5627 = vrot.lane.b32.xlu0 %v5615, 18
        %v5628 = vpop.permute.xlu0 %5627
        %5629 = vrot.lane.b32.xlu0 %v5618, 18
        %v5630 = vpop.permute.xlu0 %5629
        %5643 = vrot.lane.b32.xlu0 %v5607, 18
        %v5644 = vpop.permute.xlu0 %5643
        %5645 = vrot.lane.b32.xlu0 %v5608, 18
        %v5646 = vpop.permute.xlu0 %5645
        %5647 = vrot.lane.b32.xlu0 %v5610, 18
        %v5648 = vpop.permute.xlu0 %5647
        %5649 = vrot.lane.b32.xlu0 %v5611, 18
        %v5650 = vpop.permute.xlu0 %5649
        %5651 = vrot.lane.b32.xlu0 %v5613, 18
        %v5652 = vpop.permute.xlu0 %5651
        %5653 = vrot.lane.b32.xlu0 %v5614, 18
        %v5654 = vpop.permute.xlu0 %5653
        %5655 = vrot.lane.b32.xlu0 %v5616, 18
        %v5656 = vpop.permute.xlu0 %5655
        %5657 = vrot.lane.b32.xlu0 %v5617, 18
        %v5658 = vpop.permute.xlu0 %5657
        %v5659 = vsel %vm648, %v5644, %v5646
        %v5660 = vsel %vm648, %v5646, %v5624
        %v5661 = vsel %vm648, %v5648, %v5650
        %v5662 = vsel %vm648, %v5650, %v5626
        %v5663 = vsel %vm648, %v5652, %v5654
        %v5664 = vsel %vm648, %v5654, %v5628
        %v5665 = vsel %vm648, %v5656, %v5658
        %v5666 = vsel %vm648, %v5658, %v5630
        %v5679 = vsel %vm648, %v5624, %v5644
        %v5680 = vsel %vm648, %v5626, %v5648
        %v5681 = vsel %vm648, %v5628, %v5652
        %v5682 = vsel %vm648, %v5630, %v5656
        %v5683 = vadd.f32 %v5595, %v5679
        %v5684 = vadd.f32 %v5596, %v5659
        %v5685 = vadd.f32 %v5597, %v5660
        %v5686 = vadd.f32 %v5598, %v5680
        %v5687 = vadd.f32 %v5599, %v5661
        %v5688 = vadd.f32 %v5600, %v5662
        %v5689 = vadd.f32 %v5601, %v5681
        %v5690 = vadd.f32 %v5602, %v5663
        %v5691 = vadd.f32 %v5603, %v5664
        %v5692 = vadd.f32 %v5604, %v5682
        %v5693 = vadd.f32 %v5605, %v5665
        %v5694 = vadd.f32 %v5606, %v5666
        %v5695 = vld [vmem:[#allocation3 + $0xc0] sm:$0xff]
        %v5696 = vld [vmem:[#allocation3 + $0xc8] sm:$0xff]
        %v5697 = vld [vmem:[#allocation3 + $0xd0] sm:$0xff]
        %v5698 = vld [vmem:[#allocation3 + $0xd8] sm:$0xff]
        %v5699 = vld [vmem:[#allocation3 + $0xe0] sm:$0xff]
        %v5700 = vld [vmem:[#allocation3 + $0xe8] sm:$0xff]
        %v5701 = vld [vmem:[#allocation3 + $0xf0] sm:$0xff]
        %v5702 = vld [vmem:[#allocation3 + $0xf8] sm:$0xff]
        %v5703 = vld [vmem:[#allocation3 + $0x100] sm:$0xff]
        %v5704 = vld [vmem:[#allocation3 + $0x108] sm:$0xff]
        %v5705 = vld [vmem:[#allocation3 + $0x110] sm:$0xff]
        %v5706 = vld [vmem:[#allocation3 + $0x118] sm:$0xff]
        %5711 = vrot.lane.b32.xlu0 %v5697, 17
        %v5712 = vpop.permute.xlu0 %5711
        %5713 = vrot.lane.b32.xlu0 %v5700, 17
        %v5714 = vpop.permute.xlu0 %5713
        %5715 = vrot.lane.b32.xlu0 %v5703, 17
        %v5716 = vpop.permute.xlu0 %5715
        %5717 = vrot.lane.b32.xlu0 %v5706, 17
        %v5718 = vpop.permute.xlu0 %5717
        %5731 = vrot.lane.b32.xlu0 %v5695, 17
        %v5732 = vpop.permute.xlu0 %5731
        %5733 = vrot.lane.b32.xlu0 %v5696, 17
        %v5734 = vpop.permute.xlu0 %5733
        %5735 = vrot.lane.b32.xlu0 %v5698, 17
        %v5736 = vpop.permute.xlu0 %5735
        %5737 = vrot.lane.b32.xlu0 %v5699, 17
        %v5738 = vpop.permute.xlu0 %5737
        %5739 = vrot.lane.b32.xlu0 %v5701, 17
        %v5740 = vpop.permute.xlu0 %5739
        %5741 = vrot.lane.b32.xlu0 %v5702, 17
        %v5742 = vpop.permute.xlu0 %5741
        %5743 = vrot.lane.b32.xlu0 %v5704, 17
        %v5744 = vpop.permute.xlu0 %5743
        %5745 = vrot.lane.b32.xlu0 %v5705, 17
        %v5746 = vpop.permute.xlu0 %5745
        %v5747 = vsel %vm737, %v5732, %v5734
        %v5748 = vsel %vm737, %v5734, %v5712
        %v5749 = vsel %vm737, %v5736, %v5738
        %v5750 = vsel %vm737, %v5738, %v5714
        %v5751 = vsel %vm737, %v5740, %v5742
        %v5752 = vsel %vm737, %v5742, %v5716
        %v5753 = vsel %vm737, %v5744, %v5746
        %v5754 = vsel %vm737, %v5746, %v5718
        %v5767 = vsel %vm737, %v5712, %v5732
        %v5768 = vsel %vm737, %v5714, %v5736
        %v5769 = vsel %vm737, %v5716, %v5740
        %v5770 = vsel %vm737, %v5718, %v5744
        %v5771 = vadd.f32 %v5683, %v5767
        %v5772 = vadd.f32 %v5684, %v5747
        %v5773 = vadd.f32 %v5685, %v5748
        %v5774 = vadd.f32 %v5686, %v5768
        %v5775 = vadd.f32 %v5687, %v5749
        %v5776 = vadd.f32 %v5688, %v5750
        %v5777 = vadd.f32 %v5689, %v5769
        %v5778 = vadd.f32 %v5690, %v5751
        %v5779 = vadd.f32 %v5691, %v5752
        %v5780 = vadd.f32 %v5692, %v5770
        %v5781 = vadd.f32 %v5693, %v5753
        %v5782 = vadd.f32 %v5694, %v5754
        %v5783 = vld [vmem:[%s5164 + $0x60] sm:$0xf]
        %v5784 = vld [vmem:[%s5164 + $0x68] sm:$0xf]
        %v5785 = vld [vmem:[%s5164 + $0x70] sm:$0xf]
        %v5786 = vld [vmem:[%s5164 + $0x78] sm:$0xf]
        %v5787 = vld [vmem:[%s5164 + $0x80] sm:$0xf]
        %v5788 = vld [vmem:[%s5164 + $0x88] sm:$0xf]
        %v5789 = vld [vmem:[%s5164 + $0x90] sm:$0xf]
        %v5790 = vld [vmem:[%s5164 + $0x98] sm:$0xf]
        %v5791 = vld [vmem:[%s5164 + $0xa0] sm:$0xf]
        %v5792 = vld [vmem:[%s5164 + $0xa8] sm:$0xf]
        %v5793 = vld [vmem:[%s5164 + $0xb0] sm:$0xf]
        %v5794 = vld [vmem:[%s5164 + $0xb8] sm:$0xf]
        %v5795 = vld [vmem:[#allocation2] sm:$0xff]
        %v5796 = vld [vmem:[#allocation2 + $0x8] sm:$0xf]
        %v5797 = vld [vmem:[#allocation2 + $0xc] sm:$0xff]
        %v5798 = vld [vmem:[#allocation2 + $0x14] sm:$0xf]
        %v5799 = vld [vmem:[#allocation2 + $0x18] sm:$0xff]
        %v5800 = vld [vmem:[#allocation2 + $0x20] sm:$0xf]
        %v5801 = vld [vmem:[#allocation2 + $0x24] sm:$0xff]
        %v5802 = vld [vmem:[#allocation2 + $0x2c] sm:$0xf]
        %v5803 = vld [vmem:[#allocation2 + $0x30] sm:$0xff]
        %v5804 = vld [vmem:[#allocation2 + $0x38] sm:$0xf]
        %v5805 = vld [vmem:[#allocation2 + $0x3c] sm:$0xff]
        %v5806 = vld [vmem:[#allocation2 + $0x44] sm:$0xf]
        %v5807 = vld [vmem:[#allocation2 + $0x48] sm:$0xff]
        %v5808 = vld [vmem:[#allocation2 + $0x50] sm:$0xf]
        %v5809 = vld [vmem:[#allocation2 + $0x54] sm:$0xff]
        %v5810 = vld [vmem:[#allocation2 + $0x5c] sm:$0xf]
        %v5811 = vld [vmem:[#allocation2 + $0x60] sm:$0xff]
        %v5812 = vld [vmem:[#allocation2 + $0x68] sm:$0xf]
        %v5813 = vld [vmem:[#allocation2 + $0x6c] sm:$0xff]
        %v5814 = vld [vmem:[#allocation2 + $0x74] sm:$0xf]
        %v5815 = vld [vmem:[#allocation2 + $0x78] sm:$0xff]
        %v5816 = vld [vmem:[#allocation2 + $0x80] sm:$0xf]
        %v5817 = vld [vmem:[#allocation2 + $0x84] sm:$0xff]
        %v5818 = vld [vmem:[#allocation2 + $0x8c] sm:$0xf]
        %v5819 = vld [vmem:[#allocation2 + $0x90] sm:$0xff]
        %v5820 = vld [vmem:[#allocation2 + $0x98] sm:$0xf]
        %v5821 = vld [vmem:[#allocation2 + $0x9c] sm:$0xff]
        %v5822 = vld [vmem:[#allocation2 + $0xa4] sm:$0xf]
        %v5835 = vunpack.c.l.b16 %v5783
        %v5836 = vunpack.c.l.b16 %v5784
        %v5837 = vunpack.c.l.b16 %v5785
        %v5838 = vunpack.c.l.b16 %v5786
        %v5839 = vunpack.c.l.b16 %v5787
        %v5840 = vunpack.c.l.b16 %v5788
        %v5841 = vunpack.c.l.b16 %v5789
        %v5842 = vunpack.c.l.b16 %v5790
        %v5843 = vunpack.c.l.b16 %v5791
        %v5844 = vunpack.c.l.b16 %v5792
        %v5845 = vunpack.c.l.b16 %v5793
        %v5846 = vunpack.c.l.b16 %v5794
        %v5847 = vpack.c.b16 %v5836, %v5835
        %v5848 = vpack.c.b16 %v5838, %v5837
        %v5849 = vpack.c.b16 %v5840, %v5839
        %v5850 = vpack.c.b16 %v5842, %v5841
        %v5851 = vpack.c.b16 %v5844, %v5843
        %v5852 = vpack.c.b16 %v5846, %v5845
        %v5881 = vunpack.c.l.b16 %v5795
        %v5882 = vunpack.c.h.b16 %v5795
        %v5883 = vunpack.c.l.b16 %v5796
        %v5884 = vunpack.c.l.b16 %v5797
        %v5885 = vunpack.c.h.b16 %v5797
        %v5886 = vunpack.c.l.b16 %v5798
        %v5887 = vunpack.c.l.b16 %v5799
        %v5888 = vunpack.c.h.b16 %v5799
        %v5889 = vunpack.c.l.b16 %v5800
        %v5890 = vunpack.c.l.b16 %v5801
        %v5891 = vunpack.c.h.b16 %v5801
        %v5892 = vunpack.c.l.b16 %v5802
        %v5893 = vunpack.c.l.b16 %v5803
        %v5894 = vunpack.c.h.b16 %v5803
        %v5895 = vunpack.c.l.b16 %v5804
        %v5896 = vunpack.c.l.b16 %v5805
        %v5897 = vunpack.c.h.b16 %v5805
        %v5898 = vunpack.c.l.b16 %v5806
        %v5899 = vunpack.c.l.b16 %v5807
        %v5900 = vunpack.c.h.b16 %v5807
        %v5901 = vunpack.c.l.b16 %v5808
        %v5902 = vunpack.c.l.b16 %v5809
        %v5903 = vunpack.c.h.b16 %v5809
        %v5904 = vunpack.c.l.b16 %v5810
        %v5905 = vunpack.c.l.b16 %v5811
        %v5906 = vunpack.c.h.b16 %v5811
        %v5907 = vunpack.c.l.b16 %v5812
        %v5908 = vunpack.c.l.b16 %v5813
        %v5909 = vunpack.c.h.b16 %v5813
        %v5910 = vunpack.c.l.b16 %v5814
        %v5911 = vunpack.c.l.b16 %v5815
        %v5912 = vunpack.c.h.b16 %v5815
        %v5913 = vunpack.c.l.b16 %v5816
        %v5914 = vunpack.c.l.b16 %v5817
        %v5915 = vunpack.c.h.b16 %v5817
        %v5916 = vunpack.c.l.b16 %v5818
        %v5917 = vunpack.c.l.b16 %v5819
        %v5918 = vunpack.c.h.b16 %v5819
        %v5919 = vunpack.c.l.b16 %v5820
        %v5920 = vunpack.c.l.b16 %v5821
        %v5921 = vunpack.c.h.b16 %v5821
        %v5922 = vunpack.c.l.b16 %v5822
        %v5923 = vpack.c.b16 %v5884, %v5881
        %v5924 = vpack.c.b16 %v5885, %v5882
        %v5925 = vpack.c.b16 %v5886, %v5883
        %v5926 = vpack.c.b16 %v5890, %v5887
        %v5927 = vpack.c.b16 %v5891, %v5888
        %v5928 = vpack.c.b16 %v5892, %v5889
        %v5929 = vpack.c.b16 %v5896, %v5893
        %v5930 = vpack.c.b16 %v5897, %v5894
        %v5931 = vpack.c.b16 %v5898, %v5895
        %v5932 = vpack.c.b16 %v5902, %v5899
        %v5933 = vpack.c.b16 %v5903, %v5900
        %v5934 = vpack.c.b16 %v5904, %v5901
        %v5935 = vpack.c.b16 %v5908, %v5905
        %v5936 = vpack.c.b16 %v5909, %v5906
        %v5937 = vpack.c.b16 %v5910, %v5907
        %v5938 = vpack.c.b16 %v5914, %v5911
        %v5939 = vpack.c.b16 %v5915, %v5912
        %v5940 = vpack.c.b16 %v5916, %v5913
        %v5941 = vpack.c.b16 %v5920, %v5917
        %v5942 = vpack.c.b16 %v5921, %v5918
        %v5943 = vpack.c.b16 %v5922, %v5919
        %v5966 = vsel %vm5347, %v5847, 0
        %v5969 = vsel %vm5347, %v5848, 0
        %v5972 = vsel %vm5347, %v5849, 0
        %v5975 = vsel %vm5347, %v5850, 0
        %v5978 = vsel %vm5347, %v5851, 0
        %v5981 = vsel %vm5347, %v5852, 0
        %5983 = vmatpush.bf16.msra.mxu0 0
        %5984 = vmatpush.bf16.msra.mxu0 %v5941
        %5985 = vmatpush.bf16.msra.mxu0 %v5938
        %5986 = vmatpush.bf16.msra.mxu0 %v5935
        %5987 = vmatpush.bf16.msra.mxu0 %v5932
        %5988 = vmatpush.bf16.msra.mxu0 %v5929
        %5989 = vmatpush.bf16.msra.mxu0 %v5926
        %5990 = vmatpush.bf16.msra.mxu0 %v5923
        %5991 = vmatmul.bf16.gmra.mxu0 %v5966
        %v5992 = vpop.f32.mrf.mxu0
        %v5993 = vadd.f32 0.0, %v5992
        %v5994 = vpop.f32.mrf.mxu0
        %v5995 = vadd.f32 0.0, %v5994
        %5996 = vmatmul.bf16.gmra.mxu0 %v5969
        %v5997 = vpop.f32.mrf.mxu0
        %v5998 = vadd.f32 0.0, %v5997
        %v5999 = vpop.f32.mrf.mxu0
        %v6000 = vadd.f32 0.0, %v5999
        %6001 = vmatmul.bf16.gmra.mxu0 %v5972
        %v6002 = vpop.f32.mrf.mxu0
        %v6003 = vadd.f32 0.0, %v6002
        %v6004 = vpop.f32.mrf.mxu0
        %v6005 = vadd.f32 0.0, %v6004
        %6006 = vmatmul.bf16.gmra.mxu0 %v5975
        %v6007 = vpop.f32.mrf.mxu0
        %v6008 = vadd.f32 0.0, %v6007
        %v6009 = vpop.f32.mrf.mxu0
        %v6010 = vadd.f32 0.0, %v6009
        %6011 = vmatmul.bf16.gmra.mxu0 %v5978
        %v6012 = vpop.f32.mrf.mxu0
        %v6013 = vadd.f32 0.0, %v6012
        %v6014 = vpop.f32.mrf.mxu0
        %v6015 = vadd.f32 0.0, %v6014
        %6016 = vmatmul.bf16.gmra.mxu0 %v5981
        %v6017 = vpop.f32.mrf.mxu0
        %v6018 = vadd.f32 0.0, %v6017
        %v6019 = vpop.f32.mrf.mxu0
        %v6020 = vadd.f32 0.0, %v6019
        %6021 = vdwg.mxu0
        %6022 = vmatpush.bf16.msra.mxu0 0
        %6023 = vmatpush.bf16.msra.mxu0 %v5942
        %6024 = vmatpush.bf16.msra.mxu0 %v5939
        %6025 = vmatpush.bf16.msra.mxu0 %v5936
        %6026 = vmatpush.bf16.msra.mxu0 %v5933
        %6027 = vmatpush.bf16.msra.mxu0 %v5930
        %6028 = vmatpush.bf16.msra.mxu0 %v5927
        %6029 = vmatpush.bf16.msra.mxu0 %v5924
        %6030 = vmatmul.bf16.gmra.mxu0 %v5966
        %v6031 = vpop.f32.mrf.mxu0
        %v6032 = vadd.f32 0.0, %v6031
        %v6033 = vpop.f32.mrf.mxu0
        %v6034 = vadd.f32 0.0, %v6033
        %6035 = vmatmul.bf16.gmra.mxu0 %v5969
        %v6036 = vpop.f32.mrf.mxu0
        %v6037 = vadd.f32 0.0, %v6036
        %v6038 = vpop.f32.mrf.mxu0
        %v6039 = vadd.f32 0.0, %v6038
        %6040 = vmatmul.bf16.gmra.mxu0 %v5972
        %v6041 = vpop.f32.mrf.mxu0
        %v6042 = vadd.f32 0.0, %v6041
        %v6043 = vpop.f32.mrf.mxu0
        %v6044 = vadd.f32 0.0, %v6043
        %6045 = vmatmul.bf16.gmra.mxu0 %v5975
        %v6046 = vpop.f32.mrf.mxu0
        %v6047 = vadd.f32 0.0, %v6046
        %v6048 = vpop.f32.mrf.mxu0
        %v6049 = vadd.f32 0.0, %v6048
        %6050 = vmatmul.bf16.gmra.mxu0 %v5978
        %v6051 = vpop.f32.mrf.mxu0
        %v6052 = vadd.f32 0.0, %v6051
        %v6053 = vpop.f32.mrf.mxu0
        %v6054 = vadd.f32 0.0, %v6053
        %6055 = vmatmul.bf16.gmra.mxu0 %v5981
        %v6056 = vpop.f32.mrf.mxu0
        %v6057 = vadd.f32 0.0, %v6056
        %v6058 = vpop.f32.mrf.mxu0
        %v6059 = vadd.f32 0.0, %v6058
        %6060 = vdwg.mxu0
        %6061 = vmatpush.bf16.msra.mxu0 0
        %6062 = vmatpush.bf16.msra.mxu0 %v5943
        %6063 = vmatpush.bf16.msra.mxu0 %v5940
        %6064 = vmatpush.bf16.msra.mxu0 %v5937
        %6065 = vmatpush.bf16.msra.mxu0 %v5934
        %6066 = vmatpush.bf16.msra.mxu0 %v5931
        %6067 = vmatpush.bf16.msra.mxu0 %v5928
        %6068 = vmatpush.bf16.msra.mxu0 %v5925
        %6069 = vmatmul.bf16.gmra.mxu0 %v5966
        %v6070 = vpop.f32.mrf.mxu0
        %v6071 = vadd.f32 0.0, %v6070
        %v6072 = vpop.f32.mrf.mxu0
        %v6073 = vadd.f32 0.0, %v6072
        %6074 = vmatmul.bf16.gmra.mxu0 %v5969
        %v6075 = vpop.f32.mrf.mxu0
        %v6076 = vadd.f32 0.0, %v6075
        %v6077 = vpop.f32.mrf.mxu0
        %v6078 = vadd.f32 0.0, %v6077
        %6079 = vmatmul.bf16.gmra.mxu0 %v5972
        %v6080 = vpop.f32.mrf.mxu0
        %v6081 = vadd.f32 0.0, %v6080
        %v6082 = vpop.f32.mrf.mxu0
        %v6083 = vadd.f32 0.0, %v6082
        %6084 = vmatmul.bf16.gmra.mxu0 %v5975
        %v6085 = vpop.f32.mrf.mxu0
        %v6086 = vadd.f32 0.0, %v6085
        %v6087 = vpop.f32.mrf.mxu0
        %v6088 = vadd.f32 0.0, %v6087
        %6089 = vmatmul.bf16.gmra.mxu0 %v5978
        %v6090 = vpop.f32.mrf.mxu0
        %v6091 = vadd.f32 0.0, %v6090
        %v6092 = vpop.f32.mrf.mxu0
        %v6093 = vadd.f32 0.0, %v6092
        %6094 = vmatmul.bf16.gmra.mxu0 %v5981
        %v6095 = vpop.f32.mrf.mxu0
        %v6096 = vadd.f32 0.0, %v6095
        %v6097 = vpop.f32.mrf.mxu0
        %v6098 = vadd.f32 0.0, %v6097
        %6099 = vdwg.mxu0
        %6100 = vst [vmem:[#allocation3] sm:$0xff] %v5993
        %6101 = vst [vmem:[#allocation3 + $0x8] sm:$0xff] %v6032
        %6102 = vst [vmem:[#allocation3 + $0x10] sm:$0xff] %v6071
        %6103 = vst [vmem:[#allocation3 + $0x18] sm:$0xff] %v5995
        %6104 = vst [vmem:[#allocation3 + $0x20] sm:$0xff] %v6034
        %6105 = vst [vmem:[#allocation3 + $0x28] sm:$0xff] %v6073
        %6106 = vst [vmem:[#allocation3 + $0x30] sm:$0xff] %v5998
        %6107 = vst [vmem:[#allocation3 + $0x38] sm:$0xff] %v6037
        %6108 = vst [vmem:[#allocation3 + $0x40] sm:$0xff] %v6076
        %6109 = vst [vmem:[#allocation3 + $0x48] sm:$0xff] %v6000
        %6110 = vst [vmem:[#allocation3 + $0x50] sm:$0xff] %v6039
        %6111 = vst [vmem:[#allocation3 + $0x58] sm:$0xff] %v6078
        %6112 = vst [vmem:[#allocation3 + $0x60] sm:$0xff] %v6003
        %6113 = vst [vmem:[#allocation3 + $0x68] sm:$0xff] %v6042
        %6114 = vst [vmem:[#allocation3 + $0x70] sm:$0xff] %v6081
        %6115 = vst [vmem:[#allocation3 + $0x78] sm:$0xff] %v6005
        %6116 = vst [vmem:[#allocation3 + $0x80] sm:$0xff] %v6044
        %6117 = vst [vmem:[#allocation3 + $0x88] sm:$0xff] %v6083
        %6118 = vst [vmem:[#allocation3 + $0x90] sm:$0xff] %v6008
        %6119 = vst [vmem:[#allocation3 + $0x98] sm:$0xff] %v6047
        %6120 = vst [vmem:[#allocation3 + $0xa0] sm:$0xff] %v6086
        %6121 = vst [vmem:[#allocation3 + $0xa8] sm:$0xff] %v6010
        %6122 = vst [vmem:[#allocation3 + $0xb0] sm:$0xff] %v6049
        %6123 = vst [vmem:[#allocation3 + $0xb8] sm:$0xff] %v6088
        %6124 = vst [vmem:[#allocation3 + $0xc0] sm:$0xff] %v6013
        %6125 = vst [vmem:[#allocation3 + $0xc8] sm:$0xff] %v6052
        %6126 = vst [vmem:[#allocation3 + $0xd0] sm:$0xff] %v6091
        %6127 = vst [vmem:[#allocation3 + $0xd8] sm:$0xff] %v6015
        %6128 = vst [vmem:[#allocation3 + $0xe0] sm:$0xff] %v6054
        %6129 = vst [vmem:[#allocation3 + $0xe8] sm:$0xff] %v6093
        %6130 = vst [vmem:[#allocation3 + $0xf0] sm:$0xff] %v6018
        %6131 = vst [vmem:[#allocation3 + $0xf8] sm:$0xff] %v6057
        %6132 = vst [vmem:[#allocation3 + $0x100] sm:$0xff] %v6096
        %6133 = vst [vmem:[#allocation3 + $0x108] sm:$0xff] %v6020
        %6134 = vst [vmem:[#allocation3 + $0x110] sm:$0xff] %v6059
        %6135 = vst [vmem:[#allocation3 + $0x118] sm:$0xff] %v6098
        %v6136 = vld [vmem:[#allocation3] sm:$0xff]
        %v6137 = vld [vmem:[#allocation3 + $0x8] sm:$0xff]
        %v6138 = vld [vmem:[#allocation3 + $0x10] sm:$0xff]
        %v6139 = vld [vmem:[#allocation3 + $0x18] sm:$0xff]
        %v6140 = vld [vmem:[#allocation3 + $0x20] sm:$0xff]
        %v6141 = vld [vmem:[#allocation3 + $0x28] sm:$0xff]
        %v6142 = vld [vmem:[#allocation3 + $0x30] sm:$0xff]
        %v6143 = vld [vmem:[#allocation3 + $0x38] sm:$0xff]
        %v6144 = vld [vmem:[#allocation3 + $0x40] sm:$0xff]
        %v6145 = vld [vmem:[#allocation3 + $0x48] sm:$0xff]
        %v6146 = vld [vmem:[#allocation3 + $0x50] sm:$0xff]
        %v6147 = vld [vmem:[#allocation3 + $0x58] sm:$0xff]
        %6152 = vrot.lane.b32.xlu0 %v6138, 1
        %v6153 = vpop.permute.xlu0 %6152
        %6154 = vrot.lane.b32.xlu0 %v6141, 1
        %v6155 = vpop.permute.xlu0 %6154
        %6156 = vrot.lane.b32.xlu0 %v6144, 1
        %v6157 = vpop.permute.xlu0 %6156
        %6158 = vrot.lane.b32.xlu0 %v6147, 1
        %v6159 = vpop.permute.xlu0 %6158
        %6172 = vrot.lane.b32.xlu0 %v6136, 1
        %v6173 = vpop.permute.xlu0 %6172
        %6174 = vrot.lane.b32.xlu0 %v6137, 1
        %v6175 = vpop.permute.xlu0 %6174
        %6176 = vrot.lane.b32.xlu0 %v6139, 1
        %v6177 = vpop.permute.xlu0 %6176
        %6178 = vrot.lane.b32.xlu0 %v6140, 1
        %v6179 = vpop.permute.xlu0 %6178
        %6180 = vrot.lane.b32.xlu0 %v6142, 1
        %v6181 = vpop.permute.xlu0 %6180
        %6182 = vrot.lane.b32.xlu0 %v6143, 1
        %v6183 = vpop.permute.xlu0 %6182
        %6184 = vrot.lane.b32.xlu0 %v6145, 1
        %v6185 = vpop.permute.xlu0 %6184
        %6186 = vrot.lane.b32.xlu0 %v6146, 1
        %v6187 = vpop.permute.xlu0 %6186
        %v6188 = vsel %vm1059, %v6173, %v6175
        %v6189 = vsel %vm1059, %v6175, %v6153
        %v6190 = vsel %vm1059, %v6177, %v6179
        %v6191 = vsel %vm1059, %v6179, %v6155
        %v6192 = vsel %vm1059, %v6181, %v6183
        %v6193 = vsel %vm1059, %v6183, %v6157
        %v6194 = vsel %vm1059, %v6185, %v6187
        %v6195 = vsel %vm1059, %v6187, %v6159
        %v6208 = vsel %vm1059, %v6153, %v6173
        %v6209 = vsel %vm1059, %v6155, %v6177
        %v6210 = vsel %vm1059, %v6157, %v6181
        %v6211 = vsel %vm1059, %v6159, %v6185
        %v6212 = vadd.f32 %v5771, %v6208
        %v6213 = vadd.f32 %v5772, %v6188
        %v6214 = vadd.f32 %v5773, %v6189
        %v6215 = vadd.f32 %v5774, %v6209
        %v6216 = vadd.f32 %v5775, %v6190
        %v6217 = vadd.f32 %v5776, %v6191
        %v6218 = vadd.f32 %v5777, %v6210
        %v6219 = vadd.f32 %v5778, %v6192
        %v6220 = vadd.f32 %v5779, %v6193
        %v6221 = vadd.f32 %v5780, %v6211
        %v6222 = vadd.f32 %v5781, %v6194
        %v6223 = vadd.f32 %v5782, %v6195
        %v6224 = vld [vmem:[#allocation3 + $0x60] sm:$0xff]
        %v6225 = vld [vmem:[#allocation3 + $0x68] sm:$0xff]
        %v6226 = vld [vmem:[#allocation3 + $0x70] sm:$0xff]
        %v6227 = vld [vmem:[#allocation3 + $0x78] sm:$0xff]
        %v6228 = vld [vmem:[#allocation3 + $0x80] sm:$0xff]
        %v6229 = vld [vmem:[#allocation3 + $0x88] sm:$0xff]
        %v6230 = vld [vmem:[#allocation3 + $0x90] sm:$0xff]
        %v6231 = vld [vmem:[#allocation3 + $0x98] sm:$0xff]
        %v6232 = vld [vmem:[#allocation3 + $0xa0] sm:$0xff]
        %v6233 = vld [vmem:[#allocation3 + $0xa8] sm:$0xff]
        %v6234 = vld [vmem:[#allocation3 + $0xb0] sm:$0xff]
        %v6235 = vld [vmem:[#allocation3 + $0xb8] sm:$0xff]
        %v6236 = vadd.f32 %v6212, %v6224
        %v6237 = vadd.f32 %v6213, %v6225
        %v6238 = vadd.f32 %v6214, %v6226
        %v6239 = vadd.f32 %v6215, %v6227
        %v6240 = vadd.f32 %v6216, %v6228
        %v6241 = vadd.f32 %v6217, %v6229
        %v6242 = vadd.f32 %v6218, %v6230
        %v6243 = vadd.f32 %v6219, %v6231
        %v6244 = vadd.f32 %v6220, %v6232
        %v6245 = vadd.f32 %v6221, %v6233
        %v6246 = vadd.f32 %v6222, %v6234
        %v6247 = vadd.f32 %v6223, %v6235
        %v6248 = vld [vmem:[#allocation3 + $0xc0] sm:$0xff]
        %v6249 = vld [vmem:[#allocation3 + $0xc8] sm:$0xff]
        %v6250 = vld [vmem:[#allocation3 + $0xd0] sm:$0xff]
        %v6251 = vld [vmem:[#allocation3 + $0xd8] sm:$0xff]
        %v6252 = vld [vmem:[#allocation3 + $0xe0] sm:$0xff]
        %v6253 = vld [vmem:[#allocation3 + $0xe8] sm:$0xff]
        %v6254 = vld [vmem:[#allocation3 + $0xf0] sm:$0xff]
        %v6255 = vld [vmem:[#allocation3 + $0xf8] sm:$0xff]
        %v6256 = vld [vmem:[#allocation3 + $0x100] sm:$0xff]
        %v6257 = vld [vmem:[#allocation3 + $0x108] sm:$0xff]
        %v6258 = vld [vmem:[#allocation3 + $0x110] sm:$0xff]
        %v6259 = vld [vmem:[#allocation3 + $0x118] sm:$0xff]
        %6272 = vrot.lane.b32.xlu0 %v6248, 127
        %v6273 = vpop.permute.xlu0 %6272
        %6274 = vrot.lane.b32.xlu0 %v6249, 127
        %v6275 = vpop.permute.xlu0 %6274
        %6276 = vrot.lane.b32.xlu0 %v6250, 127
        %v6277 = vpop.permute.xlu0 %6276
        %6278 = vrot.lane.b32.xlu0 %v6251, 127
        %v6279 = vpop.permute.xlu0 %6278
        %6280 = vrot.lane.b32.xlu0 %v6252, 127
        %v6281 = vpop.permute.xlu0 %6280
        %6282 = vrot.lane.b32.xlu0 %v6253, 127
        %v6283 = vpop.permute.xlu0 %6282
        %6284 = vrot.lane.b32.xlu0 %v6254, 127
        %v6285 = vpop.permute.xlu0 %6284
        %6286 = vrot.lane.b32.xlu0 %v6255, 127
        %v6287 = vpop.permute.xlu0 %6286
        %6288 = vrot.lane.b32.xlu0 %v6256, 127
        %v6289 = vpop.permute.xlu0 %6288
        %6290 = vrot.lane.b32.xlu0 %v6257, 127
        %v6291 = vpop.permute.xlu0 %6290
        %6292 = vrot.lane.b32.xlu0 %v6258, 127
        %v6293 = vpop.permute.xlu0 %6292
        %6294 = vrot.lane.b32.xlu0 %v6259, 127
        %v6295 = vpop.permute.xlu0 %6294
        %v6296 = vsel %vm1168, %v6273, %v6275
        %v6297 = vsel %vm1168, %v6275, %v6277
        %v6298 = vsel %vm1168, %v6279, %v6281
        %v6299 = vsel %vm1168, %v6281, %v6283
        %v6300 = vsel %vm1168, %v6285, %v6287
        %v6301 = vsel %vm1168, %v6287, %v6289
        %v6302 = vsel %vm1168, %v6291, %v6293
        %v6303 = vsel %vm1168, %v6293, %v6295
        %v6320 = vsel %vm1168, %v6277, %v6273
        %v6321 = vsel %vm1168, %v6283, %v6279
        %v6322 = vsel %vm1168, %v6289, %v6285
        %v6323 = vsel %vm1168, %v6295, %v6291
        %v6324 = vadd.f32 %v6236, %v6296
        %v6325 = vadd.f32 %v6237, %v6297
        %v6326 = vadd.f32 %v6238, %v6320
        %v6327 = vadd.f32 %v6239, %v6298
        %v6328 = vadd.f32 %v6240, %v6299
        %v6329 = vadd.f32 %v6241, %v6321
        %v6330 = vadd.f32 %v6242, %v6300
        %v6331 = vadd.f32 %v6243, %v6301
        %v6332 = vadd.f32 %v6244, %v6322
        %v6333 = vadd.f32 %v6245, %v6302
        %v6334 = vadd.f32 %v6246, %v6303
        %v6335 = vadd.f32 %v6247, %v6323
        %v6336 = vld [vmem:[%s5164 + $0xc0] sm:$0xf]
        %v6337 = vld [vmem:[%s5164 + $0xc8] sm:$0xf]
        %v6338 = vld [vmem:[%s5164 + $0xd0] sm:$0xf]
        %v6339 = vld [vmem:[%s5164 + $0xd8] sm:$0xf]
        %v6340 = vld [vmem:[%s5164 + $0xe0] sm:$0xf]
        %v6341 = vld [vmem:[%s5164 + $0xe8] sm:$0xf]
        %v6342 = vld [vmem:[%s5164 + $0xf0] sm:$0xf]
        %v6343 = vld [vmem:[%s5164 + $0xf8] sm:$0xf]
        %v6344 = vld [vmem:[%s5164 + $0x100] sm:$0xf]
        %v6345 = vld [vmem:[%s5164 + $0x108] sm:$0xf]
        %v6346 = vld [vmem:[%s5164 + $0x110] sm:$0xf]
        %v6347 = vld [vmem:[%s5164 + $0x118] sm:$0xf]
        %v6348 = vld [vmem:[#allocation2] sm:$0xff]
        %v6349 = vld [vmem:[#allocation2 + $0x8] sm:$0xf]
        %v6350 = vld [vmem:[#allocation2 + $0xc] sm:$0xff]
        %v6351 = vld [vmem:[#allocation2 + $0x14] sm:$0xf]
        %v6352 = vld [vmem:[#allocation2 + $0x18] sm:$0xff]
        %v6353 = vld [vmem:[#allocation2 + $0x20] sm:$0xf]
        %v6354 = vld [vmem:[#allocation2 + $0x24] sm:$0xff]
        %v6355 = vld [vmem:[#allocation2 + $0x2c] sm:$0xf]
        %v6356 = vld [vmem:[#allocation2 + $0x30] sm:$0xff]
        %v6357 = vld [vmem:[#allocation2 + $0x38] sm:$0xf]
        %v6358 = vld [vmem:[#allocation2 + $0x3c] sm:$0xff]
        %v6359 = vld [vmem:[#allocation2 + $0x44] sm:$0xf]
        %v6360 = vld [vmem:[#allocation2 + $0x48] sm:$0xff]
        %v6361 = vld [vmem:[#allocation2 + $0x50] sm:$0xf]
        %v6362 = vld [vmem:[#allocation2 + $0x54] sm:$0xff]
        %v6363 = vld [vmem:[#allocation2 + $0x5c] sm:$0xf]
        %v6364 = vld [vmem:[#allocation2 + $0x60] sm:$0xff]
        %v6365 = vld [vmem:[#allocation2 + $0x68] sm:$0xf]
        %v6366 = vld [vmem:[#allocation2 + $0x6c] sm:$0xff]
        %v6367 = vld [vmem:[#allocation2 + $0x74] sm:$0xf]
        %v6368 = vld [vmem:[#allocation2 + $0x78] sm:$0xff]
        %v6369 = vld [vmem:[#allocation2 + $0x80] sm:$0xf]
        %v6370 = vld [vmem:[#allocation2 + $0x84] sm:$0xff]
        %v6371 = vld [vmem:[#allocation2 + $0x8c] sm:$0xf]
        %v6372 = vld [vmem:[#allocation2 + $0x90] sm:$0xff]
        %v6373 = vld [vmem:[#allocation2 + $0x98] sm:$0xf]
        %v6374 = vld [vmem:[#allocation2 + $0x9c] sm:$0xff]
        %v6375 = vld [vmem:[#allocation2 + $0xa4] sm:$0xf]
        %v6388 = vunpack.c.l.b16 %v6336
        %v6389 = vunpack.c.l.b16 %v6337
        %v6390 = vunpack.c.l.b16 %v6338
        %v6391 = vunpack.c.l.b16 %v6339
        %v6392 = vunpack.c.l.b16 %v6340
        %v6393 = vunpack.c.l.b16 %v6341
        %v6394 = vunpack.c.l.b16 %v6342
        %v6395 = vunpack.c.l.b16 %v6343
        %v6396 = vunpack.c.l.b16 %v6344
        %v6397 = vunpack.c.l.b16 %v6345
        %v6398 = vunpack.c.l.b16 %v6346
        %v6399 = vunpack.c.l.b16 %v6347
        %v6400 = vpack.c.b16 %v6389, %v6388
        %v6401 = vpack.c.b16 %v6391, %v6390
        %v6402 = vpack.c.b16 %v6393, %v6392
        %v6403 = vpack.c.b16 %v6395, %v6394
        %v6404 = vpack.c.b16 %v6397, %v6396
        %v6405 = vpack.c.b16 %v6399, %v6398
        %v6434 = vunpack.c.l.b16 %v6348
        %v6435 = vunpack.c.h.b16 %v6348
        %v6436 = vunpack.c.l.b16 %v6349
        %v6437 = vunpack.c.l.b16 %v6350
        %v6438 = vunpack.c.h.b16 %v6350
        %v6439 = vunpack.c.l.b16 %v6351
        %v6440 = vunpack.c.l.b16 %v6352
        %v6441 = vunpack.c.h.b16 %v6352
        %v6442 = vunpack.c.l.b16 %v6353
        %v6443 = vunpack.c.l.b16 %v6354
        %v6444 = vunpack.c.h.b16 %v6354
        %v6445 = vunpack.c.l.b16 %v6355
        %v6446 = vunpack.c.l.b16 %v6356
        %v6447 = vunpack.c.h.b16 %v6356
        %v6448 = vunpack.c.l.b16 %v6357
        %v6449 = vunpack.c.l.b16 %v6358
        %v6450 = vunpack.c.h.b16 %v6358
        %v6451 = vunpack.c.l.b16 %v6359
        %v6452 = vunpack.c.l.b16 %v6360
        %v6453 = vunpack.c.h.b16 %v6360
        %v6454 = vunpack.c.l.b16 %v6361
        %v6455 = vunpack.c.l.b16 %v6362
        %v6456 = vunpack.c.h.b16 %v6362
        %v6457 = vunpack.c.l.b16 %v6363
        %v6458 = vunpack.c.l.b16 %v6364
        %v6459 = vunpack.c.h.b16 %v6364
        %v6460 = vunpack.c.l.b16 %v6365
        %v6461 = vunpack.c.l.b16 %v6366
        %v6462 = vunpack.c.h.b16 %v6366
        %v6463 = vunpack.c.l.b16 %v6367
        %v6464 = vunpack.c.l.b16 %v6368
        %v6465 = vunpack.c.h.b16 %v6368
        %v6466 = vunpack.c.l.b16 %v6369
        %v6467 = vunpack.c.l.b16 %v6370
        %v6468 = vunpack.c.h.b16 %v6370
        %v6469 = vunpack.c.l.b16 %v6371
        %v6470 = vunpack.c.l.b16 %v6372
        %v6471 = vunpack.c.h.b16 %v6372
        %v6472 = vunpack.c.l.b16 %v6373
        %v6473 = vunpack.c.l.b16 %v6374
        %v6474 = vunpack.c.h.b16 %v6374
        %v6475 = vunpack.c.l.b16 %v6375
        %v6476 = vpack.c.b16 %v6437, %v6434
        %v6477 = vpack.c.b16 %v6438, %v6435
        %v6478 = vpack.c.b16 %v6439, %v6436
        %v6479 = vpack.c.b16 %v6443, %v6440
        %v6480 = vpack.c.b16 %v6444, %v6441
        %v6481 = vpack.c.b16 %v6445, %v6442
        %v6482 = vpack.c.b16 %v6449, %v6446
        %v6483 = vpack.c.b16 %v6450, %v6447
        %v6484 = vpack.c.b16 %v6451, %v6448
        %v6485 = vpack.c.b16 %v6455, %v6452
        %v6486 = vpack.c.b16 %v6456, %v6453
        %v6487 = vpack.c.b16 %v6457, %v6454
        %v6488 = vpack.c.b16 %v6461, %v6458
        %v6489 = vpack.c.b16 %v6462, %v6459
        %v6490 = vpack.c.b16 %v6463, %v6460
        %v6491 = vpack.c.b16 %v6467, %v6464
        %v6492 = vpack.c.b16 %v6468, %v6465
        %v6493 = vpack.c.b16 %v6469, %v6466
        %v6494 = vpack.c.b16 %v6473, %v6470
        %v6495 = vpack.c.b16 %v6474, %v6471
        %v6496 = vpack.c.b16 %v6475, %v6472
        %v6519 = vsel %vm5347, %v6400, 0
        %v6522 = vsel %vm5347, %v6401, 0
        %v6525 = vsel %vm5347, %v6402, 0
        %v6528 = vsel %vm5347, %v6403, 0
        %v6531 = vsel %vm5347, %v6404, 0
        %v6534 = vsel %vm5347, %v6405, 0
        %6536 = vmatpush.bf16.msra.mxu0 0
        %6537 = vmatpush.bf16.msra.mxu0 %v6494
        %6538 = vmatpush.bf16.msra.mxu0 %v6491
        %6539 = vmatpush.bf16.msra.mxu0 %v6488
        %6540 = vmatpush.bf16.msra.mxu0 %v6485
        %6541 = vmatpush.bf16.msra.mxu0 %v6482
        %6542 = vmatpush.bf16.msra.mxu0 %v6479
        %6543 = vmatpush.bf16.msra.mxu0 %v6476
        %6544 = vmatmul.bf16.gmra.mxu0 %v6519
        %v6545 = vpop.f32.mrf.mxu0
        %v6546 = vadd.f32 0.0, %v6545
        %v6547 = vpop.f32.mrf.mxu0
        %v6548 = vadd.f32 0.0, %v6547
        %6549 = vmatmul.bf16.gmra.mxu0 %v6522
        %v6550 = vpop.f32.mrf.mxu0
        %v6551 = vadd.f32 0.0, %v6550
        %v6552 = vpop.f32.mrf.mxu0
        %v6553 = vadd.f32 0.0, %v6552
        %6554 = vmatmul.bf16.gmra.mxu0 %v6525
        %v6555 = vpop.f32.mrf.mxu0
        %v6556 = vadd.f32 0.0, %v6555
        %v6557 = vpop.f32.mrf.mxu0
        %v6558 = vadd.f32 0.0, %v6557
        %6559 = vmatmul.bf16.gmra.mxu0 %v6528
        %v6560 = vpop.f32.mrf.mxu0
        %v6561 = vadd.f32 0.0, %v6560
        %v6562 = vpop.f32.mrf.mxu0
        %v6563 = vadd.f32 0.0, %v6562
        %6564 = vmatmul.bf16.gmra.mxu0 %v6531
        %v6565 = vpop.f32.mrf.mxu0
        %v6566 = vadd.f32 0.0, %v6565
        %v6567 = vpop.f32.mrf.mxu0
        %v6568 = vadd.f32 0.0, %v6567
        %6569 = vmatmul.bf16.gmra.mxu0 %v6534
        %v6570 = vpop.f32.mrf.mxu0
        %v6571 = vadd.f32 0.0, %v6570
        %v6572 = vpop.f32.mrf.mxu0
        %v6573 = vadd.f32 0.0, %v6572
        %6574 = vdwg.mxu0
        %6575 = vmatpush.bf16.msra.mxu0 0
        %6576 = vmatpush.bf16.msra.mxu0 %v6495
        %6577 = vmatpush.bf16.msra.mxu0 %v6492
        %6578 = vmatpush.bf16.msra.mxu0 %v6489
        %6579 = vmatpush.bf16.msra.mxu0 %v6486
        %6580 = vmatpush.bf16.msra.mxu0 %v6483
        %6581 = vmatpush.bf16.msra.mxu0 %v6480
        %6582 = vmatpush.bf16.msra.mxu0 %v6477
        %6583 = vmatmul.bf16.gmra.mxu0 %v6519
        %v6584 = vpop.f32.mrf.mxu0
        %v6585 = vadd.f32 0.0, %v6584
        %v6586 = vpop.f32.mrf.mxu0
        %v6587 = vadd.f32 0.0, %v6586
        %6588 = vmatmul.bf16.gmra.mxu0 %v6522
        %v6589 = vpop.f32.mrf.mxu0
        %v6590 = vadd.f32 0.0, %v6589
        %v6591 = vpop.f32.mrf.mxu0
        %v6592 = vadd.f32 0.0, %v6591
        %6593 = vmatmul.bf16.gmra.mxu0 %v6525
        %v6594 = vpop.f32.mrf.mxu0
        %v6595 = vadd.f32 0.0, %v6594
        %v6596 = vpop.f32.mrf.mxu0
        %v6597 = vadd.f32 0.0, %v6596
        %6598 = vmatmul.bf16.gmra.mxu0 %v6528
        %v6599 = vpop.f32.mrf.mxu0
        %v6600 = vadd.f32 0.0, %v6599
        %v6601 = vpop.f32.mrf.mxu0
        %v6602 = vadd.f32 0.0, %v6601
        %6603 = vmatmul.bf16.gmra.mxu0 %v6531
        %v6604 = vpop.f32.mrf.mxu0
        %v6605 = vadd.f32 0.0, %v6604
        %v6606 = vpop.f32.mrf.mxu0
        %v6607 = vadd.f32 0.0, %v6606
        %6608 = vmatmul.bf16.gmra.mxu0 %v6534
        %v6609 = vpop.f32.mrf.mxu0
        %v6610 = vadd.f32 0.0, %v6609
        %v6611 = vpop.f32.mrf.mxu0
        %v6612 = vadd.f32 0.0, %v6611
        %6613 = vdwg.mxu0
        %6614 = vmatpush.bf16.msra.mxu0 0
        %6615 = vmatpush.bf16.msra.mxu0 %v6496
        %6616 = vmatpush.bf16.msra.mxu0 %v6493
        %6617 = vmatpush.bf16.msra.mxu0 %v6490
        %6618 = vmatpush.bf16.msra.mxu0 %v6487
        %6619 = vmatpush.bf16.msra.mxu0 %v6484
        %6620 = vmatpush.bf16.msra.mxu0 %v6481
        %6621 = vmatpush.bf16.msra.mxu0 %v6478
        %6622 = vmatmul.bf16.gmra.mxu0 %v6519
        %v6623 = vpop.f32.mrf.mxu0
        %v6624 = vadd.f32 0.0, %v6623
        %v6625 = vpop.f32.mrf.mxu0
        %v6626 = vadd.f32 0.0, %v6625
        %6627 = vmatmul.bf16.gmra.mxu0 %v6522
        %v6628 = vpop.f32.mrf.mxu0
        %v6629 = vadd.f32 0.0, %v6628
        %v6630 = vpop.f32.mrf.mxu0
        %v6631 = vadd.f32 0.0, %v6630
        %6632 = vmatmul.bf16.gmra.mxu0 %v6525
        %v6633 = vpop.f32.mrf.mxu0
        %v6634 = vadd.f32 0.0, %v6633
        %v6635 = vpop.f32.mrf.mxu0
        %v6636 = vadd.f32 0.0, %v6635
        %6637 = vmatmul.bf16.gmra.mxu0 %v6528
        %v6638 = vpop.f32.mrf.mxu0
        %v6639 = vadd.f32 0.0, %v6638
        %v6640 = vpop.f32.mrf.mxu0
        %v6641 = vadd.f32 0.0, %v6640
        %6642 = vmatmul.bf16.gmra.mxu0 %v6531
        %v6643 = vpop.f32.mrf.mxu0
        %v6644 = vadd.f32 0.0, %v6643
        %v6645 = vpop.f32.mrf.mxu0
        %v6646 = vadd.f32 0.0, %v6645
        %6647 = vmatmul.bf16.gmra.mxu0 %v6534
        %v6648 = vpop.f32.mrf.mxu0
        %v6649 = vadd.f32 0.0, %v6648
        %v6650 = vpop.f32.mrf.mxu0
        %v6651 = vadd.f32 0.0, %v6650
        %6652 = vdwg.mxu0
        %6653 = vst [vmem:[#allocation3] sm:$0xff] %v6546
        %6654 = vst [vmem:[#allocation3 + $0x8] sm:$0xff] %v6585
        %6655 = vst [vmem:[#allocation3 + $0x10] sm:$0xff] %v6624
        %6656 = vst [vmem:[#allocation3 + $0x18] sm:$0xff] %v6548
        %6657 = vst [vmem:[#allocation3 + $0x20] sm:$0xff] %v6587
        %6658 = vst [vmem:[#allocation3 + $0x28] sm:$0xff] %v6626
        %6659 = vst [vmem:[#allocation3 + $0x30] sm:$0xff] %v6551
        %6660 = vst [vmem:[#allocation3 + $0x38] sm:$0xff] %v6590
        %6661 = vst [vmem:[#allocation3 + $0x40] sm:$0xff] %v6629
        %6662 = vst [vmem:[#allocation3 + $0x48] sm:$0xff] %v6553
        %6663 = vst [vmem:[#allocation3 + $0x50] sm:$0xff] %v6592
        %6664 = vst [vmem:[#allocation3 + $0x58] sm:$0xff] %v6631
        %6665 = vst [vmem:[#allocation3 + $0x60] sm:$0xff] %v6556
        %6666 = vst [vmem:[#allocation3 + $0x68] sm:$0xff] %v6595
        %6667 = vst [vmem:[#allocation3 + $0x70] sm:$0xff] %v6634
        %6668 = vst [vmem:[#allocation3 + $0x78] sm:$0xff] %v6558
        %6669 = vst [vmem:[#allocation3 + $0x80] sm:$0xff] %v6597
        %6670 = vst [vmem:[#allocation3 + $0x88] sm:$0xff] %v6636
        %6671 = vst [vmem:[#allocation3 + $0x90] sm:$0xff] %v6561
        %6672 = vst [vmem:[#allocation3 + $0x98] sm:$0xff] %v6600
        %6673 = vst [vmem:[#allocation3 + $0xa0] sm:$0xff] %v6639
        %6674 = vst [vmem:[#allocation3 + $0xa8] sm:$0xff] %v6563
        %6675 = vst [vmem:[#allocation3 + $0xb0] sm:$0xff] %v6602
        %6676 = vst [vmem:[#allocation3 + $0xb8] sm:$0xff] %v6641
        %6677 = vst [vmem:[#allocation3 + $0xc0] sm:$0xff] %v6566
        %6678 = vst [vmem:[#allocation3 + $0xc8] sm:$0xff] %v6605
        %6679 = vst [vmem:[#allocation3 + $0xd0] sm:$0xff] %v6644
        %6680 = vst [vmem:[#allocation3 + $0xd8] sm:$0xff] %v6568
        %6681 = vst [vmem:[#allocation3 + $0xe0] sm:$0xff] %v6607
        %6682 = vst [vmem:[#allocation3 + $0xe8] sm:$0xff] %v6646
        %6683 = vst [vmem:[#allocation3 + $0xf0] sm:$0xff] %v6571
        %6684 = vst [vmem:[#allocation3 + $0xf8] sm:$0xff] %v6610
        %6685 = vst [vmem:[#allocation3 + $0x100] sm:$0xff] %v6649
        %6686 = vst [vmem:[#allocation3 + $0x108] sm:$0xff] %v6573
        %6687 = vst [vmem:[#allocation3 + $0x110] sm:$0xff] %v6612
        %6688 = vst [vmem:[#allocation3 + $0x118] sm:$0xff] %v6651
        %v6689 = vld [vmem:[#allocation3] sm:$0xff]
        %v6690 = vld [vmem:[#allocation3 + $0x8] sm:$0xff]
        %v6691 = vld [vmem:[#allocation3 + $0x10] sm:$0xff]
        %v6692 = vld [vmem:[#allocation3 + $0x18] sm:$0xff]
        %v6693 = vld [vmem:[#allocation3 + $0x20] sm:$0xff]
        %v6694 = vld [vmem:[#allocation3 + $0x28] sm:$0xff]
        %v6695 = vld [vmem:[#allocation3 + $0x30] sm:$0xff]
        %v6696 = vld [vmem:[#allocation3 + $0x38] sm:$0xff]
        %v6697 = vld [vmem:[#allocation3 + $0x40] sm:$0xff]
        %v6698 = vld [vmem:[#allocation3 + $0x48] sm:$0xff]
        %v6699 = vld [vmem:[#allocation3 + $0x50] sm:$0xff]
        %v6700 = vld [vmem:[#allocation3 + $0x58] sm:$0xff]
        %6713 = vrot.lane.b32.xlu0 %v6689, 111
        %v6714 = vpop.permute.xlu0 %6713
        %6715 = vrot.lane.b32.xlu0 %v6690, 111
        %v6716 = vpop.permute.xlu0 %6715
        %6717 = vrot.lane.b32.xlu0 %v6691, 111
        %v6718 = vpop.permute.xlu0 %6717
        %6719 = vrot.lane.b32.xlu0 %v6692, 111
        %v6720 = vpop.permute.xlu0 %6719
        %6721 = vrot.lane.b32.xlu0 %v6693, 111
        %v6722 = vpop.permute.xlu0 %6721
        %6723 = vrot.lane.b32.xlu0 %v6694, 111
        %v6724 = vpop.permute.xlu0 %6723
        %6725 = vrot.lane.b32.xlu0 %v6695, 111
        %v6726 = vpop.permute.xlu0 %6725
        %6727 = vrot.lane.b32.xlu0 %v6696, 111
        %v6728 = vpop.permute.xlu0 %6727
        %6729 = vrot.lane.b32.xlu0 %v6697, 111
        %v6730 = vpop.permute.xlu0 %6729
        %6731 = vrot.lane.b32.xlu0 %v6698, 111
        %v6732 = vpop.permute.xlu0 %6731
        %6733 = vrot.lane.b32.xlu0 %v6699, 111
        %v6734 = vpop.permute.xlu0 %6733
        %6735 = vrot.lane.b32.xlu0 %v6700, 111
        %v6736 = vpop.permute.xlu0 %6735
        %v6737 = vsel %vm1490, %v6714, %v6716
        %v6738 = vsel %vm1490, %v6716, %v6718
        %v6739 = vsel %vm1490, %v6720, %v6722
        %v6740 = vsel %vm1490, %v6722, %v6724
        %v6741 = vsel %vm1490, %v6726, %v6728
        %v6742 = vsel %vm1490, %v6728, %v6730
        %v6743 = vsel %vm1490, %v6732, %v6734
        %v6744 = vsel %vm1490, %v6734, %v6736
        %v6761 = vsel %vm1490, %v6718, %v6714
        %v6762 = vsel %vm1490, %v6724, %v6720
        %v6763 = vsel %vm1490, %v6730, %v6726
        %v6764 = vsel %vm1490, %v6736, %v6732
        %v6765 = vadd.f32 %v6324, %v6737
        %v6766 = vadd.f32 %v6325, %v6738
        %v6767 = vadd.f32 %v6326, %v6761
        %v6768 = vadd.f32 %v6327, %v6739
        %v6769 = vadd.f32 %v6328, %v6740
        %v6770 = vadd.f32 %v6329, %v6762
        %v6771 = vadd.f32 %v6330, %v6741
        %v6772 = vadd.f32 %v6331, %v6742
        %v6773 = vadd.f32 %v6332, %v6763
        %v6774 = vadd.f32 %v6333, %v6743
        %v6775 = vadd.f32 %v6334, %v6744
        %v6776 = vadd.f32 %v6335, %v6764
        %v6777 = vld [vmem:[#allocation3 + $0x60] sm:$0xff]
        %v6778 = vld [vmem:[#allocation3 + $0x68] sm:$0xff]
        %v6779 = vld [vmem:[#allocation3 + $0x70] sm:$0xff]
        %v6780 = vld [vmem:[#allocation3 + $0x78] sm:$0xff]
        %v6781 = vld [vmem:[#allocation3 + $0x80] sm:$0xff]
        %v6782 = vld [vmem:[#allocation3 + $0x88] sm:$0xff]
        %v6783 = vld [vmem:[#allocation3 + $0x90] sm:$0xff]
        %v6784 = vld [vmem:[#allocation3 + $0x98] sm:$0xff]
        %v6785 = vld [vmem:[#allocation3 + $0xa0] sm:$0xff]
        %v6786 = vld [vmem:[#allocation3 + $0xa8] sm:$0xff]
        %v6787 = vld [vmem:[#allocation3 + $0xb0] sm:$0xff]
        %v6788 = vld [vmem:[#allocation3 + $0xb8] sm:$0xff]
        %6801 = vrot.lane.b32.xlu0 %v6777, 110
        %v6802 = vpop.permute.xlu0 %6801
        %6803 = vrot.lane.b32.xlu0 %v6778, 110
        %v6804 = vpop.permute.xlu0 %6803
        %6805 = vrot.lane.b32.xlu0 %v6779, 110
        %v6806 = vpop.permute.xlu0 %6805
        %6807 = vrot.lane.b32.xlu0 %v6780, 110
        %v6808 = vpop.permute.xlu0 %6807
        %6809 = vrot.lane.b32.xlu0 %v6781, 110
        %v6810 = vpop.permute.xlu0 %6809
        %6811 = vrot.lane.b32.xlu0 %v6782, 110
        %v6812 = vpop.permute.xlu0 %6811
        %6813 = vrot.lane.b32.xlu0 %v6783, 110
        %v6814 = vpop.permute.xlu0 %6813
        %6815 = vrot.lane.b32.xlu0 %v6784, 110
        %v6816 = vpop.permute.xlu0 %6815
        %6817 = vrot.lane.b32.xlu0 %v6785, 110
        %v6818 = vpop.permute.xlu0 %6817
        %6819 = vrot.lane.b32.xlu0 %v6786, 110
        %v6820 = vpop.permute.xlu0 %6819
        %6821 = vrot.lane.b32.xlu0 %v6787, 110
        %v6822 = vpop.permute.xlu0 %6821
        %6823 = vrot.lane.b32.xlu0 %v6788, 110
        %v6824 = vpop.permute.xlu0 %6823
        %v6825 = vsel %vm1579, %v6802, %v6804
        %v6826 = vsel %vm1579, %v6804, %v6806
        %v6827 = vsel %vm1579, %v6808, %v6810
        %v6828 = vsel %vm1579, %v6810, %v6812
        %v6829 = vsel %vm1579, %v6814, %v6816
        %v6830 = vsel %vm1579, %v6816, %v6818
        %v6831 = vsel %vm1579, %v6820, %v6822
        %v6832 = vsel %vm1579, %v6822, %v6824
        %v6849 = vsel %vm1579, %v6806, %v6802
        %v6850 = vsel %vm1579, %v6812, %v6808
        %v6851 = vsel %vm1579, %v6818, %v6814
        %v6852 = vsel %vm1579, %v6824, %v6820
        %v6853 = vadd.f32 %v6765, %v6825
        %v6854 = vadd.f32 %v6766, %v6826
        %v6855 = vadd.f32 %v6767, %v6849
        %v6856 = vadd.f32 %v6768, %v6827
        %v6857 = vadd.f32 %v6769, %v6828
        %v6858 = vadd.f32 %v6770, %v6850
        %v6859 = vadd.f32 %v6771, %v6829
        %v6860 = vadd.f32 %v6772, %v6830
        %v6861 = vadd.f32 %v6773, %v6851
        %v6862 = vadd.f32 %v6774, %v6831
        %v6863 = vadd.f32 %v6775, %v6832
        %v6864 = vadd.f32 %v6776, %v6852
        %v6865 = vld [vmem:[#allocation3 + $0xc0] sm:$0xff]
        %v6866 = vld [vmem:[#allocation3 + $0xc8] sm:$0xff]
        %v6867 = vld [vmem:[#allocation3 + $0xd0] sm:$0xff]
        %v6868 = vld [vmem:[#allocation3 + $0xd8] sm:$0xff]
        %v6869 = vld [vmem:[#allocation3 + $0xe0] sm:$0xff]
        %v6870 = vld [vmem:[#allocation3 + $0xe8] sm:$0xff]
        %v6871 = vld [vmem:[#allocation3 + $0xf0] sm:$0xff]
        %v6872 = vld [vmem:[#allocation3 + $0xf8] sm:$0xff]
        %v6873 = vld [vmem:[#allocation3 + $0x100] sm:$0xff]
        %v6874 = vld [vmem:[#allocation3 + $0x108] sm:$0xff]
        %v6875 = vld [vmem:[#allocation3 + $0x110] sm:$0xff]
        %v6876 = vld [vmem:[#allocation3 + $0x118] sm:$0xff]
        %6889 = vrot.lane.b32.xlu0 %v6865, 109
        %v6890 = vpop.permute.xlu0 %6889
        %6891 = vrot.lane.b32.xlu0 %v6866, 109
        %v6892 = vpop.permute.xlu0 %6891
        %6893 = vrot.lane.b32.xlu0 %v6867, 109
        %v6894 = vpop.permute.xlu0 %6893
        %6895 = vrot.lane.b32.xlu0 %v6868, 109
        %v6896 = vpop.permute.xlu0 %6895
        %6897 = vrot.lane.b32.xlu0 %v6869, 109
        %v6898 = vpop.permute.xlu0 %6897
        %6899 = vrot.lane.b32.xlu0 %v6870, 109
        %v6900 = vpop.permute.xlu0 %6899
        %6901 = vrot.lane.b32.xlu0 %v6871, 109
        %v6902 = vpop.permute.xlu0 %6901
        %6903 = vrot.lane.b32.xlu0 %v6872, 109
        %v6904 = vpop.permute.xlu0 %6903
        %6905 = vrot.lane.b32.xlu0 %v6873, 109
        %v6906 = vpop.permute.xlu0 %6905
        %6907 = vrot.lane.b32.xlu0 %v6874, 109
        %v6908 = vpop.permute.xlu0 %6907
        %6909 = vrot.lane.b32.xlu0 %v6875, 109
        %v6910 = vpop.permute.xlu0 %6909
        %6911 = vrot.lane.b32.xlu0 %v6876, 109
        %v6912 = vpop.permute.xlu0 %6911
        %v6913 = vsel %vm1668, %v6890, %v6892
        %v6914 = vsel %vm1668, %v6892, %v6894
        %v6915 = vsel %vm1668, %v6896, %v6898
        %v6916 = vsel %vm1668, %v6898, %v6900
        %v6917 = vsel %vm1668, %v6902, %v6904
        %v6918 = vsel %vm1668, %v6904, %v6906
        %v6919 = vsel %vm1668, %v6908, %v6910
        %v6920 = vsel %vm1668, %v6910, %v6912
        %v6937 = vsel %vm1668, %v6894, %v6890
        %v6938 = vsel %vm1668, %v6900, %v6896
        %v6939 = vsel %vm1668, %v6906, %v6902
        %v6940 = vsel %vm1668, %v6912, %v6908
        %v6941 = vadd.f32 %v6853, %v6913
        %v6942 = vadd.f32 %v6854, %v6914
        %v6943 = vadd.f32 %v6855, %v6937
        %v6944 = vadd.f32 %v6856, %v6915
        %v6945 = vadd.f32 %v6857, %v6916
        %v6946 = vadd.f32 %v6858, %v6938
        %v6947 = vadd.f32 %v6859, %v6917
        %v6948 = vadd.f32 %v6860, %v6918
        %v6949 = vadd.f32 %v6861, %v6939
        %v6950 = vadd.f32 %v6862, %v6919
        %v6951 = vadd.f32 %v6863, %v6920
        %v6952 = vadd.f32 %v6864, %v6940
        %s6953 = scalar_lea.vmem %s3, 96
        %v6954 = vld [vmem:[%s6953] sm:$0xff]
        %v6955 = vld [vmem:[%s6953 + $0x8] sm:$0xff]
        %v6956 = vld [vmem:[%s6953 + $0x10] sm:$0xff]
        %v6957 = vld [vmem:[%s6953 + $0x18] sm:$0xff]
        %6959 = vset.pattern.permute.xlu0 0
        %6960 = vperm.xlu0 %6959, %v6954
        %v6961 = vpop.permute.xlu0 %6960
        %6964 = vset.pattern.permute.xlu0 0
        %6965 = vperm.xlu0 %6964, %v6955
        %v6966 = vpop.permute.xlu0 %6965
        %6969 = vset.pattern.permute.xlu0 0
        %6970 = vperm.xlu0 %6969, %v6956
        %v6971 = vpop.permute.xlu0 %6970
        %6974 = vset.pattern.permute.xlu0 0
        %6975 = vperm.xlu0 %6974, %v6957
        %v6976 = vpop.permute.xlu0 %6975
        %v6978 = vadd.f32 %v6941, %v6961
        %v6979 = vadd.f32 %v6942, %v6961
        %v6980 = vadd.f32 %v6943, %v6961
        %v6981 = vadd.f32 %v6944, %v6966
        %v6982 = vadd.f32 %v6945, %v6966
        %v6983 = vadd.f32 %v6946, %v6966
        %v6984 = vadd.f32 %v6947, %v6971
        %v6985 = vadd.f32 %v6948, %v6971
        %v6986 = vadd.f32 %v6949, %v6971
        %v6987 = vadd.f32 %v6950, %v6976
        %v6988 = vadd.f32 %v6951, %v6976
        %v6989 = vadd.f32 %v6952, %v6976
        %v6990 = vmax.f32 %v6978, 0.0
        %v6991 = vmax.f32 %v6979, 0.0
        %v6992 = vmax.f32 %v6980, 0.0
        %v6993 = vmax.f32 %v6981, 0.0
        %v6994 = vmax.f32 %v6982, 0.0
        %v6995 = vmax.f32 %v6983, 0.0
        %v6996 = vmax.f32 %v6984, 0.0
        %v6997 = vmax.f32 %v6985, 0.0
        %v6998 = vmax.f32 %v6986, 0.0
        %v6999 = vmax.f32 %v6987, 0.0
        %v7000 = vmax.f32 %v6988, 0.0
        %v7001 = vmax.f32 %v6989, 0.0
        %v7002 = vmul.f32 %v6990, %v1758
        %v7003 = vmul.f32 %v6991, %v1759
        %v7004 = vmul.f32 %v6992, %v1760
        %v7005 = vmul.f32 %v6993, %v1758
        %v7006 = vmul.f32 %v6994, %v1759
        %v7007 = vmul.f32 %v6995, %v1760
        %v7008 = vmul.f32 %v6996, %v1758
        %v7009 = vmul.f32 %v6997, %v1759
        %v7010 = vmul.f32 %v6998, %v1760
        %v7011 = vmul.f32 %v6999, %v1758
        %v7012 = vmul.f32 %v7000, %v1759
        %v7013 = vmul.f32 %v7001, %v1760
        %v7014 = vpack.c.bf16 %v7003, %v7002
        %v7015 = vpack.c.bf16 %v7004, %v7004
        %v7016 = vpack.c.bf16 %v7006, %v7005
        %v7017 = vpack.c.bf16 %v7007, %v7007
        %v7018 = vpack.c.bf16 %v7009, %v7008
        %v7019 = vpack.c.bf16 %v7010, %v7010
        %v7020 = vpack.c.bf16 %v7012, %v7011
        %v7021 = vpack.c.bf16 %v7013, %v7013
        %7022 = vst [vmem:[#allocation2 + $0xa8] sm:$0xff] %v7014
        %7023 = vst [vmem:[#allocation2 + $0xb0] sm:$0xf] %v7015
        %7024 = vst [vmem:[#allocation2 + $0xb4] sm:$0xff] %v7016
        %7025 = vst [vmem:[#allocation2 + $0xbc] sm:$0xf] %v7017
        %7026 = vst [vmem:[#allocation2 + $0xc0] sm:$0xff] %v7018
        %7027 = vst [vmem:[#allocation2 + $0xc8] sm:$0xf] %v7019
        %7028 = vst [vmem:[#allocation2 + $0xcc] sm:$0xff] %v7020
        %7029 = vst [vmem:[#allocation2 + $0xd4] sm:$0xf] %v7021
        %s7030 = scalar_lea.vmem %s2, 1152
        %v7031 = vld [vmem:[%s7030] sm:$0xff]
        %v7032 = vld [vmem:[%s7030 + $0x8] sm:$0xff]
        %v7033 = vld [vmem:[%s7030 + $0x10] sm:$0xff]
        %v7034 = vld [vmem:[%s7030 + $0x18] sm:$0xff]
        %v7035 = vld [vmem:[%s7030 + $0x20] sm:$0xff]
        %v7036 = vld [vmem:[%s7030 + $0x28] sm:$0xff]
        %v7037 = vld [vmem:[%s7030 + $0x30] sm:$0xff]
        %v7038 = vld [vmem:[%s7030 + $0x38] sm:$0xff]
        %v7039 = vld [vmem:[%s7030 + $0x40] sm:$0xff]
        %v7040 = vld [vmem:[%s7030 + $0x48] sm:$0xff]
        %v7041 = vld [vmem:[%s7030 + $0x50] sm:$0xff]
        %v7042 = vld [vmem:[%s7030 + $0x58] sm:$0xff]
        %v7043 = vld [vmem:[#allocation2] sm:$0xff]
        %v7044 = vld [vmem:[#allocation2 + $0x8] sm:$0xf]
        %v7045 = vld [vmem:[#allocation2 + $0xc] sm:$0xff]
        %v7046 = vld [vmem:[#allocation2 + $0x14] sm:$0xf]
        %v7047 = vld [vmem:[#allocation2 + $0x18] sm:$0xff]
        %v7048 = vld [vmem:[#allocation2 + $0x20] sm:$0xf]
        %v7049 = vld [vmem:[#allocation2 + $0x24] sm:$0xff]
        %v7050 = vld [vmem:[#allocation2 + $0x2c] sm:$0xf]
        %v7051 = vld [vmem:[#allocation2 + $0x30] sm:$0xff]
        %v7052 = vld [vmem:[#allocation2 + $0x38] sm:$0xf]
        %v7053 = vld [vmem:[#allocation2 + $0x3c] sm:$0xff]
        %v7054 = vld [vmem:[#allocation2 + $0x44] sm:$0xf]
        %v7055 = vld [vmem:[#allocation2 + $0x48] sm:$0xff]
        %v7056 = vld [vmem:[#allocation2 + $0x50] sm:$0xf]
        %v7057 = vld [vmem:[#allocation2 + $0x54] sm:$0xff]
        %v7058 = vld [vmem:[#allocation2 + $0x5c] sm:$0xf]
        %v7059 = vld [vmem:[#allocation2 + $0x60] sm:$0xff]
        %v7060 = vld [vmem:[#allocation2 + $0x68] sm:$0xf]
        %v7061 = vld [vmem:[#allocation2 + $0x6c] sm:$0xff]
        %v7062 = vld [vmem:[#allocation2 + $0x74] sm:$0xf]
        %v7063 = vld [vmem:[#allocation2 + $0x78] sm:$0xff]
        %v7064 = vld [vmem:[#allocation2 + $0x80] sm:$0xf]
        %v7065 = vld [vmem:[#allocation2 + $0x84] sm:$0xff]
        %v7066 = vld [vmem:[#allocation2 + $0x8c] sm:$0xf]
        %v7067 = vld [vmem:[#allocation2 + $0x90] sm:$0xff]
        %v7068 = vld [vmem:[#allocation2 + $0x98] sm:$0xf]
        %v7069 = vld [vmem:[#allocation2 + $0x9c] sm:$0xff]
        %v7070 = vld [vmem:[#allocation2 + $0xa4] sm:$0xf]
        %v7071 = vld [vmem:[#allocation2 + $0xa8] sm:$0xff]
        %v7072 = vld [vmem:[#allocation2 + $0xb0] sm:$0xf]
        %v7073 = vld [vmem:[#allocation2 + $0xb4] sm:$0xff]
        %v7074 = vld [vmem:[#allocation2 + $0xbc] sm:$0xf]
        %v7075 = vld [vmem:[#allocation2 + $0xc0] sm:$0xff]
        %v7076 = vld [vmem:[#allocation2 + $0xc8] sm:$0xf]
        %v7077 = vld [vmem:[#allocation2 + $0xcc] sm:$0xff]
        %v7078 = vld [vmem:[#allocation2 + $0xd4] sm:$0xf]
        %v7091 = vunpack.c.l.b16 %v7031
        %v7092 = vunpack.c.h.b16 %v7031
        %v7093 = vunpack.c.l.b16 %v7032
        %v7094 = vunpack.c.h.b16 %v7032
        %v7095 = vunpack.c.l.b16 %v7033
        %v7096 = vunpack.c.h.b16 %v7033
        %v7097 = vunpack.c.l.b16 %v7034
        %v7098 = vunpack.c.h.b16 %v7034
        %v7099 = vunpack.c.l.b16 %v7035
        %v7100 = vunpack.c.h.b16 %v7035
        %v7101 = vunpack.c.l.b16 %v7036
        %v7102 = vunpack.c.h.b16 %v7036
        %v7103 = vunpack.c.l.b16 %v7037
        %v7104 = vunpack.c.h.b16 %v7037
        %v7105 = vunpack.c.l.b16 %v7038
        %v7106 = vunpack.c.h.b16 %v7038
        %v7107 = vunpack.c.l.b16 %v7039
        %v7108 = vunpack.c.h.b16 %v7039
        %v7109 = vunpack.c.l.b16 %v7040
        %v7110 = vunpack.c.h.b16 %v7040
        %v7111 = vunpack.c.l.b16 %v7041
        %v7112 = vunpack.c.h.b16 %v7041
        %v7113 = vunpack.c.l.b16 %v7042
        %v7114 = vunpack.c.h.b16 %v7042
        %v7115 = vpack.c.b16 %v7093, %v7091
        %v7116 = vpack.c.b16 %v7094, %v7092
        %v7117 = vpack.c.b16 %v7097, %v7095
        %v7118 = vpack.c.b16 %v7098, %v7096
        %v7119 = vpack.c.b16 %v7101, %v7099
        %v7120 = vpack.c.b16 %v7102, %v7100
        %v7121 = vpack.c.b16 %v7105, %v7103
        %v7122 = vpack.c.b16 %v7106, %v7104
        %v7123 = vpack.c.b16 %v7109, %v7107
        %v7124 = vpack.c.b16 %v7110, %v7108
        %v7125 = vpack.c.b16 %v7113, %v7111
        %v7126 = vpack.c.b16 %v7114, %v7112
        %v7169 = vunpack.c.l.b16 %v7043
        %v7170 = vunpack.c.h.b16 %v7043
        %v7171 = vunpack.c.l.b16 %v7044
        %v7172 = vunpack.c.l.b16 %v7045
        %v7173 = vunpack.c.h.b16 %v7045
        %v7174 = vunpack.c.l.b16 %v7046
        %v7175 = vunpack.c.l.b16 %v7047
        %v7176 = vunpack.c.h.b16 %v7047
        %v7177 = vunpack.c.l.b16 %v7048
        %v7178 = vunpack.c.l.b16 %v7049
        %v7179 = vunpack.c.h.b16 %v7049
        %v7180 = vunpack.c.l.b16 %v7050
        %v7181 = vunpack.c.l.b16 %v7051
        %v7182 = vunpack.c.h.b16 %v7051
        %v7183 = vunpack.c.l.b16 %v7052
        %v7184 = vunpack.c.l.b16 %v7053
        %v7185 = vunpack.c.h.b16 %v7053
        %v7186 = vunpack.c.l.b16 %v7054
        %v7187 = vunpack.c.l.b16 %v7055
        %v7188 = vunpack.c.h.b16 %v7055
        %v7189 = vunpack.c.l.b16 %v7056
        %v7190 = vunpack.c.l.b16 %v7057
        %v7191 = vunpack.c.h.b16 %v7057
        %v7192 = vunpack.c.l.b16 %v7058
        %v7193 = vunpack.c.l.b16 %v7059
        %v7194 = vunpack.c.h.b16 %v7059
        %v7195 = vunpack.c.l.b16 %v7060
        %v7196 = vunpack.c.l.b16 %v7061
        %v7197 = vunpack.c.h.b16 %v7061
        %v7198 = vunpack.c.l.b16 %v7062
        %v7199 = vunpack.c.l.b16 %v7063
        %v7200 = vunpack.c.h.b16 %v7063
        %v7201 = vunpack.c.l.b16 %v7064
        %v7202 = vunpack.c.l.b16 %v7065
        %v7203 = vunpack.c.h.b16 %v7065
        %v7204 = vunpack.c.l.b16 %v7066
        %v7205 = vunpack.c.l.b16 %v7067
        %v7206 = vunpack.c.h.b16 %v7067
        %v7207 = vunpack.c.l.b16 %v7068
        %v7208 = vunpack.c.l.b16 %v7069
        %v7209 = vunpack.c.h.b16 %v7069
        %v7210 = vunpack.c.l.b16 %v7070
        %v7211 = vunpack.c.l.b16 %v7071
        %v7212 = vunpack.c.h.b16 %v7071
        %v7213 = vunpack.c.l.b16 %v7072
        %v7214 = vunpack.c.l.b16 %v7073
        %v7215 = vunpack.c.h.b16 %v7073
        %v7216 = vunpack.c.l.b16 %v7074
        %v7217 = vunpack.c.l.b16 %v7075
        %v7218 = vunpack.c.h.b16 %v7075
        %v7219 = vunpack.c.l.b16 %v7076
        %v7220 = vunpack.c.l.b16 %v7077
        %v7221 = vunpack.c.h.b16 %v7077
        %v7222 = vunpack.c.l.b16 %v7078
        %v7223 = vpack.c.b16 %v7172, %v7169
        %v7224 = vpack.c.b16 %v7173, %v7170
        %v7225 = vpack.c.b16 %v7174, %v7171
        %v7226 = vpack.c.b16 %v7178, %v7175
        %v7227 = vpack.c.b16 %v7179, %v7176
        %v7228 = vpack.c.b16 %v7180, %v7177
        %v7229 = vpack.c.b16 %v7184, %v7181
        %v7230 = vpack.c.b16 %v7185, %v7182
        %v7231 = vpack.c.b16 %v7186, %v7183
        %v7232 = vpack.c.b16 %v7190, %v7187
        %v7233 = vpack.c.b16 %v7191, %v7188
        %v7234 = vpack.c.b16 %v7192, %v7189
        %v7235 = vpack.c.b16 %v7196, %v7193
        %v7236 = vpack.c.b16 %v7197, %v7194
        %v7237 = vpack.c.b16 %v7198, %v7195
        %v7238 = vpack.c.b16 %v7202, %v7199
        %v7239 = vpack.c.b16 %v7203, %v7200
        %v7240 = vpack.c.b16 %v7204, %v7201
        %v7241 = vpack.c.b16 %v7208, %v7205
        %v7242 = vpack.c.b16 %v7209, %v7206
        %v7243 = vpack.c.b16 %v7210, %v7207
        %v7244 = vpack.c.b16 %v7214, %v7211
        %v7245 = vpack.c.b16 %v7215, %v7212
        %v7246 = vpack.c.b16 %v7216, %v7213
        %v7247 = vpack.c.b16 %v7220, %v7217
        %v7248 = vpack.c.b16 %v7221, %v7218
        %v7249 = vpack.c.b16 %v7222, %v7219
        %v7278 = vsel %vm335, %v7116, 0
        %v7281 = vsel %vm335, %v7118, 0
        %v7284 = vsel %vm335, %v7120, 0
        %v7287 = vsel %vm335, %v7122, 0
        %v7290 = vsel %vm335, %v7124, 0
        %v7293 = vsel %vm335, %v7126, 0
        %7295 = vmatpush.bf16.msra.mxu0 %v7244
        %7296 = vmatpush.bf16.msra.mxu0 %v7241
        %7297 = vmatpush.bf16.msra.mxu0 %v7238
        %7298 = vmatpush.bf16.msra.mxu0 %v7235
        %7299 = vmatpush.bf16.msra.mxu0 %v7232
        %7300 = vmatpush.bf16.msra.mxu0 %v7229
        %7301 = vmatpush.bf16.msra.mxu0 %v7226
        %7302 = vmatpush.bf16.msra.mxu0 %v7223
        %7303 = vmatmul.bf16.gmra.mxu0 %v7115
        %v7304 = vpop.f32.mrf.mxu0
        %v7305 = vadd.f32 0.0, %v7304
        %v7306 = vpop.f32.mrf.mxu0
        %v7307 = vadd.f32 0.0, %v7306
        %7308 = vmatmul.bf16.gmra.mxu0 %v7117
        %v7309 = vpop.f32.mrf.mxu0
        %v7310 = vadd.f32 0.0, %v7309
        %v7311 = vpop.f32.mrf.mxu0
        %v7312 = vadd.f32 0.0, %v7311
        %7313 = vmatmul.bf16.gmra.mxu0 %v7119
        %v7314 = vpop.f32.mrf.mxu0
        %v7315 = vadd.f32 0.0, %v7314
        %v7316 = vpop.f32.mrf.mxu0
        %v7317 = vadd.f32 0.0, %v7316
        %7318 = vmatmul.bf16.gmra.mxu0 %v7121
        %v7319 = vpop.f32.mrf.mxu0
        %v7320 = vadd.f32 0.0, %v7319
        %v7321 = vpop.f32.mrf.mxu0
        %v7322 = vadd.f32 0.0, %v7321
        %7323 = vmatmul.bf16.gmra.mxu0 %v7123
        %v7324 = vpop.f32.mrf.mxu0
        %v7325 = vadd.f32 0.0, %v7324
        %v7326 = vpop.f32.mrf.mxu0
        %v7327 = vadd.f32 0.0, %v7326
        %7328 = vmatmul.bf16.gmra.mxu0 %v7125
        %v7329 = vpop.f32.mrf.mxu0
        %v7330 = vadd.f32 0.0, %v7329
        %v7331 = vpop.f32.mrf.mxu0
        %v7332 = vadd.f32 0.0, %v7331
        %7333 = vdwg.mxu0
        %7334 = vmatpush.bf16.msra.mxu0 0
        %7335 = vmatpush.bf16.msra.mxu0 0
        %7336 = vmatpush.bf16.msra.mxu0 0
        %7337 = vmatpush.bf16.msra.mxu0 0
        %7338 = vmatpush.bf16.msra.mxu0 0
        %7339 = vmatpush.bf16.msra.mxu0 0
        %7340 = vmatpush.bf16.msra.mxu0 0
        %7341 = vmatpush.bf16.msra.mxu0 %v7247
        %7342 = vmatmul.bf16.gmra.mxu0 %v7278
        %v7343 = vpop.f32.mrf.mxu0
        %v7344 = vadd.f32 %v7305, %v7343
        %v7345 = vpop.f32.mrf.mxu0
        %v7346 = vadd.f32 %v7307, %v7345
        %7347 = vmatmul.bf16.gmra.mxu0 %v7281
        %v7348 = vpop.f32.mrf.mxu0
        %v7349 = vadd.f32 %v7310, %v7348
        %v7350 = vpop.f32.mrf.mxu0
        %v7351 = vadd.f32 %v7312, %v7350
        %7352 = vmatmul.bf16.gmra.mxu0 %v7284
        %v7353 = vpop.f32.mrf.mxu0
        %v7354 = vadd.f32 %v7315, %v7353
        %v7355 = vpop.f32.mrf.mxu0
        %v7356 = vadd.f32 %v7317, %v7355
        %7357 = vmatmul.bf16.gmra.mxu0 %v7287
        %v7358 = vpop.f32.mrf.mxu0
        %v7359 = vadd.f32 %v7320, %v7358
        %v7360 = vpop.f32.mrf.mxu0
        %v7361 = vadd.f32 %v7322, %v7360
        %7362 = vmatmul.bf16.gmra.mxu0 %v7290
        %v7363 = vpop.f32.mrf.mxu0
        %v7364 = vadd.f32 %v7325, %v7363
        %v7365 = vpop.f32.mrf.mxu0
        %v7366 = vadd.f32 %v7327, %v7365
        %7367 = vmatmul.bf16.gmra.mxu0 %v7293
        %v7368 = vpop.f32.mrf.mxu0
        %v7369 = vadd.f32 %v7330, %v7368
        %v7370 = vpop.f32.mrf.mxu0
        %v7371 = vadd.f32 %v7332, %v7370
        %7372 = vdwg.mxu0
        %7373 = vmatpush.bf16.msra.mxu0 %v7245
        %7374 = vmatpush.bf16.msra.mxu0 %v7242
        %7375 = vmatpush.bf16.msra.mxu0 %v7239
        %7376 = vmatpush.bf16.msra.mxu0 %v7236
        %7377 = vmatpush.bf16.msra.mxu0 %v7233
        %7378 = vmatpush.bf16.msra.mxu0 %v7230
        %7379 = vmatpush.bf16.msra.mxu0 %v7227
        %7380 = vmatpush.bf16.msra.mxu0 %v7224
        %7381 = vmatmul.bf16.gmra.mxu0 %v7115
        %v7382 = vpop.f32.mrf.mxu0
        %v7383 = vadd.f32 0.0, %v7382
        %v7384 = vpop.f32.mrf.mxu0
        %v7385 = vadd.f32 0.0, %v7384
        %7386 = vmatmul.bf16.gmra.mxu0 %v7117
        %v7387 = vpop.f32.mrf.mxu0
        %v7388 = vadd.f32 0.0, %v7387
        %v7389 = vpop.f32.mrf.mxu0
        %v7390 = vadd.f32 0.0, %v7389
        %7391 = vmatmul.bf16.gmra.mxu0 %v7119
        %v7392 = vpop.f32.mrf.mxu0
        %v7393 = vadd.f32 0.0, %v7392
        %v7394 = vpop.f32.mrf.mxu0
        %v7395 = vadd.f32 0.0, %v7394
        %7396 = vmatmul.bf16.gmra.mxu0 %v7121
        %v7397 = vpop.f32.mrf.mxu0
        %v7398 = vadd.f32 0.0, %v7397
        %v7399 = vpop.f32.mrf.mxu0
        %v7400 = vadd.f32 0.0, %v7399
        %7401 = vmatmul.bf16.gmra.mxu0 %v7123
        %v7402 = vpop.f32.mrf.mxu0
        %v7403 = vadd.f32 0.0, %v7402
        %v7404 = vpop.f32.mrf.mxu0
        %v7405 = vadd.f32 0.0, %v7404
        %7406 = vmatmul.bf16.gmra.mxu0 %v7125
        %v7407 = vpop.f32.mrf.mxu0
        %v7408 = vadd.f32 0.0, %v7407
        %v7409 = vpop.f32.mrf.mxu0
        %v7410 = vadd.f32 0.0, %v7409
        %7411 = vdwg.mxu0
        %7412 = vmatpush.bf16.msra.mxu0 0
        %7413 = vmatpush.bf16.msra.mxu0 0
        %7414 = vmatpush.bf16.msra.mxu0 0
        %7415 = vmatpush.bf16.msra.mxu0 0
        %7416 = vmatpush.bf16.msra.mxu0 0
        %7417 = vmatpush.bf16.msra.mxu0 0
        %7418 = vmatpush.bf16.msra.mxu0 0
        %7419 = vmatpush.bf16.msra.mxu0 %v7248
        %7420 = vmatmul.bf16.gmra.mxu0 %v7278
        %v7421 = vpop.f32.mrf.mxu0
        %v7422 = vadd.f32 %v7383, %v7421
        %v7423 = vpop.f32.mrf.mxu0
        %v7424 = vadd.f32 %v7385, %v7423
        %7425 = vmatmul.bf16.gmra.mxu0 %v7281
        %v7426 = vpop.f32.mrf.mxu0
        %v7427 = vadd.f32 %v7388, %v7426
        %v7428 = vpop.f32.mrf.mxu0
        %v7429 = vadd.f32 %v7390, %v7428
        %7430 = vmatmul.bf16.gmra.mxu0 %v7284
        %v7431 = vpop.f32.mrf.mxu0
        %v7432 = vadd.f32 %v7393, %v7431
        %v7433 = vpop.f32.mrf.mxu0
        %v7434 = vadd.f32 %v7395, %v7433
        %7435 = vmatmul.bf16.gmra.mxu0 %v7287
        %v7436 = vpop.f32.mrf.mxu0
        %v7437 = vadd.f32 %v7398, %v7436
        %v7438 = vpop.f32.mrf.mxu0
        %v7439 = vadd.f32 %v7400, %v7438
        %7440 = vmatmul.bf16.gmra.mxu0 %v7290
        %v7441 = vpop.f32.mrf.mxu0
        %v7442 = vadd.f32 %v7403, %v7441
        %v7443 = vpop.f32.mrf.mxu0
        %v7444 = vadd.f32 %v7405, %v7443
        %7445 = vmatmul.bf16.gmra.mxu0 %v7293
        %v7446 = vpop.f32.mrf.mxu0
        %v7447 = vadd.f32 %v7408, %v7446
        %v7448 = vpop.f32.mrf.mxu0
        %v7449 = vadd.f32 %v7410, %v7448
        %7450 = vdwg.mxu0
        %7451 = vmatpush.bf16.msra.mxu0 %v7246
        %7452 = vmatpush.bf16.msra.mxu0 %v7243
        %7453 = vmatpush.bf16.msra.mxu0 %v7240
        %7454 = vmatpush.bf16.msra.mxu0 %v7237
        %7455 = vmatpush.bf16.msra.mxu0 %v7234
        %7456 = vmatpush.bf16.msra.mxu0 %v7231
        %7457 = vmatpush.bf16.msra.mxu0 %v7228
        %7458 = vmatpush.bf16.msra.mxu0 %v7225
        %7459 = vmatmul.bf16.gmra.mxu0 %v7115
        %v7460 = vpop.f32.mrf.mxu0
        %v7461 = vadd.f32 0.0, %v7460
        %v7462 = vpop.f32.mrf.mxu0
        %v7463 = vadd.f32 0.0, %v7462
        %7464 = vmatmul.bf16.gmra.mxu0 %v7117
        %v7465 = vpop.f32.mrf.mxu0
        %v7466 = vadd.f32 0.0, %v7465
        %v7467 = vpop.f32.mrf.mxu0
        %v7468 = vadd.f32 0.0, %v7467
        %7469 = vmatmul.bf16.gmra.mxu0 %v7119
        %v7470 = vpop.f32.mrf.mxu0
        %v7471 = vadd.f32 0.0, %v7470
        %v7472 = vpop.f32.mrf.mxu0
        %v7473 = vadd.f32 0.0, %v7472
        %7474 = vmatmul.bf16.gmra.mxu0 %v7121
        %v7475 = vpop.f32.mrf.mxu0
        %v7476 = vadd.f32 0.0, %v7475
        %v7477 = vpop.f32.mrf.mxu0
        %v7478 = vadd.f32 0.0, %v7477
        %7479 = vmatmul.bf16.gmra.mxu0 %v7123
        %v7480 = vpop.f32.mrf.mxu0
        %v7481 = vadd.f32 0.0, %v7480
        %v7482 = vpop.f32.mrf.mxu0
        %v7483 = vadd.f32 0.0, %v7482
        %7484 = vmatmul.bf16.gmra.mxu0 %v7125
        %v7485 = vpop.f32.mrf.mxu0
        %v7486 = vadd.f32 0.0, %v7485
        %v7487 = vpop.f32.mrf.mxu0
        %v7488 = vadd.f32 0.0, %v7487
        %7489 = vdwg.mxu0
        %7490 = vmatpush.bf16.msra.mxu0 0
        %7491 = vmatpush.bf16.msra.mxu0 0
        %7492 = vmatpush.bf16.msra.mxu0 0
        %7493 = vmatpush.bf16.msra.mxu0 0
        %7494 = vmatpush.bf16.msra.mxu0 0
        %7495 = vmatpush.bf16.msra.mxu0 0
        %7496 = vmatpush.bf16.msra.mxu0 0
        %7497 = vmatpush.bf16.msra.mxu0 %v7249
        %7498 = vmatmul.bf16.gmra.mxu0 %v7278
        %v7499 = vpop.f32.mrf.mxu0
        %v7500 = vadd.f32 %v7461, %v7499
        %v7501 = vpop.f32.mrf.mxu0
        %v7502 = vadd.f32 %v7463, %v7501
        %7503 = vmatmul.bf16.gmra.mxu0 %v7281
        %v7504 = vpop.f32.mrf.mxu0
        %v7505 = vadd.f32 %v7466, %v7504
        %v7506 = vpop.f32.mrf.mxu0
        %v7507 = vadd.f32 %v7468, %v7506
        %7508 = vmatmul.bf16.gmra.mxu0 %v7284
        %v7509 = vpop.f32.mrf.mxu0
        %v7510 = vadd.f32 %v7471, %v7509
        %v7511 = vpop.f32.mrf.mxu0
        %v7512 = vadd.f32 %v7473, %v7511
        %7513 = vmatmul.bf16.gmra.mxu0 %v7287
        %v7514 = vpop.f32.mrf.mxu0
        %v7515 = vadd.f32 %v7476, %v7514
        %v7516 = vpop.f32.mrf.mxu0
        %v7517 = vadd.f32 %v7478, %v7516
        %7518 = vmatmul.bf16.gmra.mxu0 %v7290
        %v7519 = vpop.f32.mrf.mxu0
        %v7520 = vadd.f32 %v7481, %v7519
        %v7521 = vpop.f32.mrf.mxu0
        %v7522 = vadd.f32 %v7483, %v7521
        %7523 = vmatmul.bf16.gmra.mxu0 %v7293
        %v7524 = vpop.f32.mrf.mxu0
        %v7525 = vadd.f32 %v7486, %v7524
        %v7526 = vpop.f32.mrf.mxu0
        %v7527 = vadd.f32 %v7488, %v7526
        %7528 = vdwg.mxu0
        %7529 = vst [vmem:[#allocation3] sm:$0xff] %v7344
        %7530 = vst [vmem:[#allocation3 + $0x8] sm:$0xff] %v7422
        %7531 = vst [vmem:[#allocation3 + $0x10] sm:$0xff] %v7500
        %7532 = vst [vmem:[#allocation3 + $0x18] sm:$0xff] %v7346
        %7533 = vst [vmem:[#allocation3 + $0x20] sm:$0xff] %v7424
        %7534 = vst [vmem:[#allocation3 + $0x28] sm:$0xff] %v7502
        %7535 = vst [vmem:[#allocation3 + $0x30] sm:$0xff] %v7349
        %7536 = vst [vmem:[#allocation3 + $0x38] sm:$0xff] %v7427
        %7537 = vst [vmem:[#allocation3 + $0x40] sm:$0xff] %v7505
        %7538 = vst [vmem:[#allocation3 + $0x48] sm:$0xff] %v7351
        %7539 = vst [vmem:[#allocation3 + $0x50] sm:$0xff] %v7429
        %7540 = vst [vmem:[#allocation3 + $0x58] sm:$0xff] %v7507
        %7541 = vst [vmem:[#allocation3 + $0x60] sm:$0xff] %v7354
        %7542 = vst [vmem:[#allocation3 + $0x68] sm:$0xff] %v7432
        %7543 = vst [vmem:[#allocation3 + $0x70] sm:$0xff] %v7510
        %7544 = vst [vmem:[#allocation3 + $0x78] sm:$0xff] %v7356
        %7545 = vst [vmem:[#allocation3 + $0x80] sm:$0xff] %v7434
        %7546 = vst [vmem:[#allocation3 + $0x88] sm:$0xff] %v7512
        %7547 = vst [vmem:[#allocation3 + $0x90] sm:$0xff] %v7359
        %7548 = vst [vmem:[#allocation3 + $0x98] sm:$0xff] %v7437
        %7549 = vst [vmem:[#allocation3 + $0xa0] sm:$0xff] %v7515
        %7550 = vst [vmem:[#allocation3 + $0xa8] sm:$0xff] %v7361
        %7551 = vst [vmem:[#allocation3 + $0xb0] sm:$0xff] %v7439
        %7552 = vst [vmem:[#allocation3 + $0xb8] sm:$0xff] %v7517
        %7553 = vst [vmem:[#allocation3 + $0xc0] sm:$0xff] %v7364
        %7554 = vst [vmem:[#allocation3 + $0xc8] sm:$0xff] %v7442
        %7555 = vst [vmem:[#allocation3 + $0xd0] sm:$0xff] %v7520
        %7556 = vst [vmem:[#allocation3 + $0xd8] sm:$0xff] %v7366
        %7557 = vst [vmem:[#allocation3 + $0xe0] sm:$0xff] %v7444
        %7558 = vst [vmem:[#allocation3 + $0xe8] sm:$0xff] %v7522
        %7559 = vst [vmem:[#allocation3 + $0xf0] sm:$0xff] %v7369
        %7560 = vst [vmem:[#allocation3 + $0xf8] sm:$0xff] %v7447
        %7561 = vst [vmem:[#allocation3 + $0x100] sm:$0xff] %v7525
        %7562 = vst [vmem:[#allocation3 + $0x108] sm:$0xff] %v7371
        %7563 = vst [vmem:[#allocation3 + $0x110] sm:$0xff] %v7449
        %7564 = vst [vmem:[#allocation3 + $0x118] sm:$0xff] %v7527
        %v7565 = vld [vmem:[#allocation3] sm:$0xff]
        %v7566 = vld [vmem:[#allocation3 + $0x8] sm:$0xff]
        %v7567 = vld [vmem:[#allocation3 + $0x10] sm:$0xff]
        %v7568 = vld [vmem:[#allocation3 + $0x18] sm:$0xff]
        %v7569 = vld [vmem:[#allocation3 + $0x20] sm:$0xff]
        %v7570 = vld [vmem:[#allocation3 + $0x28] sm:$0xff]
        %v7571 = vld [vmem:[#allocation3 + $0x30] sm:$0xff]
        %v7572 = vld [vmem:[#allocation3 + $0x38] sm:$0xff]
        %v7573 = vld [vmem:[#allocation3 + $0x40] sm:$0xff]
        %v7574 = vld [vmem:[#allocation3 + $0x48] sm:$0xff]
        %v7575 = vld [vmem:[#allocation3 + $0x50] sm:$0xff]
        %v7576 = vld [vmem:[#allocation3 + $0x58] sm:$0xff]
        %7581 = vrot.lane.b32.xlu0 %v7567, 19
        %v7582 = vpop.permute.xlu0 %7581
        %7583 = vrot.lane.b32.xlu0 %v7570, 19
        %v7584 = vpop.permute.xlu0 %7583
        %7585 = vrot.lane.b32.xlu0 %v7573, 19
        %v7586 = vpop.permute.xlu0 %7585
        %7587 = vrot.lane.b32.xlu0 %v7576, 19
        %v7588 = vpop.permute.xlu0 %7587
        %7601 = vrot.lane.b32.xlu0 %v7565, 19
        %v7602 = vpop.permute.xlu0 %7601
        %7603 = vrot.lane.b32.xlu0 %v7566, 19
        %v7604 = vpop.permute.xlu0 %7603
        %7605 = vrot.lane.b32.xlu0 %v7568, 19
        %v7606 = vpop.permute.xlu0 %7605
        %7607 = vrot.lane.b32.xlu0 %v7569, 19
        %v7608 = vpop.permute.xlu0 %7607
        %7609 = vrot.lane.b32.xlu0 %v7571, 19
        %v7610 = vpop.permute.xlu0 %7609
        %7611 = vrot.lane.b32.xlu0 %v7572, 19
        %v7612 = vpop.permute.xlu0 %7611
        %7613 = vrot.lane.b32.xlu0 %v7574, 19
        %v7614 = vpop.permute.xlu0 %7613
        %7615 = vrot.lane.b32.xlu0 %v7575, 19
        %v7616 = vpop.permute.xlu0 %7615
        %v7617 = vsel %vm559, %v7602, %v7604
        %v7618 = vsel %vm559, %v7604, %v7582
        %v7619 = vsel %vm559, %v7606, %v7608
        %v7620 = vsel %vm559, %v7608, %v7584
        %v7621 = vsel %vm559, %v7610, %v7612
        %v7622 = vsel %vm559, %v7612, %v7586
        %v7623 = vsel %vm559, %v7614, %v7616
        %v7624 = vsel %vm559, %v7616, %v7588
        %v7637 = vsel %vm559, %v7582, %v7602
        %v7638 = vsel %vm559, %v7584, %v7606
        %v7639 = vsel %vm559, %v7586, %v7610
        %v7640 = vsel %vm559, %v7588, %v7614
        %v7641 = vadd.f32 %v7637, 0.0
        %v7642 = vadd.f32 %v7617, 0.0
        %v7643 = vadd.f32 %v7618, 0.0
        %v7644 = vadd.f32 %v7638, 0.0
        %v7645 = vadd.f32 %v7619, 0.0
        %v7646 = vadd.f32 %v7620, 0.0
        %v7647 = vadd.f32 %v7639, 0.0
        %v7648 = vadd.f32 %v7621, 0.0
        %v7649 = vadd.f32 %v7622, 0.0
        %v7650 = vadd.f32 %v7640, 0.0
        %v7651 = vadd.f32 %v7623, 0.0
        %v7652 = vadd.f32 %v7624, 0.0
        %v7653 = vld [vmem:[#allocation3 + $0x60] sm:$0xff]
        %v7654 = vld [vmem:[#allocation3 + $0x68] sm:$0xff]
        %v7655 = vld [vmem:[#allocation3 + $0x70] sm:$0xff]
        %v7656 = vld [vmem:[#allocation3 + $0x78] sm:$0xff]
        %v7657 = vld [vmem:[#allocation3 + $0x80] sm:$0xff]
        %v7658 = vld [vmem:[#allocation3 + $0x88] sm:$0xff]
        %v7659 = vld [vmem:[#allocation3 + $0x90] sm:$0xff]
        %v7660 = vld [vmem:[#allocation3 + $0x98] sm:$0xff]
        %v7661 = vld [vmem:[#allocation3 + $0xa0] sm:$0xff]
        %v7662 = vld [vmem:[#allocation3 + $0xa8] sm:$0xff]
        %v7663 = vld [vmem:[#allocation3 + $0xb0] sm:$0xff]
        %v7664 = vld [vmem:[#allocation3 + $0xb8] sm:$0xff]
        %7669 = vrot.lane.b32.xlu0 %v7655, 18
        %v7670 = vpop.permute.xlu0 %7669
        %7671 = vrot.lane.b32.xlu0 %v7658, 18
        %v7672 = vpop.permute.xlu0 %7671
        %7673 = vrot.lane.b32.xlu0 %v7661, 18
        %v7674 = vpop.permute.xlu0 %7673
        %7675 = vrot.lane.b32.xlu0 %v7664, 18
        %v7676 = vpop.permute.xlu0 %7675
        %7689 = vrot.lane.b32.xlu0 %v7653, 18
        %v7690 = vpop.permute.xlu0 %7689
        %7691 = vrot.lane.b32.xlu0 %v7654, 18
        %v7692 = vpop.permute.xlu0 %7691
        %7693 = vrot.lane.b32.xlu0 %v7656, 18
        %v7694 = vpop.permute.xlu0 %7693
        %7695 = vrot.lane.b32.xlu0 %v7657, 18
        %v7696 = vpop.permute.xlu0 %7695
        %7697 = vrot.lane.b32.xlu0 %v7659, 18
        %v7698 = vpop.permute.xlu0 %7697
        %7699 = vrot.lane.b32.xlu0 %v7660, 18
        %v7700 = vpop.permute.xlu0 %7699
        %7701 = vrot.lane.b32.xlu0 %v7662, 18
        %v7702 = vpop.permute.xlu0 %7701
        %7703 = vrot.lane.b32.xlu0 %v7663, 18
        %v7704 = vpop.permute.xlu0 %7703
        %v7705 = vsel %vm648, %v7690, %v7692
        %v7706 = vsel %vm648, %v7692, %v7670
        %v7707 = vsel %vm648, %v7694, %v7696
        %v7708 = vsel %vm648, %v7696, %v7672
        %v7709 = vsel %vm648, %v7698, %v7700
        %v7710 = vsel %vm648, %v7700, %v7674
        %v7711 = vsel %vm648, %v7702, %v7704
        %v7712 = vsel %vm648, %v7704, %v7676
        %v7725 = vsel %vm648, %v7670, %v7690
        %v7726 = vsel %vm648, %v7672, %v7694
        %v7727 = vsel %vm648, %v7674, %v7698
        %v7728 = vsel %vm648, %v7676, %v7702
        %v7729 = vadd.f32 %v7641, %v7725
        %v7730 = vadd.f32 %v7642, %v7705
        %v7731 = vadd.f32 %v7643, %v7706
        %v7732 = vadd.f32 %v7644, %v7726
        %v7733 = vadd.f32 %v7645, %v7707
        %v7734 = vadd.f32 %v7646, %v7708
        %v7735 = vadd.f32 %v7647, %v7727
        %v7736 = vadd.f32 %v7648, %v7709
        %v7737 = vadd.f32 %v7649, %v7710
        %v7738 = vadd.f32 %v7650, %v7728
        %v7739 = vadd.f32 %v7651, %v7711
        %v7740 = vadd.f32 %v7652, %v7712
        %v7741 = vld [vmem:[#allocation3 + $0xc0] sm:$0xff]
        %v7742 = vld [vmem:[#allocation3 + $0xc8] sm:$0xff]
        %v7743 = vld [vmem:[#allocation3 + $0xd0] sm:$0xff]
        %v7744 = vld [vmem:[#allocation3 + $0xd8] sm:$0xff]
        %v7745 = vld [vmem:[#allocation3 + $0xe0] sm:$0xff]
        %v7746 = vld [vmem:[#allocation3 + $0xe8] sm:$0xff]
        %v7747 = vld [vmem:[#allocation3 + $0xf0] sm:$0xff]
        %v7748 = vld [vmem:[#allocation3 + $0xf8] sm:$0xff]
        %v7749 = vld [vmem:[#allocation3 + $0x100] sm:$0xff]
        %v7750 = vld [vmem:[#allocation3 + $0x108] sm:$0xff]
        %v7751 = vld [vmem:[#allocation3 + $0x110] sm:$0xff]
        %v7752 = vld [vmem:[#allocation3 + $0x118] sm:$0xff]
        %7757 = vrot.lane.b32.xlu0 %v7743, 17
        %v7758 = vpop.permute.xlu0 %7757
        %7759 = vrot.lane.b32.xlu0 %v7746, 17
        %v7760 = vpop.permute.xlu0 %7759
        %7761 = vrot.lane.b32.xlu0 %v7749, 17
        %v7762 = vpop.permute.xlu0 %7761
        %7763 = vrot.lane.b32.xlu0 %v7752, 17
        %v7764 = vpop.permute.xlu0 %7763
        %7777 = vrot.lane.b32.xlu0 %v7741, 17
        %v7778 = vpop.permute.xlu0 %7777
        %7779 = vrot.lane.b32.xlu0 %v7742, 17
        %v7780 = vpop.permute.xlu0 %7779
        %7781 = vrot.lane.b32.xlu0 %v7744, 17
        %v7782 = vpop.permute.xlu0 %7781
        %7783 = vrot.lane.b32.xlu0 %v7745, 17
        %v7784 = vpop.permute.xlu0 %7783
        %7785 = vrot.lane.b32.xlu0 %v7747, 17
        %v7786 = vpop.permute.xlu0 %7785
        %7787 = vrot.lane.b32.xlu0 %v7748, 17
        %v7788 = vpop.permute.xlu0 %7787
        %7789 = vrot.lane.b32.xlu0 %v7750, 17
        %v7790 = vpop.permute.xlu0 %7789
        %7791 = vrot.lane.b32.xlu0 %v7751, 17
        %v7792 = vpop.permute.xlu0 %7791
        %v7793 = vsel %vm737, %v7778, %v7780
        %v7794 = vsel %vm737, %v7780, %v7758
        %v7795 = vsel %vm737, %v7782, %v7784
        %v7796 = vsel %vm737, %v7784, %v7760
        %v7797 = vsel %vm737, %v7786, %v7788
        %v7798 = vsel %vm737, %v7788, %v7762
        %v7799 = vsel %vm737, %v7790, %v7792
        %v7800 = vsel %vm737, %v7792, %v7764
        %v7813 = vsel %vm737, %v7758, %v7778
        %v7814 = vsel %vm737, %v7760, %v7782
        %v7815 = vsel %vm737, %v7762, %v7786
        %v7816 = vsel %vm737, %v7764, %v7790
        %v7817 = vadd.f32 %v7729, %v7813
        %v7818 = vadd.f32 %v7730, %v7793
        %v7819 = vadd.f32 %v7731, %v7794
        %v7820 = vadd.f32 %v7732, %v7814
        %v7821 = vadd.f32 %v7733, %v7795
        %v7822 = vadd.f32 %v7734, %v7796
        %v7823 = vadd.f32 %v7735, %v7815
        %v7824 = vadd.f32 %v7736, %v7797
        %v7825 = vadd.f32 %v7737, %v7798
        %v7826 = vadd.f32 %v7738, %v7816
        %v7827 = vadd.f32 %v7739, %v7799
        %v7828 = vadd.f32 %v7740, %v7800
        %v7829 = vld [vmem:[%s7030 + $0x60] sm:$0xff]
        %v7830 = vld [vmem:[%s7030 + $0x68] sm:$0xff]
        %v7831 = vld [vmem:[%s7030 + $0x70] sm:$0xff]
        %v7832 = vld [vmem:[%s7030 + $0x78] sm:$0xff]
        %v7833 = vld [vmem:[%s7030 + $0x80] sm:$0xff]
        %v7834 = vld [vmem:[%s7030 + $0x88] sm:$0xff]
        %v7835 = vld [vmem:[%s7030 + $0x90] sm:$0xff]
        %v7836 = vld [vmem:[%s7030 + $0x98] sm:$0xff]
        %v7837 = vld [vmem:[%s7030 + $0xa0] sm:$0xff]
        %v7838 = vld [vmem:[%s7030 + $0xa8] sm:$0xff]
        %v7839 = vld [vmem:[%s7030 + $0xb0] sm:$0xff]
        %v7840 = vld [vmem:[%s7030 + $0xb8] sm:$0xff]
        %v7841 = vld [vmem:[#allocation2] sm:$0xff]
        %v7842 = vld [vmem:[#allocation2 + $0x8] sm:$0xf]
        %v7843 = vld [vmem:[#allocation2 + $0xc] sm:$0xff]
        %v7844 = vld [vmem:[#allocation2 + $0x14] sm:$0xf]
        %v7845 = vld [vmem:[#allocation2 + $0x18] sm:$0xff]
        %v7846 = vld [vmem:[#allocation2 + $0x20] sm:$0xf]
        %v7847 = vld [vmem:[#allocation2 + $0x24] sm:$0xff]
        %v7848 = vld [vmem:[#allocation2 + $0x2c] sm:$0xf]
        %v7849 = vld [vmem:[#allocation2 + $0x30] sm:$0xff]
        %v7850 = vld [vmem:[#allocation2 + $0x38] sm:$0xf]
        %v7851 = vld [vmem:[#allocation2 + $0x3c] sm:$0xff]
        %v7852 = vld [vmem:[#allocation2 + $0x44] sm:$0xf]
        %v7853 = vld [vmem:[#allocation2 + $0x48] sm:$0xff]
        %v7854 = vld [vmem:[#allocation2 + $0x50] sm:$0xf]
        %v7855 = vld [vmem:[#allocation2 + $0x54] sm:$0xff]
        %v7856 = vld [vmem:[#allocation2 + $0x5c] sm:$0xf]
        %v7857 = vld [vmem:[#allocation2 + $0x60] sm:$0xff]
        %v7858 = vld [vmem:[#allocation2 + $0x68] sm:$0xf]
        %v7859 = vld [vmem:[#allocation2 + $0x6c] sm:$0xff]
        %v7860 = vld [vmem:[#allocation2 + $0x74] sm:$0xf]
        %v7861 = vld [vmem:[#allocation2 + $0x78] sm:$0xff]
        %v7862 = vld [vmem:[#allocation2 + $0x80] sm:$0xf]
        %v7863 = vld [vmem:[#allocation2 + $0x84] sm:$0xff]
        %v7864 = vld [vmem:[#allocation2 + $0x8c] sm:$0xf]
        %v7865 = vld [vmem:[#allocation2 + $0x90] sm:$0xff]
        %v7866 = vld [vmem:[#allocation2 + $0x98] sm:$0xf]
        %v7867 = vld [vmem:[#allocation2 + $0x9c] sm:$0xff]
        %v7868 = vld [vmem:[#allocation2 + $0xa4] sm:$0xf]
        %v7869 = vld [vmem:[#allocation2 + $0xa8] sm:$0xff]
        %v7870 = vld [vmem:[#allocation2 + $0xb0] sm:$0xf]
        %v7871 = vld [vmem:[#allocation2 + $0xb4] sm:$0xff]
        %v7872 = vld [vmem:[#allocation2 + $0xbc] sm:$0xf]
        %v7873 = vld [vmem:[#allocation2 + $0xc0] sm:$0xff]
        %v7874 = vld [vmem:[#allocation2 + $0xc8] sm:$0xf]
        %v7875 = vld [vmem:[#allocation2 + $0xcc] sm:$0xff]
        %v7876 = vld [vmem:[#allocation2 + $0xd4] sm:$0xf]
        %v7889 = vunpack.c.l.b16 %v7829
        %v7890 = vunpack.c.h.b16 %v7829
        %v7891 = vunpack.c.l.b16 %v7830
        %v7892 = vunpack.c.h.b16 %v7830
        %v7893 = vunpack.c.l.b16 %v7831
        %v7894 = vunpack.c.h.b16 %v7831
        %v7895 = vunpack.c.l.b16 %v7832
        %v7896 = vunpack.c.h.b16 %v7832
        %v7897 = vunpack.c.l.b16 %v7833
        %v7898 = vunpack.c.h.b16 %v7833
        %v7899 = vunpack.c.l.b16 %v7834
        %v7900 = vunpack.c.h.b16 %v7834
        %v7901 = vunpack.c.l.b16 %v7835
        %v7902 = vunpack.c.h.b16 %v7835
        %v7903 = vunpack.c.l.b16 %v7836
        %v7904 = vunpack.c.h.b16 %v7836
        %v7905 = vunpack.c.l.b16 %v7837
        %v7906 = vunpack.c.h.b16 %v7837
        %v7907 = vunpack.c.l.b16 %v7838
        %v7908 = vunpack.c.h.b16 %v7838
        %v7909 = vunpack.c.l.b16 %v7839
        %v7910 = vunpack.c.h.b16 %v7839
        %v7911 = vunpack.c.l.b16 %v7840
        %v7912 = vunpack.c.h.b16 %v7840
        %v7913 = vpack.c.b16 %v7891, %v7889
        %v7914 = vpack.c.b16 %v7892, %v7890
        %v7915 = vpack.c.b16 %v7895, %v7893
        %v7916 = vpack.c.b16 %v7896, %v7894
        %v7917 = vpack.c.b16 %v7899, %v7897
        %v7918 = vpack.c.b16 %v7900, %v7898
        %v7919 = vpack.c.b16 %v7903, %v7901
        %v7920 = vpack.c.b16 %v7904, %v7902
        %v7921 = vpack.c.b16 %v7907, %v7905
        %v7922 = vpack.c.b16 %v7908, %v7906
        %v7923 = vpack.c.b16 %v7911, %v7909
        %v7924 = vpack.c.b16 %v7912, %v7910
        %v7967 = vunpack.c.l.b16 %v7841
        %v7968 = vunpack.c.h.b16 %v7841
        %v7969 = vunpack.c.l.b16 %v7842
        %v7970 = vunpack.c.l.b16 %v7843
        %v7971 = vunpack.c.h.b16 %v7843
        %v7972 = vunpack.c.l.b16 %v7844
        %v7973 = vunpack.c.l.b16 %v7845
        %v7974 = vunpack.c.h.b16 %v7845
        %v7975 = vunpack.c.l.b16 %v7846
        %v7976 = vunpack.c.l.b16 %v7847
        %v7977 = vunpack.c.h.b16 %v7847
        %v7978 = vunpack.c.l.b16 %v7848
        %v7979 = vunpack.c.l.b16 %v7849
        %v7980 = vunpack.c.h.b16 %v7849
        %v7981 = vunpack.c.l.b16 %v7850
        %v7982 = vunpack.c.l.b16 %v7851
        %v7983 = vunpack.c.h.b16 %v7851
        %v7984 = vunpack.c.l.b16 %v7852
        %v7985 = vunpack.c.l.b16 %v7853
        %v7986 = vunpack.c.h.b16 %v7853
        %v7987 = vunpack.c.l.b16 %v7854
        %v7988 = vunpack.c.l.b16 %v7855
        %v7989 = vunpack.c.h.b16 %v7855
        %v7990 = vunpack.c.l.b16 %v7856
        %v7991 = vunpack.c.l.b16 %v7857
        %v7992 = vunpack.c.h.b16 %v7857
        %v7993 = vunpack.c.l.b16 %v7858
        %v7994 = vunpack.c.l.b16 %v7859
        %v7995 = vunpack.c.h.b16 %v7859
        %v7996 = vunpack.c.l.b16 %v7860
        %v7997 = vunpack.c.l.b16 %v7861
        %v7998 = vunpack.c.h.b16 %v7861
        %v7999 = vunpack.c.l.b16 %v7862
        %v8000 = vunpack.c.l.b16 %v7863
        %v8001 = vunpack.c.h.b16 %v7863
        %v8002 = vunpack.c.l.b16 %v7864
        %v8003 = vunpack.c.l.b16 %v7865
        %v8004 = vunpack.c.h.b16 %v7865
        %v8005 = vunpack.c.l.b16 %v7866
        %v8006 = vunpack.c.l.b16 %v7867
        %v8007 = vunpack.c.h.b16 %v7867
        %v8008 = vunpack.c.l.b16 %v7868
        %v8009 = vunpack.c.l.b16 %v7869
        %v8010 = vunpack.c.h.b16 %v7869
        %v8011 = vunpack.c.l.b16 %v7870
        %v8012 = vunpack.c.l.b16 %v7871
        %v8013 = vunpack.c.h.b16 %v7871
        %v8014 = vunpack.c.l.b16 %v7872
        %v8015 = vunpack.c.l.b16 %v7873
        %v8016 = vunpack.c.h.b16 %v7873
        %v8017 = vunpack.c.l.b16 %v7874
        %v8018 = vunpack.c.l.b16 %v7875
        %v8019 = vunpack.c.h.b16 %v7875
        %v8020 = vunpack.c.l.b16 %v7876
        %v8021 = vpack.c.b16 %v7970, %v7967
        %v8022 = vpack.c.b16 %v7971, %v7968
        %v8023 = vpack.c.b16 %v7972, %v7969
        %v8024 = vpack.c.b16 %v7976, %v7973
        %v8025 = vpack.c.b16 %v7977, %v7974
        %v8026 = vpack.c.b16 %v7978, %v7975
        %v8027 = vpack.c.b16 %v7982, %v7979
        %v8028 = vpack.c.b16 %v7983, %v7980
        %v8029 = vpack.c.b16 %v7984, %v7981
        %v8030 = vpack.c.b16 %v7988, %v7985
        %v8031 = vpack.c.b16 %v7989, %v7986
        %v8032 = vpack.c.b16 %v7990, %v7987
        %v8033 = vpack.c.b16 %v7994, %v7991
        %v8034 = vpack.c.b16 %v7995, %v7992
        %v8035 = vpack.c.b16 %v7996, %v7993
        %v8036 = vpack.c.b16 %v8000, %v7997
        %v8037 = vpack.c.b16 %v8001, %v7998
        %v8038 = vpack.c.b16 %v8002, %v7999
        %v8039 = vpack.c.b16 %v8006, %v8003
        %v8040 = vpack.c.b16 %v8007, %v8004
        %v8041 = vpack.c.b16 %v8008, %v8005
        %v8042 = vpack.c.b16 %v8012, %v8009
        %v8043 = vpack.c.b16 %v8013, %v8010
        %v8044 = vpack.c.b16 %v8014, %v8011
        %v8045 = vpack.c.b16 %v8018, %v8015
        %v8046 = vpack.c.b16 %v8019, %v8016
        %v8047 = vpack.c.b16 %v8020, %v8017
        %v8076 = vsel %vm335, %v7914, 0
        %v8079 = vsel %vm335, %v7916, 0
        %v8082 = vsel %vm335, %v7918, 0
        %v8085 = vsel %vm335, %v7920, 0
        %v8088 = vsel %vm335, %v7922, 0
        %v8091 = vsel %vm335, %v7924, 0
        %8093 = vmatpush.bf16.msra.mxu0 %v8042
        %8094 = vmatpush.bf16.msra.mxu0 %v8039
        %8095 = vmatpush.bf16.msra.mxu0 %v8036
        %8096 = vmatpush.bf16.msra.mxu0 %v8033
        %8097 = vmatpush.bf16.msra.mxu0 %v8030
        %8098 = vmatpush.bf16.msra.mxu0 %v8027
        %8099 = vmatpush.bf16.msra.mxu0 %v8024
        %8100 = vmatpush.bf16.msra.mxu0 %v8021
        %8101 = vmatmul.bf16.gmra.mxu0 %v7913
        %v8102 = vpop.f32.mrf.mxu0
        %v8103 = vadd.f32 0.0, %v8102
        %v8104 = vpop.f32.mrf.mxu0
        %v8105 = vadd.f32 0.0, %v8104
        %8106 = vmatmul.bf16.gmra.mxu0 %v7915
        %v8107 = vpop.f32.mrf.mxu0
        %v8108 = vadd.f32 0.0, %v8107
        %v8109 = vpop.f32.mrf.mxu0
        %v8110 = vadd.f32 0.0, %v8109
        %8111 = vmatmul.bf16.gmra.mxu0 %v7917
        %v8112 = vpop.f32.mrf.mxu0
        %v8113 = vadd.f32 0.0, %v8112
        %v8114 = vpop.f32.mrf.mxu0
        %v8115 = vadd.f32 0.0, %v8114
        %8116 = vmatmul.bf16.gmra.mxu0 %v7919
        %v8117 = vpop.f32.mrf.mxu0
        %v8118 = vadd.f32 0.0, %v8117
        %v8119 = vpop.f32.mrf.mxu0
        %v8120 = vadd.f32 0.0, %v8119
        %8121 = vmatmul.bf16.gmra.mxu0 %v7921
        %v8122 = vpop.f32.mrf.mxu0
        %v8123 = vadd.f32 0.0, %v8122
        %v8124 = vpop.f32.mrf.mxu0
        %v8125 = vadd.f32 0.0, %v8124
        %8126 = vmatmul.bf16.gmra.mxu0 %v7923
        %v8127 = vpop.f32.mrf.mxu0
        %v8128 = vadd.f32 0.0, %v8127
        %v8129 = vpop.f32.mrf.mxu0
        %v8130 = vadd.f32 0.0, %v8129
        %8131 = vdwg.mxu0
        %8132 = vmatpush.bf16.msra.mxu0 0
        %8133 = vmatpush.bf16.msra.mxu0 0
        %8134 = vmatpush.bf16.msra.mxu0 0
        %8135 = vmatpush.bf16.msra.mxu0 0
        %8136 = vmatpush.bf16.msra.mxu0 0
        %8137 = vmatpush.bf16.msra.mxu0 0
        %8138 = vmatpush.bf16.msra.mxu0 0
        %8139 = vmatpush.bf16.msra.mxu0 %v8045
        %8140 = vmatmul.bf16.gmra.mxu0 %v8076
        %v8141 = vpop.f32.mrf.mxu0
        %v8142 = vadd.f32 %v8103, %v8141
        %v8143 = vpop.f32.mrf.mxu0
        %v8144 = vadd.f32 %v8105, %v8143
        %8145 = vmatmul.bf16.gmra.mxu0 %v8079
        %v8146 = vpop.f32.mrf.mxu0
        %v8147 = vadd.f32 %v8108, %v8146
        %v8148 = vpop.f32.mrf.mxu0
        %v8149 = vadd.f32 %v8110, %v8148
        %8150 = vmatmul.bf16.gmra.mxu0 %v8082
        %v8151 = vpop.f32.mrf.mxu0
        %v8152 = vadd.f32 %v8113, %v8151
        %v8153 = vpop.f32.mrf.mxu0
        %v8154 = vadd.f32 %v8115, %v8153
        %8155 = vmatmul.bf16.gmra.mxu0 %v8085
        %v8156 = vpop.f32.mrf.mxu0
        %v8157 = vadd.f32 %v8118, %v8156
        %v8158 = vpop.f32.mrf.mxu0
        %v8159 = vadd.f32 %v8120, %v8158
        %8160 = vmatmul.bf16.gmra.mxu0 %v8088
        %v8161 = vpop.f32.mrf.mxu0
        %v8162 = vadd.f32 %v8123, %v8161
        %v8163 = vpop.f32.mrf.mxu0
        %v8164 = vadd.f32 %v8125, %v8163
        %8165 = vmatmul.bf16.gmra.mxu0 %v8091
        %v8166 = vpop.f32.mrf.mxu0
        %v8167 = vadd.f32 %v8128, %v8166
        %v8168 = vpop.f32.mrf.mxu0
        %v8169 = vadd.f32 %v8130, %v8168
        %8170 = vdwg.mxu0
        %8171 = vmatpush.bf16.msra.mxu0 %v8043
        %8172 = vmatpush.bf16.msra.mxu0 %v8040
        %8173 = vmatpush.bf16.msra.mxu0 %v8037
        %8174 = vmatpush.bf16.msra.mxu0 %v8034
        %8175 = vmatpush.bf16.msra.mxu0 %v8031
        %8176 = vmatpush.bf16.msra.mxu0 %v8028
        %8177 = vmatpush.bf16.msra.mxu0 %v8025
        %8178 = vmatpush.bf16.msra.mxu0 %v8022
        %8179 = vmatmul.bf16.gmra.mxu0 %v7913
        %v8180 = vpop.f32.mrf.mxu0
        %v8181 = vadd.f32 0.0, %v8180
        %v8182 = vpop.f32.mrf.mxu0
        %v8183 = vadd.f32 0.0, %v8182
        %8184 = vmatmul.bf16.gmra.mxu0 %v7915
        %v8185 = vpop.f32.mrf.mxu0
        %v8186 = vadd.f32 0.0, %v8185
        %v8187 = vpop.f32.mrf.mxu0
        %v8188 = vadd.f32 0.0, %v8187
        %8189 = vmatmul.bf16.gmra.mxu0 %v7917
        %v8190 = vpop.f32.mrf.mxu0
        %v8191 = vadd.f32 0.0, %v8190
        %v8192 = vpop.f32.mrf.mxu0
        %v8193 = vadd.f32 0.0, %v8192
        %8194 = vmatmul.bf16.gmra.mxu0 %v7919
        %v8195 = vpop.f32.mrf.mxu0
        %v8196 = vadd.f32 0.0, %v8195
        %v8197 = vpop.f32.mrf.mxu0
        %v8198 = vadd.f32 0.0, %v8197
        %8199 = vmatmul.bf16.gmra.mxu0 %v7921
        %v8200 = vpop.f32.mrf.mxu0
        %v8201 = vadd.f32 0.0, %v8200
        %v8202 = vpop.f32.mrf.mxu0
        %v8203 = vadd.f32 0.0, %v8202
        %8204 = vmatmul.bf16.gmra.mxu0 %v7923
        %v8205 = vpop.f32.mrf.mxu0
        %v8206 = vadd.f32 0.0, %v8205
        %v8207 = vpop.f32.mrf.mxu0
        %v8208 = vadd.f32 0.0, %v8207
        %8209 = vdwg.mxu0
        %8210 = vmatpush.bf16.msra.mxu0 0
        %8211 = vmatpush.bf16.msra.mxu0 0
        %8212 = vmatpush.bf16.msra.mxu0 0
        %8213 = vmatpush.bf16.msra.mxu0 0
        %8214 = vmatpush.bf16.msra.mxu0 0
        %8215 = vmatpush.bf16.msra.mxu0 0
        %8216 = vmatpush.bf16.msra.mxu0 0
        %8217 = vmatpush.bf16.msra.mxu0 %v8046
        %8218 = vmatmul.bf16.gmra.mxu0 %v8076
        %v8219 = vpop.f32.mrf.mxu0
        %v8220 = vadd.f32 %v8181, %v8219
        %v8221 = vpop.f32.mrf.mxu0
        %v8222 = vadd.f32 %v8183, %v8221
        %8223 = vmatmul.bf16.gmra.mxu0 %v8079
        %v8224 = vpop.f32.mrf.mxu0
        %v8225 = vadd.f32 %v8186, %v8224
        %v8226 = vpop.f32.mrf.mxu0
        %v8227 = vadd.f32 %v8188, %v8226
        %8228 = vmatmul.bf16.gmra.mxu0 %v8082
        %v8229 = vpop.f32.mrf.mxu0
        %v8230 = vadd.f32 %v8191, %v8229
        %v8231 = vpop.f32.mrf.mxu0
        %v8232 = vadd.f32 %v8193, %v8231
        %8233 = vmatmul.bf16.gmra.mxu0 %v8085
        %v8234 = vpop.f32.mrf.mxu0
        %v8235 = vadd.f32 %v8196, %v8234
        %v8236 = vpop.f32.mrf.mxu0
        %v8237 = vadd.f32 %v8198, %v8236
        %8238 = vmatmul.bf16.gmra.mxu0 %v8088
        %v8239 = vpop.f32.mrf.mxu0
        %v8240 = vadd.f32 %v8201, %v8239
        %v8241 = vpop.f32.mrf.mxu0
        %v8242 = vadd.f32 %v8203, %v8241
        %8243 = vmatmul.bf16.gmra.mxu0 %v8091
        %v8244 = vpop.f32.mrf.mxu0
        %v8245 = vadd.f32 %v8206, %v8244
        %v8246 = vpop.f32.mrf.mxu0
        %v8247 = vadd.f32 %v8208, %v8246
        %8248 = vdwg.mxu0
        %8249 = vmatpush.bf16.msra.mxu0 %v8044
        %8250 = vmatpush.bf16.msra.mxu0 %v8041
        %8251 = vmatpush.bf16.msra.mxu0 %v8038
        %8252 = vmatpush.bf16.msra.mxu0 %v8035
        %8253 = vmatpush.bf16.msra.mxu0 %v8032
        %8254 = vmatpush.bf16.msra.mxu0 %v8029
        %8255 = vmatpush.bf16.msra.mxu0 %v8026
        %8256 = vmatpush.bf16.msra.mxu0 %v8023
        %8257 = vmatmul.bf16.gmra.mxu0 %v7913
        %v8258 = vpop.f32.mrf.mxu0
        %v8259 = vadd.f32 0.0, %v8258
        %v8260 = vpop.f32.mrf.mxu0
        %v8261 = vadd.f32 0.0, %v8260
        %8262 = vmatmul.bf16.gmra.mxu0 %v7915
        %v8263 = vpop.f32.mrf.mxu0
        %v8264 = vadd.f32 0.0, %v8263
        %v8265 = vpop.f32.mrf.mxu0
        %v8266 = vadd.f32 0.0, %v8265
        %8267 = vmatmul.bf16.gmra.mxu0 %v7917
        %v8268 = vpop.f32.mrf.mxu0
        %v8269 = vadd.f32 0.0, %v8268
        %v8270 = vpop.f32.mrf.mxu0
        %v8271 = vadd.f32 0.0, %v8270
        %8272 = vmatmul.bf16.gmra.mxu0 %v7919
        %v8273 = vpop.f32.mrf.mxu0
        %v8274 = vadd.f32 0.0, %v8273
        %v8275 = vpop.f32.mrf.mxu0
        %v8276 = vadd.f32 0.0, %v8275
        %8277 = vmatmul.bf16.gmra.mxu0 %v7921
        %v8278 = vpop.f32.mrf.mxu0
        %v8279 = vadd.f32 0.0, %v8278
        %v8280 = vpop.f32.mrf.mxu0
        %v8281 = vadd.f32 0.0, %v8280
        %8282 = vmatmul.bf16.gmra.mxu0 %v7923
        %v8283 = vpop.f32.mrf.mxu0
        %v8284 = vadd.f32 0.0, %v8283
        %v8285 = vpop.f32.mrf.mxu0
        %v8286 = vadd.f32 0.0, %v8285
        %8287 = vdwg.mxu0
        %8288 = vmatpush.bf16.msra.mxu0 0
        %8289 = vmatpush.bf16.msra.mxu0 0
        %8290 = vmatpush.bf16.msra.mxu0 0
        %8291 = vmatpush.bf16.msra.mxu0 0
        %8292 = vmatpush.bf16.msra.mxu0 0
        %8293 = vmatpush.bf16.msra.mxu0 0
        %8294 = vmatpush.bf16.msra.mxu0 0
        %8295 = vmatpush.bf16.msra.mxu0 %v8047
        %8296 = vmatmul.bf16.gmra.mxu0 %v8076
        %v8297 = vpop.f32.mrf.mxu0
        %v8298 = vadd.f32 %v8259, %v8297
        %v8299 = vpop.f32.mrf.mxu0
        %v8300 = vadd.f32 %v8261, %v8299
        %8301 = vmatmul.bf16.gmra.mxu0 %v8079
        %v8302 = vpop.f32.mrf.mxu0
        %v8303 = vadd.f32 %v8264, %v8302
        %v8304 = vpop.f32.mrf.mxu0
        %v8305 = vadd.f32 %v8266, %v8304
        %8306 = vmatmul.bf16.gmra.mxu0 %v8082
        %v8307 = vpop.f32.mrf.mxu0
        %v8308 = vadd.f32 %v8269, %v8307
        %v8309 = vpop.f32.mrf.mxu0
        %v8310 = vadd.f32 %v8271, %v8309
        %8311 = vmatmul.bf16.gmra.mxu0 %v8085
        %v8312 = vpop.f32.mrf.mxu0
        %v8313 = vadd.f32 %v8274, %v8312
        %v8314 = vpop.f32.mrf.mxu0
        %v8315 = vadd.f32 %v8276, %v8314
        %8316 = vmatmul.bf16.gmra.mxu0 %v8088
        %v8317 = vpop.f32.mrf.mxu0
        %v8318 = vadd.f32 %v8279, %v8317
        %v8319 = vpop.f32.mrf.mxu0
        %v8320 = vadd.f32 %v8281, %v8319
        %8321 = vmatmul.bf16.gmra.mxu0 %v8091
        %v8322 = vpop.f32.mrf.mxu0
        %v8323 = vadd.f32 %v8284, %v8322
        %v8324 = vpop.f32.mrf.mxu0
        %v8325 = vadd.f32 %v8286, %v8324
        %8326 = vdwg.mxu0
        %8327 = vst [vmem:[#allocation3] sm:$0xff] %v8142
        %8328 = vst [vmem:[#allocation3 + $0x8] sm:$0xff] %v8220
        %8329 = vst [vmem:[#allocation3 + $0x10] sm:$0xff] %v8298
        %8330 = vst [vmem:[#allocation3 + $0x18] sm:$0xff] %v8144
        %8331 = vst [vmem:[#allocation3 + $0x20] sm:$0xff] %v8222
        %8332 = vst [vmem:[#allocation3 + $0x28] sm:$0xff] %v8300
        %8333 = vst [vmem:[#allocation3 + $0x30] sm:$0xff] %v8147
        %8334 = vst [vmem:[#allocation3 + $0x38] sm:$0xff] %v8225
        %8335 = vst [vmem:[#allocation3 + $0x40] sm:$0xff] %v8303
        %8336 = vst [vmem:[#allocation3 + $0x48] sm:$0xff] %v8149
        %8337 = vst [vmem:[#allocation3 + $0x50] sm:$0xff] %v8227
        %8338 = vst [vmem:[#allocation3 + $0x58] sm:$0xff] %v8305
        %8339 = vst [vmem:[#allocation3 + $0x60] sm:$0xff] %v8152
        %8340 = vst [vmem:[#allocation3 + $0x68] sm:$0xff] %v8230
        %8341 = vst [vmem:[#allocation3 + $0x70] sm:$0xff] %v8308
        %8342 = vst [vmem:[#allocation3 + $0x78] sm:$0xff] %v8154
        %8343 = vst [vmem:[#allocation3 + $0x80] sm:$0xff] %v8232
        %8344 = vst [vmem:[#allocation3 + $0x88] sm:$0xff] %v8310
        %8345 = vst [vmem:[#allocation3 + $0x90] sm:$0xff] %v8157
        %8346 = vst [vmem:[#allocation3 + $0x98] sm:$0xff] %v8235
        %8347 = vst [vmem:[#allocation3 + $0xa0] sm:$0xff] %v8313
        %8348 = vst [vmem:[#allocation3 + $0xa8] sm:$0xff] %v8159
        %8349 = vst [vmem:[#allocation3 + $0xb0] sm:$0xff] %v8237
        %8350 = vst [vmem:[#allocation3 + $0xb8] sm:$0xff] %v8315
        %8351 = vst [vmem:[#allocation3 + $0xc0] sm:$0xff] %v8162
        %8352 = vst [vmem:[#allocation3 + $0xc8] sm:$0xff] %v8240
        %8353 = vst [vmem:[#allocation3 + $0xd0] sm:$0xff] %v8318
        %8354 = vst [vmem:[#allocation3 + $0xd8] sm:$0xff] %v8164
        %8355 = vst [vmem:[#allocation3 + $0xe0] sm:$0xff] %v8242
        %8356 = vst [vmem:[#allocation3 + $0xe8] sm:$0xff] %v8320
        %8357 = vst [vmem:[#allocation3 + $0xf0] sm:$0xff] %v8167
        %8358 = vst [vmem:[#allocation3 + $0xf8] sm:$0xff] %v8245
        %8359 = vst [vmem:[#allocation3 + $0x100] sm:$0xff] %v8323
        %8360 = vst [vmem:[#allocation3 + $0x108] sm:$0xff] %v8169
        %8361 = vst [vmem:[#allocation3 + $0x110] sm:$0xff] %v8247
        %8362 = vst [vmem:[#allocation3 + $0x118] sm:$0xff] %v8325
        %v8363 = vld [vmem:[#allocation3] sm:$0xff]
        %v8364 = vld [vmem:[#allocation3 + $0x8] sm:$0xff]
        %v8365 = vld [vmem:[#allocation3 + $0x10] sm:$0xff]
        %v8366 = vld [vmem:[#allocation3 + $0x18] sm:$0xff]
        %v8367 = vld [vmem:[#allocation3 + $0x20] sm:$0xff]
        %v8368 = vld [vmem:[#allocation3 + $0x28] sm:$0xff]
        %v8369 = vld [vmem:[#allocation3 + $0x30] sm:$0xff]
        %v8370 = vld [vmem:[#allocation3 + $0x38] sm:$0xff]
        %v8371 = vld [vmem:[#allocation3 + $0x40] sm:$0xff]
        %v8372 = vld [vmem:[#allocation3 + $0x48] sm:$0xff]
        %v8373 = vld [vmem:[#allocation3 + $0x50] sm:$0xff]
        %v8374 = vld [vmem:[#allocation3 + $0x58] sm:$0xff]
        %8379 = vrot.lane.b32.xlu0 %v8365, 1
        %v8380 = vpop.permute.xlu0 %8379
        %8381 = vrot.lane.b32.xlu0 %v8368, 1
        %v8382 = vpop.permute.xlu0 %8381
        %8383 = vrot.lane.b32.xlu0 %v8371, 1
        %v8384 = vpop.permute.xlu0 %8383
        %8385 = vrot.lane.b32.xlu0 %v8374, 1
        %v8386 = vpop.permute.xlu0 %8385
        %8399 = vrot.lane.b32.xlu0 %v8363, 1
        %v8400 = vpop.permute.xlu0 %8399
        %8401 = vrot.lane.b32.xlu0 %v8364, 1
        %v8402 = vpop.permute.xlu0 %8401
        %8403 = vrot.lane.b32.xlu0 %v8366, 1
        %v8404 = vpop.permute.xlu0 %8403
        %8405 = vrot.lane.b32.xlu0 %v8367, 1
        %v8406 = vpop.permute.xlu0 %8405
        %8407 = vrot.lane.b32.xlu0 %v8369, 1
        %v8408 = vpop.permute.xlu0 %8407
        %8409 = vrot.lane.b32.xlu0 %v8370, 1
        %v8410 = vpop.permute.xlu0 %8409
        %8411 = vrot.lane.b32.xlu0 %v8372, 1
        %v8412 = vpop.permute.xlu0 %8411
        %8413 = vrot.lane.b32.xlu0 %v8373, 1
        %v8414 = vpop.permute.xlu0 %8413
        %v8415 = vsel %vm1059, %v8400, %v8402
        %v8416 = vsel %vm1059, %v8402, %v8380
        %v8417 = vsel %vm1059, %v8404, %v8406
        %v8418 = vsel %vm1059, %v8406, %v8382
        %v8419 = vsel %vm1059, %v8408, %v8410
        %v8420 = vsel %vm1059, %v8410, %v8384
        %v8421 = vsel %vm1059, %v8412, %v8414
        %v8422 = vsel %vm1059, %v8414, %v8386
        %v8435 = vsel %vm1059, %v8380, %v8400
        %v8436 = vsel %vm1059, %v8382, %v8404
        %v8437 = vsel %vm1059, %v8384, %v8408
        %v8438 = vsel %vm1059, %v8386, %v8412
        %v8439 = vadd.f32 %v7817, %v8435
        %v8440 = vadd.f32 %v7818, %v8415
        %v8441 = vadd.f32 %v7819, %v8416
        %v8442 = vadd.f32 %v7820, %v8436
        %v8443 = vadd.f32 %v7821, %v8417
        %v8444 = vadd.f32 %v7822, %v8418
        %v8445 = vadd.f32 %v7823, %v8437
        %v8446 = vadd.f32 %v7824, %v8419
        %v8447 = vadd.f32 %v7825, %v8420
        %v8448 = vadd.f32 %v7826, %v8438
        %v8449 = vadd.f32 %v7827, %v8421
        %v8450 = vadd.f32 %v7828, %v8422
        %v8451 = vld [vmem:[#allocation3 + $0x60] sm:$0xff]
        %v8452 = vld [vmem:[#allocation3 + $0x68] sm:$0xff]
        %v8453 = vld [vmem:[#allocation3 + $0x70] sm:$0xff]
        %v8454 = vld [vmem:[#allocation3 + $0x78] sm:$0xff]
        %v8455 = vld [vmem:[#allocation3 + $0x80] sm:$0xff]
        %v8456 = vld [vmem:[#allocation3 + $0x88] sm:$0xff]
        %v8457 = vld [vmem:[#allocation3 + $0x90] sm:$0xff]
        %v8458 = vld [vmem:[#allocation3 + $0x98] sm:$0xff]
        %v8459 = vld [vmem:[#allocation3 + $0xa0] sm:$0xff]
        %v8460 = vld [vmem:[#allocation3 + $0xa8] sm:$0xff]
        %v8461 = vld [vmem:[#allocation3 + $0xb0] sm:$0xff]
        %v8462 = vld [vmem:[#allocation3 + $0xb8] sm:$0xff]
        %v8463 = vadd.f32 %v8439, %v8451
        %v8464 = vadd.f32 %v8440, %v8452
        %v8465 = vadd.f32 %v8441, %v8453
        %v8466 = vadd.f32 %v8442, %v8454
        %v8467 = vadd.f32 %v8443, %v8455
        %v8468 = vadd.f32 %v8444, %v8456
        %v8469 = vadd.f32 %v8445, %v8457
        %v8470 = vadd.f32 %v8446, %v8458
        %v8471 = vadd.f32 %v8447, %v8459
        %v8472 = vadd.f32 %v8448, %v8460
        %v8473 = vadd.f32 %v8449, %v8461
        %v8474 = vadd.f32 %v8450, %v8462
        %v8475 = vld [vmem:[#allocation3 + $0xc0] sm:$0xff]
        %v8476 = vld [vmem:[#allocation3 + $0xc8] sm:$0xff]
        %v8477 = vld [vmem:[#allocation3 + $0xd0] sm:$0xff]
        %v8478 = vld [vmem:[#allocation3 + $0xd8] sm:$0xff]
        %v8479 = vld [vmem:[#allocation3 + $0xe0] sm:$0xff]
        %v8480 = vld [vmem:[#allocation3 + $0xe8] sm:$0xff]
        %v8481 = vld [vmem:[#allocation3 + $0xf0] sm:$0xff]
        %v8482 = vld [vmem:[#allocation3 + $0xf8] sm:$0xff]
        %v8483 = vld [vmem:[#allocation3 + $0x100] sm:$0xff]
        %v8484 = vld [vmem:[#allocation3 + $0x108] sm:$0xff]
        %v8485 = vld [vmem:[#allocation3 + $0x110] sm:$0xff]
        %v8486 = vld [vmem:[#allocation3 + $0x118] sm:$0xff]
        %8499 = vrot.lane.b32.xlu0 %v8475, 127
        %v8500 = vpop.permute.xlu0 %8499
        %8501 = vrot.lane.b32.xlu0 %v8476, 127
        %v8502 = vpop.permute.xlu0 %8501
        %8503 = vrot.lane.b32.xlu0 %v8477, 127
        %v8504 = vpop.permute.xlu0 %8503
        %8505 = vrot.lane.b32.xlu0 %v8478, 127
        %v8506 = vpop.permute.xlu0 %8505
        %8507 = vrot.lane.b32.xlu0 %v8479, 127
        %v8508 = vpop.permute.xlu0 %8507
        %8509 = vrot.lane.b32.xlu0 %v8480, 127
        %v8510 = vpop.permute.xlu0 %8509
        %8511 = vrot.lane.b32.xlu0 %v8481, 127
        %v8512 = vpop.permute.xlu0 %8511
        %8513 = vrot.lane.b32.xlu0 %v8482, 127
        %v8514 = vpop.permute.xlu0 %8513
        %8515 = vrot.lane.b32.xlu0 %v8483, 127
        %v8516 = vpop.permute.xlu0 %8515
        %8517 = vrot.lane.b32.xlu0 %v8484, 127
        %v8518 = vpop.permute.xlu0 %8517
        %8519 = vrot.lane.b32.xlu0 %v8485, 127
        %v8520 = vpop.permute.xlu0 %8519
        %8521 = vrot.lane.b32.xlu0 %v8486, 127
        %v8522 = vpop.permute.xlu0 %8521
        %v8523 = vsel %vm1168, %v8500, %v8502
        %v8524 = vsel %vm1168, %v8502, %v8504
        %v8525 = vsel %vm1168, %v8506, %v8508
        %v8526 = vsel %vm1168, %v8508, %v8510
        %v8527 = vsel %vm1168, %v8512, %v8514
        %v8528 = vsel %vm1168, %v8514, %v8516
        %v8529 = vsel %vm1168, %v8518, %v8520
        %v8530 = vsel %vm1168, %v8520, %v8522
        %v8547 = vsel %vm1168, %v8504, %v8500
        %v8548 = vsel %vm1168, %v8510, %v8506
        %v8549 = vsel %vm1168, %v8516, %v8512
        %v8550 = vsel %vm1168, %v8522, %v8518
        %v8551 = vadd.f32 %v8463, %v8523
        %v8552 = vadd.f32 %v8464, %v8524
        %v8553 = vadd.f32 %v8465, %v8547
        %v8554 = vadd.f32 %v8466, %v8525
        %v8555 = vadd.f32 %v8467, %v8526
        %v8556 = vadd.f32 %v8468, %v8548
        %v8557 = vadd.f32 %v8469, %v8527
        %v8558 = vadd.f32 %v8470, %v8528
        %v8559 = vadd.f32 %v8471, %v8549
        %v8560 = vadd.f32 %v8472, %v8529
        %v8561 = vadd.f32 %v8473, %v8530
        %v8562 = vadd.f32 %v8474, %v8550
        %v8563 = vld [vmem:[%s7030 + $0xc0] sm:$0xff]
        %v8564 = vld [vmem:[%s7030 + $0xc8] sm:$0xff]
        %v8565 = vld [vmem:[%s7030 + $0xd0] sm:$0xff]
        %v8566 = vld [vmem:[%s7030 + $0xd8] sm:$0xff]
        %v8567 = vld [vmem:[%s7030 + $0xe0] sm:$0xff]
        %v8568 = vld [vmem:[%s7030 + $0xe8] sm:$0xff]
        %v8569 = vld [vmem:[%s7030 + $0xf0] sm:$0xff]
        %v8570 = vld [vmem:[%s7030 + $0xf8] sm:$0xff]
        %v8571 = vld [vmem:[%s7030 + $0x100] sm:$0xff]
        %v8572 = vld [vmem:[%s7030 + $0x108] sm:$0xff]
        %v8573 = vld [vmem:[%s7030 + $0x110] sm:$0xff]
        %v8574 = vld [vmem:[%s7030 + $0x118] sm:$0xff]
        %v8575 = vld [vmem:[#allocation2] sm:$0xff]
        %v8576 = vld [vmem:[#allocation2 + $0x8] sm:$0xf]
        %v8577 = vld [vmem:[#allocation2 + $0xc] sm:$0xff]
        %v8578 = vld [vmem:[#allocation2 + $0x14] sm:$0xf]
        %v8579 = vld [vmem:[#allocation2 + $0x18] sm:$0xff]
        %v8580 = vld [vmem:[#allocation2 + $0x20] sm:$0xf]
        %v8581 = vld [vmem:[#allocation2 + $0x24] sm:$0xff]
        %v8582 = vld [vmem:[#allocation2 + $0x2c] sm:$0xf]
        %v8583 = vld [vmem:[#allocation2 + $0x30] sm:$0xff]
        %v8584 = vld [vmem:[#allocation2 + $0x38] sm:$0xf]
        %v8585 = vld [vmem:[#allocation2 + $0x3c] sm:$0xff]
        %v8586 = vld [vmem:[#allocation2 + $0x44] sm:$0xf]
        %v8587 = vld [vmem:[#allocation2 + $0x48] sm:$0xff]
        %v8588 = vld [vmem:[#allocation2 + $0x50] sm:$0xf]
        %v8589 = vld [vmem:[#allocation2 + $0x54] sm:$0xff]
        %v8590 = vld [vmem:[#allocation2 + $0x5c] sm:$0xf]
        %v8591 = vld [vmem:[#allocation2 + $0x60] sm:$0xff]
        %v8592 = vld [vmem:[#allocation2 + $0x68] sm:$0xf]
        %v8593 = vld [vmem:[#allocation2 + $0x6c] sm:$0xff]
        %v8594 = vld [vmem:[#allocation2 + $0x74] sm:$0xf]
        %v8595 = vld [vmem:[#allocation2 + $0x78] sm:$0xff]
        %v8596 = vld [vmem:[#allocation2 + $0x80] sm:$0xf]
        %v8597 = vld [vmem:[#allocation2 + $0x84] sm:$0xff]
        %v8598 = vld [vmem:[#allocation2 + $0x8c] sm:$0xf]
        %v8599 = vld [vmem:[#allocation2 + $0x90] sm:$0xff]
        %v8600 = vld [vmem:[#allocation2 + $0x98] sm:$0xf]
        %v8601 = vld [vmem:[#allocation2 + $0x9c] sm:$0xff]
        %v8602 = vld [vmem:[#allocation2 + $0xa4] sm:$0xf]
        %v8603 = vld [vmem:[#allocation2 + $0xa8] sm:$0xff]
        %v8604 = vld [vmem:[#allocation2 + $0xb0] sm:$0xf]
        %v8605 = vld [vmem:[#allocation2 + $0xb4] sm:$0xff]
        %v8606 = vld [vmem:[#allocation2 + $0xbc] sm:$0xf]
        %v8607 = vld [vmem:[#allocation2 + $0xc0] sm:$0xff]
        %v8608 = vld [vmem:[#allocation2 + $0xc8] sm:$0xf]
        %v8609 = vld [vmem:[#allocation2 + $0xcc] sm:$0xff]
        %v8610 = vld [vmem:[#allocation2 + $0xd4] sm:$0xf]
        %v8623 = vunpack.c.l.b16 %v8563
        %v8624 = vunpack.c.h.b16 %v8563
        %v8625 = vunpack.c.l.b16 %v8564
        %v8626 = vunpack.c.h.b16 %v8564
        %v8627 = vunpack.c.l.b16 %v8565
        %v8628 = vunpack.c.h.b16 %v8565
        %v8629 = vunpack.c.l.b16 %v8566
        %v8630 = vunpack.c.h.b16 %v8566
        %v8631 = vunpack.c.l.b16 %v8567
        %v8632 = vunpack.c.h.b16 %v8567
        %v8633 = vunpack.c.l.b16 %v8568
        %v8634 = vunpack.c.h.b16 %v8568
        %v8635 = vunpack.c.l.b16 %v8569
        %v8636 = vunpack.c.h.b16 %v8569
        %v8637 = vunpack.c.l.b16 %v8570
        %v8638 = vunpack.c.h.b16 %v8570
        %v8639 = vunpack.c.l.b16 %v8571
        %v8640 = vunpack.c.h.b16 %v8571
        %v8641 = vunpack.c.l.b16 %v8572
        %v8642 = vunpack.c.h.b16 %v8572
        %v8643 = vunpack.c.l.b16 %v8573
        %v8644 = vunpack.c.h.b16 %v8573
        %v8645 = vunpack.c.l.b16 %v8574
        %v8646 = vunpack.c.h.b16 %v8574
        %v8647 = vpack.c.b16 %v8625, %v8623
        %v8648 = vpack.c.b16 %v8626, %v8624
        %v8649 = vpack.c.b16 %v8629, %v8627
        %v8650 = vpack.c.b16 %v8630, %v8628
        %v8651 = vpack.c.b16 %v8633, %v8631
        %v8652 = vpack.c.b16 %v8634, %v8632
        %v8653 = vpack.c.b16 %v8637, %v8635
        %v8654 = vpack.c.b16 %v8638, %v8636
        %v8655 = vpack.c.b16 %v8641, %v8639
        %v8656 = vpack.c.b16 %v8642, %v8640
        %v8657 = vpack.c.b16 %v8645, %v8643
        %v8658 = vpack.c.b16 %v8646, %v8644
        %v8701 = vunpack.c.l.b16 %v8575
        %v8702 = vunpack.c.h.b16 %v8575
        %v8703 = vunpack.c.l.b16 %v8576
        %v8704 = vunpack.c.l.b16 %v8577
        %v8705 = vunpack.c.h.b16 %v8577
        %v8706 = vunpack.c.l.b16 %v8578
        %v8707 = vunpack.c.l.b16 %v8579
        %v8708 = vunpack.c.h.b16 %v8579
        %v8709 = vunpack.c.l.b16 %v8580
        %v8710 = vunpack.c.l.b16 %v8581
        %v8711 = vunpack.c.h.b16 %v8581
        %v8712 = vunpack.c.l.b16 %v8582
        %v8713 = vunpack.c.l.b16 %v8583
        %v8714 = vunpack.c.h.b16 %v8583
        %v8715 = vunpack.c.l.b16 %v8584
        %v8716 = vunpack.c.l.b16 %v8585
        %v8717 = vunpack.c.h.b16 %v8585
        %v8718 = vunpack.c.l.b16 %v8586
        %v8719 = vunpack.c.l.b16 %v8587
        %v8720 = vunpack.c.h.b16 %v8587
        %v8721 = vunpack.c.l.b16 %v8588
        %v8722 = vunpack.c.l.b16 %v8589
        %v8723 = vunpack.c.h.b16 %v8589
        %v8724 = vunpack.c.l.b16 %v8590
        %v8725 = vunpack.c.l.b16 %v8591
        %v8726 = vunpack.c.h.b16 %v8591
        %v8727 = vunpack.c.l.b16 %v8592
        %v8728 = vunpack.c.l.b16 %v8593
        %v8729 = vunpack.c.h.b16 %v8593
        %v8730 = vunpack.c.l.b16 %v8594
        %v8731 = vunpack.c.l.b16 %v8595
        %v8732 = vunpack.c.h.b16 %v8595
        %v8733 = vunpack.c.l.b16 %v8596
        %v8734 = vunpack.c.l.b16 %v8597
        %v8735 = vunpack.c.h.b16 %v8597
        %v8736 = vunpack.c.l.b16 %v8598
        %v8737 = vunpack.c.l.b16 %v8599
        %v8738 = vunpack.c.h.b16 %v8599
        %v8739 = vunpack.c.l.b16 %v8600
        %v8740 = vunpack.c.l.b16 %v8601
        %v8741 = vunpack.c.h.b16 %v8601
        %v8742 = vunpack.c.l.b16 %v8602
        %v8743 = vunpack.c.l.b16 %v8603
        %v8744 = vunpack.c.h.b16 %v8603
        %v8745 = vunpack.c.l.b16 %v8604
        %v8746 = vunpack.c.l.b16 %v8605
        %v8747 = vunpack.c.h.b16 %v8605
        %v8748 = vunpack.c.l.b16 %v8606
        %v8749 = vunpack.c.l.b16 %v8607
        %v8750 = vunpack.c.h.b16 %v8607
        %v8751 = vunpack.c.l.b16 %v8608
        %v8752 = vunpack.c.l.b16 %v8609
        %v8753 = vunpack.c.h.b16 %v8609
        %v8754 = vunpack.c.l.b16 %v8610
        %v8755 = vpack.c.b16 %v8704, %v8701
        %v8756 = vpack.c.b16 %v8705, %v8702
        %v8757 = vpack.c.b16 %v8706, %v8703
        %v8758 = vpack.c.b16 %v8710, %v8707
        %v8759 = vpack.c.b16 %v8711, %v8708
        %v8760 = vpack.c.b16 %v8712, %v8709
        %v8761 = vpack.c.b16 %v8716, %v8713
        %v8762 = vpack.c.b16 %v8717, %v8714
        %v8763 = vpack.c.b16 %v8718, %v8715
        %v8764 = vpack.c.b16 %v8722, %v8719
        %v8765 = vpack.c.b16 %v8723, %v8720
        %v8766 = vpack.c.b16 %v8724, %v8721
        %v8767 = vpack.c.b16 %v8728, %v8725
        %v8768 = vpack.c.b16 %v8729, %v8726
        %v8769 = vpack.c.b16 %v8730, %v8727
        %v8770 = vpack.c.b16 %v8734, %v8731
        %v8771 = vpack.c.b16 %v8735, %v8732
        %v8772 = vpack.c.b16 %v8736, %v8733
        %v8773 = vpack.c.b16 %v8740, %v8737
        %v8774 = vpack.c.b16 %v8741, %v8738
        %v8775 = vpack.c.b16 %v8742, %v8739
        %v8776 = vpack.c.b16 %v8746, %v8743
        %v8777 = vpack.c.b16 %v8747, %v8744
        %v8778 = vpack.c.b16 %v8748, %v8745
        %v8779 = vpack.c.b16 %v8752, %v8749
        %v8780 = vpack.c.b16 %v8753, %v8750
        %v8781 = vpack.c.b16 %v8754, %v8751
        %v8810 = vsel %vm335, %v8648, 0
        %v8813 = vsel %vm335, %v8650, 0
        %v8816 = vsel %vm335, %v8652, 0
        %v8819 = vsel %vm335, %v8654, 0
        %v8822 = vsel %vm335, %v8656, 0
        %v8825 = vsel %vm335, %v8658, 0
        %8827 = vmatpush.bf16.msra.mxu0 %v8776
        %8828 = vmatpush.bf16.msra.mxu0 %v8773
        %8829 = vmatpush.bf16.msra.mxu0 %v8770
        %8830 = vmatpush.bf16.msra.mxu0 %v8767
        %8831 = vmatpush.bf16.msra.mxu0 %v8764
        %8832 = vmatpush.bf16.msra.mxu0 %v8761
        %8833 = vmatpush.bf16.msra.mxu0 %v8758
        %8834 = vmatpush.bf16.msra.mxu0 %v8755
        %8835 = vmatmul.bf16.gmra.mxu0 %v8647
        %v8836 = vpop.f32.mrf.mxu0
        %v8837 = vadd.f32 0.0, %v8836
        %v8838 = vpop.f32.mrf.mxu0
        %v8839 = vadd.f32 0.0, %v8838
        %8840 = vmatmul.bf16.gmra.mxu0 %v8649
        %v8841 = vpop.f32.mrf.mxu0
        %v8842 = vadd.f32 0.0, %v8841
        %v8843 = vpop.f32.mrf.mxu0
        %v8844 = vadd.f32 0.0, %v8843
        %8845 = vmatmul.bf16.gmra.mxu0 %v8651
        %v8846 = vpop.f32.mrf.mxu0
        %v8847 = vadd.f32 0.0, %v8846
        %v8848 = vpop.f32.mrf.mxu0
        %v8849 = vadd.f32 0.0, %v8848
        %8850 = vmatmul.bf16.gmra.mxu0 %v8653
        %v8851 = vpop.f32.mrf.mxu0
        %v8852 = vadd.f32 0.0, %v8851
        %v8853 = vpop.f32.mrf.mxu0
        %v8854 = vadd.f32 0.0, %v8853
        %8855 = vmatmul.bf16.gmra.mxu0 %v8655
        %v8856 = vpop.f32.mrf.mxu0
        %v8857 = vadd.f32 0.0, %v8856
        %v8858 = vpop.f32.mrf.mxu0
        %v8859 = vadd.f32 0.0, %v8858
        %8860 = vmatmul.bf16.gmra.mxu0 %v8657
        %v8861 = vpop.f32.mrf.mxu0
        %v8862 = vadd.f32 0.0, %v8861
        %v8863 = vpop.f32.mrf.mxu0
        %v8864 = vadd.f32 0.0, %v8863
        %8865 = vdwg.mxu0
        %8866 = vmatpush.bf16.msra.mxu0 0
        %8867 = vmatpush.bf16.msra.mxu0 0
        %8868 = vmatpush.bf16.msra.mxu0 0
        %8869 = vmatpush.bf16.msra.mxu0 0
        %8870 = vmatpush.bf16.msra.mxu0 0
        %8871 = vmatpush.bf16.msra.mxu0 0
        %8872 = vmatpush.bf16.msra.mxu0 0
        %8873 = vmatpush.bf16.msra.mxu0 %v8779
        %8874 = vmatmul.bf16.gmra.mxu0 %v8810
        %v8875 = vpop.f32.mrf.mxu0
        %v8876 = vadd.f32 %v8837, %v8875
        %v8877 = vpop.f32.mrf.mxu0
        %v8878 = vadd.f32 %v8839, %v8877
        %8879 = vmatmul.bf16.gmra.mxu0 %v8813
        %v8880 = vpop.f32.mrf.mxu0
        %v8881 = vadd.f32 %v8842, %v8880
        %v8882 = vpop.f32.mrf.mxu0
        %v8883 = vadd.f32 %v8844, %v8882
        %8884 = vmatmul.bf16.gmra.mxu0 %v8816
        %v8885 = vpop.f32.mrf.mxu0
        %v8886 = vadd.f32 %v8847, %v8885
        %v8887 = vpop.f32.mrf.mxu0
        %v8888 = vadd.f32 %v8849, %v8887
        %8889 = vmatmul.bf16.gmra.mxu0 %v8819
        %v8890 = vpop.f32.mrf.mxu0
        %v8891 = vadd.f32 %v8852, %v8890
        %v8892 = vpop.f32.mrf.mxu0
        %v8893 = vadd.f32 %v8854, %v8892
        %8894 = vmatmul.bf16.gmra.mxu0 %v8822
        %v8895 = vpop.f32.mrf.mxu0
        %v8896 = vadd.f32 %v8857, %v8895
        %v8897 = vpop.f32.mrf.mxu0
        %v8898 = vadd.f32 %v8859, %v8897
        %8899 = vmatmul.bf16.gmra.mxu0 %v8825
        %v8900 = vpop.f32.mrf.mxu0
        %v8901 = vadd.f32 %v8862, %v8900
        %v8902 = vpop.f32.mrf.mxu0
        %v8903 = vadd.f32 %v8864, %v8902
        %8904 = vdwg.mxu0
        %8905 = vmatpush.bf16.msra.mxu0 %v8777
        %8906 = vmatpush.bf16.msra.mxu0 %v8774
        %8907 = vmatpush.bf16.msra.mxu0 %v8771
        %8908 = vmatpush.bf16.msra.mxu0 %v8768
        %8909 = vmatpush.bf16.msra.mxu0 %v8765
        %8910 = vmatpush.bf16.msra.mxu0 %v8762
        %8911 = vmatpush.bf16.msra.mxu0 %v8759
        %8912 = vmatpush.bf16.msra.mxu0 %v8756
        %8913 = vmatmul.bf16.gmra.mxu0 %v8647
        %v8914 = vpop.f32.mrf.mxu0
        %v8915 = vadd.f32 0.0, %v8914
        %v8916 = vpop.f32.mrf.mxu0
        %v8917 = vadd.f32 0.0, %v8916
        %8918 = vmatmul.bf16.gmra.mxu0 %v8649
        %v8919 = vpop.f32.mrf.mxu0
        %v8920 = vadd.f32 0.0, %v8919
        %v8921 = vpop.f32.mrf.mxu0
        %v8922 = vadd.f32 0.0, %v8921
        %8923 = vmatmul.bf16.gmra.mxu0 %v8651
        %v8924 = vpop.f32.mrf.mxu0
        %v8925 = vadd.f32 0.0, %v8924
        %v8926 = vpop.f32.mrf.mxu0
        %v8927 = vadd.f32 0.0, %v8926
        %8928 = vmatmul.bf16.gmra.mxu0 %v8653
        %v8929 = vpop.f32.mrf.mxu0
        %v8930 = vadd.f32 0.0, %v8929
        %v8931 = vpop.f32.mrf.mxu0
        %v8932 = vadd.f32 0.0, %v8931
        %8933 = vmatmul.bf16.gmra.mxu0 %v8655
        %v8934 = vpop.f32.mrf.mxu0
        %v8935 = vadd.f32 0.0, %v8934
        %v8936 = vpop.f32.mrf.mxu0
        %v8937 = vadd.f32 0.0, %v8936
        %8938 = vmatmul.bf16.gmra.mxu0 %v8657
        %v8939 = vpop.f32.mrf.mxu0
        %v8940 = vadd.f32 0.0, %v8939
        %v8941 = vpop.f32.mrf.mxu0
        %v8942 = vadd.f32 0.0, %v8941
        %8943 = vdwg.mxu0
        %8944 = vmatpush.bf16.msra.mxu0 0
        %8945 = vmatpush.bf16.msra.mxu0 0
        %8946 = vmatpush.bf16.msra.mxu0 0
        %8947 = vmatpush.bf16.msra.mxu0 0
        %8948 = vmatpush.bf16.msra.mxu0 0
        %8949 = vmatpush.bf16.msra.mxu0 0
        %8950 = vmatpush.bf16.msra.mxu0 0
        %8951 = vmatpush.bf16.msra.mxu0 %v8780
        %8952 = vmatmul.bf16.gmra.mxu0 %v8810
        %v8953 = vpop.f32.mrf.mxu0
        %v8954 = vadd.f32 %v8915, %v8953
        %v8955 = vpop.f32.mrf.mxu0
        %v8956 = vadd.f32 %v8917, %v8955
        %8957 = vmatmul.bf16.gmra.mxu0 %v8813
        %v8958 = vpop.f32.mrf.mxu0
        %v8959 = vadd.f32 %v8920, %v8958
        %v8960 = vpop.f32.mrf.mxu0
        %v8961 = vadd.f32 %v8922, %v8960
        %8962 = vmatmul.bf16.gmra.mxu0 %v8816
        %v8963 = vpop.f32.mrf.mxu0
        %v8964 = vadd.f32 %v8925, %v8963
        %v8965 = vpop.f32.mrf.mxu0
        %v8966 = vadd.f32 %v8927, %v8965
        %8967 = vmatmul.bf16.gmra.mxu0 %v8819
        %v8968 = vpop.f32.mrf.mxu0
        %v8969 = vadd.f32 %v8930, %v8968
        %v8970 = vpop.f32.mrf.mxu0
        %v8971 = vadd.f32 %v8932, %v8970
        %8972 = vmatmul.bf16.gmra.mxu0 %v8822
        %v8973 = vpop.f32.mrf.mxu0
        %v8974 = vadd.f32 %v8935, %v8973
        %v8975 = vpop.f32.mrf.mxu0
        %v8976 = vadd.f32 %v8937, %v8975
        %8977 = vmatmul.bf16.gmra.mxu0 %v8825
        %v8978 = vpop.f32.mrf.mxu0
        %v8979 = vadd.f32 %v8940, %v8978
        %v8980 = vpop.f32.mrf.mxu0
        %v8981 = vadd.f32 %v8942, %v8980
        %8982 = vdwg.mxu0
        %8983 = vmatpush.bf16.msra.mxu0 %v8778
        %8984 = vmatpush.bf16.msra.mxu0 %v8775
        %8985 = vmatpush.bf16.msra.mxu0 %v8772
        %8986 = vmatpush.bf16.msra.mxu0 %v8769
        %8987 = vmatpush.bf16.msra.mxu0 %v8766
        %8988 = vmatpush.bf16.msra.mxu0 %v8763
        %8989 = vmatpush.bf16.msra.mxu0 %v8760
        %8990 = vmatpush.bf16.msra.mxu0 %v8757
        %8991 = vmatmul.bf16.gmra.mxu0 %v8647
        %v8992 = vpop.f32.mrf.mxu0
        %v8993 = vadd.f32 0.0, %v8992
        %v8994 = vpop.f32.mrf.mxu0
        %v8995 = vadd.f32 0.0, %v8994
        %8996 = vmatmul.bf16.gmra.mxu0 %v8649
        %v8997 = vpop.f32.mrf.mxu0
        %v8998 = vadd.f32 0.0, %v8997
        %v8999 = vpop.f32.mrf.mxu0
        %v9000 = vadd.f32 0.0, %v8999
        %9001 = vmatmul.bf16.gmra.mxu0 %v8651
        %v9002 = vpop.f32.mrf.mxu0
        %v9003 = vadd.f32 0.0, %v9002
        %v9004 = vpop.f32.mrf.mxu0
        %v9005 = vadd.f32 0.0, %v9004
        %9006 = vmatmul.bf16.gmra.mxu0 %v8653
        %v9007 = vpop.f32.mrf.mxu0
        %v9008 = vadd.f32 0.0, %v9007
        %v9009 = vpop.f32.mrf.mxu0
        %v9010 = vadd.f32 0.0, %v9009
        %9011 = vmatmul.bf16.gmra.mxu0 %v8655
        %v9012 = vpop.f32.mrf.mxu0
        %v9013 = vadd.f32 0.0, %v9012
        %v9014 = vpop.f32.mrf.mxu0
        %v9015 = vadd.f32 0.0, %v9014
        %9016 = vmatmul.bf16.gmra.mxu0 %v8657
        %v9017 = vpop.f32.mrf.mxu0
        %v9018 = vadd.f32 0.0, %v9017
        %v9019 = vpop.f32.mrf.mxu0
        %v9020 = vadd.f32 0.0, %v9019
        %9021 = vdwg.mxu0
        %9022 = vmatpush.bf16.msra.mxu0 0
        %9023 = vmatpush.bf16.msra.mxu0 0
        %9024 = vmatpush.bf16.msra.mxu0 0
        %9025 = vmatpush.bf16.msra.mxu0 0
        %9026 = vmatpush.bf16.msra.mxu0 0
        %9027 = vmatpush.bf16.msra.mxu0 0
        %9028 = vmatpush.bf16.msra.mxu0 0
        %9029 = vmatpush.bf16.msra.mxu0 %v8781
        %9030 = vmatmul.bf16.gmra.mxu0 %v8810
        %v9031 = vpop.f32.mrf.mxu0
        %v9032 = vadd.f32 %v8993, %v9031
        %v9033 = vpop.f32.mrf.mxu0
        %v9034 = vadd.f32 %v8995, %v9033
        %9035 = vmatmul.bf16.gmra.mxu0 %v8813
        %v9036 = vpop.f32.mrf.mxu0
        %v9037 = vadd.f32 %v8998, %v9036
        %v9038 = vpop.f32.mrf.mxu0
        %v9039 = vadd.f32 %v9000, %v9038
        %9040 = vmatmul.bf16.gmra.mxu0 %v8816
        %v9041 = vpop.f32.mrf.mxu0
        %v9042 = vadd.f32 %v9003, %v9041
        %v9043 = vpop.f32.mrf.mxu0
        %v9044 = vadd.f32 %v9005, %v9043
        %9045 = vmatmul.bf16.gmra.mxu0 %v8819
        %v9046 = vpop.f32.mrf.mxu0
        %v9047 = vadd.f32 %v9008, %v9046
        %v9048 = vpop.f32.mrf.mxu0
        %v9049 = vadd.f32 %v9010, %v9048
        %9050 = vmatmul.bf16.gmra.mxu0 %v8822
        %v9051 = vpop.f32.mrf.mxu0
        %v9052 = vadd.f32 %v9013, %v9051
        %v9053 = vpop.f32.mrf.mxu0
        %v9054 = vadd.f32 %v9015, %v9053
        %9055 = vmatmul.bf16.gmra.mxu0 %v8825
        %v9056 = vpop.f32.mrf.mxu0
        %v9057 = vadd.f32 %v9018, %v9056
        %v9058 = vpop.f32.mrf.mxu0
        %v9059 = vadd.f32 %v9020, %v9058
        %9060 = vdwg.mxu0
        %9061 = vst [vmem:[#allocation3] sm:$0xff] %v8876
        %9062 = vst [vmem:[#allocation3 + $0x8] sm:$0xff] %v8954
        %9063 = vst [vmem:[#allocation3 + $0x10] sm:$0xff] %v9032
        %9064 = vst [vmem:[#allocation3 + $0x18] sm:$0xff] %v8878
        %9065 = vst [vmem:[#allocation3 + $0x20] sm:$0xff] %v8956
        %9066 = vst [vmem:[#allocation3 + $0x28] sm:$0xff] %v9034
        %9067 = vst [vmem:[#allocation3 + $0x30] sm:$0xff] %v8881
        %9068 = vst [vmem:[#allocation3 + $0x38] sm:$0xff] %v8959
        %9069 = vst [vmem:[#allocation3 + $0x40] sm:$0xff] %v9037
        %9070 = vst [vmem:[#allocation3 + $0x48] sm:$0xff] %v8883
        %9071 = vst [vmem:[#allocation3 + $0x50] sm:$0xff] %v8961
        %9072 = vst [vmem:[#allocation3 + $0x58] sm:$0xff] %v9039
        %9073 = vst [vmem:[#allocation3 + $0x60] sm:$0xff] %v8886
        %9074 = vst [vmem:[#allocation3 + $0x68] sm:$0xff] %v8964
        %9075 = vst [vmem:[#allocation3 + $0x70] sm:$0xff] %v9042
        %9076 = vst [vmem:[#allocation3 + $0x78] sm:$0xff] %v8888
        %9077 = vst [vmem:[#allocation3 + $0x80] sm:$0xff] %v8966
        %9078 = vst [vmem:[#allocation3 + $0x88] sm:$0xff] %v9044
        %9079 = vst [vmem:[#allocation3 + $0x90] sm:$0xff] %v8891
        %9080 = vst [vmem:[#allocation3 + $0x98] sm:$0xff] %v8969
        %9081 = vst [vmem:[#allocation3 + $0xa0] sm:$0xff] %v9047
        %9082 = vst [vmem:[#allocation3 + $0xa8] sm:$0xff] %v8893
        %9083 = vst [vmem:[#allocation3 + $0xb0] sm:$0xff] %v8971
        %9084 = vst [vmem:[#allocation3 + $0xb8] sm:$0xff] %v9049
        %9085 = vst [vmem:[#allocation3 + $0xc0] sm:$0xff] %v8896
        %9086 = vst [vmem:[#allocation3 + $0xc8] sm:$0xff] %v8974
        %9087 = vst [vmem:[#allocation3 + $0xd0] sm:$0xff] %v9052
        %9088 = vst [vmem:[#allocation3 + $0xd8] sm:$0xff] %v8898
        %9089 = vst [vmem:[#allocation3 + $0xe0] sm:$0xff] %v8976
        %9090 = vst [vmem:[#allocation3 + $0xe8] sm:$0xff] %v9054
        %9091 = vst [vmem:[#allocation3 + $0xf0] sm:$0xff] %v8901
        %9092 = vst [vmem:[#allocation3 + $0xf8] sm:$0xff] %v8979
        %9093 = vst [vmem:[#allocation3 + $0x100] sm:$0xff] %v9057
        %9094 = vst [vmem:[#allocation3 + $0x108] sm:$0xff] %v8903
        %9095 = vst [vmem:[#allocation3 + $0x110] sm:$0xff] %v8981
        %9096 = vst [vmem:[#allocation3 + $0x118] sm:$0xff] %v9059
        %v9097 = vld [vmem:[#allocation3] sm:$0xff]
        %v9098 = vld [vmem:[#allocation3 + $0x8] sm:$0xff]
        %v9099 = vld [vmem:[#allocation3 + $0x10] sm:$0xff]
        %v9100 = vld [vmem:[#allocation3 + $0x18] sm:$0xff]
        %v9101 = vld [vmem:[#allocation3 + $0x20] sm:$0xff]
        %v9102 = vld [vmem:[#allocation3 + $0x28] sm:$0xff]
        %v9103 = vld [vmem:[#allocation3 + $0x30] sm:$0xff]
        %v9104 = vld [vmem:[#allocation3 + $0x38] sm:$0xff]
        %v9105 = vld [vmem:[#allocation3 + $0x40] sm:$0xff]
        %v9106 = vld [vmem:[#allocation3 + $0x48] sm:$0xff]
        %v9107 = vld [vmem:[#allocation3 + $0x50] sm:$0xff]
        %v9108 = vld [vmem:[#allocation3 + $0x58] sm:$0xff]
        %9121 = vrot.lane.b32.xlu0 %v9097, 111
        %v9122 = vpop.permute.xlu0 %9121
        %9123 = vrot.lane.b32.xlu0 %v9098, 111
        %v9124 = vpop.permute.xlu0 %9123
        %9125 = vrot.lane.b32.xlu0 %v9099, 111
        %v9126 = vpop.permute.xlu0 %9125
        %9127 = vrot.lane.b32.xlu0 %v9100, 111
        %v9128 = vpop.permute.xlu0 %9127
        %9129 = vrot.lane.b32.xlu0 %v9101, 111
        %v9130 = vpop.permute.xlu0 %9129
        %9131 = vrot.lane.b32.xlu0 %v9102, 111
        %v9132 = vpop.permute.xlu0 %9131
        %9133 = vrot.lane.b32.xlu0 %v9103, 111
        %v9134 = vpop.permute.xlu0 %9133
        %9135 = vrot.lane.b32.xlu0 %v9104, 111
        %v9136 = vpop.permute.xlu0 %9135
        %9137 = vrot.lane.b32.xlu0 %v9105, 111
        %v9138 = vpop.permute.xlu0 %9137
        %9139 = vrot.lane.b32.xlu0 %v9106, 111
        %v9140 = vpop.permute.xlu0 %9139
        %9141 = vrot.lane.b32.xlu0 %v9107, 111
        %v9142 = vpop.permute.xlu0 %9141
        %9143 = vrot.lane.b32.xlu0 %v9108, 111
        %v9144 = vpop.permute.xlu0 %9143
        %v9145 = vsel %vm1490, %v9122, %v9124
        %v9146 = vsel %vm1490, %v9124, %v9126
        %v9147 = vsel %vm1490, %v9128, %v9130
        %v9148 = vsel %vm1490, %v9130, %v9132
        %v9149 = vsel %vm1490, %v9134, %v9136
        %v9150 = vsel %vm1490, %v9136, %v9138
        %v9151 = vsel %vm1490, %v9140, %v9142
        %v9152 = vsel %vm1490, %v9142, %v9144
        %v9169 = vsel %vm1490, %v9126, %v9122
        %v9170 = vsel %vm1490, %v9132, %v9128
        %v9171 = vsel %vm1490, %v9138, %v9134
        %v9172 = vsel %vm1490, %v9144, %v9140
        %v9173 = vadd.f32 %v8551, %v9145
        %v9174 = vadd.f32 %v8552, %v9146
        %v9175 = vadd.f32 %v8553, %v9169
        %v9176 = vadd.f32 %v8554, %v9147
        %v9177 = vadd.f32 %v8555, %v9148
        %v9178 = vadd.f32 %v8556, %v9170
        %v9179 = vadd.f32 %v8557, %v9149
        %v9180 = vadd.f32 %v8558, %v9150
        %v9181 = vadd.f32 %v8559, %v9171
        %v9182 = vadd.f32 %v8560, %v9151
        %v9183 = vadd.f32 %v8561, %v9152
        %v9184 = vadd.f32 %v8562, %v9172
        %v9185 = vld [vmem:[#allocation3 + $0x60] sm:$0xff]
        %v9186 = vld [vmem:[#allocation3 + $0x68] sm:$0xff]
        %v9187 = vld [vmem:[#allocation3 + $0x70] sm:$0xff]
        %v9188 = vld [vmem:[#allocation3 + $0x78] sm:$0xff]
        %v9189 = vld [vmem:[#allocation3 + $0x80] sm:$0xff]
        %v9190 = vld [vmem:[#allocation3 + $0x88] sm:$0xff]
        %v9191 = vld [vmem:[#allocation3 + $0x90] sm:$0xff]
        %v9192 = vld [vmem:[#allocation3 + $0x98] sm:$0xff]
        %v9193 = vld [vmem:[#allocation3 + $0xa0] sm:$0xff]
        %v9194 = vld [vmem:[#allocation3 + $0xa8] sm:$0xff]
        %v9195 = vld [vmem:[#allocation3 + $0xb0] sm:$0xff]
        %v9196 = vld [vmem:[#allocation3 + $0xb8] sm:$0xff]
        %9209 = vrot.lane.b32.xlu0 %v9185, 110
        %v9210 = vpop.permute.xlu0 %9209
        %9211 = vrot.lane.b32.xlu0 %v9186, 110
        %v9212 = vpop.permute.xlu0 %9211
        %9213 = vrot.lane.b32.xlu0 %v9187, 110
        %v9214 = vpop.permute.xlu0 %9213
        %9215 = vrot.lane.b32.xlu0 %v9188, 110
        %v9216 = vpop.permute.xlu0 %9215
        %9217 = vrot.lane.b32.xlu0 %v9189, 110
        %v9218 = vpop.permute.xlu0 %9217
        %9219 = vrot.lane.b32.xlu0 %v9190, 110
        %v9220 = vpop.permute.xlu0 %9219
        %9221 = vrot.lane.b32.xlu0 %v9191, 110
        %v9222 = vpop.permute.xlu0 %9221
        %9223 = vrot.lane.b32.xlu0 %v9192, 110
        %v9224 = vpop.permute.xlu0 %9223
        %9225 = vrot.lane.b32.xlu0 %v9193, 110
        %v9226 = vpop.permute.xlu0 %9225
        %9227 = vrot.lane.b32.xlu0 %v9194, 110
        %v9228 = vpop.permute.xlu0 %9227
        %9229 = vrot.lane.b32.xlu0 %v9195, 110
        %v9230 = vpop.permute.xlu0 %9229
        %9231 = vrot.lane.b32.xlu0 %v9196, 110
        %v9232 = vpop.permute.xlu0 %9231
        %v9233 = vsel %vm1579, %v9210, %v9212
        %v9234 = vsel %vm1579, %v9212, %v9214
        %v9235 = vsel %vm1579, %v9216, %v9218
        %v9236 = vsel %vm1579, %v9218, %v9220
        %v9237 = vsel %vm1579, %v9222, %v9224
        %v9238 = vsel %vm1579, %v9224, %v9226
        %v9239 = vsel %vm1579, %v9228, %v9230
        %v9240 = vsel %vm1579, %v9230, %v9232
        %v9257 = vsel %vm1579, %v9214, %v9210
        %v9258 = vsel %vm1579, %v9220, %v9216
        %v9259 = vsel %vm1579, %v9226, %v9222
        %v9260 = vsel %vm1579, %v9232, %v9228
        %v9261 = vadd.f32 %v9173, %v9233
        %v9262 = vadd.f32 %v9174, %v9234
        %v9263 = vadd.f32 %v9175, %v9257
        %v9264 = vadd.f32 %v9176, %v9235
        %v9265 = vadd.f32 %v9177, %v9236
        %v9266 = vadd.f32 %v9178, %v9258
        %v9267 = vadd.f32 %v9179, %v9237
        %v9268 = vadd.f32 %v9180, %v9238
        %v9269 = vadd.f32 %v9181, %v9259
        %v9270 = vadd.f32 %v9182, %v9239
        %v9271 = vadd.f32 %v9183, %v9240
        %v9272 = vadd.f32 %v9184, %v9260
        %v9273 = vld [vmem:[#allocation3 + $0xc0] sm:$0xff]
        %v9274 = vld [vmem:[#allocation3 + $0xc8] sm:$0xff]
        %v9275 = vld [vmem:[#allocation3 + $0xd0] sm:$0xff]
        %v9276 = vld [vmem:[#allocation3 + $0xd8] sm:$0xff]
        %v9277 = vld [vmem:[#allocation3 + $0xe0] sm:$0xff]
        %v9278 = vld [vmem:[#allocation3 + $0xe8] sm:$0xff]
        %v9279 = vld [vmem:[#allocation3 + $0xf0] sm:$0xff]
        %v9280 = vld [vmem:[#allocation3 + $0xf8] sm:$0xff]
        %v9281 = vld [vmem:[#allocation3 + $0x100] sm:$0xff]
        %v9282 = vld [vmem:[#allocation3 + $0x108] sm:$0xff]
        %v9283 = vld [vmem:[#allocation3 + $0x110] sm:$0xff]
        %v9284 = vld [vmem:[#allocation3 + $0x118] sm:$0xff]
        %9297 = vrot.lane.b32.xlu0 %v9273, 109
        %v9298 = vpop.permute.xlu0 %9297
        %9299 = vrot.lane.b32.xlu0 %v9274, 109
        %v9300 = vpop.permute.xlu0 %9299
        %9301 = vrot.lane.b32.xlu0 %v9275, 109
        %v9302 = vpop.permute.xlu0 %9301
        %9303 = vrot.lane.b32.xlu0 %v9276, 109
        %v9304 = vpop.permute.xlu0 %9303
        %9305 = vrot.lane.b32.xlu0 %v9277, 109
        %v9306 = vpop.permute.xlu0 %9305
        %9307 = vrot.lane.b32.xlu0 %v9278, 109
        %v9308 = vpop.permute.xlu0 %9307
        %9309 = vrot.lane.b32.xlu0 %v9279, 109
        %v9310 = vpop.permute.xlu0 %9309
        %9311 = vrot.lane.b32.xlu0 %v9280, 109
        %v9312 = vpop.permute.xlu0 %9311
        %9313 = vrot.lane.b32.xlu0 %v9281, 109
        %v9314 = vpop.permute.xlu0 %9313
        %9315 = vrot.lane.b32.xlu0 %v9282, 109
        %v9316 = vpop.permute.xlu0 %9315
        %9317 = vrot.lane.b32.xlu0 %v9283, 109
        %v9318 = vpop.permute.xlu0 %9317
        %9319 = vrot.lane.b32.xlu0 %v9284, 109
        %v9320 = vpop.permute.xlu0 %9319
        %v9321 = vsel %vm1668, %v9298, %v9300
        %v9322 = vsel %vm1668, %v9300, %v9302
        %v9323 = vsel %vm1668, %v9304, %v9306
        %v9324 = vsel %vm1668, %v9306, %v9308
        %v9325 = vsel %vm1668, %v9310, %v9312
        %v9326 = vsel %vm1668, %v9312, %v9314
        %v9327 = vsel %vm1668, %v9316, %v9318
        %v9328 = vsel %vm1668, %v9318, %v9320
        %v9345 = vsel %vm1668, %v9302, %v9298
        %v9346 = vsel %vm1668, %v9308, %v9304
        %v9347 = vsel %vm1668, %v9314, %v9310
        %v9348 = vsel %vm1668, %v9320, %v9316
        %v9349 = vadd.f32 %v9261, %v9321
        %v9350 = vadd.f32 %v9262, %v9322
        %v9351 = vadd.f32 %v9263, %v9345
        %v9352 = vadd.f32 %v9264, %v9323
        %v9353 = vadd.f32 %v9265, %v9324
        %v9354 = vadd.f32 %v9266, %v9346
        %v9355 = vadd.f32 %v9267, %v9325
        %v9356 = vadd.f32 %v9268, %v9326
        %v9357 = vadd.f32 %v9269, %v9347
        %v9358 = vadd.f32 %v9270, %v9327
        %v9359 = vadd.f32 %v9271, %v9328
        %v9360 = vadd.f32 %v9272, %v9348
        %s9361 = scalar_lea.vmem %s3, 128
        %v9362 = vld [vmem:[%s9361] sm:$0xff]
        %v9363 = vld [vmem:[%s9361 + $0x8] sm:$0xff]
        %v9364 = vld [vmem:[%s9361 + $0x10] sm:$0xff]
        %v9365 = vld [vmem:[%s9361 + $0x18] sm:$0xff]
        %9367 = vset.pattern.permute.xlu0 0
        %9368 = vperm.xlu0 %9367, %v9362
        %v9369 = vpop.permute.xlu0 %9368
        %9372 = vset.pattern.permute.xlu0 0
        %9373 = vperm.xlu0 %9372, %v9363
        %v9374 = vpop.permute.xlu0 %9373
        %9377 = vset.pattern.permute.xlu0 0
        %9378 = vperm.xlu0 %9377, %v9364
        %v9379 = vpop.permute.xlu0 %9378
        %9382 = vset.pattern.permute.xlu0 0
        %9383 = vperm.xlu0 %9382, %v9365
        %v9384 = vpop.permute.xlu0 %9383
        %v9386 = vadd.f32 %v9349, %v9369
        %v9387 = vadd.f32 %v9350, %v9369
        %v9388 = vadd.f32 %v9351, %v9369
        %v9389 = vadd.f32 %v9352, %v9374
        %v9390 = vadd.f32 %v9353, %v9374
        %v9391 = vadd.f32 %v9354, %v9374
        %v9392 = vadd.f32 %v9355, %v9379
        %v9393 = vadd.f32 %v9356, %v9379
        %v9394 = vadd.f32 %v9357, %v9379
        %v9395 = vadd.f32 %v9358, %v9384
        %v9396 = vadd.f32 %v9359, %v9384
        %v9397 = vadd.f32 %v9360, %v9384
        %v9398 = vmax.f32 %v9386, 0.0
        %v9399 = vmax.f32 %v9387, 0.0
        %v9400 = vmax.f32 %v9388, 0.0
        %v9401 = vmax.f32 %v9389, 0.0
        %v9402 = vmax.f32 %v9390, 0.0
        %v9403 = vmax.f32 %v9391, 0.0
        %v9404 = vmax.f32 %v9392, 0.0
        %v9405 = vmax.f32 %v9393, 0.0
        %v9406 = vmax.f32 %v9394, 0.0
        %v9407 = vmax.f32 %v9395, 0.0
        %v9408 = vmax.f32 %v9396, 0.0
        %v9409 = vmax.f32 %v9397, 0.0
        %v9410 = vmul.f32 %v9398, %v1758
        %v9411 = vmul.f32 %v9399, %v1759
        %v9412 = vmul.f32 %v9400, %v1760
        %v9413 = vmul.f32 %v9401, %v1758
        %v9414 = vmul.f32 %v9402, %v1759
        %v9415 = vmul.f32 %v9403, %v1760
        %v9416 = vmul.f32 %v9404, %v1758
        %v9417 = vmul.f32 %v9405, %v1759
        %v9418 = vmul.f32 %v9406, %v1760
        %v9419 = vmul.f32 %v9407, %v1758
        %v9420 = vmul.f32 %v9408, %v1759
        %v9421 = vmul.f32 %v9409, %v1760
        %v9422 = vpack.c.bf16 %v9411, %v9410
        %v9423 = vpack.c.bf16 %v9412, %v9412
        %v9424 = vpack.c.bf16 %v9414, %v9413
        %v9425 = vpack.c.bf16 %v9415, %v9415
        %v9426 = vpack.c.bf16 %v9417, %v9416
        %v9427 = vpack.c.bf16 %v9418, %v9418
        %v9428 = vpack.c.bf16 %v9420, %v9419
        %v9429 = vpack.c.bf16 %v9421, %v9421
        %9430 = vst [vmem:[#allocation2 + $0xd8] sm:$0xff] %v9422
        %9431 = vst [vmem:[#allocation2 + $0xe0] sm:$0xf] %v9423
        %9432 = vst [vmem:[#allocation2 + $0xe4] sm:$0xff] %v9424
        %9433 = vst [vmem:[#allocation2 + $0xec] sm:$0xf] %v9425
        %9434 = vst [vmem:[#allocation2 + $0xf0] sm:$0xff] %v9426
        %9435 = vst [vmem:[#allocation2 + $0xf8] sm:$0xf] %v9427
        %9436 = vst [vmem:[#allocation2 + $0xfc] sm:$0xff] %v9428
        %9437 = vst [vmem:[#allocation2 + $0x104] sm:$0xf] %v9429
        %v9438 = vld [vmem:[%s4] sm:$0xf]
        %v9439 = vld [vmem:[#allocation2] sm:$0xff]
        %v9440 = vld [vmem:[#allocation2 + $0x8] sm:$0xf]
        %v9441 = vld [vmem:[#allocation2 + $0xc] sm:$0xff]
        %v9442 = vld [vmem:[#allocation2 + $0x14] sm:$0xf]
        %v9443 = vld [vmem:[#allocation2 + $0x18] sm:$0xff]
        %v9444 = vld [vmem:[#allocation2 + $0x20] sm:$0xf]
        %v9445 = vld [vmem:[#allocation2 + $0x24] sm:$0xff]
        %v9446 = vld [vmem:[#allocation2 + $0x2c] sm:$0xf]
        %v9447 = vld [vmem:[#allocation2 + $0x30] sm:$0xff]
        %v9448 = vld [vmem:[#allocation2 + $0x38] sm:$0xf]
        %v9449 = vld [vmem:[#allocation2 + $0x3c] sm:$0xff]
        %v9450 = vld [vmem:[#allocation2 + $0x44] sm:$0xf]
        %v9451 = vld [vmem:[#allocation2 + $0x48] sm:$0xff]
        %v9452 = vld [vmem:[#allocation2 + $0x50] sm:$0xf]
        %v9453 = vld [vmem:[#allocation2 + $0x54] sm:$0xff]
        %v9454 = vld [vmem:[#allocation2 + $0x5c] sm:$0xf]
        %v9455 = vld [vmem:[#allocation2 + $0x60] sm:$0xff]
        %v9456 = vld [vmem:[#allocation2 + $0x68] sm:$0xf]
        %v9457 = vld [vmem:[#allocation2 + $0x6c] sm:$0xff]
        %v9458 = vld [vmem:[#allocation2 + $0x74] sm:$0xf]
        %v9459 = vld [vmem:[#allocation2 + $0x78] sm:$0xff]
        %v9460 = vld [vmem:[#allocation2 + $0x80] sm:$0xf]
        %v9461 = vld [vmem:[#allocation2 + $0x84] sm:$0xff]
        %v9462 = vld [vmem:[#allocation2 + $0x8c] sm:$0xf]
        %v9463 = vld [vmem:[#allocation2 + $0x90] sm:$0xff]
        %v9464 = vld [vmem:[#allocation2 + $0x98] sm:$0xf]
        %v9465 = vld [vmem:[#allocation2 + $0x9c] sm:$0xff]
        %v9466 = vld [vmem:[#allocation2 + $0xa4] sm:$0xf]
        %v9467 = vld [vmem:[#allocation2 + $0xa8] sm:$0xff]
        %v9468 = vld [vmem:[#allocation2 + $0xb0] sm:$0xf]
        %v9469 = vld [vmem:[#allocation2 + $0xb4] sm:$0xff]
        %v9470 = vld [vmem:[#allocation2 + $0xbc] sm:$0xf]
        %v9471 = vld [vmem:[#allocation2 + $0xc0] sm:$0xff]
        %v9472 = vld [vmem:[#allocation2 + $0xc8] sm:$0xf]
        %v9473 = vld [vmem:[#allocation2 + $0xcc] sm:$0xff]
        %v9474 = vld [vmem:[#allocation2 + $0xd4] sm:$0xf]
        %v9475 = vld [vmem:[#allocation2 + $0xd8] sm:$0xff]
        %v9476 = vld [vmem:[#allocation2 + $0xe0] sm:$0xf]
        %v9477 = vld [vmem:[#allocation2 + $0xe4] sm:$0xff]
        %v9478 = vld [vmem:[#allocation2 + $0xec] sm:$0xf]
        %v9479 = vld [vmem:[#allocation2 + $0xf0] sm:$0xff]
        %v9480 = vld [vmem:[#allocation2 + $0xf8] sm:$0xf]
        %v9481 = vld [vmem:[#allocation2 + $0xfc] sm:$0xff]
        %v9482 = vld [vmem:[#allocation2 + $0x104] sm:$0xf]
        %v9483 = vld [vmem:[%s5] sm:$0xf]
        %9485 = vset.pattern.permute.xlu0 0
        %9486 = vperm.xlu0 %9485, %v9483
        %v9487 = vpop.permute.xlu0 %9486
        %9490 = vst [vmem:[#allocation1] ss:$4 sm:$0xff] %v9438
        %v9491 = vld.sshfl [vmem:[#allocation1] sm:$0xff pattern:$0x73625140]
        %v9492 = vld.sshfl [vmem:[#allocation1 + $0x8] sm:$0xff pattern:$0x73625140]
        %v9538 = vunpack.c.l.b16 %v9439
        %v9539 = vunpack.c.h.b16 %v9439
        %v9540 = vunpack.c.l.b16 %v9440
        %v9541 = vunpack.c.l.b16 %v9441
        %v9542 = vunpack.c.h.b16 %v9441
        %v9543 = vunpack.c.l.b16 %v9442
        %v9544 = vunpack.c.l.b16 %v9443
        %v9545 = vunpack.c.h.b16 %v9443
        %v9546 = vunpack.c.l.b16 %v9444
        %v9547 = vunpack.c.l.b16 %v9445
        %v9548 = vunpack.c.h.b16 %v9445
        %v9549 = vunpack.c.l.b16 %v9446
        %v9550 = vunpack.c.l.b16 %v9447
        %v9551 = vunpack.c.h.b16 %v9447
        %v9552 = vunpack.c.l.b16 %v9448
        %v9553 = vunpack.c.l.b16 %v9449
        %v9554 = vunpack.c.h.b16 %v9449
        %v9555 = vunpack.c.l.b16 %v9450
        %v9556 = vunpack.c.l.b16 %v9451
        %v9557 = vunpack.c.h.b16 %v9451
        %v9558 = vunpack.c.l.b16 %v9452
        %v9559 = vunpack.c.l.b16 %v9453
        %v9560 = vunpack.c.h.b16 %v9453
        %v9561 = vunpack.c.l.b16 %v9454
        %v9562 = vunpack.c.l.b16 %v9455
        %v9563 = vunpack.c.h.b16 %v9455
        %v9564 = vunpack.c.l.b16 %v9456
        %v9565 = vunpack.c.l.b16 %v9457
        %v9566 = vunpack.c.h.b16 %v9457
        %v9567 = vunpack.c.l.b16 %v9458
        %v9568 = vunpack.c.l.b16 %v9459
        %v9569 = vunpack.c.h.b16 %v9459
        %v9570 = vunpack.c.l.b16 %v9460
        %v9571 = vunpack.c.l.b16 %v9461
        %v9572 = vunpack.c.h.b16 %v9461
        %v9573 = vunpack.c.l.b16 %v9462
        %v9574 = vunpack.c.l.b16 %v9463
        %v9575 = vunpack.c.h.b16 %v9463
        %v9576 = vunpack.c.l.b16 %v9464
        %v9577 = vunpack.c.l.b16 %v9465
        %v9578 = vunpack.c.h.b16 %v9465
        %v9579 = vunpack.c.l.b16 %v9466
        %v9580 = vunpack.c.l.b16 %v9467
        %v9581 = vunpack.c.h.b16 %v9467
        %v9582 = vunpack.c.l.b16 %v9468
        %v9583 = vunpack.c.l.b16 %v9469
        %v9584 = vunpack.c.h.b16 %v9469
        %v9585 = vunpack.c.l.b16 %v9470
        %v9586 = vunpack.c.l.b16 %v9471
        %v9587 = vunpack.c.h.b16 %v9471
        %v9588 = vunpack.c.l.b16 %v9472
        %v9589 = vunpack.c.l.b16 %v9473
        %v9590 = vunpack.c.h.b16 %v9473
        %v9591 = vunpack.c.l.b16 %v9474
        %v9592 = vunpack.c.l.b16 %v9475
        %v9593 = vunpack.c.h.b16 %v9475
        %v9594 = vunpack.c.l.b16 %v9476
        %v9595 = vunpack.c.l.b16 %v9477
        %v9596 = vunpack.c.h.b16 %v9477
        %v9597 = vunpack.c.l.b16 %v9478
        %v9598 = vunpack.c.l.b16 %v9479
        %v9599 = vunpack.c.h.b16 %v9479
        %v9600 = vunpack.c.l.b16 %v9480
        %v9601 = vunpack.c.l.b16 %v9481
        %v9602 = vunpack.c.h.b16 %v9481
        %v9603 = vunpack.c.l.b16 %v9482
        %v9604 = vpack.c.b16 %v9541, %v9538
        %v9605 = vpack.c.b16 %v9542, %v9539
        %v9606 = vpack.c.b16 %v9543, %v9540
        %v9607 = vpack.c.b16 %v9547, %v9544
        %v9608 = vpack.c.b16 %v9548, %v9545
        %v9609 = vpack.c.b16 %v9549, %v9546
        %v9610 = vpack.c.b16 %v9553, %v9550
        %v9611 = vpack.c.b16 %v9554, %v9551
        %v9612 = vpack.c.b16 %v9555, %v9552
        %v9613 = vpack.c.b16 %v9559, %v9556
        %v9614 = vpack.c.b16 %v9560, %v9557
        %v9615 = vpack.c.b16 %v9561, %v9558
        %v9616 = vpack.c.b16 %v9565, %v9562
        %v9617 = vpack.c.b16 %v9566, %v9563
        %v9618 = vpack.c.b16 %v9567, %v9564
        %v9619 = vpack.c.b16 %v9571, %v9568
        %v9620 = vpack.c.b16 %v9572, %v9569
        %v9621 = vpack.c.b16 %v9573, %v9570
        %v9622 = vpack.c.b16 %v9577, %v9574
        %v9623 = vpack.c.b16 %v9578, %v9575
        %v9624 = vpack.c.b16 %v9579, %v9576
        %v9625 = vpack.c.b16 %v9583, %v9580
        %v9626 = vpack.c.b16 %v9584, %v9581
        %v9627 = vpack.c.b16 %v9585, %v9582
        %v9628 = vpack.c.b16 %v9589, %v9586
        %v9629 = vpack.c.b16 %v9590, %v9587
        %v9630 = vpack.c.b16 %v9591, %v9588
        %v9631 = vpack.c.b16 %v9595, %v9592
        %v9632 = vpack.c.b16 %v9596, %v9593
        %v9633 = vpack.c.b16 %v9597, %v9594
        %v9634 = vpack.c.b16 %v9601, %v9598
        %v9635 = vpack.c.b16 %v9602, %v9599
        %v9636 = vpack.c.b16 %v9603, %v9600
        %v9670 = vsel %vm1895, %v9492, 0
        %9672 = vmatpush.bf16.msra.mxu0 %v9625
        %9673 = vmatpush.bf16.msra.mxu0 %v9622
        %9674 = vmatpush.bf16.msra.mxu0 %v9619
        %9675 = vmatpush.bf16.msra.mxu0 %v9616
        %9676 = vmatpush.bf16.msra.mxu0 %v9613
        %9677 = vmatpush.bf16.msra.mxu0 %v9610
        %9678 = vmatpush.bf16.msra.mxu0 %v9607
        %9679 = vmatpush.bf16.msra.mxu0 %v9604
        %9680 = vmatmul.bf16.gmra.mxu0 %v9491
        %v9681 = vpop.f32.mrf.mxu0
        %v9682 = vadd.f32 %v9487, %v9681
        %v9683 = vpop.f32.mrf.mxu0
        %9684 = vdwg.mxu0
        %9685 = vmatpush.bf16.msra.mxu0 0
        %9686 = vmatpush.bf16.msra.mxu0 0
        %9687 = vmatpush.bf16.msra.mxu0 0
        %9688 = vmatpush.bf16.msra.mxu0 0
        %9689 = vmatpush.bf16.msra.mxu0 0
        %9690 = vmatpush.bf16.msra.mxu0 %v9634
        %9691 = vmatpush.bf16.msra.mxu0 %v9631
        %9692 = vmatpush.bf16.msra.mxu0 %v9628
        %9693 = vmatmul.bf16.gmra.mxu0 %v9670
        %v9694 = vpop.f32.mrf.mxu0
        %v9695 = vadd.f32 %v9682, %v9694
        %v9696 = vpop.f32.mrf.mxu0
        %9697 = vdwg.mxu0
        %9698 = vmatpush.bf16.msra.mxu0 %v9626
        %9699 = vmatpush.bf16.msra.mxu0 %v9623
        %9700 = vmatpush.bf16.msra.mxu0 %v9620
        %9701 = vmatpush.bf16.msra.mxu0 %v9617
        %9702 = vmatpush.bf16.msra.mxu0 %v9614
        %9703 = vmatpush.bf16.msra.mxu0 %v9611
        %9704 = vmatpush.bf16.msra.mxu0 %v9608
        %9705 = vmatpush.bf16.msra.mxu0 %v9605
        %9706 = vmatmul.bf16.gmra.mxu0 %v9491
        %v9707 = vpop.f32.mrf.mxu0
        %v9708 = vadd.f32 %v9487, %v9707
        %v9709 = vpop.f32.mrf.mxu0
        %9710 = vdwg.mxu0
        %9711 = vmatpush.bf16.msra.mxu0 0
        %9712 = vmatpush.bf16.msra.mxu0 0
        %9713 = vmatpush.bf16.msra.mxu0 0
        %9714 = vmatpush.bf16.msra.mxu0 0
        %9715 = vmatpush.bf16.msra.mxu0 0
        %9716 = vmatpush.bf16.msra.mxu0 %v9635
        %9717 = vmatpush.bf16.msra.mxu0 %v9632
        %9718 = vmatpush.bf16.msra.mxu0 %v9629
        %9719 = vmatmul.bf16.gmra.mxu0 %v9670
        %v9720 = vpop.f32.mrf.mxu0
        %v9721 = vadd.f32 %v9708, %v9720
        %v9722 = vpop.f32.mrf.mxu0
        %9723 = vdwg.mxu0
        %9724 = vmatpush.bf16.msra.mxu0 %v9627
        %9725 = vmatpush.bf16.msra.mxu0 %v9624
        %9726 = vmatpush.bf16.msra.mxu0 %v9621
        %9727 = vmatpush.bf16.msra.mxu0 %v9618
        %9728 = vmatpush.bf16.msra.mxu0 %v9615
        %9729 = vmatpush.bf16.msra.mxu0 %v9612
        %9730 = vmatpush.bf16.msra.mxu0 %v9609
        %9731 = vmatpush.bf16.msra.mxu0 %v9606
        %9732 = vmatmul.bf16.gmra.mxu0 %v9491
        %v9733 = vpop.f32.mrf.mxu0
        %v9734 = vadd.f32 %v9487, %v9733
        %v9735 = vpop.f32.mrf.mxu0
        %9736 = vdwg.mxu0
        %9737 = vmatpush.bf16.msra.mxu0 0
        %9738 = vmatpush.bf16.msra.mxu0 0
        %9739 = vmatpush.bf16.msra.mxu0 0
        %9740 = vmatpush.bf16.msra.mxu0 0
        %9741 = vmatpush.bf16.msra.mxu0 0
        %9742 = vmatpush.bf16.msra.mxu0 %v9636
        %9743 = vmatpush.bf16.msra.mxu0 %v9633
        %9744 = vmatpush.bf16.msra.mxu0 %v9630
        %9745 = vmatmul.bf16.gmra.mxu0 %v9670
        %v9746 = vpop.f32.mrf.mxu0
        %v9747 = vadd.f32 %v9734, %v9746
        %v9748 = vpop.f32.mrf.mxu0
        %9749 = vdwg.mxu0
        %v9750 = vmul.f32 %v9695, 0.2
        %v9751 = vmul.f32 %v9721, 0.2
        %v9752 = vmul.f32 %v9747, 0.2
        %v9753 = vld [vmem:[%s249] sm:$0xff]
        %v9754 = vld [vmem:[%s249 + $0x8] sm:$0xf]
        %9757 = vst [vmem:[#allocation1] ss:$2 sm:$0xff] %v9753
        %s9758 = scalar_lea.vmem [#allocation1], 16
        %9759 = vst [vmem:[%s9758] ss:$2 sm:$0xff] %v9754
        %v9760 = vld.sshfl [vmem:[#allocation1] sm:$0xff pattern:$0x75316420]
        %v9761 = vld.sshfl [vmem:[#allocation1 + $0x8] sm:$0xff pattern:$0x75316420]
        %v9762 = vld.sshfl [vmem:[#allocation1 + $0x10] sm:$0xff pattern:$0x75316420]
        %v9766 = vadd.f32 %v9750, %v9760
        %v9767 = vadd.f32 %v9751, %v9761
        %v9768 = vadd.f32 %v9752, %v9762
        %v9771 = vrot.slane %v9767, 4
        %vm9772 = vcmask 1043456
        %v9773 = vsel %vm9772, %v9766, %v9771
        %9775 = vst [vmem:[%s244] sm:$0xff] %v9773
        %9776 = vst [vmem:[%s244 + $0x8] sm:$0xf] %v9768
        %s9777 = sand.u32 %s159, 1
        %s9778 = scalar_lea.sflag [#allocation5], %s9777
        %s9779 = sand.u32 %s159, 1
        %s9780 = smul.addr %s9779, 12
        %s9781 = scalar_lea.vmem [#allocation4], %s9780
        // Predicated region
        $region45: #{tpu_custom_call.1} parent=43 // pred_check
          %p9782 = pneg %p169
        $region46: #{tpu_custom_call.1} parent=43 // pred_check_branch
          %9784 = sbr.rel (%p9782) target = $region48
        $region47: #{tpu_custom_call.1} parent=43 // pred_region
          %9786 = vsyncadd %s9778, 0
          %s9787 = smul.addr %s20, 3
          %s9788 = smul.addr %s9787, 4
          %s9789 = scalar_lea.hbm %s6, %s9788
          %s9791 = sshll.u32 %s9781, 4
          %s9792 = int_to_ptr.vmem [resolvable:$true] %s9791
          %s9793 = sshll.u32 %s9789, 4
          %s9794 = int_to_ptr.hbm [resolvable:$true] %s9793
          %9796 = dma.vmem_to_hbm [thread:$0]  %s9792, 192, %s9794, %s9778
        $region48: #{tpu_custom_call.1} parent=43 // pred_fallthru
          _
      $region44: #{tpu_custom_call.1} parent=5 // pred_fallthru
        _
      %p9797 = scmp.le.s32.totalorder 2, %s15
      // Predicated region
      $region49: #{tpu_custom_call.1} parent=5 // pred_check
        %p9798 = pneg %p9797
      $region50: #{tpu_custom_call.1} parent=5 // pred_check_branch
        %9800 = sbr.rel (%p9798) target = $region52
      $region51: #{tpu_custom_call.1} parent=5 // pred_region
        %s9801 = ssub.s32 %s15, 2
        // Predicated region
        $region53: #{tpu_custom_call.1} parent=51 // pred_check
          %p9802 = pneg %p175
        $region54: #{tpu_custom_call.1} parent=51 // pred_check_branch
          %9804 = sbr.rel (%p9802) target = $region56
        $region55: #{tpu_custom_call.1} parent=51 // pred_region
          %s9805 = sand.u32 %s160, 1
          %s9806 = scalar_lea.sflag [#allocation5], %s9805
          %s9807 = sand.u32 %s160, 1
          %s9808 = smul.addr %s9807, 12
          %s9809 = scalar_lea.vmem [#allocation4], %s9808
          %9811 = dma.done %s9806, 192
        $region56: #{tpu_custom_call.1} parent=51 // pred_fallthru
          _
      $region52: #{tpu_custom_call.1} parent=5 // pred_fallthru
        _
    $region6: #{tpu_custom_call.1} parent=1 // loop_footer
      %s19 = sadd.s32 1, %s15
    $region7: #{tpu_custom_call.1} parent=1 // loop_footer_branch
      %14 = sbr.rel target = $region3
    $region8: #{tpu_custom_call.1} parent=1 // loop_exit
      _
    %9812 = vsyncpa [#allocation5], 1
    %s9813 = scalar_lea.sflag [#allocation5], 1
    %9814 = vsyncpa %s9813, 1

</llo_original>
